<compile_context>
chip_gen: v5e
topology: v5e:2x2
jax: 0.10.0
libtpu: 0.0.40
codegen_flags: <defaults>
</compile_context>

<pallas_src>
import functools

import jax
import jax.numpy as jnp
from jax.experimental import pallas as pl
from jax.experimental.pallas import tpu as pltpu

# Hyperparameters fixed by the PyTorch module.
FILTERS = (4, 5, 6)
K_MAX = max(FILTERS)
EMBEDDING_DIM = 500
NUM_KERNEL = 128
NUM_FEAT = NUM_KERNEL * len(FILTERS)        # 384
DROPOUT_P = 0.2


def _round_up(x, m):
    return (x + m - 1) // m * m


def _net_kernel(x_ref, w_ref, b_ref, fcw_ref, fcb_ref, out_ref, *, seq_len, l_pad):
    """One batch tile (TB samples) per grid step.

    x_ref:   (TB, S_p, E_p)        bf16  zero-padded embedded tokens (channels-last)
    w_ref:   (K_MAX, E_p, 384)     bf16  per-tap conv weights, 3 filters fused on N
    b_ref:   (1, 384)              f32   packed conv biases
    fcw_ref: (1, 384)              f32   fc weight row
    fcb_ref: (1, 128)              f32   fc bias broadcast across lanes
    out_ref: (TB, 128)             f32   sigmoid(logit) broadcast across lanes
    """
    tb = x_ref.shape[0]
    e_p = x_ref.shape[2]
    m = tb * l_pad

    # Fused conv: one (TB*L_pad, E_p) @ (E_p, 384) MXU matmul per tap index.
    acc = jnp.zeros((m, NUM_FEAT), jnp.float32)
    for j in range(K_MAX):                         # static unroll over 6 taps
        xs = x_ref[:, j:j + l_pad, :]              # (TB, L_pad, E_p) bf16
        xs = xs.reshape(m, e_p)                    # tile-aligned collapse (L_pad % 16 == 0)
        acc += jnp.dot(xs, w_ref[j], preferred_element_type=jnp.float32)

    acc = jnp.maximum(acc + b_ref[...], 0.0)       # bias + ReLU (f32)

    # Mask time positions past each filter's valid output length, then max over time.
    # (ReLU output >= 0, so masking invalid positions to 0 preserves the max.)
    acc = acc.reshape(tb, l_pad, NUM_FEAT)
    t_idx = jax.lax.broadcasted_iota(jnp.int32, (l_pad, NUM_FEAT), 0)
    c_idx = jax.lax.broadcasted_iota(jnp.int32, (l_pad, NUM_FEAT), 1)
    limit = jnp.where(c_idx < NUM_KERNEL, seq_len - FILTERS[0] + 1,
                      jnp.where(c_idx < 2 * NUM_KERNEL, seq_len - FILTERS[1] + 1,
                                seq_len - FILTERS[2] + 1))
    valid = t_idx < limit                          # (L_pad, 384)
    acc = jnp.where(valid[None, :, :], acc, 0.0)
    feat = jnp.max(acc, axis=1)                    # (TB, 384), already concatenated

    # TODO(synk): F.dropout(p=0.2) defaults to training=True in the PyTorch forward
    # (stochastic mask even under eval); we take the deterministic identity path.

    # FC(384 -> 1) as VPU multiply + lane reduce (avoids an N=1 MXU pass).
    logit = jnp.sum(feat * fcw_ref[...], axis=-1, keepdims=True)        # (TB, 1)
    logit = jnp.broadcast_to(logit, (tb, out_ref.shape[1])) + fcb_ref[...]
    out_ref[...] = jax.nn.sigmoid(logit)           # single unmasked (TB, 128) store


def net_forward(inp, params, *, batch_tile=8):
    """inp: (B, S) int32 token ids -> (B,) float32 probabilities."""
    emb = params["embedding"]                                   # (V, E) f32
    B, S = inp.shape
    E = emb.shape[1]
    assert S >= K_MAX, "sequence must be at least as long as the largest filter"

    e_p = _round_up(E, 128)                                     # 500 -> 512 (contraction pad)
    l_max = S - min(FILTERS) + 1                                # longest conv output
    l_pad = _round_up(l_max, 16)                                # bf16 sublane tile
    s_p = _round_up(l_pad + K_MAX - 1, 8)                       # >= S + 2, time pad

    tb = min(batch_tile, B)
    b_p = _round_up(B, tb)

    # ---- XLA glue: embedding gather, bf16 cast, zero padding -------------------
    # TODO(synk): for small vocabularies the gather could move in-kernel
    # (scalar-prefetched ids + VMEM-resident table) to cut input HBM traffic further.
    x = jnp.take(emb, inp, axis=0).astype(jnp.bfloat16)         # (B, S, E)
    x = jnp.pad(x, ((0, b_p - B), (0, s_p - S), (0, e_p - E)))  # (B_p, S_p, E_p), zeros

    # Pack the three conv weights tap-major and fused along the output channels.
    w_packed = jnp.zeros((K_MAX, e_p, NUM_FEAT), jnp.float32)
    for i, k in enumerate(FILTERS):
        w_packed = w_packed.at[:k, :E, i * NUM_KERNEL:(i + 1) * NUM_KERNEL].set(
            params[f"conv_w_{i}"])
    w_packed = w_packed.astype(jnp.bfloat16)                    # (6, 512, 384)
    b_packed = jnp.concatenate(
        [params[f"conv_b_{i}"] for i in range(len(FILTERS))], axis=1)   # (1, 384)
    fcw_row = params["fc_w"].reshape(1, NUM_FEAT)               # (1, 384)
    fcb_row = jnp.broadcast_to(params["fc_b"].reshape(1, 1), (1, 128))  # (1, 128)

    kernel = functools.partial(_net_kernel, seq_len=S, l_pad=l_pad)

    # VMEM budget (TB=8): x tile ~0.2 MB, packed weights ~2.3 MB, f32 acc ~0.2 MB
    # -> far below the 32 MiB default scoped limit on all generations.
    out = pl.pallas_call(
        kernel,
        out_shape=jax.ShapeDtypeStruct((b_p, 128), jnp.float32),
        grid_spec=pltpu.PrefetchScalarGridSpec(
            num_scalar_prefetch=0,
            grid=(b_p // tb,),
            in_specs=[
                pl.BlockSpec((tb, s_p, e_p), lambda b: (b, 0, 0)),
                pl.BlockSpec((K_MAX, e_p, NUM_FEAT), lambda b: (0, 0, 0)),
                pl.BlockSpec((1, NUM_FEAT), lambda b: (0, 0)),
                pl.BlockSpec((1, NUM_FEAT), lambda b: (0, 0)),
                pl.BlockSpec((1, 128), lambda b: (0, 0)),
            ],
            out_specs=pl.BlockSpec((tb, 128), lambda b: (b, 0)),
        ),
        compiler_params=pltpu.CompilerParams(
            dimension_semantics=("parallel",)),      # batch axis -> both TCs on v7x
    )(x, w_packed, b_packed, fcw_row, fcb_row)
    return out[:B, 0]                                 # == x.squeeze() -> (B,)


def init_params(key, vocab_size):
    """Deterministic synthetic parameters matching the module's shapes."""
    ks = jax.random.split(key, 9)
    params = {
        "embedding": jax.random.normal(ks[0], (vocab_size, EMBEDDING_DIM),
                                       jnp.float32) * 0.1,
        # fc: PyTorch Linear(384, 1) -> stored transposed (384, 1)
        "fc_w": jax.random.normal(ks[1], (NUM_FEAT, 1), jnp.float32) * 0.05,
        "fc_b": jnp.full((1, 1), 0.01, jnp.float32),
    }
    for i, k in enumerate(FILTERS):
        # PyTorch Conv1d weight is (K_out, E_in, k); we store it tap-major (k, E, K).
        params[f"conv_w_{i}"] = jax.random.normal(
            ks[2 + 2 * i], (k, EMBEDDING_DIM, NUM_KERNEL), jnp.float32) * 0.02
        params[f"conv_b_{i}"] = jax.random.normal(
            ks[3 + 2 * i], (1, NUM_KERNEL), jnp.float32) * 0.02
    return params


def reference_forward(inp, params, *, quantize=False):
    """Pure-JAX reference. quantize=True mimics the kernel's bf16 input rounding."""
    def maybe_q(a):
        return a.astype(jnp.bfloat16).astype(jnp.float32) if quantize else a

    x = jnp.take(maybe_q(params["embedding"]), inp, axis=0)      # (B, S, E) f32
    B, S, _ = x.shape
    hi = jax.lax.Precision.HIGHEST
    feats = []
    for i, k in enumerate(FILTERS):
        w = maybe_q(params[f"conv_w_{i}"])
        b = params[f"conv_b_{i}"]
        L = S - k + 1
        acc = jnp.zeros((B, L, NUM_KERNEL), jnp.float32)
        for j in range(k):
            acc += jnp.einsum("bse,ek->bsk", x[:, j:j + L, :], w[j], precision=hi)
        acc = jax.nn.relu(acc + b[None])
        feats.append(jnp.max(acc, axis=1))
    feat = jnp.concatenate(feats, axis=1)                        # (B, 384)
    logit = jnp.dot(feat, params["fc_w"], precision=hi) + params["fc_b"]
    return jax.nn.sigmoid(logit)[:, 0]


if __name__ == "__main__":
    vocab_size, seq_len, batch = 50, 16, 16
    key = jax.random.PRNGKey(0)
    k_inp, k_par = jax.random.split(key)

    inp = jax.random.randint(k_inp, (batch, seq_len), 0, vocab_size, jnp.int32)
    params = init_params(k_par, vocab_size)

    out = jax.block_until_ready(net_forward(inp, params, batch_tile=8))

    ref_bf16 = reference_forward(inp, params, quantize=True)    # matches kernel precision
    ref_f32 = reference_forward(inp, params, quantize=False)    # full-precision module math

    assert out.shape == (batch,)
    assert jnp.allclose(out, ref_bf16, atol=5e-3), (out, ref_bf16)
    assert jnp.allclose(out, ref_f32, atol=5e-2), (out, ref_f32)

    print("KERNEL_OK")
</pallas_src>

<mosaic_0001>
module attributes {stable_mosaic.version = 11 : i64} {
  func.func @_net_kernel(%arg0: i32, %arg1: memref<8x24x512xbf16, #tpu.memory_space<vmem>>, %arg2: memref<6x512x384xbf16, #tpu.memory_space<vmem>>, %arg3: memref<1x384xf32, #tpu.memory_space<vmem>>, %arg4: memref<1x384xf32, #tpu.memory_space<vmem>>, %arg5: memref<1x128xf32, #tpu.memory_space<vmem>>, %arg6: memref<8x128xf32, #tpu.memory_space<vmem>>) attributes {dimension_semantics = [#tpu.dimension_semantics<parallel>], iteration_bounds = array<i64: 2>, scalar_prefetch = 0 : i64, scratch_operands = 0 : i64, tpu.core_type = #tpu.core_type<tc>, window_params = [{transform_indices = @transform_0, window_bounds = array<i64: 8, 24, 512>}, {pipeline_mode = #tpu.pipeline_mode<synchronous>, transform_indices = @transform_1, window_bounds = array<i64: 6, 512, 384>}, {pipeline_mode = #tpu.pipeline_mode<synchronous>, transform_indices = @transform_2, window_bounds = array<i64: 1, 384>}, {pipeline_mode = #tpu.pipeline_mode<synchronous>, transform_indices = @transform_3, window_bounds = array<i64: 1, 384>}, {pipeline_mode = #tpu.pipeline_mode<synchronous>, transform_indices = @transform_4, window_bounds = array<i64: 1, 128>}, {transform_indices = @transform_5, window_bounds = array<i64: 8, 128>}]} {
    %cst = arith.constant 0.000000e+00 : f32
    %0 = vector.broadcast %cst : f32 to vector<128x384xf32>
    %c0 = arith.constant 0 : index
    %c0_0 = arith.constant 0 : index
    %c0_1 = arith.constant 0 : index
    %1 = vector.load %arg1[%c0, %c0_0, %c0_1] : memref<8x24x512xbf16, #tpu.memory_space<vmem>>, vector<8x16x512xbf16>
    %2 = vector.shape_cast %1 : vector<8x16x512xbf16> to vector<128x512xbf16>
    %c0_2 = arith.constant 0 : index
    %c0_3 = arith.constant 0 : index
    %c0_4 = arith.constant 0 : index
    %3 = vector.load %arg2[%c0_2, %c0_3, %c0_4] : memref<6x512x384xbf16, #tpu.memory_space<vmem>>, vector<1x512x384xbf16>
    %4 = vector.shape_cast %3 : vector<1x512x384xbf16> to vector<512x384xbf16>
    %cst_5 = arith.constant dense<0.000000e+00> : vector<128x384xf32>
    %5 = tpu.matmul %2, %4, %cst_5 {dimension_numbers = #tpu.dot_dimension_numbers<[1], [0], [0], [1], [0, 0, 1, 1], [], []>} : vector<128x512xbf16>, vector<512x384xbf16>, vector<128x384xf32> -> vector<128x384xf32>
    %6 = arith.addf %0, %5 : vector<128x384xf32>
    %c0_6 = arith.constant 0 : index
    %c1 = arith.constant 1 : index
    %c0_7 = arith.constant 0 : index
    %7 = vector.load %arg1[%c0_6, %c1, %c0_7] : memref<8x24x512xbf16, #tpu.memory_space<vmem>>, vector<8x16x512xbf16>
    %8 = vector.shape_cast %7 : vector<8x16x512xbf16> to vector<128x512xbf16>
    %c1_8 = arith.constant 1 : index
    %c0_9 = arith.constant 0 : index
    %c0_10 = arith.constant 0 : index
    %9 = vector.load %arg2[%c1_8, %c0_9, %c0_10] : memref<6x512x384xbf16, #tpu.memory_space<vmem>>, vector<1x512x384xbf16>
    %10 = vector.shape_cast %9 : vector<1x512x384xbf16> to vector<512x384xbf16>
    %cst_11 = arith.constant dense<0.000000e+00> : vector<128x384xf32>
    %11 = tpu.matmul %8, %10, %cst_11 {dimension_numbers = #tpu.dot_dimension_numbers<[1], [0], [0], [1], [0, 0, 1, 1], [], []>} : vector<128x512xbf16>, vector<512x384xbf16>, vector<128x384xf32> -> vector<128x384xf32>
    %12 = arith.addf %6, %11 : vector<128x384xf32>
    %c0_12 = arith.constant 0 : index
    %c2 = arith.constant 2 : index
    %c0_13 = arith.constant 0 : index
    %13 = vector.load %arg1[%c0_12, %c2, %c0_13] : memref<8x24x512xbf16, #tpu.memory_space<vmem>>, vector<8x16x512xbf16>
    %14 = vector.shape_cast %13 : vector<8x16x512xbf16> to vector<128x512xbf16>
    %c2_14 = arith.constant 2 : index
    %c0_15 = arith.constant 0 : index
    %c0_16 = arith.constant 0 : index
    %15 = vector.load %arg2[%c2_14, %c0_15, %c0_16] : memref<6x512x384xbf16, #tpu.memory_space<vmem>>, vector<1x512x384xbf16>
    %16 = vector.shape_cast %15 : vector<1x512x384xbf16> to vector<512x384xbf16>
    %cst_17 = arith.constant dense<0.000000e+00> : vector<128x384xf32>
    %17 = tpu.matmul %14, %16, %cst_17 {dimension_numbers = #tpu.dot_dimension_numbers<[1], [0], [0], [1], [0, 0, 1, 1], [], []>} : vector<128x512xbf16>, vector<512x384xbf16>, vector<128x384xf32> -> vector<128x384xf32>
    %18 = arith.addf %12, %17 : vector<128x384xf32>
    %c0_18 = arith.constant 0 : index
    %c3 = arith.constant 3 : index
    %c0_19 = arith.constant 0 : index
    %19 = vector.load %arg1[%c0_18, %c3, %c0_19] : memref<8x24x512xbf16, #tpu.memory_space<vmem>>, vector<8x16x512xbf16>
    %20 = vector.shape_cast %19 : vector<8x16x512xbf16> to vector<128x512xbf16>
    %c3_20 = arith.constant 3 : index
    %c0_21 = arith.constant 0 : index
    %c0_22 = arith.constant 0 : index
    %21 = vector.load %arg2[%c3_20, %c0_21, %c0_22] : memref<6x512x384xbf16, #tpu.memory_space<vmem>>, vector<1x512x384xbf16>
    %22 = vector.shape_cast %21 : vector<1x512x384xbf16> to vector<512x384xbf16>
    %cst_23 = arith.constant dense<0.000000e+00> : vector<128x384xf32>
    %23 = tpu.matmul %20, %22, %cst_23 {dimension_numbers = #tpu.dot_dimension_numbers<[1], [0], [0], [1], [0, 0, 1, 1], [], []>} : vector<128x512xbf16>, vector<512x384xbf16>, vector<128x384xf32> -> vector<128x384xf32>
    %24 = arith.addf %18, %23 : vector<128x384xf32>
    %c0_24 = arith.constant 0 : index
    %c4 = arith.constant 4 : index
    %c0_25 = arith.constant 0 : index
    %25 = vector.load %arg1[%c0_24, %c4, %c0_25] : memref<8x24x512xbf16, #tpu.memory_space<vmem>>, vector<8x16x512xbf16>
    %26 = vector.shape_cast %25 : vector<8x16x512xbf16> to vector<128x512xbf16>
    %c4_26 = arith.constant 4 : index
    %c0_27 = arith.constant 0 : index
    %c0_28 = arith.constant 0 : index
    %27 = vector.load %arg2[%c4_26, %c0_27, %c0_28] : memref<6x512x384xbf16, #tpu.memory_space<vmem>>, vector<1x512x384xbf16>
    %28 = vector.shape_cast %27 : vector<1x512x384xbf16> to vector<512x384xbf16>
    %cst_29 = arith.constant dense<0.000000e+00> : vector<128x384xf32>
    %29 = tpu.matmul %26, %28, %cst_29 {dimension_numbers = #tpu.dot_dimension_numbers<[1], [0], [0], [1], [0, 0, 1, 1], [], []>} : vector<128x512xbf16>, vector<512x384xbf16>, vector<128x384xf32> -> vector<128x384xf32>
    %30 = arith.addf %24, %29 : vector<128x384xf32>
    %c0_30 = arith.constant 0 : index
    %c5 = arith.constant 5 : index
    %c0_31 = arith.constant 0 : index
    %31 = vector.load %arg1[%c0_30, %c5, %c0_31] : memref<8x24x512xbf16, #tpu.memory_space<vmem>>, vector<8x16x512xbf16>
    %32 = vector.shape_cast %31 : vector<8x16x512xbf16> to vector<128x512xbf16>
    %c5_32 = arith.constant 5 : index
    %c0_33 = arith.constant 0 : index
    %c0_34 = arith.constant 0 : index
    %33 = vector.load %arg2[%c5_32, %c0_33, %c0_34] : memref<6x512x384xbf16, #tpu.memory_space<vmem>>, vector<1x512x384xbf16>
    %34 = vector.shape_cast %33 : vector<1x512x384xbf16> to vector<512x384xbf16>
    %cst_35 = arith.constant dense<0.000000e+00> : vector<128x384xf32>
    %35 = tpu.matmul %32, %34, %cst_35 {dimension_numbers = #tpu.dot_dimension_numbers<[1], [0], [0], [1], [0, 0, 1, 1], [], []>} : vector<128x512xbf16>, vector<512x384xbf16>, vector<128x384xf32> -> vector<128x384xf32>
    %36 = arith.addf %30, %35 : vector<128x384xf32>
    %c0_36 = arith.constant 0 : index
    %c0_37 = arith.constant 0 : index
    %37 = vector.load %arg3[%c0_36, %c0_37] : memref<1x384xf32, #tpu.memory_space<vmem>>, vector<1x384xf32>
    %38 = vector.broadcast %37 : vector<1x384xf32> to vector<128x384xf32>
    %39 = arith.addf %36, %38 : vector<128x384xf32>
    %cst_38 = arith.constant 0.000000e+00 : f32
    %40 = vector.broadcast %cst_38 : f32 to vector<128x384xf32>
    %41 = arith.maximumf %39, %40 : vector<128x384xf32>
    %42 = vector.shape_cast %41 : vector<128x384xf32> to vector<8x16x384xf32>
    %43 = tpu.iota {dimensions = array<i32: 0>} : vector<16x384xi32>
    %44 = tpu.iota {dimensions = array<i32: 1>} : vector<16x384xi32>
    %c128_i32 = arith.constant 128 : i32
    %45 = vector.broadcast %c128_i32 : i32 to vector<16x384xi32>
    %46 = arith.cmpi slt, %44, %45 : vector<16x384xi32>
    %c256_i32 = arith.constant 256 : i32
    %47 = vector.broadcast %c256_i32 : i32 to vector<16x384xi32>
    %48 = arith.cmpi slt, %44, %47 : vector<16x384xi32>
    %c12_i32 = arith.constant 12 : i32
    %c11_i32 = arith.constant 11 : i32
    %49 = vector.broadcast %c12_i32 : i32 to vector<16x384xi32>
    %50 = vector.broadcast %c11_i32 : i32 to vector<16x384xi32>
    %51 = arith.select %48, %49, %50 : vector<16x384xi1>, vector<16x384xi32>
    %c13_i32 = arith.constant 13 : i32
    %52 = vector.broadcast %c13_i32 : i32 to vector<16x384xi32>
    %53 = arith.select %46, %52, %51 : vector<16x384xi1>, vector<16x384xi32>
    %54 = arith.cmpi slt, %43, %53 : vector<16x384xi32>
    %55 = vector.shape_cast %54 : vector<16x384xi1> to vector<1x16x384xi1>
    %cst_39 = arith.constant 0.000000e+00 : f32
    %56 = vector.shape_cast %55 : vector<1x16x384xi1> to vector<1x16x384xi1>
    %57 = vector.broadcast %56 : vector<1x16x384xi1> to vector<8x16x384xi1>
    %58 = vector.broadcast %cst_39 : f32 to vector<8x16x384xf32>
    %59 = arith.select %57, %42, %58 : vector<8x16x384xi1>, vector<8x16x384xf32>
    %cst_40 = arith.constant dense<0xFF800000> : vector<8x384xf32>
    %60 = vector.multi_reduction <maximumf>, %59, %cst_40 [1] : vector<8x16x384xf32> to vector<8x384xf32>
    %c0_41 = arith.constant 0 : index
    %c0_42 = arith.constant 0 : index
    %61 = vector.load %arg4[%c0_41, %c0_42] : memref<1x384xf32, #tpu.memory_space<vmem>>, vector<1x384xf32>
    %62 = vector.broadcast %61 : vector<1x384xf32> to vector<8x384xf32>
    %63 = arith.mulf %60, %62 : vector<8x384xf32>
    %cst_43 = arith.constant dense<0.000000e+00> : vector<8xf32>
    %64 = vector.multi_reduction <add>, %63, %cst_43 [1] : vector<8x384xf32> to vector<8xf32>
    %65 = vector.shape_cast %64 : vector<8xf32> to vector<8x1xf32>
    %66 = vector.shape_cast %65 : vector<8x1xf32> to vector<8x1xf32>
    %67 = vector.broadcast %66 : vector<8x1xf32> to vector<8x128xf32>
    %c0_44 = arith.constant 0 : index
    %c0_45 = arith.constant 0 : index
    %68 = vector.load %arg5[%c0_44, %c0_45] : memref<1x128xf32, #tpu.memory_space<vmem>>, vector<1x128xf32>
    %69 = vector.broadcast %68 : vector<1x128xf32> to vector<8x128xf32>
    %70 = arith.addf %67, %69 : vector<8x128xf32>
    %71 = arith.negf %70 : vector<8x128xf32>
    %72 = math.exp %71 : vector<8x128xf32>
    %cst_46 = arith.constant 1.000000e+00 : f32
    %73 = vector.broadcast %cst_46 : f32 to vector<8x128xf32>
    %74 = arith.addf %73, %72 : vector<8x128xf32>
    %75 = arith.divf %73, %74 : vector<8x128xf32>
    %c0_47 = arith.constant 0 : index
    %c0_48 = arith.constant 0 : index
    %76 = vector.load %arg6[%c0_47, %c0_48] : memref<8x128xf32, #tpu.memory_space<vmem>>, vector<8x128xf32>
    tpu.vector_store %arg6[%c0_47, %c0_48], %75 {strides = array<i32>} : memref<8x128xf32, #tpu.memory_space<vmem>>, vector<8x128xf32>,
    return
  }
  func.func @transform_0(%arg0: i32) -> (i32, i32, i32) {
    %c0_i32 = arith.constant 0 : i32
    %c0_i32_0 = arith.constant 0 : i32
    %c0_i32_1 = arith.constant 0 : i32
    return %arg0, %c0_i32, %c0_i32_0 : i32, i32, i32
  }
  func.func @transform_1(%arg0: i32) -> (i32, i32, i32) {
    %c0_i32 = arith.constant 0 : i32
    %c0_i32_0 = arith.constant 0 : i32
    %c0_i32_1 = arith.constant 0 : i32
    %c0_i32_2 = arith.constant 0 : i32
    return %c0_i32, %c0_i32_0, %c0_i32_1 : i32, i32, i32
  }
  func.func @transform_2(%arg0: i32) -> (i32, i32) {
    %c0_i32 = arith.constant 0 : i32
    %c0_i32_0 = arith.constant 0 : i32
    %c0_i32_1 = arith.constant 0 : i32
    return %c0_i32, %c0_i32_0 : i32, i32
  }
  func.func @transform_3(%arg0: i32) -> (i32, i32) {
    %c0_i32 = arith.constant 0 : i32
    %c0_i32_0 = arith.constant 0 : i32
    %c0_i32_1 = arith.constant 0 : i32
    return %c0_i32, %c0_i32_0 : i32, i32
  }
  func.func @transform_4(%arg0: i32) -> (i32, i32) {
    %c0_i32 = arith.constant 0 : i32
    %c0_i32_0 = arith.constant 0 : i32
    %c0_i32_1 = arith.constant 0 : i32
    return %c0_i32, %c0_i32_0 : i32, i32
  }
  func.func @transform_5(%arg0: i32) -> (i32, i32) {
    %c0_i32 = arith.constant 0 : i32
    %c0_i32_0 = arith.constant 0 : i32
    return %arg0, %c0_i32 : i32, i32
  }
}

</mosaic_0001>

<llo_original>
// kernel: tpu_custom_call.1
$region0: #{tpu_custom_call.1}
  #allocation0 [shape = 'u32[]', space=smem, size = 0x4, offset = 0x4, fixed_abs, tag = 'smem constant byte address 0x4 - core index']
  #allocation1 [shape = 'u32[72,128]{1,0:T(1,128)}', space=vmem, size = 0x9000, scoped, tag = 'internal scratch']
  %s0 = inlined_call_operand.hbm [shape: bf16[16,24,512], index: 0, kind: input, shape index: {}]
  %s1 = inlined_call_operand.hbm [shape: bf16[6,512,384], index: 1, kind: input, shape index: {}]
  %s2 = inlined_call_operand.hbm [shape: f32[1,384], index: 2, kind: input, shape index: {}]
  %s3 = inlined_call_operand.hbm [shape: f32[1,384], index: 3, kind: input, shape index: {}]
  %s4 = inlined_call_operand.hbm [shape: f32[1,128], index: 4, kind: input, shape index: {}]
  %s5 = inlined_call_operand.hbm [shape: f32[16,128], index: 5, kind: output, shape index: {}]
  %s6 = sld [smem:[#allocation0]]
  $region73: #{tpu_custom_call.1} parent=0
    _
  %s8 = ssub.s32 1, %s6
  %s9 = scalar_select 0, %s8, %s6
  $region1: #{tpu_custom_call.1} parent=0
    #allocation2 [shape = 'u8[393216]{0}', space=vmem, size = 0x60000, scoped, tag = 'input window, operand 0']
    #allocation3 [shape = 's32[2]{0}', space=sflag, size = 0x8, scoped, tag = 'scoped memory for tpu_custom_call.1']
    #allocation4 [shape = 's32[2]{0}', space=sflag, size = 0x8, scoped, tag = 'scoped memory for tpu_custom_call.1']
    #allocation5 [shape = 'u8[2359296]{0}', space=vmem, size = 0x240000, scoped, tag = 'input window, operand 1, single buffered']
    #allocation6 [shape = 's32[1]{0}', space=sflag, size = 0x4, scoped, tag = 'scoped memory for tpu_custom_call.1']
    #allocation7 [shape = 'u8[1536]{0}', space=vmem, size = 0x800, scoped, tag = 'input window, operand 2, single buffered']
    #allocation8 [shape = 'u8[1536]{0}', space=vmem, size = 0x800, scoped, tag = 'input window, operand 3, single buffered']
    #allocation9 [shape = 's32[1]{0}', space=sflag, size = 0x4, scoped, tag = 'scoped memory for tpu_custom_call.1']
    #allocation10 [shape = 'u8[512]{0}', space=vmem, size = 0x400, scoped, tag = 'input window, operand 4, single buffered']
    #allocation11 [shape = 'u8[8192]{0}', space=vmem, size = 0x2000, scoped, tag = 'output window, operand 0']
    %10 = vsyncpa [#allocation3], 0
    %s11 = scalar_lea.sflag [#allocation3], 1
    %12 = vsyncpa %s11, 0
    %13 = vsyncpa [#allocation6], 0
    %14 = vsyncpa [#allocation9], 0
    %15 = vsyncpa [#allocation4], 0
    %s16 = scalar_lea.sflag [#allocation4], 1
    %17 = vsyncpa %s16, 0
    loop: start=0, step=1, limit=4
    $region2: #{tpu_custom_call.1} parent=1 // loop_pre_header
      _
    $region3: #{tpu_custom_call.1} parent=1 // loop_header
      %s19 = sphi 0, %s23
      %p20 = scmp.ge.s32.totalorder %s19, 4
      %s29 = sphi 0, %s31
      %s32 = sphi 0, %s29
      %s33 = sphi 0, %s32
      %s49 = sphi 0, %s33
      %s53 = sphi 0, %s53
      %s55 = sphi 0, %s53
      %s56 = sphi 0, %s55
      %s70 = sphi 0, %s56
      %s74 = sphi 0, %s74
      %s76 = sphi 0, %s74
      %s77 = sphi 0, %s76
      %s91 = sphi 0, %s77
      %s95 = sphi 0, %s95
      %s97 = sphi 0, %s95
      %s98 = sphi 0, %s97
      %s112 = sphi 0, %s98
      %s116 = sphi 0, %s116
      %s118 = sphi 0, %s116
      %s119 = sphi 0, %s118
      %s133 = sphi 0, %s119
      %s139 = sphi 0, %s141
      %s142 = sphi 0, %s139
      %s143 = sphi 0, %s142
      %s159 = sphi 0, %s143
    $region4: #{tpu_custom_call.1} parent=1 // loop_header_branch
      %22 = sbr.rel (%p20) target = $region8
    $region5: #{tpu_custom_call.1} parent=1 // loop_body
      %s24 = ssub.s32 %s19, 1
      %s25 = ssub.s32 %s19, 2
      %s26 = sadd.s32 %s19, 1
      %s27 = ssub.s32 %s19, %s26
      %p28 = scmp.eq.s32.totalorder %s27, 0
      %s30 = sadd.s32 %s29, 1
      %s31 = scalar_select %p28, %s29, %s30
      %p34 = pneg %p28
      %p35 = scmp.eq.s32.totalorder %s19, 1
      %p36 = por %p34, %p35
      %p37 = scmp.ne.s32.totalorder %s29, %s32
      %p38 = scmp.eq.s32.totalorder %s19, 0
      %p39 = por %p37, %p38
      %p40 = scmp.ne.s32.totalorder %s29, %s32
      %p41 = scmp.eq.s32.totalorder %s24, 1
      %p42 = por %p40, %p41
      %p43 = scmp.ne.s32.totalorder %s32, %s33
      %p44 = scmp.eq.s32.totalorder %s24, 0
      %p45 = por %p43, %p44
      %p46 = scmp.ne.s32.totalorder %s32, %s33
      %p47 = scmp.eq.s32.totalorder %s25, 1
      %p48 = por %p46, %p47
      %p50 = scmp.ne.s32.totalorder %s33, %s49
      %p51 = scmp.eq.s32.totalorder %s25, 0
      %p52 = por %p50, %p51
      %s54 = sadd.s32 %s53, 1
      %p57 = scmp.eq.s32.totalorder %s19, 1
      %p58 = scmp.ne.s32.totalorder %s53, %s55
      %p59 = scmp.eq.s32.totalorder %s19, 0
      %p60 = por %p58, %p59
      %p61 = scmp.ne.s32.totalorder %s53, %s55
      %p62 = scmp.eq.s32.totalorder %s24, 1
      %p63 = por %p61, %p62
      %p64 = scmp.ne.s32.totalorder %s55, %s56
      %p65 = scmp.eq.s32.totalorder %s24, 0
      %p66 = por %p64, %p65
      %p67 = scmp.ne.s32.totalorder %s55, %s56
      %p68 = scmp.eq.s32.totalorder %s25, 1
      %p69 = por %p67, %p68
      %p71 = scmp.ne.s32.totalorder %s56, %s70
      %p72 = scmp.eq.s32.totalorder %s25, 0
      %p73 = por %p71, %p72
      %s75 = sadd.s32 %s74, 1
      %p78 = scmp.eq.s32.totalorder %s19, 1
      %p79 = scmp.ne.s32.totalorder %s74, %s76
      %p80 = scmp.eq.s32.totalorder %s19, 0
      %p81 = por %p79, %p80
      %p82 = scmp.ne.s32.totalorder %s74, %s76
      %p83 = scmp.eq.s32.totalorder %s24, 1
      %p84 = por %p82, %p83
      %p85 = scmp.ne.s32.totalorder %s76, %s77
      %p86 = scmp.eq.s32.totalorder %s24, 0
      %p87 = por %p85, %p86
      %p88 = scmp.ne.s32.totalorder %s76, %s77
      %p89 = scmp.eq.s32.totalorder %s25, 1
      %p90 = por %p88, %p89
      %p92 = scmp.ne.s32.totalorder %s77, %s91
      %p93 = scmp.eq.s32.totalorder %s25, 0
      %p94 = por %p92, %p93
      %s96 = sadd.s32 %s95, 1
      %p99 = scmp.eq.s32.totalorder %s19, 1
      %p100 = scmp.ne.s32.totalorder %s95, %s97
      %p101 = scmp.eq.s32.totalorder %s19, 0
      %p102 = por %p100, %p101
      %p103 = scmp.ne.s32.totalorder %s95, %s97
      %p104 = scmp.eq.s32.totalorder %s24, 1
      %p105 = por %p103, %p104
      %p106 = scmp.ne.s32.totalorder %s97, %s98
      %p107 = scmp.eq.s32.totalorder %s24, 0
      %p108 = por %p106, %p107
      %p109 = scmp.ne.s32.totalorder %s97, %s98
      %p110 = scmp.eq.s32.totalorder %s25, 1
      %p111 = por %p109, %p110
      %p113 = scmp.ne.s32.totalorder %s98, %s112
      %p114 = scmp.eq.s32.totalorder %s25, 0
      %p115 = por %p113, %p114
      %s117 = sadd.s32 %s116, 1
      %p120 = scmp.eq.s32.totalorder %s19, 1
      %p121 = scmp.ne.s32.totalorder %s116, %s118
      %p122 = scmp.eq.s32.totalorder %s19, 0
      %p123 = por %p121, %p122
      %p124 = scmp.ne.s32.totalorder %s116, %s118
      %p125 = scmp.eq.s32.totalorder %s24, 1
      %p126 = por %p124, %p125
      %p127 = scmp.ne.s32.totalorder %s118, %s119
      %p128 = scmp.eq.s32.totalorder %s24, 0
      %p129 = por %p127, %p128
      %p130 = scmp.ne.s32.totalorder %s118, %s119
      %p131 = scmp.eq.s32.totalorder %s25, 1
      %p132 = por %p130, %p131
      %p134 = scmp.ne.s32.totalorder %s119, %s133
      %p135 = scmp.eq.s32.totalorder %s25, 0
      %p136 = por %p134, %p135
      %s137 = ssub.s32 %s19, %s26
      %p138 = scmp.eq.s32.totalorder %s137, 0
      %s140 = sadd.s32 %s139, 1
      %s141 = scalar_select %p138, %s139, %s140
      %p144 = pneg %p138
      %p145 = scmp.eq.s32.totalorder %s19, 1
      %p146 = por %p144, %p145
      %p147 = scmp.ne.s32.totalorder %s139, %s142
      %p148 = scmp.eq.s32.totalorder %s19, 0
      %p149 = por %p147, %p148
      %p150 = scmp.ne.s32.totalorder %s139, %s142
      %p151 = scmp.eq.s32.totalorder %s24, 1
      %p152 = por %p150, %p151
      %p153 = scmp.ne.s32.totalorder %s142, %s143
      %p154 = scmp.eq.s32.totalorder %s24, 0
      %p155 = por %p153, %p154
      %p156 = scmp.ne.s32.totalorder %s142, %s143
      %p157 = scmp.eq.s32.totalorder %s25, 1
      %p158 = por %p156, %p157
      %p160 = scmp.ne.s32.totalorder %s143, %s159
      %p161 = scmp.eq.s32.totalorder %s25, 0
      %p162 = por %p160, %p161
      %p163 = scmp.le.s32.totalorder 1, %s19
      %p164 = scmp.lt.s32.totalorder %s19, 3
      %p165 = pnand %p163, %p164
      %p166 = pneg %p165
      // Predicated region
      $region9: #{tpu_custom_call.1} parent=5 // pred_check
        _
      $region10: #{tpu_custom_call.1} parent=5 // pred_check_branch
        %168 = sbr.rel (%p165) target = $region12
      $region11: #{tpu_custom_call.1} parent=5 // pred_region
        %s169 = ssub.s32 %s19, 1
        // Predicated region
        $region13: #{tpu_custom_call.1} parent=11 // pred_check
          %p170 = pneg %p66
        $region14: #{tpu_custom_call.1} parent=11 // pred_check_branch
          %172 = sbr.rel (%p170) target = $region16
        $region15: #{tpu_custom_call.1} parent=11 // pred_region
          %174 = vsyncadd [#allocation6], 0
          %s175 = sshll.u32 %s1, 4
          %s176 = int_to_ptr.hbm [resolvable:$true] %s175
          %s177 = sshll.u32 [#allocation5], 4
          %s178 = int_to_ptr.vmem [resolvable:$true] %s177
          %183 = dma.hbm_to_vmem [thread:$0]  %s176, 73728, %s178, [#allocation6], 192, 192, 12
        $region16: #{tpu_custom_call.1} parent=11 // pred_fallthru
          _
        // Predicated region
        $region17: #{tpu_custom_call.1} parent=11 // pred_check
          %p184 = pneg %p87
        $region18: #{tpu_custom_call.1} parent=11 // pred_check_branch
          %186 = sbr.rel (%p184) target = $region20
        $region19: #{tpu_custom_call.1} parent=11 // pred_region
          %188 = vsyncadd [#allocation6], 0
          %s190 = sshll.u32 %s2, 4
          %s191 = int_to_ptr.hbm [resolvable:$true] %s190
          %s192 = sshll.u32 [#allocation7], 4
          %s193 = int_to_ptr.vmem [resolvable:$true] %s192
          %195 = dma.hbm_to_vmem [thread:$0]  %s191, 48, %s193, [#allocation6]
        $region20: #{tpu_custom_call.1} parent=11 // pred_fallthru
          _
        // Predicated region
        $region21: #{tpu_custom_call.1} parent=11 // pred_check
          %p196 = pneg %p108
        $region22: #{tpu_custom_call.1} parent=11 // pred_check_branch
          %198 = sbr.rel (%p196) target = $region24
        $region23: #{tpu_custom_call.1} parent=11 // pred_region
          %200 = vsyncadd [#allocation9], 0
          %s202 = sshll.u32 %s3, 4
          %s203 = int_to_ptr.hbm [resolvable:$true] %s202
          %s204 = sshll.u32 [#allocation8], 4
          %s205 = int_to_ptr.vmem [resolvable:$true] %s204
          %207 = dma.hbm_to_vmem [thread:$0]  %s203, 48, %s205, [#allocation9]
        $region24: #{tpu_custom_call.1} parent=11 // pred_fallthru
          _
        // Predicated region
        $region25: #{tpu_custom_call.1} parent=11 // pred_check
          %p208 = pneg %p129
        $region26: #{tpu_custom_call.1} parent=11 // pred_check_branch
          %210 = sbr.rel (%p208) target = $region28
        $region27: #{tpu_custom_call.1} parent=11 // pred_region
          %212 = vsyncadd [#allocation9], 0
          %s214 = sshll.u32 %s4, 4
          %s215 = int_to_ptr.hbm [resolvable:$true] %s214
          %s216 = sshll.u32 [#allocation10], 4
          %s217 = int_to_ptr.vmem [resolvable:$true] %s216
          %219 = dma.hbm_to_vmem [thread:$0]  %s215, 16, %s217, [#allocation9]
        $region28: #{tpu_custom_call.1} parent=11 // pred_fallthru
          _
      $region12: #{tpu_custom_call.1} parent=5 // pred_fallthru
        _
      %p220 = scmp.lt.s32.totalorder %s19, 2
      // Predicated region
      $region29: #{tpu_custom_call.1} parent=5 // pred_check
        %p221 = pneg %p220
      $region30: #{tpu_custom_call.1} parent=5 // pred_check_branch
        %223 = sbr.rel (%p221) target = $region32
      $region31: #{tpu_custom_call.1} parent=5 // pred_region
        // Predicated region
        $region33: #{tpu_custom_call.1} parent=31 // pred_check
          %p224 = pneg %p39
        $region34: #{tpu_custom_call.1} parent=31 // pred_check_branch
          %226 = sbr.rel (%p224) target = $region36
        $region35: #{tpu_custom_call.1} parent=31 // pred_region
          %s227 = sand.u32 %s29, 1
          %s228 = scalar_lea.sflag [#allocation3], %s227
          %s229 = sand.u32 %s29, 1
          %s230 = smul.addr %s229, 384
          %s231 = scalar_lea.vmem [#allocation2], %s230
          %s232 = smul.u32 8, %s19
          %234 = vsyncadd %s228, 0
          %s235 = smul.addr %s232, 12
          %s236 = smul.addr %s235, 4
          %s237 = scalar_lea.hbm %s0, %s236
          %s238 = sshll.u32 %s237, 4
          %s239 = int_to_ptr.hbm [resolvable:$true] %s238
          %s240 = sshll.u32 %s231, 4
          %s241 = int_to_ptr.vmem [resolvable:$true] %s240
          %246 = dma.hbm_to_vmem [thread:$0]  %s239, 6144, %s241, %s228, 256, 256, 16
        $region36: #{tpu_custom_call.1} parent=31 // pred_fallthru
          _
      $region32: #{tpu_custom_call.1} parent=5 // pred_fallthru
        _
      %p247 = scmp.le.s32.totalorder 1, %s19
      %p248 = scmp.lt.s32.totalorder %s19, 3
      %p249 = pnand %p247, %p248
      %p250 = pneg %p249
      // Predicated region
      $region37: #{tpu_custom_call.1} parent=5 // pred_check
        _
      $region38: #{tpu_custom_call.1} parent=5 // pred_check_branch
        %252 = sbr.rel (%p249) target = $region40
      $region39: #{tpu_custom_call.1} parent=5 // pred_region
        %s253 = ssub.s32 %s19, 1
        %s254 = sand.u32 %s32, 1
        %s255 = scalar_lea.sflag [#allocation3], %s254
        %s256 = sand.u32 %s32, 1
        %s257 = smul.addr %s256, 384
        %s258 = scalar_lea.vmem [#allocation2], %s257
        // Predicated region
        $region41: #{tpu_custom_call.1} parent=39 // pred_check
          %p259 = pneg %p45
        $region42: #{tpu_custom_call.1} parent=39 // pred_check_branch
          %261 = sbr.rel (%p259) target = $region44
        $region43: #{tpu_custom_call.1} parent=39 // pred_region
          %263 = dma.done %s255, 6144
        $region44: #{tpu_custom_call.1} parent=39 // pred_fallthru
          _
        // Predicated region
        $region45: #{tpu_custom_call.1} parent=39 // pred_check
          %p264 = pneg %p66
        $region46: #{tpu_custom_call.1} parent=39 // pred_check_branch
          %266 = sbr.rel (%p264) target = $region48
        $region47: #{tpu_custom_call.1} parent=39 // pred_region
          %268 = dma.done [#allocation6], 73728
        $region48: #{tpu_custom_call.1} parent=39 // pred_fallthru
          _
        // Predicated region
        $region49: #{tpu_custom_call.1} parent=39 // pred_check
          %p269 = pneg %p87
        $region50: #{tpu_custom_call.1} parent=39 // pred_check_branch
          %271 = sbr.rel (%p269) target = $region52
        $region51: #{tpu_custom_call.1} parent=39 // pred_region
          %273 = dma.done [#allocation6], 48
        $region52: #{tpu_custom_call.1} parent=39 // pred_fallthru
          _
        // Predicated region
        $region53: #{tpu_custom_call.1} parent=39 // pred_check
          %p274 = pneg %p108
        $region54: #{tpu_custom_call.1} parent=39 // pred_check_branch
          %276 = sbr.rel (%p274) target = $region56
        $region55: #{tpu_custom_call.1} parent=39 // pred_region
          %278 = dma.done [#allocation9], 48
        $region56: #{tpu_custom_call.1} parent=39 // pred_fallthru
          _
        // Predicated region
        $region57: #{tpu_custom_call.1} parent=39 // pred_check
          %p279 = pneg %p129
        $region58: #{tpu_custom_call.1} parent=39 // pred_check_branch
          %281 = sbr.rel (%p279) target = $region60
        $region59: #{tpu_custom_call.1} parent=39 // pred_region
          %283 = dma.done [#allocation9], 16
        $region60: #{tpu_custom_call.1} parent=39 // pred_fallthru
          _
        %s284 = sand.u32 %s32, 1
        %s285 = scalar_lea.sflag [#allocation3], %s284
        %s286 = sand.u32 %s32, 1
        %s287 = smul.addr %s286, 384
        %s288 = scalar_lea.vmem [#allocation2], %s287
        %p289 = pneg %p45
        %p290 = pneg %p42
        %p291 = pneg %p66
        %p292 = pneg %p63
        %p293 = pneg %p87
        %p294 = pneg %p84
        %p295 = pneg %p108
        %p296 = pneg %p105
        %p297 = pneg %p129
        %p298 = pneg %p126
        %p299 = pneg %p155
        %p300 = pneg %p152
        %s301 = sand.u32 %s142, 1
        %s302 = scalar_lea.sflag [#allocation4], %s301
        %s303 = sand.u32 %s142, 1
        %s304 = smul.addr %s303, 8
        %s305 = scalar_lea.vmem [#allocation11], %s304
        %s306 = smul.u32 8, %s24
        %v307 = vld [vmem:[%s258] sm:$0xff]
        %v308 = vld [vmem:[%s258 + $0x8] sm:$0xff]
        %v309 = vld [vmem:[%s258 + $0x10] sm:$0xff]
        %v310 = vld [vmem:[%s258 + $0x18] sm:$0xff]
        %v311 = vld [vmem:[%s258 + $0x30] sm:$0xff]
        %v312 = vld [vmem:[%s258 + $0x38] sm:$0xff]
        %v313 = vld [vmem:[%s258 + $0x40] sm:$0xff]
        %v314 = vld [vmem:[%s258 + $0x48] sm:$0xff]
        %v315 = vld [vmem:[%s258 + $0x60] sm:$0xff]
        %v316 = vld [vmem:[%s258 + $0x68] sm:$0xff]
        %v317 = vld [vmem:[%s258 + $0x70] sm:$0xff]
        %v318 = vld [vmem:[%s258 + $0x78] sm:$0xff]
        %v319 = vld [vmem:[%s258 + $0x90] sm:$0xff]
        %v320 = vld [vmem:[%s258 + $0x98] sm:$0xff]
        %v321 = vld [vmem:[%s258 + $0xa0] sm:$0xff]
        %v322 = vld [vmem:[%s258 + $0xa8] sm:$0xff]
        %v323 = vld [vmem:[%s258 + $0xc0] sm:$0xff]
        %v324 = vld [vmem:[%s258 + $0xc8] sm:$0xff]
        %v325 = vld [vmem:[%s258 + $0xd0] sm:$0xff]
        %v326 = vld [vmem:[%s258 + $0xd8] sm:$0xff]
        %v327 = vld [vmem:[%s258 + $0xf0] sm:$0xff]
        %v328 = vld [vmem:[%s258 + $0xf8] sm:$0xff]
        %v329 = vld [vmem:[%s258 + $0x100] sm:$0xff]
        %v330 = vld [vmem:[%s258 + $0x108] sm:$0xff]
        %v331 = vld [vmem:[%s258 + $0x120] sm:$0xff]
        %v332 = vld [vmem:[%s258 + $0x128] sm:$0xff]
        %v333 = vld [vmem:[%s258 + $0x130] sm:$0xff]
        %v334 = vld [vmem:[%s258 + $0x138] sm:$0xff]
        %v335 = vld [vmem:[%s258 + $0x150] sm:$0xff]
        %v336 = vld [vmem:[%s258 + $0x158] sm:$0xff]
        %v337 = vld [vmem:[%s258 + $0x160] sm:$0xff]
        %v338 = vld [vmem:[%s258 + $0x168] sm:$0xff]
        %v339 = vld [vmem:[#allocation5] sm:$0xff]
        %v340 = vld [vmem:[#allocation5 + $0x8] sm:$0xf]
        %v341 = vld [vmem:[#allocation5 + $0xc] sm:$0xff]
        %v342 = vld [vmem:[#allocation5 + $0x14] sm:$0xf]
        %v343 = vld [vmem:[#allocation5 + $0x18] sm:$0xff]
        %v344 = vld [vmem:[#allocation5 + $0x20] sm:$0xf]
        %v345 = vld [vmem:[#allocation5 + $0x24] sm:$0xff]
        %v346 = vld [vmem:[#allocation5 + $0x2c] sm:$0xf]
        %v347 = vld [vmem:[#allocation5 + $0x30] sm:$0xff]
        %v348 = vld [vmem:[#allocation5 + $0x38] sm:$0xf]
        %v349 = vld [vmem:[#allocation5 + $0x3c] sm:$0xff]
        %v350 = vld [vmem:[#allocation5 + $0x44] sm:$0xf]
        %v351 = vld [vmem:[#allocation5 + $0x48] sm:$0xff]
        %v352 = vld [vmem:[#allocation5 + $0x50] sm:$0xf]
        %v353 = vld [vmem:[#allocation5 + $0x54] sm:$0xff]
        %v354 = vld [vmem:[#allocation5 + $0x5c] sm:$0xf]
        %v355 = vld [vmem:[#allocation5 + $0x60] sm:$0xff]
        %v356 = vld [vmem:[#allocation5 + $0x68] sm:$0xf]
        %v357 = vld [vmem:[#allocation5 + $0x6c] sm:$0xff]
        %v358 = vld [vmem:[#allocation5 + $0x74] sm:$0xf]
        %v359 = vld [vmem:[#allocation5 + $0x78] sm:$0xff]
        %v360 = vld [vmem:[#allocation5 + $0x80] sm:$0xf]
        %v361 = vld [vmem:[#allocation5 + $0x84] sm:$0xff]
        %v362 = vld [vmem:[#allocation5 + $0x8c] sm:$0xf]
        %v363 = vld [vmem:[#allocation5 + $0x90] sm:$0xff]
        %v364 = vld [vmem:[#allocation5 + $0x98] sm:$0xf]
        %v365 = vld [vmem:[#allocation5 + $0x9c] sm:$0xff]
        %v366 = vld [vmem:[#allocation5 + $0xa4] sm:$0xf]
        %v367 = vld [vmem:[#allocation5 + $0xa8] sm:$0xff]
        %v368 = vld [vmem:[#allocation5 + $0xb0] sm:$0xf]
        %v369 = vld [vmem:[#allocation5 + $0xb4] sm:$0xff]
        %v370 = vld [vmem:[#allocation5 + $0xbc] sm:$0xf]
        %v371 = vld [vmem:[#allocation5 + $0xc0] sm:$0xff]
        %v372 = vld [vmem:[#allocation5 + $0xc8] sm:$0xf]
        %v373 = vld [vmem:[#allocation5 + $0xcc] sm:$0xff]
        %v374 = vld [vmem:[#allocation5 + $0xd4] sm:$0xf]
        %v375 = vld [vmem:[#allocation5 + $0xd8] sm:$0xff]
        %v376 = vld [vmem:[#allocation5 + $0xe0] sm:$0xf]
        %v377 = vld [vmem:[#allocation5 + $0xe4] sm:$0xff]
        %v378 = vld [vmem:[#allocation5 + $0xec] sm:$0xf]
        %v379 = vld [vmem:[#allocation5 + $0xf0] sm:$0xff]
        %v380 = vld [vmem:[#allocation5 + $0xf8] sm:$0xf]
        %v381 = vld [vmem:[#allocation5 + $0xfc] sm:$0xff]
        %v382 = vld [vmem:[#allocation5 + $0x104] sm:$0xf]
        %v383 = vld [vmem:[#allocation5 + $0x108] sm:$0xff]
        %v384 = vld [vmem:[#allocation5 + $0x110] sm:$0xf]
        %v385 = vld [vmem:[#allocation5 + $0x114] sm:$0xff]
        %v386 = vld [vmem:[#allocation5 + $0x11c] sm:$0xf]
        %v387 = vld [vmem:[#allocation5 + $0x120] sm:$0xff]
        %v388 = vld [vmem:[#allocation5 + $0x128] sm:$0xf]
        %v389 = vld [vmem:[#allocation5 + $0x12c] sm:$0xff]
        %v390 = vld [vmem:[#allocation5 + $0x134] sm:$0xf]
        %v391 = vld [vmem:[#allocation5 + $0x138] sm:$0xff]
        %v392 = vld [vmem:[#allocation5 + $0x140] sm:$0xf]
        %v393 = vld [vmem:[#allocation5 + $0x144] sm:$0xff]
        %v394 = vld [vmem:[#allocation5 + $0x14c] sm:$0xf]
        %v395 = vld [vmem:[#allocation5 + $0x150] sm:$0xff]
        %v396 = vld [vmem:[#allocation5 + $0x158] sm:$0xf]
        %v397 = vld [vmem:[#allocation5 + $0x15c] sm:$0xff]
        %v398 = vld [vmem:[#allocation5 + $0x164] sm:$0xf]
        %v399 = vld [vmem:[#allocation5 + $0x168] sm:$0xff]
        %v400 = vld [vmem:[#allocation5 + $0x170] sm:$0xf]
        %v401 = vld [vmem:[#allocation5 + $0x174] sm:$0xff]
        %v402 = vld [vmem:[#allocation5 + $0x17c] sm:$0xf]
        %v403 = vld [vmem:[#allocation5 + $0x180] sm:$0xff]
        %v404 = vld [vmem:[#allocation5 + $0x188] sm:$0xf]
        %v405 = vld [vmem:[#allocation5 + $0x18c] sm:$0xff]
        %v406 = vld [vmem:[#allocation5 + $0x194] sm:$0xf]
        %v407 = vld [vmem:[#allocation5 + $0x198] sm:$0xff]
        %v408 = vld [vmem:[#allocation5 + $0x1a0] sm:$0xf]
        %v409 = vld [vmem:[#allocation5 + $0x1a4] sm:$0xff]
        %v410 = vld [vmem:[#allocation5 + $0x1ac] sm:$0xf]
        %v411 = vld [vmem:[#allocation5 + $0x1b0] sm:$0xff]
        %v412 = vld [vmem:[#allocation5 + $0x1b8] sm:$0xf]
        %v413 = vld [vmem:[#allocation5 + $0x1bc] sm:$0xff]
        %v414 = vld [vmem:[#allocation5 + $0x1c4] sm:$0xf]
        %v415 = vld [vmem:[#allocation5 + $0x1c8] sm:$0xff]
        %v416 = vld [vmem:[#allocation5 + $0x1d0] sm:$0xf]
        %v417 = vld [vmem:[#allocation5 + $0x1d4] sm:$0xff]
        %v418 = vld [vmem:[#allocation5 + $0x1dc] sm:$0xf]
        %v419 = vld [vmem:[#allocation5 + $0x1e0] sm:$0xff]
        %v420 = vld [vmem:[#allocation5 + $0x1e8] sm:$0xf]
        %v421 = vld [vmem:[#allocation5 + $0x1ec] sm:$0xff]
        %v422 = vld [vmem:[#allocation5 + $0x1f4] sm:$0xf]
        %v423 = vld [vmem:[#allocation5 + $0x1f8] sm:$0xff]
        %v424 = vld [vmem:[#allocation5 + $0x200] sm:$0xf]
        %v425 = vld [vmem:[#allocation5 + $0x204] sm:$0xff]
        %v426 = vld [vmem:[#allocation5 + $0x20c] sm:$0xf]
        %v427 = vld [vmem:[#allocation5 + $0x210] sm:$0xff]
        %v428 = vld [vmem:[#allocation5 + $0x218] sm:$0xf]
        %v429 = vld [vmem:[#allocation5 + $0x21c] sm:$0xff]
        %v430 = vld [vmem:[#allocation5 + $0x224] sm:$0xf]
        %v431 = vld [vmem:[#allocation5 + $0x228] sm:$0xff]
        %v432 = vld [vmem:[#allocation5 + $0x230] sm:$0xf]
        %v433 = vld [vmem:[#allocation5 + $0x234] sm:$0xff]
        %v434 = vld [vmem:[#allocation5 + $0x23c] sm:$0xf]
        %v435 = vld [vmem:[#allocation5 + $0x240] sm:$0xff]
        %v436 = vld [vmem:[#allocation5 + $0x248] sm:$0xf]
        %v437 = vld [vmem:[#allocation5 + $0x24c] sm:$0xff]
        %v438 = vld [vmem:[#allocation5 + $0x254] sm:$0xf]
        %v439 = vld [vmem:[#allocation5 + $0x258] sm:$0xff]
        %v440 = vld [vmem:[#allocation5 + $0x260] sm:$0xf]
        %v441 = vld [vmem:[#allocation5 + $0x264] sm:$0xff]
        %v442 = vld [vmem:[#allocation5 + $0x26c] sm:$0xf]
        %v443 = vld [vmem:[#allocation5 + $0x270] sm:$0xff]
        %v444 = vld [vmem:[#allocation5 + $0x278] sm:$0xf]
        %v445 = vld [vmem:[#allocation5 + $0x27c] sm:$0xff]
        %v446 = vld [vmem:[#allocation5 + $0x284] sm:$0xf]
        %v447 = vld [vmem:[#allocation5 + $0x288] sm:$0xff]
        %v448 = vld [vmem:[#allocation5 + $0x290] sm:$0xf]
        %v449 = vld [vmem:[#allocation5 + $0x294] sm:$0xff]
        %v450 = vld [vmem:[#allocation5 + $0x29c] sm:$0xf]
        %v451 = vld [vmem:[#allocation5 + $0x2a0] sm:$0xff]
        %v452 = vld [vmem:[#allocation5 + $0x2a8] sm:$0xf]
        %v453 = vld [vmem:[#allocation5 + $0x2ac] sm:$0xff]
        %v454 = vld [vmem:[#allocation5 + $0x2b4] sm:$0xf]
        %v455 = vld [vmem:[#allocation5 + $0x2b8] sm:$0xff]
        %v456 = vld [vmem:[#allocation5 + $0x2c0] sm:$0xf]
        %v457 = vld [vmem:[#allocation5 + $0x2c4] sm:$0xff]
        %v458 = vld [vmem:[#allocation5 + $0x2cc] sm:$0xf]
        %v459 = vld [vmem:[#allocation5 + $0x2d0] sm:$0xff]
        %v460 = vld [vmem:[#allocation5 + $0x2d8] sm:$0xf]
        %v461 = vld [vmem:[#allocation5 + $0x2dc] sm:$0xff]
        %v462 = vld [vmem:[#allocation5 + $0x2e4] sm:$0xf]
        %v463 = vld [vmem:[#allocation5 + $0x2e8] sm:$0xff]
        %v464 = vld [vmem:[#allocation5 + $0x2f0] sm:$0xf]
        %v465 = vld [vmem:[#allocation5 + $0x2f4] sm:$0xff]
        %v466 = vld [vmem:[#allocation5 + $0x2fc] sm:$0xf]
        %v467 = vld [vmem:[%s258] sm:$0xff]
        %v468 = vld [vmem:[%s258 + $0x8] sm:$0xff]
        %v469 = vld [vmem:[%s258 + $0x10] sm:$0xff]
        %v470 = vld [vmem:[%s258 + $0x18] sm:$0xff]
        %v471 = vld [vmem:[%s258 + $0x20] sm:$0x11]
        %v472 = vld [vmem:[%s258 + $0x28] sm:$0x11]
        %v473 = vld [vmem:[%s258 + $0x30] sm:$0xff]
        %v474 = vld [vmem:[%s258 + $0x38] sm:$0xff]
        %v475 = vld [vmem:[%s258 + $0x40] sm:$0xff]
        %v476 = vld [vmem:[%s258 + $0x48] sm:$0xff]
        %v477 = vld [vmem:[%s258 + $0x50] sm:$0x11]
        %v478 = vld [vmem:[%s258 + $0x58] sm:$0x11]
        %v479 = vld [vmem:[%s258 + $0x60] sm:$0xff]
        %v480 = vld [vmem:[%s258 + $0x68] sm:$0xff]
        %v481 = vld [vmem:[%s258 + $0x70] sm:$0xff]
        %v482 = vld [vmem:[%s258 + $0x78] sm:$0xff]
        %v483 = vld [vmem:[%s258 + $0x80] sm:$0x11]
        %v484 = vld [vmem:[%s258 + $0x88] sm:$0x11]
        %v485 = vld [vmem:[%s258 + $0x90] sm:$0xff]
        %v486 = vld [vmem:[%s258 + $0x98] sm:$0xff]
        %v487 = vld [vmem:[%s258 + $0xa0] sm:$0xff]
        %v488 = vld [vmem:[%s258 + $0xa8] sm:$0xff]
        %v489 = vld [vmem:[%s258 + $0xb0] sm:$0x11]
        %v490 = vld [vmem:[%s258 + $0xb8] sm:$0x11]
        %v491 = vld [vmem:[%s258 + $0xc0] sm:$0xff]
        %v492 = vld [vmem:[%s258 + $0xc8] sm:$0xff]
        %v493 = vld [vmem:[%s258 + $0xd0] sm:$0xff]
        %v494 = vld [vmem:[%s258 + $0xd8] sm:$0xff]
        %v495 = vld [vmem:[%s258 + $0xe0] sm:$0x11]
        %v496 = vld [vmem:[%s258 + $0xe8] sm:$0x11]
        %v497 = vld [vmem:[%s258 + $0xf0] sm:$0xff]
        %v498 = vld [vmem:[%s258 + $0xf8] sm:$0xff]
        %v499 = vld [vmem:[%s258 + $0x100] sm:$0xff]
        %v500 = vld [vmem:[%s258 + $0x108] sm:$0xff]
        %v501 = vld [vmem:[%s258 + $0x110] sm:$0x11]
        %v502 = vld [vmem:[%s258 + $0x118] sm:$0x11]
        %v503 = vld [vmem:[%s258 + $0x120] sm:$0xff]
        %v504 = vld [vmem:[%s258 + $0x128] sm:$0xff]
        %v505 = vld [vmem:[%s258 + $0x130] sm:$0xff]
        %v506 = vld [vmem:[%s258 + $0x138] sm:$0xff]
        %v507 = vld [vmem:[%s258 + $0x140] sm:$0x11]
        %v508 = vld [vmem:[%s258 + $0x148] sm:$0x11]
        %v509 = vld [vmem:[%s258 + $0x150] sm:$0xff]
        %v510 = vld [vmem:[%s258 + $0x158] sm:$0xff]
        %v511 = vld [vmem:[%s258 + $0x160] sm:$0xff]
        %v512 = vld [vmem:[%s258 + $0x168] sm:$0xff]
        %v513 = vld [vmem:[%s258 + $0x170] sm:$0x11]
        %v514 = vld [vmem:[%s258 + $0x178] sm:$0x11]
        %vm515 = vsmask.f32 3328
        %vm516 = vsmask.f32 7440
        %vm517 = vmor %vm515, %vm516
        %v519 = vshrl.u32 %v467, 16
        %v521 = vrot.slane %v519, 4
        %v522 = vshll.u32 %v467, 16
        %v524 = vrot.slane %v522, 5
        %v525 = vor.u32 %v521, %v524
        %v526 = vrot.slane %v525, 4
        %v528 = vshll.u32 %v469, 16
        %v530 = vrot.slane %v528, 5
        %v531 = vsel %vm517, %v526, %v530
        %v533 = vshrl.u32 %v468, 16
        %v535 = vrot.slane %v533, 4
        %v536 = vshll.u32 %v468, 16
        %v538 = vrot.slane %v536, 5
        %v539 = vor.u32 %v535, %v538
        %v540 = vrot.slane %v539, 4
        %v542 = vshll.u32 %v470, 16
        %v544 = vrot.slane %v542, 5
        %v545 = vsel %vm517, %v540, %v544
        %v546 = vshrl.u32 %v469, 16
        %v548 = vrot.slane %v546, 4
        %v549 = vor.u32 %v548, %v530
        %v550 = vrot.slane %v549, 4
        %v552 = vshll.u32 %v471, 16
        %v554 = vrot.slane %v552, 5
        %v555 = vsel %vm517, %v550, %v554
        %v556 = vshrl.u32 %v470, 16
        %v558 = vrot.slane %v556, 4
        %v559 = vor.u32 %v558, %v544
        %v560 = vrot.slane %v559, 4
        %v562 = vshll.u32 %v472, 16
        %v564 = vrot.slane %v562, 5
        %v565 = vsel %vm517, %v560, %v564
        %v567 = vshrl.u32 %v473, 16
        %v569 = vrot.slane %v567, 4
        %v570 = vshll.u32 %v473, 16
        %v572 = vrot.slane %v570, 5
        %v573 = vor.u32 %v569, %v572
        %v574 = vrot.slane %v573, 4
        %v576 = vshll.u32 %v475, 16
        %v578 = vrot.slane %v576, 5
        %v579 = vsel %vm517, %v574, %v578
        %v581 = vshrl.u32 %v474, 16
        %v583 = vrot.slane %v581, 4
        %v584 = vshll.u32 %v474, 16
        %v586 = vrot.slane %v584, 5
        %v587 = vor.u32 %v583, %v586
        %v588 = vrot.slane %v587, 4
        %v590 = vshll.u32 %v476, 16
        %v592 = vrot.slane %v590, 5
        %v593 = vsel %vm517, %v588, %v592
        %v594 = vshrl.u32 %v475, 16
        %v596 = vrot.slane %v594, 4
        %v597 = vor.u32 %v596, %v578
        %v598 = vrot.slane %v597, 4
        %v600 = vshll.u32 %v477, 16
        %v602 = vrot.slane %v600, 5
        %v603 = vsel %vm517, %v598, %v602
        %v604 = vshrl.u32 %v476, 16
        %v606 = vrot.slane %v604, 4
        %v607 = vor.u32 %v606, %v592
        %v608 = vrot.slane %v607, 4
        %v610 = vshll.u32 %v478, 16
        %v612 = vrot.slane %v610, 5
        %v613 = vsel %vm517, %v608, %v612
        %v615 = vshrl.u32 %v479, 16
        %v617 = vrot.slane %v615, 4
        %v618 = vshll.u32 %v479, 16
        %v620 = vrot.slane %v618, 5
        %v621 = vor.u32 %v617, %v620
        %v622 = vrot.slane %v621, 4
        %v624 = vshll.u32 %v481, 16
        %v626 = vrot.slane %v624, 5
        %v627 = vsel %vm517, %v622, %v626
        %v629 = vshrl.u32 %v480, 16
        %v631 = vrot.slane %v629, 4
        %v632 = vshll.u32 %v480, 16
        %v634 = vrot.slane %v632, 5
        %v635 = vor.u32 %v631, %v634
        %v636 = vrot.slane %v635, 4
        %v638 = vshll.u32 %v482, 16
        %v640 = vrot.slane %v638, 5
        %v641 = vsel %vm517, %v636, %v640
        %v642 = vshrl.u32 %v481, 16
        %v644 = vrot.slane %v642, 4
        %v645 = vor.u32 %v644, %v626
        %v646 = vrot.slane %v645, 4
        %v648 = vshll.u32 %v483, 16
        %v650 = vrot.slane %v648, 5
        %v651 = vsel %vm517, %v646, %v650
        %v652 = vshrl.u32 %v482, 16
        %v654 = vrot.slane %v652, 4
        %v655 = vor.u32 %v654, %v640
        %v656 = vrot.slane %v655, 4
        %v658 = vshll.u32 %v484, 16
        %v660 = vrot.slane %v658, 5
        %v661 = vsel %vm517, %v656, %v660
        %v663 = vshrl.u32 %v485, 16
        %v665 = vrot.slane %v663, 4
        %v666 = vshll.u32 %v485, 16
        %v668 = vrot.slane %v666, 5
        %v669 = vor.u32 %v665, %v668
        %v670 = vrot.slane %v669, 4
        %v672 = vshll.u32 %v487, 16
        %v674 = vrot.slane %v672, 5
        %v675 = vsel %vm517, %v670, %v674
        %v677 = vshrl.u32 %v486, 16
        %v679 = vrot.slane %v677, 4
        %v680 = vshll.u32 %v486, 16
        %v682 = vrot.slane %v680, 5
        %v683 = vor.u32 %v679, %v682
        %v684 = vrot.slane %v683, 4
        %v686 = vshll.u32 %v488, 16
        %v688 = vrot.slane %v686, 5
        %v689 = vsel %vm517, %v684, %v688
        %v690 = vshrl.u32 %v487, 16
        %v692 = vrot.slane %v690, 4
        %v693 = vor.u32 %v692, %v674
        %v694 = vrot.slane %v693, 4
        %v696 = vshll.u32 %v489, 16
        %v698 = vrot.slane %v696, 5
        %v699 = vsel %vm517, %v694, %v698
        %v700 = vshrl.u32 %v488, 16
        %v702 = vrot.slane %v700, 4
        %v703 = vor.u32 %v702, %v688
        %v704 = vrot.slane %v703, 4
        %v706 = vshll.u32 %v490, 16
        %v708 = vrot.slane %v706, 5
        %v709 = vsel %vm517, %v704, %v708
        %v711 = vshrl.u32 %v491, 16
        %v713 = vrot.slane %v711, 4
        %v714 = vshll.u32 %v491, 16
        %v716 = vrot.slane %v714, 5
        %v717 = vor.u32 %v713, %v716
        %v718 = vrot.slane %v717, 4
        %v720 = vshll.u32 %v493, 16
        %v722 = vrot.slane %v720, 5
        %v723 = vsel %vm517, %v718, %v722
        %v725 = vshrl.u32 %v492, 16
        %v727 = vrot.slane %v725, 4
        %v728 = vshll.u32 %v492, 16
        %v730 = vrot.slane %v728, 5
        %v731 = vor.u32 %v727, %v730
        %v732 = vrot.slane %v731, 4
        %v734 = vshll.u32 %v494, 16
        %v736 = vrot.slane %v734, 5
        %v737 = vsel %vm517, %v732, %v736
        %v738 = vshrl.u32 %v493, 16
        %v740 = vrot.slane %v738, 4
        %v741 = vor.u32 %v740, %v722
        %v742 = vrot.slane %v741, 4
        %v744 = vshll.u32 %v495, 16
        %v746 = vrot.slane %v744, 5
        %v747 = vsel %vm517, %v742, %v746
        %v748 = vshrl.u32 %v494, 16
        %v750 = vrot.slane %v748, 4
        %v751 = vor.u32 %v750, %v736
        %v752 = vrot.slane %v751, 4
        %v754 = vshll.u32 %v496, 16
        %v756 = vrot.slane %v754, 5
        %v757 = vsel %vm517, %v752, %v756
        %v759 = vshrl.u32 %v497, 16
        %v761 = vrot.slane %v759, 4
        %v762 = vshll.u32 %v497, 16
        %v764 = vrot.slane %v762, 5
        %v765 = vor.u32 %v761, %v764
        %v766 = vrot.slane %v765, 4
        %v768 = vshll.u32 %v499, 16
        %v770 = vrot.slane %v768, 5
        %v771 = vsel %vm517, %v766, %v770
        %v773 = vshrl.u32 %v498, 16
        %v775 = vrot.slane %v773, 4
        %v776 = vshll.u32 %v498, 16
        %v778 = vrot.slane %v776, 5
        %v779 = vor.u32 %v775, %v778
        %v780 = vrot.slane %v779, 4
        %v782 = vshll.u32 %v500, 16
        %v784 = vrot.slane %v782, 5
        %v785 = vsel %vm517, %v780, %v784
        %v786 = vshrl.u32 %v499, 16
        %v788 = vrot.slane %v786, 4
        %v789 = vor.u32 %v788, %v770
        %v790 = vrot.slane %v789, 4
        %v792 = vshll.u32 %v501, 16
        %v794 = vrot.slane %v792, 5
        %v795 = vsel %vm517, %v790, %v794
        %v796 = vshrl.u32 %v500, 16
        %v798 = vrot.slane %v796, 4
        %v799 = vor.u32 %v798, %v784
        %v800 = vrot.slane %v799, 4
        %v802 = vshll.u32 %v502, 16
        %v804 = vrot.slane %v802, 5
        %v805 = vsel %vm517, %v800, %v804
        %v807 = vshrl.u32 %v503, 16
        %v809 = vrot.slane %v807, 4
        %v810 = vshll.u32 %v503, 16
        %v812 = vrot.slane %v810, 5
        %v813 = vor.u32 %v809, %v812
        %v814 = vrot.slane %v813, 4
        %v816 = vshll.u32 %v505, 16
        %v818 = vrot.slane %v816, 5
        %v819 = vsel %vm517, %v814, %v818
        %v821 = vshrl.u32 %v504, 16
        %v823 = vrot.slane %v821, 4
        %v824 = vshll.u32 %v504, 16
        %v826 = vrot.slane %v824, 5
        %v827 = vor.u32 %v823, %v826
        %v828 = vrot.slane %v827, 4
        %v830 = vshll.u32 %v506, 16
        %v832 = vrot.slane %v830, 5
        %v833 = vsel %vm517, %v828, %v832
        %v834 = vshrl.u32 %v505, 16
        %v836 = vrot.slane %v834, 4
        %v837 = vor.u32 %v836, %v818
        %v838 = vrot.slane %v837, 4
        %v840 = vshll.u32 %v507, 16
        %v842 = vrot.slane %v840, 5
        %v843 = vsel %vm517, %v838, %v842
        %v844 = vshrl.u32 %v506, 16
        %v846 = vrot.slane %v844, 4
        %v847 = vor.u32 %v846, %v832
        %v848 = vrot.slane %v847, 4
        %v850 = vshll.u32 %v508, 16
        %v852 = vrot.slane %v850, 5
        %v853 = vsel %vm517, %v848, %v852
        %v855 = vshrl.u32 %v509, 16
        %v857 = vrot.slane %v855, 4
        %v858 = vshll.u32 %v509, 16
        %v860 = vrot.slane %v858, 5
        %v861 = vor.u32 %v857, %v860
        %v862 = vrot.slane %v861, 4
        %v864 = vshll.u32 %v511, 16
        %v866 = vrot.slane %v864, 5
        %v867 = vsel %vm517, %v862, %v866
        %v869 = vshrl.u32 %v510, 16
        %v871 = vrot.slane %v869, 4
        %v872 = vshll.u32 %v510, 16
        %v874 = vrot.slane %v872, 5
        %v875 = vor.u32 %v871, %v874
        %v876 = vrot.slane %v875, 4
        %v878 = vshll.u32 %v512, 16
        %v880 = vrot.slane %v878, 5
        %v881 = vsel %vm517, %v876, %v880
        %v882 = vshrl.u32 %v511, 16
        %v884 = vrot.slane %v882, 4
        %v885 = vor.u32 %v884, %v866
        %v886 = vrot.slane %v885, 4
        %v888 = vshll.u32 %v513, 16
        %v890 = vrot.slane %v888, 5
        %v891 = vsel %vm517, %v886, %v890
        %v892 = vshrl.u32 %v512, 16
        %v894 = vrot.slane %v892, 4
        %v895 = vor.u32 %v894, %v880
        %v896 = vrot.slane %v895, 4
        %v898 = vshll.u32 %v514, 16
        %v900 = vrot.slane %v898, 5
        %v901 = vsel %vm517, %v896, %v900
        %s902 = scalar_lea.vmem [#allocation5], 768
        %v903 = vld [vmem:[%s902] sm:$0xff]
        %v904 = vld [vmem:[%s902 + $0x8] sm:$0xf]
        %v905 = vld [vmem:[%s902 + $0xc] sm:$0xff]
        %v906 = vld [vmem:[%s902 + $0x14] sm:$0xf]
        %v907 = vld [vmem:[%s902 + $0x18] sm:$0xff]
        %v908 = vld [vmem:[%s902 + $0x20] sm:$0xf]
        %v909 = vld [vmem:[%s902 + $0x24] sm:$0xff]
        %v910 = vld [vmem:[%s902 + $0x2c] sm:$0xf]
        %v911 = vld [vmem:[%s902 + $0x30] sm:$0xff]
        %v912 = vld [vmem:[%s902 + $0x38] sm:$0xf]
        %v913 = vld [vmem:[%s902 + $0x3c] sm:$0xff]
        %v914 = vld [vmem:[%s902 + $0x44] sm:$0xf]
        %v915 = vld [vmem:[%s902 + $0x48] sm:$0xff]
        %v916 = vld [vmem:[%s902 + $0x50] sm:$0xf]
        %v917 = vld [vmem:[%s902 + $0x54] sm:$0xff]
        %v918 = vld [vmem:[%s902 + $0x5c] sm:$0xf]
        %v919 = vld [vmem:[%s902 + $0x60] sm:$0xff]
        %v920 = vld [vmem:[%s902 + $0x68] sm:$0xf]
        %v921 = vld [vmem:[%s902 + $0x6c] sm:$0xff]
        %v922 = vld [vmem:[%s902 + $0x74] sm:$0xf]
        %v923 = vld [vmem:[%s902 + $0x78] sm:$0xff]
        %v924 = vld [vmem:[%s902 + $0x80] sm:$0xf]
        %v925 = vld [vmem:[%s902 + $0x84] sm:$0xff]
        %v926 = vld [vmem:[%s902 + $0x8c] sm:$0xf]
        %v927 = vld [vmem:[%s902 + $0x90] sm:$0xff]
        %v928 = vld [vmem:[%s902 + $0x98] sm:$0xf]
        %v929 = vld [vmem:[%s902 + $0x9c] sm:$0xff]
        %v930 = vld [vmem:[%s902 + $0xa4] sm:$0xf]
        %v931 = vld [vmem:[%s902 + $0xa8] sm:$0xff]
        %v932 = vld [vmem:[%s902 + $0xb0] sm:$0xf]
        %v933 = vld [vmem:[%s902 + $0xb4] sm:$0xff]
        %v934 = vld [vmem:[%s902 + $0xbc] sm:$0xf]
        %v935 = vld [vmem:[%s902 + $0xc0] sm:$0xff]
        %v936 = vld [vmem:[%s902 + $0xc8] sm:$0xf]
        %v937 = vld [vmem:[%s902 + $0xcc] sm:$0xff]
        %v938 = vld [vmem:[%s902 + $0xd4] sm:$0xf]
        %v939 = vld [vmem:[%s902 + $0xd8] sm:$0xff]
        %v940 = vld [vmem:[%s902 + $0xe0] sm:$0xf]
        %v941 = vld [vmem:[%s902 + $0xe4] sm:$0xff]
        %v942 = vld [vmem:[%s902 + $0xec] sm:$0xf]
        %v943 = vld [vmem:[%s902 + $0xf0] sm:$0xff]
        %v944 = vld [vmem:[%s902 + $0xf8] sm:$0xf]
        %v945 = vld [vmem:[%s902 + $0xfc] sm:$0xff]
        %v946 = vld [vmem:[%s902 + $0x104] sm:$0xf]
        %v947 = vld [vmem:[%s902 + $0x108] sm:$0xff]
        %v948 = vld [vmem:[%s902 + $0x110] sm:$0xf]
        %v949 = vld [vmem:[%s902 + $0x114] sm:$0xff]
        %v950 = vld [vmem:[%s902 + $0x11c] sm:$0xf]
        %v951 = vld [vmem:[%s902 + $0x120] sm:$0xff]
        %v952 = vld [vmem:[%s902 + $0x128] sm:$0xf]
        %v953 = vld [vmem:[%s902 + $0x12c] sm:$0xff]
        %v954 = vld [vmem:[%s902 + $0x134] sm:$0xf]
        %v955 = vld [vmem:[%s902 + $0x138] sm:$0xff]
        %v956 = vld [vmem:[%s902 + $0x140] sm:$0xf]
        %v957 = vld [vmem:[%s902 + $0x144] sm:$0xff]
        %v958 = vld [vmem:[%s902 + $0x14c] sm:$0xf]
        %v959 = vld [vmem:[%s902 + $0x150] sm:$0xff]
        %v960 = vld [vmem:[%s902 + $0x158] sm:$0xf]
        %v961 = vld [vmem:[%s902 + $0x15c] sm:$0xff]
        %v962 = vld [vmem:[%s902 + $0x164] sm:$0xf]
        %v963 = vld [vmem:[%s902 + $0x168] sm:$0xff]
        %v964 = vld [vmem:[%s902 + $0x170] sm:$0xf]
        %v965 = vld [vmem:[%s902 + $0x174] sm:$0xff]
        %v966 = vld [vmem:[%s902 + $0x17c] sm:$0xf]
        %v967 = vld [vmem:[%s902 + $0x180] sm:$0xff]
        %v968 = vld [vmem:[%s902 + $0x188] sm:$0xf]
        %v969 = vld [vmem:[%s902 + $0x18c] sm:$0xff]
        %v970 = vld [vmem:[%s902 + $0x194] sm:$0xf]
        %v971 = vld [vmem:[%s902 + $0x198] sm:$0xff]
        %v972 = vld [vmem:[%s902 + $0x1a0] sm:$0xf]
        %v973 = vld [vmem:[%s902 + $0x1a4] sm:$0xff]
        %v974 = vld [vmem:[%s902 + $0x1ac] sm:$0xf]
        %v975 = vld [vmem:[%s902 + $0x1b0] sm:$0xff]
        %v976 = vld [vmem:[%s902 + $0x1b8] sm:$0xf]
        %v977 = vld [vmem:[%s902 + $0x1bc] sm:$0xff]
        %v978 = vld [vmem:[%s902 + $0x1c4] sm:$0xf]
        %v979 = vld [vmem:[%s902 + $0x1c8] sm:$0xff]
        %v980 = vld [vmem:[%s902 + $0x1d0] sm:$0xf]
        %v981 = vld [vmem:[%s902 + $0x1d4] sm:$0xff]
        %v982 = vld [vmem:[%s902 + $0x1dc] sm:$0xf]
        %v983 = vld [vmem:[%s902 + $0x1e0] sm:$0xff]
        %v984 = vld [vmem:[%s902 + $0x1e8] sm:$0xf]
        %v985 = vld [vmem:[%s902 + $0x1ec] sm:$0xff]
        %v986 = vld [vmem:[%s902 + $0x1f4] sm:$0xf]
        %v987 = vld [vmem:[%s902 + $0x1f8] sm:$0xff]
        %v988 = vld [vmem:[%s902 + $0x200] sm:$0xf]
        %v989 = vld [vmem:[%s902 + $0x204] sm:$0xff]
        %v990 = vld [vmem:[%s902 + $0x20c] sm:$0xf]
        %v991 = vld [vmem:[%s902 + $0x210] sm:$0xff]
        %v992 = vld [vmem:[%s902 + $0x218] sm:$0xf]
        %v993 = vld [vmem:[%s902 + $0x21c] sm:$0xff]
        %v994 = vld [vmem:[%s902 + $0x224] sm:$0xf]
        %v995 = vld [vmem:[%s902 + $0x228] sm:$0xff]
        %v996 = vld [vmem:[%s902 + $0x230] sm:$0xf]
        %v997 = vld [vmem:[%s902 + $0x234] sm:$0xff]
        %v998 = vld [vmem:[%s902 + $0x23c] sm:$0xf]
        %v999 = vld [vmem:[%s902 + $0x240] sm:$0xff]
        %v1000 = vld [vmem:[%s902 + $0x248] sm:$0xf]
        %v1001 = vld [vmem:[%s902 + $0x24c] sm:$0xff]
        %v1002 = vld [vmem:[%s902 + $0x254] sm:$0xf]
        %v1003 = vld [vmem:[%s902 + $0x258] sm:$0xff]
        %v1004 = vld [vmem:[%s902 + $0x260] sm:$0xf]
        %v1005 = vld [vmem:[%s902 + $0x264] sm:$0xff]
        %v1006 = vld [vmem:[%s902 + $0x26c] sm:$0xf]
        %v1007 = vld [vmem:[%s902 + $0x270] sm:$0xff]
        %v1008 = vld [vmem:[%s902 + $0x278] sm:$0xf]
        %v1009 = vld [vmem:[%s902 + $0x27c] sm:$0xff]
        %v1010 = vld [vmem:[%s902 + $0x284] sm:$0xf]
        %v1011 = vld [vmem:[%s902 + $0x288] sm:$0xff]
        %v1012 = vld [vmem:[%s902 + $0x290] sm:$0xf]
        %v1013 = vld [vmem:[%s902 + $0x294] sm:$0xff]
        %v1014 = vld [vmem:[%s902 + $0x29c] sm:$0xf]
        %v1015 = vld [vmem:[%s902 + $0x2a0] sm:$0xff]
        %v1016 = vld [vmem:[%s902 + $0x2a8] sm:$0xf]
        %v1017 = vld [vmem:[%s902 + $0x2ac] sm:$0xff]
        %v1018 = vld [vmem:[%s902 + $0x2b4] sm:$0xf]
        %v1019 = vld [vmem:[%s902 + $0x2b8] sm:$0xff]
        %v1020 = vld [vmem:[%s902 + $0x2c0] sm:$0xf]
        %v1021 = vld [vmem:[%s902 + $0x2c4] sm:$0xff]
        %v1022 = vld [vmem:[%s902 + $0x2cc] sm:$0xf]
        %v1023 = vld [vmem:[%s902 + $0x2d0] sm:$0xff]
        %v1024 = vld [vmem:[%s902 + $0x2d8] sm:$0xf]
        %v1025 = vld [vmem:[%s902 + $0x2dc] sm:$0xff]
        %v1026 = vld [vmem:[%s902 + $0x2e4] sm:$0xf]
        %v1027 = vld [vmem:[%s902 + $0x2e8] sm:$0xff]
        %v1028 = vld [vmem:[%s902 + $0x2f0] sm:$0xf]
        %v1029 = vld [vmem:[%s902 + $0x2f4] sm:$0xff]
        %v1030 = vld [vmem:[%s902 + $0x2fc] sm:$0xf]
        %v1031 = vunpack.c.l.b16 %v531
        %v1032 = vunpack.c.h.b16 %v531
        %v1033 = vunpack.c.l.b16 %v545
        %v1034 = vunpack.c.h.b16 %v545
        %v1035 = vunpack.c.l.b16 %v555
        %v1036 = vunpack.c.h.b16 %v555
        %v1037 = vunpack.c.l.b16 %v565
        %v1038 = vunpack.c.h.b16 %v565
        %v1039 = vunpack.c.l.b16 %v579
        %v1040 = vunpack.c.h.b16 %v579
        %v1041 = vunpack.c.l.b16 %v593
        %v1042 = vunpack.c.h.b16 %v593
        %v1043 = vunpack.c.l.b16 %v603
        %v1044 = vunpack.c.h.b16 %v603
        %v1045 = vunpack.c.l.b16 %v613
        %v1046 = vunpack.c.h.b16 %v613
        %v1047 = vunpack.c.l.b16 %v627
        %v1048 = vunpack.c.h.b16 %v627
        %v1049 = vunpack.c.l.b16 %v641
        %v1050 = vunpack.c.h.b16 %v641
        %v1051 = vunpack.c.l.b16 %v651
        %v1052 = vunpack.c.h.b16 %v651
        %v1053 = vunpack.c.l.b16 %v661
        %v1054 = vunpack.c.h.b16 %v661
        %v1055 = vunpack.c.l.b16 %v675
        %v1056 = vunpack.c.h.b16 %v675
        %v1057 = vunpack.c.l.b16 %v689
        %v1058 = vunpack.c.h.b16 %v689
        %v1059 = vunpack.c.l.b16 %v699
        %v1060 = vunpack.c.h.b16 %v699
        %v1061 = vunpack.c.l.b16 %v709
        %v1062 = vunpack.c.h.b16 %v709
        %v1063 = vunpack.c.l.b16 %v723
        %v1064 = vunpack.c.h.b16 %v723
        %v1065 = vunpack.c.l.b16 %v737
        %v1066 = vunpack.c.h.b16 %v737
        %v1067 = vunpack.c.l.b16 %v747
        %v1068 = vunpack.c.h.b16 %v747
        %v1069 = vunpack.c.l.b16 %v757
        %v1070 = vunpack.c.h.b16 %v757
        %v1071 = vunpack.c.l.b16 %v771
        %v1072 = vunpack.c.h.b16 %v771
        %v1073 = vunpack.c.l.b16 %v785
        %v1074 = vunpack.c.h.b16 %v785
        %v1075 = vunpack.c.l.b16 %v795
        %v1076 = vunpack.c.h.b16 %v795
        %v1077 = vunpack.c.l.b16 %v805
        %v1078 = vunpack.c.h.b16 %v805
        %v1079 = vunpack.c.l.b16 %v819
        %v1080 = vunpack.c.h.b16 %v819
        %v1081 = vunpack.c.l.b16 %v833
        %v1082 = vunpack.c.h.b16 %v833
        %v1083 = vunpack.c.l.b16 %v843
        %v1084 = vunpack.c.h.b16 %v843
        %v1085 = vunpack.c.l.b16 %v853
        %v1086 = vunpack.c.h.b16 %v853
        %v1087 = vunpack.c.l.b16 %v867
        %v1088 = vunpack.c.h.b16 %v867
        %v1089 = vunpack.c.l.b16 %v881
        %v1090 = vunpack.c.h.b16 %v881
        %v1091 = vunpack.c.l.b16 %v891
        %v1092 = vunpack.c.h.b16 %v891
        %v1093 = vunpack.c.l.b16 %v901
        %v1094 = vunpack.c.h.b16 %v901
        %v1095 = vpack.c.b16 %v1035, %v1031
        %v1096 = vpack.c.b16 %v1036, %v1032
        %v1097 = vpack.c.b16 %v1037, %v1033
        %v1098 = vpack.c.b16 %v1038, %v1034
        %v1099 = vpack.c.b16 %v1043, %v1039
        %v1100 = vpack.c.b16 %v1044, %v1040
        %v1101 = vpack.c.b16 %v1045, %v1041
        %v1102 = vpack.c.b16 %v1046, %v1042
        %v1103 = vpack.c.b16 %v1051, %v1047
        %v1104 = vpack.c.b16 %v1052, %v1048
        %v1105 = vpack.c.b16 %v1053, %v1049
        %v1106 = vpack.c.b16 %v1054, %v1050
        %v1107 = vpack.c.b16 %v1059, %v1055
        %v1108 = vpack.c.b16 %v1060, %v1056
        %v1109 = vpack.c.b16 %v1061, %v1057
        %v1110 = vpack.c.b16 %v1062, %v1058
        %v1111 = vpack.c.b16 %v1067, %v1063
        %v1112 = vpack.c.b16 %v1068, %v1064
        %v1113 = vpack.c.b16 %v1069, %v1065
        %v1114 = vpack.c.b16 %v1070, %v1066
        %v1115 = vpack.c.b16 %v1075, %v1071
        %v1116 = vpack.c.b16 %v1076, %v1072
        %v1117 = vpack.c.b16 %v1077, %v1073
        %v1118 = vpack.c.b16 %v1078, %v1074
        %v1119 = vpack.c.b16 %v1083, %v1079
        %v1120 = vpack.c.b16 %v1084, %v1080
        %v1121 = vpack.c.b16 %v1085, %v1081
        %v1122 = vpack.c.b16 %v1086, %v1082
        %v1123 = vpack.c.b16 %v1091, %v1087
        %v1124 = vpack.c.b16 %v1092, %v1088
        %v1125 = vpack.c.b16 %v1093, %v1089
        %v1126 = vpack.c.b16 %v1094, %v1090
        %v1287 = vunpack.c.l.b16 %v903
        %v1288 = vunpack.c.h.b16 %v903
        %v1289 = vunpack.c.l.b16 %v904
        %v1290 = vunpack.c.l.b16 %v905
        %v1291 = vunpack.c.h.b16 %v905
        %v1292 = vunpack.c.l.b16 %v906
        %v1293 = vunpack.c.l.b16 %v907
        %v1294 = vunpack.c.h.b16 %v907
        %v1295 = vunpack.c.l.b16 %v908
        %v1296 = vunpack.c.l.b16 %v909
        %v1297 = vunpack.c.h.b16 %v909
        %v1298 = vunpack.c.l.b16 %v910
        %v1299 = vunpack.c.l.b16 %v911
        %v1300 = vunpack.c.h.b16 %v911
        %v1301 = vunpack.c.l.b16 %v912
        %v1302 = vunpack.c.l.b16 %v913
        %v1303 = vunpack.c.h.b16 %v913
        %v1304 = vunpack.c.l.b16 %v914
        %v1305 = vunpack.c.l.b16 %v915
        %v1306 = vunpack.c.h.b16 %v915
        %v1307 = vunpack.c.l.b16 %v916
        %v1308 = vunpack.c.l.b16 %v917
        %v1309 = vunpack.c.h.b16 %v917
        %v1310 = vunpack.c.l.b16 %v918
        %v1311 = vunpack.c.l.b16 %v919
        %v1312 = vunpack.c.h.b16 %v919
        %v1313 = vunpack.c.l.b16 %v920
        %v1314 = vunpack.c.l.b16 %v921
        %v1315 = vunpack.c.h.b16 %v921
        %v1316 = vunpack.c.l.b16 %v922
        %v1317 = vunpack.c.l.b16 %v923
        %v1318 = vunpack.c.h.b16 %v923
        %v1319 = vunpack.c.l.b16 %v924
        %v1320 = vunpack.c.l.b16 %v925
        %v1321 = vunpack.c.h.b16 %v925
        %v1322 = vunpack.c.l.b16 %v926
        %v1323 = vunpack.c.l.b16 %v927
        %v1324 = vunpack.c.h.b16 %v927
        %v1325 = vunpack.c.l.b16 %v928
        %v1326 = vunpack.c.l.b16 %v929
        %v1327 = vunpack.c.h.b16 %v929
        %v1328 = vunpack.c.l.b16 %v930
        %v1329 = vunpack.c.l.b16 %v931
        %v1330 = vunpack.c.h.b16 %v931
        %v1331 = vunpack.c.l.b16 %v932
        %v1332 = vunpack.c.l.b16 %v933
        %v1333 = vunpack.c.h.b16 %v933
        %v1334 = vunpack.c.l.b16 %v934
        %v1335 = vunpack.c.l.b16 %v935
        %v1336 = vunpack.c.h.b16 %v935
        %v1337 = vunpack.c.l.b16 %v936
        %v1338 = vunpack.c.l.b16 %v937
        %v1339 = vunpack.c.h.b16 %v937
        %v1340 = vunpack.c.l.b16 %v938
        %v1341 = vunpack.c.l.b16 %v939
        %v1342 = vunpack.c.h.b16 %v939
        %v1343 = vunpack.c.l.b16 %v940
        %v1344 = vunpack.c.l.b16 %v941
        %v1345 = vunpack.c.h.b16 %v941
        %v1346 = vunpack.c.l.b16 %v942
        %v1347 = vunpack.c.l.b16 %v943
        %v1348 = vunpack.c.h.b16 %v943
        %v1349 = vunpack.c.l.b16 %v944
        %v1350 = vunpack.c.l.b16 %v945
        %v1351 = vunpack.c.h.b16 %v945
        %v1352 = vunpack.c.l.b16 %v946
        %v1353 = vunpack.c.l.b16 %v947
        %v1354 = vunpack.c.h.b16 %v947
        %v1355 = vunpack.c.l.b16 %v948
        %v1356 = vunpack.c.l.b16 %v949
        %v1357 = vunpack.c.h.b16 %v949
        %v1358 = vunpack.c.l.b16 %v950
        %v1359 = vunpack.c.l.b16 %v951
        %v1360 = vunpack.c.h.b16 %v951
        %v1361 = vunpack.c.l.b16 %v952
        %v1362 = vunpack.c.l.b16 %v953
        %v1363 = vunpack.c.h.b16 %v953
        %v1364 = vunpack.c.l.b16 %v954
        %v1365 = vunpack.c.l.b16 %v955
        %v1366 = vunpack.c.h.b16 %v955
        %v1367 = vunpack.c.l.b16 %v956
        %v1368 = vunpack.c.l.b16 %v957
        %v1369 = vunpack.c.h.b16 %v957
        %v1370 = vunpack.c.l.b16 %v958
        %v1371 = vunpack.c.l.b16 %v959
        %v1372 = vunpack.c.h.b16 %v959
        %v1373 = vunpack.c.l.b16 %v960
        %v1374 = vunpack.c.l.b16 %v961
        %v1375 = vunpack.c.h.b16 %v961
        %v1376 = vunpack.c.l.b16 %v962
        %v1377 = vunpack.c.l.b16 %v963
        %v1378 = vunpack.c.h.b16 %v963
        %v1379 = vunpack.c.l.b16 %v964
        %v1380 = vunpack.c.l.b16 %v965
        %v1381 = vunpack.c.h.b16 %v965
        %v1382 = vunpack.c.l.b16 %v966
        %v1383 = vunpack.c.l.b16 %v967
        %v1384 = vunpack.c.h.b16 %v967
        %v1385 = vunpack.c.l.b16 %v968
        %v1386 = vunpack.c.l.b16 %v969
        %v1387 = vunpack.c.h.b16 %v969
        %v1388 = vunpack.c.l.b16 %v970
        %v1389 = vunpack.c.l.b16 %v971
        %v1390 = vunpack.c.h.b16 %v971
        %v1391 = vunpack.c.l.b16 %v972
        %v1392 = vunpack.c.l.b16 %v973
        %v1393 = vunpack.c.h.b16 %v973
        %v1394 = vunpack.c.l.b16 %v974
        %v1395 = vunpack.c.l.b16 %v975
        %v1396 = vunpack.c.h.b16 %v975
        %v1397 = vunpack.c.l.b16 %v976
        %v1398 = vunpack.c.l.b16 %v977
        %v1399 = vunpack.c.h.b16 %v977
        %v1400 = vunpack.c.l.b16 %v978
        %v1401 = vunpack.c.l.b16 %v979
        %v1402 = vunpack.c.h.b16 %v979
        %v1403 = vunpack.c.l.b16 %v980
        %v1404 = vunpack.c.l.b16 %v981
        %v1405 = vunpack.c.h.b16 %v981
        %v1406 = vunpack.c.l.b16 %v982
        %v1407 = vunpack.c.l.b16 %v983
        %v1408 = vunpack.c.h.b16 %v983
        %v1409 = vunpack.c.l.b16 %v984
        %v1410 = vunpack.c.l.b16 %v985
        %v1411 = vunpack.c.h.b16 %v985
        %v1412 = vunpack.c.l.b16 %v986
        %v1413 = vunpack.c.l.b16 %v987
        %v1414 = vunpack.c.h.b16 %v987
        %v1415 = vunpack.c.l.b16 %v988
        %v1416 = vunpack.c.l.b16 %v989
        %v1417 = vunpack.c.h.b16 %v989
        %v1418 = vunpack.c.l.b16 %v990
        %v1419 = vunpack.c.l.b16 %v991
        %v1420 = vunpack.c.h.b16 %v991
        %v1421 = vunpack.c.l.b16 %v992
        %v1422 = vunpack.c.l.b16 %v993
        %v1423 = vunpack.c.h.b16 %v993
        %v1424 = vunpack.c.l.b16 %v994
        %v1425 = vunpack.c.l.b16 %v995
        %v1426 = vunpack.c.h.b16 %v995
        %v1427 = vunpack.c.l.b16 %v996
        %v1428 = vunpack.c.l.b16 %v997
        %v1429 = vunpack.c.h.b16 %v997
        %v1430 = vunpack.c.l.b16 %v998
        %v1431 = vunpack.c.l.b16 %v999
        %v1432 = vunpack.c.h.b16 %v999
        %v1433 = vunpack.c.l.b16 %v1000
        %v1434 = vunpack.c.l.b16 %v1001
        %v1435 = vunpack.c.h.b16 %v1001
        %v1436 = vunpack.c.l.b16 %v1002
        %v1437 = vunpack.c.l.b16 %v1003
        %v1438 = vunpack.c.h.b16 %v1003
        %v1439 = vunpack.c.l.b16 %v1004
        %v1440 = vunpack.c.l.b16 %v1005
        %v1441 = vunpack.c.h.b16 %v1005
        %v1442 = vunpack.c.l.b16 %v1006
        %v1443 = vunpack.c.l.b16 %v1007
        %v1444 = vunpack.c.h.b16 %v1007
        %v1445 = vunpack.c.l.b16 %v1008
        %v1446 = vunpack.c.l.b16 %v1009
        %v1447 = vunpack.c.h.b16 %v1009
        %v1448 = vunpack.c.l.b16 %v1010
        %v1449 = vunpack.c.l.b16 %v1011
        %v1450 = vunpack.c.h.b16 %v1011
        %v1451 = vunpack.c.l.b16 %v1012
        %v1452 = vunpack.c.l.b16 %v1013
        %v1453 = vunpack.c.h.b16 %v1013
        %v1454 = vunpack.c.l.b16 %v1014
        %v1455 = vunpack.c.l.b16 %v1015
        %v1456 = vunpack.c.h.b16 %v1015
        %v1457 = vunpack.c.l.b16 %v1016
        %v1458 = vunpack.c.l.b16 %v1017
        %v1459 = vunpack.c.h.b16 %v1017
        %v1460 = vunpack.c.l.b16 %v1018
        %v1461 = vunpack.c.l.b16 %v1019
        %v1462 = vunpack.c.h.b16 %v1019
        %v1463 = vunpack.c.l.b16 %v1020
        %v1464 = vunpack.c.l.b16 %v1021
        %v1465 = vunpack.c.h.b16 %v1021
        %v1466 = vunpack.c.l.b16 %v1022
        %v1467 = vunpack.c.l.b16 %v1023
        %v1468 = vunpack.c.h.b16 %v1023
        %v1469 = vunpack.c.l.b16 %v1024
        %v1470 = vunpack.c.l.b16 %v1025
        %v1471 = vunpack.c.h.b16 %v1025
        %v1472 = vunpack.c.l.b16 %v1026
        %v1473 = vunpack.c.l.b16 %v1027
        %v1474 = vunpack.c.h.b16 %v1027
        %v1475 = vunpack.c.l.b16 %v1028
        %v1476 = vunpack.c.l.b16 %v1029
        %v1477 = vunpack.c.h.b16 %v1029
        %v1478 = vunpack.c.l.b16 %v1030
        %v1479 = vpack.c.b16 %v1290, %v1287
        %v1480 = vpack.c.b16 %v1291, %v1288
        %v1481 = vpack.c.b16 %v1292, %v1289
        %v1482 = vpack.c.b16 %v1296, %v1293
        %v1483 = vpack.c.b16 %v1297, %v1294
        %v1484 = vpack.c.b16 %v1298, %v1295
        %v1485 = vpack.c.b16 %v1302, %v1299
        %v1486 = vpack.c.b16 %v1303, %v1300
        %v1487 = vpack.c.b16 %v1304, %v1301
        %v1488 = vpack.c.b16 %v1308, %v1305
        %v1489 = vpack.c.b16 %v1309, %v1306
        %v1490 = vpack.c.b16 %v1310, %v1307
        %v1491 = vpack.c.b16 %v1314, %v1311
        %v1492 = vpack.c.b16 %v1315, %v1312
        %v1493 = vpack.c.b16 %v1316, %v1313
        %v1494 = vpack.c.b16 %v1320, %v1317
        %v1495 = vpack.c.b16 %v1321, %v1318
        %v1496 = vpack.c.b16 %v1322, %v1319
        %v1497 = vpack.c.b16 %v1326, %v1323
        %v1498 = vpack.c.b16 %v1327, %v1324
        %v1499 = vpack.c.b16 %v1328, %v1325
        %v1500 = vpack.c.b16 %v1332, %v1329
        %v1501 = vpack.c.b16 %v1333, %v1330
        %v1502 = vpack.c.b16 %v1334, %v1331
        %v1503 = vpack.c.b16 %v1338, %v1335
        %v1504 = vpack.c.b16 %v1339, %v1336
        %v1505 = vpack.c.b16 %v1340, %v1337
        %v1506 = vpack.c.b16 %v1344, %v1341
        %v1507 = vpack.c.b16 %v1345, %v1342
        %v1508 = vpack.c.b16 %v1346, %v1343
        %v1509 = vpack.c.b16 %v1350, %v1347
        %v1510 = vpack.c.b16 %v1351, %v1348
        %v1511 = vpack.c.b16 %v1352, %v1349
        %v1512 = vpack.c.b16 %v1356, %v1353
        %v1513 = vpack.c.b16 %v1357, %v1354
        %v1514 = vpack.c.b16 %v1358, %v1355
        %v1515 = vpack.c.b16 %v1362, %v1359
        %v1516 = vpack.c.b16 %v1363, %v1360
        %v1517 = vpack.c.b16 %v1364, %v1361
        %v1518 = vpack.c.b16 %v1368, %v1365
        %v1519 = vpack.c.b16 %v1369, %v1366
        %v1520 = vpack.c.b16 %v1370, %v1367
        %v1521 = vpack.c.b16 %v1374, %v1371
        %v1522 = vpack.c.b16 %v1375, %v1372
        %v1523 = vpack.c.b16 %v1376, %v1373
        %v1524 = vpack.c.b16 %v1380, %v1377
        %v1525 = vpack.c.b16 %v1381, %v1378
        %v1526 = vpack.c.b16 %v1382, %v1379
        %v1527 = vpack.c.b16 %v1386, %v1383
        %v1528 = vpack.c.b16 %v1387, %v1384
        %v1529 = vpack.c.b16 %v1388, %v1385
        %v1530 = vpack.c.b16 %v1392, %v1389
        %v1531 = vpack.c.b16 %v1393, %v1390
        %v1532 = vpack.c.b16 %v1394, %v1391
        %v1533 = vpack.c.b16 %v1398, %v1395
        %v1534 = vpack.c.b16 %v1399, %v1396
        %v1535 = vpack.c.b16 %v1400, %v1397
        %v1536 = vpack.c.b16 %v1404, %v1401
        %v1537 = vpack.c.b16 %v1405, %v1402
        %v1538 = vpack.c.b16 %v1406, %v1403
        %v1539 = vpack.c.b16 %v1410, %v1407
        %v1540 = vpack.c.b16 %v1411, %v1408
        %v1541 = vpack.c.b16 %v1412, %v1409
        %v1542 = vpack.c.b16 %v1416, %v1413
        %v1543 = vpack.c.b16 %v1417, %v1414
        %v1544 = vpack.c.b16 %v1418, %v1415
        %v1545 = vpack.c.b16 %v1422, %v1419
        %v1546 = vpack.c.b16 %v1423, %v1420
        %v1547 = vpack.c.b16 %v1424, %v1421
        %v1548 = vpack.c.b16 %v1428, %v1425
        %v1549 = vpack.c.b16 %v1429, %v1426
        %v1550 = vpack.c.b16 %v1430, %v1427
        %v1551 = vpack.c.b16 %v1434, %v1431
        %v1552 = vpack.c.b16 %v1435, %v1432
        %v1553 = vpack.c.b16 %v1436, %v1433
        %v1554 = vpack.c.b16 %v1440, %v1437
        %v1555 = vpack.c.b16 %v1441, %v1438
        %v1556 = vpack.c.b16 %v1442, %v1439
        %v1557 = vpack.c.b16 %v1446, %v1443
        %v1558 = vpack.c.b16 %v1447, %v1444
        %v1559 = vpack.c.b16 %v1448, %v1445
        %v1560 = vpack.c.b16 %v1452, %v1449
        %v1561 = vpack.c.b16 %v1453, %v1450
        %v1562 = vpack.c.b16 %v1454, %v1451
        %v1563 = vpack.c.b16 %v1458, %v1455
        %v1564 = vpack.c.b16 %v1459, %v1456
        %v1565 = vpack.c.b16 %v1460, %v1457
        %v1566 = vpack.c.b16 %v1464, %v1461
        %v1567 = vpack.c.b16 %v1465, %v1462
        %v1568 = vpack.c.b16 %v1466, %v1463
        %v1569 = vpack.c.b16 %v1470, %v1467
        %v1570 = vpack.c.b16 %v1471, %v1468
        %v1571 = vpack.c.b16 %v1472, %v1469
        %v1572 = vpack.c.b16 %v1476, %v1473
        %v1573 = vpack.c.b16 %v1477, %v1474
        %v1574 = vpack.c.b16 %v1478, %v1475
        %1671 = vmatpush.bf16.msra.mxu0 %v1500
        %1672 = vmatpush.bf16.msra.mxu0 %v1497
        %1673 = vmatpush.bf16.msra.mxu0 %v1494
        %1674 = vmatpush.bf16.msra.mxu0 %v1491
        %1675 = vmatpush.bf16.msra.mxu0 %v1488
        %1676 = vmatpush.bf16.msra.mxu0 %v1485
        %1677 = vmatpush.bf16.msra.mxu0 %v1482
        %1678 = vmatpush.bf16.msra.mxu0 %v1479
        %1679 = vmatmul.bf16.gmra.mxu0 %v1095
        %v1680 = vpop.f32.mrf.mxu0
        %v1681 = vadd.f32 0.0, %v1680
        %v1682 = vpop.f32.mrf.mxu0
        %v1683 = vadd.f32 0.0, %v1682
        %1684 = vmatmul.bf16.gmra.mxu0 %v1099
        %v1685 = vpop.f32.mrf.mxu0
        %v1686 = vadd.f32 0.0, %v1685
        %v1687 = vpop.f32.mrf.mxu0
        %v1688 = vadd.f32 0.0, %v1687
        %1689 = vmatmul.bf16.gmra.mxu0 %v1103
        %v1690 = vpop.f32.mrf.mxu0
        %v1691 = vadd.f32 0.0, %v1690
        %v1692 = vpop.f32.mrf.mxu0
        %v1693 = vadd.f32 0.0, %v1692
        %1694 = vmatmul.bf16.gmra.mxu0 %v1107
        %v1695 = vpop.f32.mrf.mxu0
        %v1696 = vadd.f32 0.0, %v1695
        %v1697 = vpop.f32.mrf.mxu0
        %v1698 = vadd.f32 0.0, %v1697
        %1699 = vmatmul.bf16.gmra.mxu0 %v1111
        %v1700 = vpop.f32.mrf.mxu0
        %v1701 = vadd.f32 0.0, %v1700
        %v1702 = vpop.f32.mrf.mxu0
        %v1703 = vadd.f32 0.0, %v1702
        %1704 = vmatmul.bf16.gmra.mxu0 %v1115
        %v1705 = vpop.f32.mrf.mxu0
        %v1706 = vadd.f32 0.0, %v1705
        %v1707 = vpop.f32.mrf.mxu0
        %v1708 = vadd.f32 0.0, %v1707
        %1709 = vmatmul.bf16.gmra.mxu0 %v1119
        %v1710 = vpop.f32.mrf.mxu0
        %v1711 = vadd.f32 0.0, %v1710
        %v1712 = vpop.f32.mrf.mxu0
        %v1713 = vadd.f32 0.0, %v1712
        %1714 = vmatmul.bf16.gmra.mxu0 %v1123
        %v1715 = vpop.f32.mrf.mxu0
        %v1716 = vadd.f32 0.0, %v1715
        %v1717 = vpop.f32.mrf.mxu0
        %v1718 = vadd.f32 0.0, %v1717
        %1719 = vdwg.mxu0
        %1720 = vmatpush.bf16.msra.mxu0 %v1524
        %1721 = vmatpush.bf16.msra.mxu0 %v1521
        %1722 = vmatpush.bf16.msra.mxu0 %v1518
        %1723 = vmatpush.bf16.msra.mxu0 %v1515
        %1724 = vmatpush.bf16.msra.mxu0 %v1512
        %1725 = vmatpush.bf16.msra.mxu0 %v1509
        %1726 = vmatpush.bf16.msra.mxu0 %v1506
        %1727 = vmatpush.bf16.msra.mxu0 %v1503
        %1728 = vmatmul.bf16.gmra.mxu0 %v1096
        %v1729 = vpop.f32.mrf.mxu0
        %v1730 = vadd.f32 %v1681, %v1729
        %v1731 = vpop.f32.mrf.mxu0
        %v1732 = vadd.f32 %v1683, %v1731
        %1733 = vmatmul.bf16.gmra.mxu0 %v1100
        %v1734 = vpop.f32.mrf.mxu0
        %v1735 = vadd.f32 %v1686, %v1734
        %v1736 = vpop.f32.mrf.mxu0
        %v1737 = vadd.f32 %v1688, %v1736
        %1738 = vmatmul.bf16.gmra.mxu0 %v1104
        %v1739 = vpop.f32.mrf.mxu0
        %v1740 = vadd.f32 %v1691, %v1739
        %v1741 = vpop.f32.mrf.mxu0
        %v1742 = vadd.f32 %v1693, %v1741
        %1743 = vmatmul.bf16.gmra.mxu0 %v1108
        %v1744 = vpop.f32.mrf.mxu0
        %v1745 = vadd.f32 %v1696, %v1744
        %v1746 = vpop.f32.mrf.mxu0
        %v1747 = vadd.f32 %v1698, %v1746
        %1748 = vmatmul.bf16.gmra.mxu0 %v1112
        %v1749 = vpop.f32.mrf.mxu0
        %v1750 = vadd.f32 %v1701, %v1749
        %v1751 = vpop.f32.mrf.mxu0
        %v1752 = vadd.f32 %v1703, %v1751
        %1753 = vmatmul.bf16.gmra.mxu0 %v1116
        %v1754 = vpop.f32.mrf.mxu0
        %v1755 = vadd.f32 %v1706, %v1754
        %v1756 = vpop.f32.mrf.mxu0
        %v1757 = vadd.f32 %v1708, %v1756
        %1758 = vmatmul.bf16.gmra.mxu0 %v1120
        %v1759 = vpop.f32.mrf.mxu0
        %v1760 = vadd.f32 %v1711, %v1759
        %v1761 = vpop.f32.mrf.mxu0
        %v1762 = vadd.f32 %v1713, %v1761
        %1763 = vmatmul.bf16.gmra.mxu0 %v1124
        %v1764 = vpop.f32.mrf.mxu0
        %v1765 = vadd.f32 %v1716, %v1764
        %v1766 = vpop.f32.mrf.mxu0
        %v1767 = vadd.f32 %v1718, %v1766
        %1768 = vdwg.mxu0
        %1769 = vmatpush.bf16.msra.mxu0 %v1548
        %1770 = vmatpush.bf16.msra.mxu0 %v1545
        %1771 = vmatpush.bf16.msra.mxu0 %v1542
        %1772 = vmatpush.bf16.msra.mxu0 %v1539
        %1773 = vmatpush.bf16.msra.mxu0 %v1536
        %1774 = vmatpush.bf16.msra.mxu0 %v1533
        %1775 = vmatpush.bf16.msra.mxu0 %v1530
        %1776 = vmatpush.bf16.msra.mxu0 %v1527
        %1777 = vmatmul.bf16.gmra.mxu0 %v1097
        %v1778 = vpop.f32.mrf.mxu0
        %v1779 = vadd.f32 %v1730, %v1778
        %v1780 = vpop.f32.mrf.mxu0
        %v1781 = vadd.f32 %v1732, %v1780
        %1782 = vmatmul.bf16.gmra.mxu0 %v1101
        %v1783 = vpop.f32.mrf.mxu0
        %v1784 = vadd.f32 %v1735, %v1783
        %v1785 = vpop.f32.mrf.mxu0
        %v1786 = vadd.f32 %v1737, %v1785
        %1787 = vmatmul.bf16.gmra.mxu0 %v1105
        %v1788 = vpop.f32.mrf.mxu0
        %v1789 = vadd.f32 %v1740, %v1788
        %v1790 = vpop.f32.mrf.mxu0
        %v1791 = vadd.f32 %v1742, %v1790
        %1792 = vmatmul.bf16.gmra.mxu0 %v1109
        %v1793 = vpop.f32.mrf.mxu0
        %v1794 = vadd.f32 %v1745, %v1793
        %v1795 = vpop.f32.mrf.mxu0
        %v1796 = vadd.f32 %v1747, %v1795
        %1797 = vmatmul.bf16.gmra.mxu0 %v1113
        %v1798 = vpop.f32.mrf.mxu0
        %v1799 = vadd.f32 %v1750, %v1798
        %v1800 = vpop.f32.mrf.mxu0
        %v1801 = vadd.f32 %v1752, %v1800
        %1802 = vmatmul.bf16.gmra.mxu0 %v1117
        %v1803 = vpop.f32.mrf.mxu0
        %v1804 = vadd.f32 %v1755, %v1803
        %v1805 = vpop.f32.mrf.mxu0
        %v1806 = vadd.f32 %v1757, %v1805
        %1807 = vmatmul.bf16.gmra.mxu0 %v1121
        %v1808 = vpop.f32.mrf.mxu0
        %v1809 = vadd.f32 %v1760, %v1808
        %v1810 = vpop.f32.mrf.mxu0
        %v1811 = vadd.f32 %v1762, %v1810
        %1812 = vmatmul.bf16.gmra.mxu0 %v1125
        %v1813 = vpop.f32.mrf.mxu0
        %v1814 = vadd.f32 %v1765, %v1813
        %v1815 = vpop.f32.mrf.mxu0
        %v1816 = vadd.f32 %v1767, %v1815
        %1817 = vdwg.mxu0
        %1818 = vmatpush.bf16.msra.mxu0 %v1572
        %1819 = vmatpush.bf16.msra.mxu0 %v1569
        %1820 = vmatpush.bf16.msra.mxu0 %v1566
        %1821 = vmatpush.bf16.msra.mxu0 %v1563
        %1822 = vmatpush.bf16.msra.mxu0 %v1560
        %1823 = vmatpush.bf16.msra.mxu0 %v1557
        %1824 = vmatpush.bf16.msra.mxu0 %v1554
        %1825 = vmatpush.bf16.msra.mxu0 %v1551
        %1826 = vmatmul.bf16.gmra.mxu0 %v1098
        %v1827 = vpop.f32.mrf.mxu0
        %v1828 = vadd.f32 %v1779, %v1827
        %v1829 = vpop.f32.mrf.mxu0
        %v1830 = vadd.f32 %v1781, %v1829
        %1831 = vmatmul.bf16.gmra.mxu0 %v1102
        %v1832 = vpop.f32.mrf.mxu0
        %v1833 = vadd.f32 %v1784, %v1832
        %v1834 = vpop.f32.mrf.mxu0
        %v1835 = vadd.f32 %v1786, %v1834
        %1836 = vmatmul.bf16.gmra.mxu0 %v1106
        %v1837 = vpop.f32.mrf.mxu0
        %v1838 = vadd.f32 %v1789, %v1837
        %v1839 = vpop.f32.mrf.mxu0
        %v1840 = vadd.f32 %v1791, %v1839
        %1841 = vmatmul.bf16.gmra.mxu0 %v1110
        %v1842 = vpop.f32.mrf.mxu0
        %v1843 = vadd.f32 %v1794, %v1842
        %v1844 = vpop.f32.mrf.mxu0
        %v1845 = vadd.f32 %v1796, %v1844
        %1846 = vmatmul.bf16.gmra.mxu0 %v1114
        %v1847 = vpop.f32.mrf.mxu0
        %v1848 = vadd.f32 %v1799, %v1847
        %v1849 = vpop.f32.mrf.mxu0
        %v1850 = vadd.f32 %v1801, %v1849
        %1851 = vmatmul.bf16.gmra.mxu0 %v1118
        %v1852 = vpop.f32.mrf.mxu0
        %v1853 = vadd.f32 %v1804, %v1852
        %v1854 = vpop.f32.mrf.mxu0
        %v1855 = vadd.f32 %v1806, %v1854
        %1856 = vmatmul.bf16.gmra.mxu0 %v1122
        %v1857 = vpop.f32.mrf.mxu0
        %v1858 = vadd.f32 %v1809, %v1857
        %v1859 = vpop.f32.mrf.mxu0
        %v1860 = vadd.f32 %v1811, %v1859
        %1861 = vmatmul.bf16.gmra.mxu0 %v1126
        %v1862 = vpop.f32.mrf.mxu0
        %v1863 = vadd.f32 %v1814, %v1862
        %v1864 = vpop.f32.mrf.mxu0
        %v1865 = vadd.f32 %v1816, %v1864
        %1866 = vdwg.mxu0
        %1867 = vmatpush.bf16.msra.mxu0 %v1501
        %1868 = vmatpush.bf16.msra.mxu0 %v1498
        %1869 = vmatpush.bf16.msra.mxu0 %v1495
        %1870 = vmatpush.bf16.msra.mxu0 %v1492
        %1871 = vmatpush.bf16.msra.mxu0 %v1489
        %1872 = vmatpush.bf16.msra.mxu0 %v1486
        %1873 = vmatpush.bf16.msra.mxu0 %v1483
        %1874 = vmatpush.bf16.msra.mxu0 %v1480
        %1875 = vmatmul.bf16.gmra.mxu0 %v1095
        %v1876 = vpop.f32.mrf.mxu0
        %v1877 = vadd.f32 0.0, %v1876
        %v1878 = vpop.f32.mrf.mxu0
        %v1879 = vadd.f32 0.0, %v1878
        %1880 = vmatmul.bf16.gmra.mxu0 %v1099
        %v1881 = vpop.f32.mrf.mxu0
        %v1882 = vadd.f32 0.0, %v1881
        %v1883 = vpop.f32.mrf.mxu0
        %v1884 = vadd.f32 0.0, %v1883
        %1885 = vmatmul.bf16.gmra.mxu0 %v1103
        %v1886 = vpop.f32.mrf.mxu0
        %v1887 = vadd.f32 0.0, %v1886
        %v1888 = vpop.f32.mrf.mxu0
        %v1889 = vadd.f32 0.0, %v1888
        %1890 = vmatmul.bf16.gmra.mxu0 %v1107
        %v1891 = vpop.f32.mrf.mxu0
        %v1892 = vadd.f32 0.0, %v1891
        %v1893 = vpop.f32.mrf.mxu0
        %v1894 = vadd.f32 0.0, %v1893
        %1895 = vmatmul.bf16.gmra.mxu0 %v1111
        %v1896 = vpop.f32.mrf.mxu0
        %v1897 = vadd.f32 0.0, %v1896
        %v1898 = vpop.f32.mrf.mxu0
        %v1899 = vadd.f32 0.0, %v1898
        %1900 = vmatmul.bf16.gmra.mxu0 %v1115
        %v1901 = vpop.f32.mrf.mxu0
        %v1902 = vadd.f32 0.0, %v1901
        %v1903 = vpop.f32.mrf.mxu0
        %v1904 = vadd.f32 0.0, %v1903
        %1905 = vmatmul.bf16.gmra.mxu0 %v1119
        %v1906 = vpop.f32.mrf.mxu0
        %v1907 = vadd.f32 0.0, %v1906
        %v1908 = vpop.f32.mrf.mxu0
        %v1909 = vadd.f32 0.0, %v1908
        %1910 = vmatmul.bf16.gmra.mxu0 %v1123
        %v1911 = vpop.f32.mrf.mxu0
        %v1912 = vadd.f32 0.0, %v1911
        %v1913 = vpop.f32.mrf.mxu0
        %v1914 = vadd.f32 0.0, %v1913
        %1915 = vdwg.mxu0
        %1916 = vmatpush.bf16.msra.mxu0 %v1525
        %1917 = vmatpush.bf16.msra.mxu0 %v1522
        %1918 = vmatpush.bf16.msra.mxu0 %v1519
        %1919 = vmatpush.bf16.msra.mxu0 %v1516
        %1920 = vmatpush.bf16.msra.mxu0 %v1513
        %1921 = vmatpush.bf16.msra.mxu0 %v1510
        %1922 = vmatpush.bf16.msra.mxu0 %v1507
        %1923 = vmatpush.bf16.msra.mxu0 %v1504
        %1924 = vmatmul.bf16.gmra.mxu0 %v1096
        %v1925 = vpop.f32.mrf.mxu0
        %v1926 = vadd.f32 %v1877, %v1925
        %v1927 = vpop.f32.mrf.mxu0
        %v1928 = vadd.f32 %v1879, %v1927
        %1929 = vmatmul.bf16.gmra.mxu0 %v1100
        %v1930 = vpop.f32.mrf.mxu0
        %v1931 = vadd.f32 %v1882, %v1930
        %v1932 = vpop.f32.mrf.mxu0
        %v1933 = vadd.f32 %v1884, %v1932
        %1934 = vmatmul.bf16.gmra.mxu0 %v1104
        %v1935 = vpop.f32.mrf.mxu0
        %v1936 = vadd.f32 %v1887, %v1935
        %v1937 = vpop.f32.mrf.mxu0
        %v1938 = vadd.f32 %v1889, %v1937
        %1939 = vmatmul.bf16.gmra.mxu0 %v1108
        %v1940 = vpop.f32.mrf.mxu0
        %v1941 = vadd.f32 %v1892, %v1940
        %v1942 = vpop.f32.mrf.mxu0
        %v1943 = vadd.f32 %v1894, %v1942
        %1944 = vmatmul.bf16.gmra.mxu0 %v1112
        %v1945 = vpop.f32.mrf.mxu0
        %v1946 = vadd.f32 %v1897, %v1945
        %v1947 = vpop.f32.mrf.mxu0
        %v1948 = vadd.f32 %v1899, %v1947
        %1949 = vmatmul.bf16.gmra.mxu0 %v1116
        %v1950 = vpop.f32.mrf.mxu0
        %v1951 = vadd.f32 %v1902, %v1950
        %v1952 = vpop.f32.mrf.mxu0
        %v1953 = vadd.f32 %v1904, %v1952
        %1954 = vmatmul.bf16.gmra.mxu0 %v1120
        %v1955 = vpop.f32.mrf.mxu0
        %v1956 = vadd.f32 %v1907, %v1955
        %v1957 = vpop.f32.mrf.mxu0
        %v1958 = vadd.f32 %v1909, %v1957
        %1959 = vmatmul.bf16.gmra.mxu0 %v1124
        %v1960 = vpop.f32.mrf.mxu0
        %v1961 = vadd.f32 %v1912, %v1960
        %v1962 = vpop.f32.mrf.mxu0
        %v1963 = vadd.f32 %v1914, %v1962
        %1964 = vdwg.mxu0
        %1965 = vmatpush.bf16.msra.mxu0 %v1549
        %1966 = vmatpush.bf16.msra.mxu0 %v1546
        %1967 = vmatpush.bf16.msra.mxu0 %v1543
        %1968 = vmatpush.bf16.msra.mxu0 %v1540
        %1969 = vmatpush.bf16.msra.mxu0 %v1537
        %1970 = vmatpush.bf16.msra.mxu0 %v1534
        %1971 = vmatpush.bf16.msra.mxu0 %v1531
        %1972 = vmatpush.bf16.msra.mxu0 %v1528
        %1973 = vmatmul.bf16.gmra.mxu0 %v1097
        %v1974 = vpop.f32.mrf.mxu0
        %v1975 = vadd.f32 %v1926, %v1974
        %v1976 = vpop.f32.mrf.mxu0
        %v1977 = vadd.f32 %v1928, %v1976
        %1978 = vmatmul.bf16.gmra.mxu0 %v1101
        %v1979 = vpop.f32.mrf.mxu0
        %v1980 = vadd.f32 %v1931, %v1979
        %v1981 = vpop.f32.mrf.mxu0
        %v1982 = vadd.f32 %v1933, %v1981
        %1983 = vmatmul.bf16.gmra.mxu0 %v1105
        %v1984 = vpop.f32.mrf.mxu0
        %v1985 = vadd.f32 %v1936, %v1984
        %v1986 = vpop.f32.mrf.mxu0
        %v1987 = vadd.f32 %v1938, %v1986
        %1988 = vmatmul.bf16.gmra.mxu0 %v1109
        %v1989 = vpop.f32.mrf.mxu0
        %v1990 = vadd.f32 %v1941, %v1989
        %v1991 = vpop.f32.mrf.mxu0
        %v1992 = vadd.f32 %v1943, %v1991
        %1993 = vmatmul.bf16.gmra.mxu0 %v1113
        %v1994 = vpop.f32.mrf.mxu0
        %v1995 = vadd.f32 %v1946, %v1994
        %v1996 = vpop.f32.mrf.mxu0
        %v1997 = vadd.f32 %v1948, %v1996
        %1998 = vmatmul.bf16.gmra.mxu0 %v1117
        %v1999 = vpop.f32.mrf.mxu0
        %v2000 = vadd.f32 %v1951, %v1999
        %v2001 = vpop.f32.mrf.mxu0
        %v2002 = vadd.f32 %v1953, %v2001
        %2003 = vmatmul.bf16.gmra.mxu0 %v1121
        %v2004 = vpop.f32.mrf.mxu0
        %v2005 = vadd.f32 %v1956, %v2004
        %v2006 = vpop.f32.mrf.mxu0
        %v2007 = vadd.f32 %v1958, %v2006
        %2008 = vmatmul.bf16.gmra.mxu0 %v1125
        %v2009 = vpop.f32.mrf.mxu0
        %v2010 = vadd.f32 %v1961, %v2009
        %v2011 = vpop.f32.mrf.mxu0
        %v2012 = vadd.f32 %v1963, %v2011
        %2013 = vdwg.mxu0
        %2014 = vmatpush.bf16.msra.mxu0 %v1573
        %2015 = vmatpush.bf16.msra.mxu0 %v1570
        %2016 = vmatpush.bf16.msra.mxu0 %v1567
        %2017 = vmatpush.bf16.msra.mxu0 %v1564
        %2018 = vmatpush.bf16.msra.mxu0 %v1561
        %2019 = vmatpush.bf16.msra.mxu0 %v1558
        %2020 = vmatpush.bf16.msra.mxu0 %v1555
        %2021 = vmatpush.bf16.msra.mxu0 %v1552
        %2022 = vmatmul.bf16.gmra.mxu0 %v1098
        %v2023 = vpop.f32.mrf.mxu0
        %v2024 = vadd.f32 %v1975, %v2023
        %v2025 = vpop.f32.mrf.mxu0
        %v2026 = vadd.f32 %v1977, %v2025
        %2027 = vmatmul.bf16.gmra.mxu0 %v1102
        %v2028 = vpop.f32.mrf.mxu0
        %v2029 = vadd.f32 %v1980, %v2028
        %v2030 = vpop.f32.mrf.mxu0
        %v2031 = vadd.f32 %v1982, %v2030
        %2032 = vmatmul.bf16.gmra.mxu0 %v1106
        %v2033 = vpop.f32.mrf.mxu0
        %v2034 = vadd.f32 %v1985, %v2033
        %v2035 = vpop.f32.mrf.mxu0
        %v2036 = vadd.f32 %v1987, %v2035
        %2037 = vmatmul.bf16.gmra.mxu0 %v1110
        %v2038 = vpop.f32.mrf.mxu0
        %v2039 = vadd.f32 %v1990, %v2038
        %v2040 = vpop.f32.mrf.mxu0
        %v2041 = vadd.f32 %v1992, %v2040
        %2042 = vmatmul.bf16.gmra.mxu0 %v1114
        %v2043 = vpop.f32.mrf.mxu0
        %v2044 = vadd.f32 %v1995, %v2043
        %v2045 = vpop.f32.mrf.mxu0
        %v2046 = vadd.f32 %v1997, %v2045
        %2047 = vmatmul.bf16.gmra.mxu0 %v1118
        %v2048 = vpop.f32.mrf.mxu0
        %v2049 = vadd.f32 %v2000, %v2048
        %v2050 = vpop.f32.mrf.mxu0
        %v2051 = vadd.f32 %v2002, %v2050
        %2052 = vmatmul.bf16.gmra.mxu0 %v1122
        %v2053 = vpop.f32.mrf.mxu0
        %v2054 = vadd.f32 %v2005, %v2053
        %v2055 = vpop.f32.mrf.mxu0
        %v2056 = vadd.f32 %v2007, %v2055
        %2057 = vmatmul.bf16.gmra.mxu0 %v1126
        %v2058 = vpop.f32.mrf.mxu0
        %v2059 = vadd.f32 %v2010, %v2058
        %v2060 = vpop.f32.mrf.mxu0
        %v2061 = vadd.f32 %v2012, %v2060
        %2062 = vdwg.mxu0
        %2063 = vmatpush.bf16.msra.mxu0 %v1502
        %2064 = vmatpush.bf16.msra.mxu0 %v1499
        %2065 = vmatpush.bf16.msra.mxu0 %v1496
        %2066 = vmatpush.bf16.msra.mxu0 %v1493
        %2067 = vmatpush.bf16.msra.mxu0 %v1490
        %2068 = vmatpush.bf16.msra.mxu0 %v1487
        %2069 = vmatpush.bf16.msra.mxu0 %v1484
        %2070 = vmatpush.bf16.msra.mxu0 %v1481
        %2071 = vmatmul.bf16.gmra.mxu0 %v1095
        %v2072 = vpop.f32.mrf.mxu0
        %v2073 = vadd.f32 0.0, %v2072
        %v2074 = vpop.f32.mrf.mxu0
        %v2075 = vadd.f32 0.0, %v2074
        %2076 = vmatmul.bf16.gmra.mxu0 %v1099
        %v2077 = vpop.f32.mrf.mxu0
        %v2078 = vadd.f32 0.0, %v2077
        %v2079 = vpop.f32.mrf.mxu0
        %v2080 = vadd.f32 0.0, %v2079
        %2081 = vmatmul.bf16.gmra.mxu0 %v1103
        %v2082 = vpop.f32.mrf.mxu0
        %v2083 = vadd.f32 0.0, %v2082
        %v2084 = vpop.f32.mrf.mxu0
        %v2085 = vadd.f32 0.0, %v2084
        %2086 = vmatmul.bf16.gmra.mxu0 %v1107
        %v2087 = vpop.f32.mrf.mxu0
        %v2088 = vadd.f32 0.0, %v2087
        %v2089 = vpop.f32.mrf.mxu0
        %v2090 = vadd.f32 0.0, %v2089
        %2091 = vmatmul.bf16.gmra.mxu0 %v1111
        %v2092 = vpop.f32.mrf.mxu0
        %v2093 = vadd.f32 0.0, %v2092
        %v2094 = vpop.f32.mrf.mxu0
        %v2095 = vadd.f32 0.0, %v2094
        %2096 = vmatmul.bf16.gmra.mxu0 %v1115
        %v2097 = vpop.f32.mrf.mxu0
        %v2098 = vadd.f32 0.0, %v2097
        %v2099 = vpop.f32.mrf.mxu0
        %v2100 = vadd.f32 0.0, %v2099
        %2101 = vmatmul.bf16.gmra.mxu0 %v1119
        %v2102 = vpop.f32.mrf.mxu0
        %v2103 = vadd.f32 0.0, %v2102
        %v2104 = vpop.f32.mrf.mxu0
        %v2105 = vadd.f32 0.0, %v2104
        %2106 = vmatmul.bf16.gmra.mxu0 %v1123
        %v2107 = vpop.f32.mrf.mxu0
        %v2108 = vadd.f32 0.0, %v2107
        %v2109 = vpop.f32.mrf.mxu0
        %v2110 = vadd.f32 0.0, %v2109
        %2111 = vdwg.mxu0
        %2112 = vmatpush.bf16.msra.mxu0 %v1526
        %2113 = vmatpush.bf16.msra.mxu0 %v1523
        %2114 = vmatpush.bf16.msra.mxu0 %v1520
        %2115 = vmatpush.bf16.msra.mxu0 %v1517
        %2116 = vmatpush.bf16.msra.mxu0 %v1514
        %2117 = vmatpush.bf16.msra.mxu0 %v1511
        %2118 = vmatpush.bf16.msra.mxu0 %v1508
        %2119 = vmatpush.bf16.msra.mxu0 %v1505
        %2120 = vmatmul.bf16.gmra.mxu0 %v1096
        %v2121 = vpop.f32.mrf.mxu0
        %v2122 = vadd.f32 %v2073, %v2121
        %v2123 = vpop.f32.mrf.mxu0
        %v2124 = vadd.f32 %v2075, %v2123
        %2125 = vmatmul.bf16.gmra.mxu0 %v1100
        %v2126 = vpop.f32.mrf.mxu0
        %v2127 = vadd.f32 %v2078, %v2126
        %v2128 = vpop.f32.mrf.mxu0
        %v2129 = vadd.f32 %v2080, %v2128
        %2130 = vmatmul.bf16.gmra.mxu0 %v1104
        %v2131 = vpop.f32.mrf.mxu0
        %v2132 = vadd.f32 %v2083, %v2131
        %v2133 = vpop.f32.mrf.mxu0
        %v2134 = vadd.f32 %v2085, %v2133
        %2135 = vmatmul.bf16.gmra.mxu0 %v1108
        %v2136 = vpop.f32.mrf.mxu0
        %v2137 = vadd.f32 %v2088, %v2136
        %v2138 = vpop.f32.mrf.mxu0
        %v2139 = vadd.f32 %v2090, %v2138
        %2140 = vmatmul.bf16.gmra.mxu0 %v1112
        %v2141 = vpop.f32.mrf.mxu0
        %v2142 = vadd.f32 %v2093, %v2141
        %v2143 = vpop.f32.mrf.mxu0
        %v2144 = vadd.f32 %v2095, %v2143
        %2145 = vmatmul.bf16.gmra.mxu0 %v1116
        %v2146 = vpop.f32.mrf.mxu0
        %v2147 = vadd.f32 %v2098, %v2146
        %v2148 = vpop.f32.mrf.mxu0
        %v2149 = vadd.f32 %v2100, %v2148
        %2150 = vmatmul.bf16.gmra.mxu0 %v1120
        %v2151 = vpop.f32.mrf.mxu0
        %v2152 = vadd.f32 %v2103, %v2151
        %v2153 = vpop.f32.mrf.mxu0
        %v2154 = vadd.f32 %v2105, %v2153
        %2155 = vmatmul.bf16.gmra.mxu0 %v1124
        %v2156 = vpop.f32.mrf.mxu0
        %v2157 = vadd.f32 %v2108, %v2156
        %v2158 = vpop.f32.mrf.mxu0
        %v2159 = vadd.f32 %v2110, %v2158
        %2160 = vdwg.mxu0
        %2161 = vmatpush.bf16.msra.mxu0 %v1550
        %2162 = vmatpush.bf16.msra.mxu0 %v1547
        %2163 = vmatpush.bf16.msra.mxu0 %v1544
        %2164 = vmatpush.bf16.msra.mxu0 %v1541
        %2165 = vmatpush.bf16.msra.mxu0 %v1538
        %2166 = vmatpush.bf16.msra.mxu0 %v1535
        %2167 = vmatpush.bf16.msra.mxu0 %v1532
        %2168 = vmatpush.bf16.msra.mxu0 %v1529
        %2169 = vmatmul.bf16.gmra.mxu0 %v1097
        %v2170 = vpop.f32.mrf.mxu0
        %v2171 = vadd.f32 %v2122, %v2170
        %v2172 = vpop.f32.mrf.mxu0
        %v2173 = vadd.f32 %v2124, %v2172
        %2174 = vmatmul.bf16.gmra.mxu0 %v1101
        %v2175 = vpop.f32.mrf.mxu0
        %v2176 = vadd.f32 %v2127, %v2175
        %v2177 = vpop.f32.mrf.mxu0
        %v2178 = vadd.f32 %v2129, %v2177
        %2179 = vmatmul.bf16.gmra.mxu0 %v1105
        %v2180 = vpop.f32.mrf.mxu0
        %v2181 = vadd.f32 %v2132, %v2180
        %v2182 = vpop.f32.mrf.mxu0
        %v2183 = vadd.f32 %v2134, %v2182
        %2184 = vmatmul.bf16.gmra.mxu0 %v1109
        %v2185 = vpop.f32.mrf.mxu0
        %v2186 = vadd.f32 %v2137, %v2185
        %v2187 = vpop.f32.mrf.mxu0
        %v2188 = vadd.f32 %v2139, %v2187
        %2189 = vmatmul.bf16.gmra.mxu0 %v1113
        %v2190 = vpop.f32.mrf.mxu0
        %v2191 = vadd.f32 %v2142, %v2190
        %v2192 = vpop.f32.mrf.mxu0
        %v2193 = vadd.f32 %v2144, %v2192
        %2194 = vmatmul.bf16.gmra.mxu0 %v1117
        %v2195 = vpop.f32.mrf.mxu0
        %v2196 = vadd.f32 %v2147, %v2195
        %v2197 = vpop.f32.mrf.mxu0
        %v2198 = vadd.f32 %v2149, %v2197
        %2199 = vmatmul.bf16.gmra.mxu0 %v1121
        %v2200 = vpop.f32.mrf.mxu0
        %v2201 = vadd.f32 %v2152, %v2200
        %v2202 = vpop.f32.mrf.mxu0
        %v2203 = vadd.f32 %v2154, %v2202
        %2204 = vmatmul.bf16.gmra.mxu0 %v1125
        %v2205 = vpop.f32.mrf.mxu0
        %v2206 = vadd.f32 %v2157, %v2205
        %v2207 = vpop.f32.mrf.mxu0
        %v2208 = vadd.f32 %v2159, %v2207
        %2209 = vdwg.mxu0
        %2210 = vmatpush.bf16.msra.mxu0 %v1574
        %2211 = vmatpush.bf16.msra.mxu0 %v1571
        %2212 = vmatpush.bf16.msra.mxu0 %v1568
        %2213 = vmatpush.bf16.msra.mxu0 %v1565
        %2214 = vmatpush.bf16.msra.mxu0 %v1562
        %2215 = vmatpush.bf16.msra.mxu0 %v1559
        %2216 = vmatpush.bf16.msra.mxu0 %v1556
        %2217 = vmatpush.bf16.msra.mxu0 %v1553
        %2218 = vmatmul.bf16.gmra.mxu0 %v1098
        %v2219 = vpop.f32.mrf.mxu0
        %v2220 = vadd.f32 %v2171, %v2219
        %v2221 = vpop.f32.mrf.mxu0
        %v2222 = vadd.f32 %v2173, %v2221
        %2223 = vmatmul.bf16.gmra.mxu0 %v1102
        %v2224 = vpop.f32.mrf.mxu0
        %v2225 = vadd.f32 %v2176, %v2224
        %v2226 = vpop.f32.mrf.mxu0
        %v2227 = vadd.f32 %v2178, %v2226
        %2228 = vmatmul.bf16.gmra.mxu0 %v1106
        %v2229 = vpop.f32.mrf.mxu0
        %v2230 = vadd.f32 %v2181, %v2229
        %v2231 = vpop.f32.mrf.mxu0
        %v2232 = vadd.f32 %v2183, %v2231
        %2233 = vmatmul.bf16.gmra.mxu0 %v1110
        %v2234 = vpop.f32.mrf.mxu0
        %v2235 = vadd.f32 %v2186, %v2234
        %v2236 = vpop.f32.mrf.mxu0
        %v2237 = vadd.f32 %v2188, %v2236
        %2238 = vmatmul.bf16.gmra.mxu0 %v1114
        %v2239 = vpop.f32.mrf.mxu0
        %v2240 = vadd.f32 %v2191, %v2239
        %v2241 = vpop.f32.mrf.mxu0
        %v2242 = vadd.f32 %v2193, %v2241
        %2243 = vmatmul.bf16.gmra.mxu0 %v1118
        %v2244 = vpop.f32.mrf.mxu0
        %v2245 = vadd.f32 %v2196, %v2244
        %v2246 = vpop.f32.mrf.mxu0
        %v2247 = vadd.f32 %v2198, %v2246
        %2248 = vmatmul.bf16.gmra.mxu0 %v1122
        %v2249 = vpop.f32.mrf.mxu0
        %v2250 = vadd.f32 %v2201, %v2249
        %v2251 = vpop.f32.mrf.mxu0
        %v2252 = vadd.f32 %v2203, %v2251
        %2253 = vmatmul.bf16.gmra.mxu0 %v1126
        %v2254 = vpop.f32.mrf.mxu0
        %v2255 = vadd.f32 %v2206, %v2254
        %v2256 = vpop.f32.mrf.mxu0
        %v2257 = vadd.f32 %v2208, %v2256
        %2258 = vdwg.mxu0
        %v2291 = vunpack.c.l.b16 %v307
        %v2292 = vunpack.c.h.b16 %v307
        %v2293 = vunpack.c.l.b16 %v308
        %v2294 = vunpack.c.h.b16 %v308
        %v2295 = vunpack.c.l.b16 %v309
        %v2296 = vunpack.c.h.b16 %v309
        %v2297 = vunpack.c.l.b16 %v310
        %v2298 = vunpack.c.h.b16 %v310
        %v2299 = vunpack.c.l.b16 %v311
        %v2300 = vunpack.c.h.b16 %v311
        %v2301 = vunpack.c.l.b16 %v312
        %v2302 = vunpack.c.h.b16 %v312
        %v2303 = vunpack.c.l.b16 %v313
        %v2304 = vunpack.c.h.b16 %v313
        %v2305 = vunpack.c.l.b16 %v314
        %v2306 = vunpack.c.h.b16 %v314
        %v2307 = vunpack.c.l.b16 %v315
        %v2308 = vunpack.c.h.b16 %v315
        %v2309 = vunpack.c.l.b16 %v316
        %v2310 = vunpack.c.h.b16 %v316
        %v2311 = vunpack.c.l.b16 %v317
        %v2312 = vunpack.c.h.b16 %v317
        %v2313 = vunpack.c.l.b16 %v318
        %v2314 = vunpack.c.h.b16 %v318
        %v2315 = vunpack.c.l.b16 %v319
        %v2316 = vunpack.c.h.b16 %v319
        %v2317 = vunpack.c.l.b16 %v320
        %v2318 = vunpack.c.h.b16 %v320
        %v2319 = vunpack.c.l.b16 %v321
        %v2320 = vunpack.c.h.b16 %v321
        %v2321 = vunpack.c.l.b16 %v322
        %v2322 = vunpack.c.h.b16 %v322
        %v2323 = vunpack.c.l.b16 %v323
        %v2324 = vunpack.c.h.b16 %v323
        %v2325 = vunpack.c.l.b16 %v324
        %v2326 = vunpack.c.h.b16 %v324
        %v2327 = vunpack.c.l.b16 %v325
        %v2328 = vunpack.c.h.b16 %v325
        %v2329 = vunpack.c.l.b16 %v326
        %v2330 = vunpack.c.h.b16 %v326
        %v2331 = vunpack.c.l.b16 %v327
        %v2332 = vunpack.c.h.b16 %v327
        %v2333 = vunpack.c.l.b16 %v328
        %v2334 = vunpack.c.h.b16 %v328
        %v2335 = vunpack.c.l.b16 %v329
        %v2336 = vunpack.c.h.b16 %v329
        %v2337 = vunpack.c.l.b16 %v330
        %v2338 = vunpack.c.h.b16 %v330
        %v2339 = vunpack.c.l.b16 %v331
        %v2340 = vunpack.c.h.b16 %v331
        %v2341 = vunpack.c.l.b16 %v332
        %v2342 = vunpack.c.h.b16 %v332
        %v2343 = vunpack.c.l.b16 %v333
        %v2344 = vunpack.c.h.b16 %v333
        %v2345 = vunpack.c.l.b16 %v334
        %v2346 = vunpack.c.h.b16 %v334
        %v2347 = vunpack.c.l.b16 %v335
        %v2348 = vunpack.c.h.b16 %v335
        %v2349 = vunpack.c.l.b16 %v336
        %v2350 = vunpack.c.h.b16 %v336
        %v2351 = vunpack.c.l.b16 %v337
        %v2352 = vunpack.c.h.b16 %v337
        %v2353 = vunpack.c.l.b16 %v338
        %v2354 = vunpack.c.h.b16 %v338
        %v2355 = vpack.c.b16 %v2295, %v2291
        %v2356 = vpack.c.b16 %v2296, %v2292
        %v2357 = vpack.c.b16 %v2297, %v2293
        %v2358 = vpack.c.b16 %v2298, %v2294
        %v2359 = vpack.c.b16 %v2303, %v2299
        %v2360 = vpack.c.b16 %v2304, %v2300
        %v2361 = vpack.c.b16 %v2305, %v2301
        %v2362 = vpack.c.b16 %v2306, %v2302
        %v2363 = vpack.c.b16 %v2311, %v2307
        %v2364 = vpack.c.b16 %v2312, %v2308
        %v2365 = vpack.c.b16 %v2313, %v2309
        %v2366 = vpack.c.b16 %v2314, %v2310
        %v2367 = vpack.c.b16 %v2319, %v2315
        %v2368 = vpack.c.b16 %v2320, %v2316
        %v2369 = vpack.c.b16 %v2321, %v2317
        %v2370 = vpack.c.b16 %v2322, %v2318
        %v2371 = vpack.c.b16 %v2327, %v2323
        %v2372 = vpack.c.b16 %v2328, %v2324
        %v2373 = vpack.c.b16 %v2329, %v2325
        %v2374 = vpack.c.b16 %v2330, %v2326
        %v2375 = vpack.c.b16 %v2335, %v2331
        %v2376 = vpack.c.b16 %v2336, %v2332
        %v2377 = vpack.c.b16 %v2337, %v2333
        %v2378 = vpack.c.b16 %v2338, %v2334
        %v2379 = vpack.c.b16 %v2343, %v2339
        %v2380 = vpack.c.b16 %v2344, %v2340
        %v2381 = vpack.c.b16 %v2345, %v2341
        %v2382 = vpack.c.b16 %v2346, %v2342
        %v2383 = vpack.c.b16 %v2351, %v2347
        %v2384 = vpack.c.b16 %v2352, %v2348
        %v2385 = vpack.c.b16 %v2353, %v2349
        %v2386 = vpack.c.b16 %v2354, %v2350
        %v2547 = vunpack.c.l.b16 %v339
        %v2548 = vunpack.c.h.b16 %v339
        %v2549 = vunpack.c.l.b16 %v340
        %v2550 = vunpack.c.l.b16 %v341
        %v2551 = vunpack.c.h.b16 %v341
        %v2552 = vunpack.c.l.b16 %v342
        %v2553 = vunpack.c.l.b16 %v343
        %v2554 = vunpack.c.h.b16 %v343
        %v2555 = vunpack.c.l.b16 %v344
        %v2556 = vunpack.c.l.b16 %v345
        %v2557 = vunpack.c.h.b16 %v345
        %v2558 = vunpack.c.l.b16 %v346
        %v2559 = vunpack.c.l.b16 %v347
        %v2560 = vunpack.c.h.b16 %v347
        %v2561 = vunpack.c.l.b16 %v348
        %v2562 = vunpack.c.l.b16 %v349
        %v2563 = vunpack.c.h.b16 %v349
        %v2564 = vunpack.c.l.b16 %v350
        %v2565 = vunpack.c.l.b16 %v351
        %v2566 = vunpack.c.h.b16 %v351
        %v2567 = vunpack.c.l.b16 %v352
        %v2568 = vunpack.c.l.b16 %v353
        %v2569 = vunpack.c.h.b16 %v353
        %v2570 = vunpack.c.l.b16 %v354
        %v2571 = vunpack.c.l.b16 %v355
        %v2572 = vunpack.c.h.b16 %v355
        %v2573 = vunpack.c.l.b16 %v356
        %v2574 = vunpack.c.l.b16 %v357
        %v2575 = vunpack.c.h.b16 %v357
        %v2576 = vunpack.c.l.b16 %v358
        %v2577 = vunpack.c.l.b16 %v359
        %v2578 = vunpack.c.h.b16 %v359
        %v2579 = vunpack.c.l.b16 %v360
        %v2580 = vunpack.c.l.b16 %v361
        %v2581 = vunpack.c.h.b16 %v361
        %v2582 = vunpack.c.l.b16 %v362
        %v2583 = vunpack.c.l.b16 %v363
        %v2584 = vunpack.c.h.b16 %v363
        %v2585 = vunpack.c.l.b16 %v364
        %v2586 = vunpack.c.l.b16 %v365
        %v2587 = vunpack.c.h.b16 %v365
        %v2588 = vunpack.c.l.b16 %v366
        %v2589 = vunpack.c.l.b16 %v367
        %v2590 = vunpack.c.h.b16 %v367
        %v2591 = vunpack.c.l.b16 %v368
        %v2592 = vunpack.c.l.b16 %v369
        %v2593 = vunpack.c.h.b16 %v369
        %v2594 = vunpack.c.l.b16 %v370
        %v2595 = vunpack.c.l.b16 %v371
        %v2596 = vunpack.c.h.b16 %v371
        %v2597 = vunpack.c.l.b16 %v372
        %v2598 = vunpack.c.l.b16 %v373
        %v2599 = vunpack.c.h.b16 %v373
        %v2600 = vunpack.c.l.b16 %v374
        %v2601 = vunpack.c.l.b16 %v375
        %v2602 = vunpack.c.h.b16 %v375
        %v2603 = vunpack.c.l.b16 %v376
        %v2604 = vunpack.c.l.b16 %v377
        %v2605 = vunpack.c.h.b16 %v377
        %v2606 = vunpack.c.l.b16 %v378
        %v2607 = vunpack.c.l.b16 %v379
        %v2608 = vunpack.c.h.b16 %v379
        %v2609 = vunpack.c.l.b16 %v380
        %v2610 = vunpack.c.l.b16 %v381
        %v2611 = vunpack.c.h.b16 %v381
        %v2612 = vunpack.c.l.b16 %v382
        %v2613 = vunpack.c.l.b16 %v383
        %v2614 = vunpack.c.h.b16 %v383
        %v2615 = vunpack.c.l.b16 %v384
        %v2616 = vunpack.c.l.b16 %v385
        %v2617 = vunpack.c.h.b16 %v385
        %v2618 = vunpack.c.l.b16 %v386
        %v2619 = vunpack.c.l.b16 %v387
        %v2620 = vunpack.c.h.b16 %v387
        %v2621 = vunpack.c.l.b16 %v388
        %v2622 = vunpack.c.l.b16 %v389
        %v2623 = vunpack.c.h.b16 %v389
        %v2624 = vunpack.c.l.b16 %v390
        %v2625 = vunpack.c.l.b16 %v391
        %v2626 = vunpack.c.h.b16 %v391
        %v2627 = vunpack.c.l.b16 %v392
        %v2628 = vunpack.c.l.b16 %v393
        %v2629 = vunpack.c.h.b16 %v393
        %v2630 = vunpack.c.l.b16 %v394
        %v2631 = vunpack.c.l.b16 %v395
        %v2632 = vunpack.c.h.b16 %v395
        %v2633 = vunpack.c.l.b16 %v396
        %v2634 = vunpack.c.l.b16 %v397
        %v2635 = vunpack.c.h.b16 %v397
        %v2636 = vunpack.c.l.b16 %v398
        %v2637 = vunpack.c.l.b16 %v399
        %v2638 = vunpack.c.h.b16 %v399
        %v2639 = vunpack.c.l.b16 %v400
        %v2640 = vunpack.c.l.b16 %v401
        %v2641 = vunpack.c.h.b16 %v401
        %v2642 = vunpack.c.l.b16 %v402
        %v2643 = vunpack.c.l.b16 %v403
        %v2644 = vunpack.c.h.b16 %v403
        %v2645 = vunpack.c.l.b16 %v404
        %v2646 = vunpack.c.l.b16 %v405
        %v2647 = vunpack.c.h.b16 %v405
        %v2648 = vunpack.c.l.b16 %v406
        %v2649 = vunpack.c.l.b16 %v407
        %v2650 = vunpack.c.h.b16 %v407
        %v2651 = vunpack.c.l.b16 %v408
        %v2652 = vunpack.c.l.b16 %v409
        %v2653 = vunpack.c.h.b16 %v409
        %v2654 = vunpack.c.l.b16 %v410
        %v2655 = vunpack.c.l.b16 %v411
        %v2656 = vunpack.c.h.b16 %v411
        %v2657 = vunpack.c.l.b16 %v412
        %v2658 = vunpack.c.l.b16 %v413
        %v2659 = vunpack.c.h.b16 %v413
        %v2660 = vunpack.c.l.b16 %v414
        %v2661 = vunpack.c.l.b16 %v415
        %v2662 = vunpack.c.h.b16 %v415
        %v2663 = vunpack.c.l.b16 %v416
        %v2664 = vunpack.c.l.b16 %v417
        %v2665 = vunpack.c.h.b16 %v417
        %v2666 = vunpack.c.l.b16 %v418
        %v2667 = vunpack.c.l.b16 %v419
        %v2668 = vunpack.c.h.b16 %v419
        %v2669 = vunpack.c.l.b16 %v420
        %v2670 = vunpack.c.l.b16 %v421
        %v2671 = vunpack.c.h.b16 %v421
        %v2672 = vunpack.c.l.b16 %v422
        %v2673 = vunpack.c.l.b16 %v423
        %v2674 = vunpack.c.h.b16 %v423
        %v2675 = vunpack.c.l.b16 %v424
        %v2676 = vunpack.c.l.b16 %v425
        %v2677 = vunpack.c.h.b16 %v425
        %v2678 = vunpack.c.l.b16 %v426
        %v2679 = vunpack.c.l.b16 %v427
        %v2680 = vunpack.c.h.b16 %v427
        %v2681 = vunpack.c.l.b16 %v428
        %v2682 = vunpack.c.l.b16 %v429
        %v2683 = vunpack.c.h.b16 %v429
        %v2684 = vunpack.c.l.b16 %v430
        %v2685 = vunpack.c.l.b16 %v431
        %v2686 = vunpack.c.h.b16 %v431
        %v2687 = vunpack.c.l.b16 %v432
        %v2688 = vunpack.c.l.b16 %v433
        %v2689 = vunpack.c.h.b16 %v433
        %v2690 = vunpack.c.l.b16 %v434
        %v2691 = vunpack.c.l.b16 %v435
        %v2692 = vunpack.c.h.b16 %v435
        %v2693 = vunpack.c.l.b16 %v436
        %v2694 = vunpack.c.l.b16 %v437
        %v2695 = vunpack.c.h.b16 %v437
        %v2696 = vunpack.c.l.b16 %v438
        %v2697 = vunpack.c.l.b16 %v439
        %v2698 = vunpack.c.h.b16 %v439
        %v2699 = vunpack.c.l.b16 %v440
        %v2700 = vunpack.c.l.b16 %v441
        %v2701 = vunpack.c.h.b16 %v441
        %v2702 = vunpack.c.l.b16 %v442
        %v2703 = vunpack.c.l.b16 %v443
        %v2704 = vunpack.c.h.b16 %v443
        %v2705 = vunpack.c.l.b16 %v444
        %v2706 = vunpack.c.l.b16 %v445
        %v2707 = vunpack.c.h.b16 %v445
        %v2708 = vunpack.c.l.b16 %v446
        %v2709 = vunpack.c.l.b16 %v447
        %v2710 = vunpack.c.h.b16 %v447
        %v2711 = vunpack.c.l.b16 %v448
        %v2712 = vunpack.c.l.b16 %v449
        %v2713 = vunpack.c.h.b16 %v449
        %v2714 = vunpack.c.l.b16 %v450
        %v2715 = vunpack.c.l.b16 %v451
        %v2716 = vunpack.c.h.b16 %v451
        %v2717 = vunpack.c.l.b16 %v452
        %v2718 = vunpack.c.l.b16 %v453
        %v2719 = vunpack.c.h.b16 %v453
        %v2720 = vunpack.c.l.b16 %v454
        %v2721 = vunpack.c.l.b16 %v455
        %v2722 = vunpack.c.h.b16 %v455
        %v2723 = vunpack.c.l.b16 %v456
        %v2724 = vunpack.c.l.b16 %v457
        %v2725 = vunpack.c.h.b16 %v457
        %v2726 = vunpack.c.l.b16 %v458
        %v2727 = vunpack.c.l.b16 %v459
        %v2728 = vunpack.c.h.b16 %v459
        %v2729 = vunpack.c.l.b16 %v460
        %v2730 = vunpack.c.l.b16 %v461
        %v2731 = vunpack.c.h.b16 %v461
        %v2732 = vunpack.c.l.b16 %v462
        %v2733 = vunpack.c.l.b16 %v463
        %v2734 = vunpack.c.h.b16 %v463
        %v2735 = vunpack.c.l.b16 %v464
        %v2736 = vunpack.c.l.b16 %v465
        %v2737 = vunpack.c.h.b16 %v465
        %v2738 = vunpack.c.l.b16 %v466
        %v2739 = vpack.c.b16 %v2550, %v2547
        %v2740 = vpack.c.b16 %v2551, %v2548
        %v2741 = vpack.c.b16 %v2552, %v2549
        %v2742 = vpack.c.b16 %v2556, %v2553
        %v2743 = vpack.c.b16 %v2557, %v2554
        %v2744 = vpack.c.b16 %v2558, %v2555
        %v2745 = vpack.c.b16 %v2562, %v2559
        %v2746 = vpack.c.b16 %v2563, %v2560
        %v2747 = vpack.c.b16 %v2564, %v2561
        %v2748 = vpack.c.b16 %v2568, %v2565
        %v2749 = vpack.c.b16 %v2569, %v2566
        %v2750 = vpack.c.b16 %v2570, %v2567
        %v2751 = vpack.c.b16 %v2574, %v2571
        %v2752 = vpack.c.b16 %v2575, %v2572
        %v2753 = vpack.c.b16 %v2576, %v2573
        %v2754 = vpack.c.b16 %v2580, %v2577
        %v2755 = vpack.c.b16 %v2581, %v2578
        %v2756 = vpack.c.b16 %v2582, %v2579
        %v2757 = vpack.c.b16 %v2586, %v2583
        %v2758 = vpack.c.b16 %v2587, %v2584
        %v2759 = vpack.c.b16 %v2588, %v2585
        %v2760 = vpack.c.b16 %v2592, %v2589
        %v2761 = vpack.c.b16 %v2593, %v2590
        %v2762 = vpack.c.b16 %v2594, %v2591
        %v2763 = vpack.c.b16 %v2598, %v2595
        %v2764 = vpack.c.b16 %v2599, %v2596
        %v2765 = vpack.c.b16 %v2600, %v2597
        %v2766 = vpack.c.b16 %v2604, %v2601
        %v2767 = vpack.c.b16 %v2605, %v2602
        %v2768 = vpack.c.b16 %v2606, %v2603
        %v2769 = vpack.c.b16 %v2610, %v2607
        %v2770 = vpack.c.b16 %v2611, %v2608
        %v2771 = vpack.c.b16 %v2612, %v2609
        %v2772 = vpack.c.b16 %v2616, %v2613
        %v2773 = vpack.c.b16 %v2617, %v2614
        %v2774 = vpack.c.b16 %v2618, %v2615
        %v2775 = vpack.c.b16 %v2622, %v2619
        %v2776 = vpack.c.b16 %v2623, %v2620
        %v2777 = vpack.c.b16 %v2624, %v2621
        %v2778 = vpack.c.b16 %v2628, %v2625
        %v2779 = vpack.c.b16 %v2629, %v2626
        %v2780 = vpack.c.b16 %v2630, %v2627
        %v2781 = vpack.c.b16 %v2634, %v2631
        %v2782 = vpack.c.b16 %v2635, %v2632
        %v2783 = vpack.c.b16 %v2636, %v2633
        %v2784 = vpack.c.b16 %v2640, %v2637
        %v2785 = vpack.c.b16 %v2641, %v2638
        %v2786 = vpack.c.b16 %v2642, %v2639
        %v2787 = vpack.c.b16 %v2646, %v2643
        %v2788 = vpack.c.b16 %v2647, %v2644
        %v2789 = vpack.c.b16 %v2648, %v2645
        %v2790 = vpack.c.b16 %v2652, %v2649
        %v2791 = vpack.c.b16 %v2653, %v2650
        %v2792 = vpack.c.b16 %v2654, %v2651
        %v2793 = vpack.c.b16 %v2658, %v2655
        %v2794 = vpack.c.b16 %v2659, %v2656
        %v2795 = vpack.c.b16 %v2660, %v2657
        %v2796 = vpack.c.b16 %v2664, %v2661
        %v2797 = vpack.c.b16 %v2665, %v2662
        %v2798 = vpack.c.b16 %v2666, %v2663
        %v2799 = vpack.c.b16 %v2670, %v2667
        %v2800 = vpack.c.b16 %v2671, %v2668
        %v2801 = vpack.c.b16 %v2672, %v2669
        %v2802 = vpack.c.b16 %v2676, %v2673
        %v2803 = vpack.c.b16 %v2677, %v2674
        %v2804 = vpack.c.b16 %v2678, %v2675
        %v2805 = vpack.c.b16 %v2682, %v2679
        %v2806 = vpack.c.b16 %v2683, %v2680
        %v2807 = vpack.c.b16 %v2684, %v2681
        %v2808 = vpack.c.b16 %v2688, %v2685
        %v2809 = vpack.c.b16 %v2689, %v2686
        %v2810 = vpack.c.b16 %v2690, %v2687
        %v2811 = vpack.c.b16 %v2694, %v2691
        %v2812 = vpack.c.b16 %v2695, %v2692
        %v2813 = vpack.c.b16 %v2696, %v2693
        %v2814 = vpack.c.b16 %v2700, %v2697
        %v2815 = vpack.c.b16 %v2701, %v2698
        %v2816 = vpack.c.b16 %v2702, %v2699
        %v2817 = vpack.c.b16 %v2706, %v2703
        %v2818 = vpack.c.b16 %v2707, %v2704
        %v2819 = vpack.c.b16 %v2708, %v2705
        %v2820 = vpack.c.b16 %v2712, %v2709
        %v2821 = vpack.c.b16 %v2713, %v2710
        %v2822 = vpack.c.b16 %v2714, %v2711
        %v2823 = vpack.c.b16 %v2718, %v2715
        %v2824 = vpack.c.b16 %v2719, %v2716
        %v2825 = vpack.c.b16 %v2720, %v2717
        %v2826 = vpack.c.b16 %v2724, %v2721
        %v2827 = vpack.c.b16 %v2725, %v2722
        %v2828 = vpack.c.b16 %v2726, %v2723
        %v2829 = vpack.c.b16 %v2730, %v2727
        %v2830 = vpack.c.b16 %v2731, %v2728
        %v2831 = vpack.c.b16 %v2732, %v2729
        %v2832 = vpack.c.b16 %v2736, %v2733
        %v2833 = vpack.c.b16 %v2737, %v2734
        %v2834 = vpack.c.b16 %v2738, %v2735
        %2931 = vmatpush.bf16.msra.mxu0 %v2760
        %2932 = vmatpush.bf16.msra.mxu0 %v2757
        %2933 = vmatpush.bf16.msra.mxu0 %v2754
        %2934 = vmatpush.bf16.msra.mxu0 %v2751
        %2935 = vmatpush.bf16.msra.mxu0 %v2748
        %2936 = vmatpush.bf16.msra.mxu0 %v2745
        %2937 = vmatpush.bf16.msra.mxu0 %v2742
        %2938 = vmatpush.bf16.msra.mxu0 %v2739
        %2939 = vmatmul.bf16.gmra.mxu0 %v2355
        %v2940 = vpop.f32.mrf.mxu0
        %v2941 = vadd.f32 %v1828, %v2940
        %v2942 = vpop.f32.mrf.mxu0
        %v2943 = vadd.f32 %v1830, %v2942
        %2944 = vmatmul.bf16.gmra.mxu0 %v2359
        %v2945 = vpop.f32.mrf.mxu0
        %v2946 = vadd.f32 %v1833, %v2945
        %v2947 = vpop.f32.mrf.mxu0
        %v2948 = vadd.f32 %v1835, %v2947
        %2949 = vmatmul.bf16.gmra.mxu0 %v2363
        %v2950 = vpop.f32.mrf.mxu0
        %v2951 = vadd.f32 %v1838, %v2950
        %v2952 = vpop.f32.mrf.mxu0
        %v2953 = vadd.f32 %v1840, %v2952
        %2954 = vmatmul.bf16.gmra.mxu0 %v2367
        %v2955 = vpop.f32.mrf.mxu0
        %v2956 = vadd.f32 %v1843, %v2955
        %v2957 = vpop.f32.mrf.mxu0
        %v2958 = vadd.f32 %v1845, %v2957
        %2959 = vmatmul.bf16.gmra.mxu0 %v2371
        %v2960 = vpop.f32.mrf.mxu0
        %v2961 = vadd.f32 %v1848, %v2960
        %v2962 = vpop.f32.mrf.mxu0
        %v2963 = vadd.f32 %v1850, %v2962
        %2964 = vmatmul.bf16.gmra.mxu0 %v2375
        %v2965 = vpop.f32.mrf.mxu0
        %v2966 = vadd.f32 %v1853, %v2965
        %v2967 = vpop.f32.mrf.mxu0
        %v2968 = vadd.f32 %v1855, %v2967
        %2969 = vmatmul.bf16.gmra.mxu0 %v2379
        %v2970 = vpop.f32.mrf.mxu0
        %v2971 = vadd.f32 %v1858, %v2970
        %v2972 = vpop.f32.mrf.mxu0
        %v2973 = vadd.f32 %v1860, %v2972
        %2974 = vmatmul.bf16.gmra.mxu0 %v2383
        %v2975 = vpop.f32.mrf.mxu0
        %v2976 = vadd.f32 %v1863, %v2975
        %v2977 = vpop.f32.mrf.mxu0
        %v2978 = vadd.f32 %v1865, %v2977
        %2979 = vdwg.mxu0
        %2980 = vmatpush.bf16.msra.mxu0 %v2784
        %2981 = vmatpush.bf16.msra.mxu0 %v2781
        %2982 = vmatpush.bf16.msra.mxu0 %v2778
        %2983 = vmatpush.bf16.msra.mxu0 %v2775
        %2984 = vmatpush.bf16.msra.mxu0 %v2772
        %2985 = vmatpush.bf16.msra.mxu0 %v2769
        %2986 = vmatpush.bf16.msra.mxu0 %v2766
        %2987 = vmatpush.bf16.msra.mxu0 %v2763
        %2988 = vmatmul.bf16.gmra.mxu0 %v2356
        %v2989 = vpop.f32.mrf.mxu0
        %v2990 = vadd.f32 %v2941, %v2989
        %v2991 = vpop.f32.mrf.mxu0
        %v2992 = vadd.f32 %v2943, %v2991
        %2993 = vmatmul.bf16.gmra.mxu0 %v2360
        %v2994 = vpop.f32.mrf.mxu0
        %v2995 = vadd.f32 %v2946, %v2994
        %v2996 = vpop.f32.mrf.mxu0
        %v2997 = vadd.f32 %v2948, %v2996
        %2998 = vmatmul.bf16.gmra.mxu0 %v2364
        %v2999 = vpop.f32.mrf.mxu0
        %v3000 = vadd.f32 %v2951, %v2999
        %v3001 = vpop.f32.mrf.mxu0
        %v3002 = vadd.f32 %v2953, %v3001
        %3003 = vmatmul.bf16.gmra.mxu0 %v2368
        %v3004 = vpop.f32.mrf.mxu0
        %v3005 = vadd.f32 %v2956, %v3004
        %v3006 = vpop.f32.mrf.mxu0
        %v3007 = vadd.f32 %v2958, %v3006
        %3008 = vmatmul.bf16.gmra.mxu0 %v2372
        %v3009 = vpop.f32.mrf.mxu0
        %v3010 = vadd.f32 %v2961, %v3009
        %v3011 = vpop.f32.mrf.mxu0
        %v3012 = vadd.f32 %v2963, %v3011
        %3013 = vmatmul.bf16.gmra.mxu0 %v2376
        %v3014 = vpop.f32.mrf.mxu0
        %v3015 = vadd.f32 %v2966, %v3014
        %v3016 = vpop.f32.mrf.mxu0
        %v3017 = vadd.f32 %v2968, %v3016
        %3018 = vmatmul.bf16.gmra.mxu0 %v2380
        %v3019 = vpop.f32.mrf.mxu0
        %v3020 = vadd.f32 %v2971, %v3019
        %v3021 = vpop.f32.mrf.mxu0
        %v3022 = vadd.f32 %v2973, %v3021
        %3023 = vmatmul.bf16.gmra.mxu0 %v2384
        %v3024 = vpop.f32.mrf.mxu0
        %v3025 = vadd.f32 %v2976, %v3024
        %v3026 = vpop.f32.mrf.mxu0
        %v3027 = vadd.f32 %v2978, %v3026
        %3028 = vdwg.mxu0
        %3029 = vmatpush.bf16.msra.mxu0 %v2808
        %3030 = vmatpush.bf16.msra.mxu0 %v2805
        %3031 = vmatpush.bf16.msra.mxu0 %v2802
        %3032 = vmatpush.bf16.msra.mxu0 %v2799
        %3033 = vmatpush.bf16.msra.mxu0 %v2796
        %3034 = vmatpush.bf16.msra.mxu0 %v2793
        %3035 = vmatpush.bf16.msra.mxu0 %v2790
        %3036 = vmatpush.bf16.msra.mxu0 %v2787
        %3037 = vmatmul.bf16.gmra.mxu0 %v2357
        %v3038 = vpop.f32.mrf.mxu0
        %v3039 = vadd.f32 %v2990, %v3038
        %v3040 = vpop.f32.mrf.mxu0
        %v3041 = vadd.f32 %v2992, %v3040
        %3042 = vmatmul.bf16.gmra.mxu0 %v2361
        %v3043 = vpop.f32.mrf.mxu0
        %v3044 = vadd.f32 %v2995, %v3043
        %v3045 = vpop.f32.mrf.mxu0
        %v3046 = vadd.f32 %v2997, %v3045
        %3047 = vmatmul.bf16.gmra.mxu0 %v2365
        %v3048 = vpop.f32.mrf.mxu0
        %v3049 = vadd.f32 %v3000, %v3048
        %v3050 = vpop.f32.mrf.mxu0
        %v3051 = vadd.f32 %v3002, %v3050
        %3052 = vmatmul.bf16.gmra.mxu0 %v2369
        %v3053 = vpop.f32.mrf.mxu0
        %v3054 = vadd.f32 %v3005, %v3053
        %v3055 = vpop.f32.mrf.mxu0
        %v3056 = vadd.f32 %v3007, %v3055
        %3057 = vmatmul.bf16.gmra.mxu0 %v2373
        %v3058 = vpop.f32.mrf.mxu0
        %v3059 = vadd.f32 %v3010, %v3058
        %v3060 = vpop.f32.mrf.mxu0
        %v3061 = vadd.f32 %v3012, %v3060
        %3062 = vmatmul.bf16.gmra.mxu0 %v2377
        %v3063 = vpop.f32.mrf.mxu0
        %v3064 = vadd.f32 %v3015, %v3063
        %v3065 = vpop.f32.mrf.mxu0
        %v3066 = vadd.f32 %v3017, %v3065
        %3067 = vmatmul.bf16.gmra.mxu0 %v2381
        %v3068 = vpop.f32.mrf.mxu0
        %v3069 = vadd.f32 %v3020, %v3068
        %v3070 = vpop.f32.mrf.mxu0
        %v3071 = vadd.f32 %v3022, %v3070
        %3072 = vmatmul.bf16.gmra.mxu0 %v2385
        %v3073 = vpop.f32.mrf.mxu0
        %v3074 = vadd.f32 %v3025, %v3073
        %v3075 = vpop.f32.mrf.mxu0
        %v3076 = vadd.f32 %v3027, %v3075
        %3077 = vdwg.mxu0
        %3078 = vmatpush.bf16.msra.mxu0 %v2832
        %3079 = vmatpush.bf16.msra.mxu0 %v2829
        %3080 = vmatpush.bf16.msra.mxu0 %v2826
        %3081 = vmatpush.bf16.msra.mxu0 %v2823
        %3082 = vmatpush.bf16.msra.mxu0 %v2820
        %3083 = vmatpush.bf16.msra.mxu0 %v2817
        %3084 = vmatpush.bf16.msra.mxu0 %v2814
        %3085 = vmatpush.bf16.msra.mxu0 %v2811
        %3086 = vmatmul.bf16.gmra.mxu0 %v2358
        %v3087 = vpop.f32.mrf.mxu0
        %v3088 = vadd.f32 %v3039, %v3087
        %v3089 = vpop.f32.mrf.mxu0
        %v3090 = vadd.f32 %v3041, %v3089
        %3091 = vmatmul.bf16.gmra.mxu0 %v2362
        %v3092 = vpop.f32.mrf.mxu0
        %v3093 = vadd.f32 %v3044, %v3092
        %v3094 = vpop.f32.mrf.mxu0
        %v3095 = vadd.f32 %v3046, %v3094
        %3096 = vmatmul.bf16.gmra.mxu0 %v2366
        %v3097 = vpop.f32.mrf.mxu0
        %v3098 = vadd.f32 %v3049, %v3097
        %v3099 = vpop.f32.mrf.mxu0
        %v3100 = vadd.f32 %v3051, %v3099
        %3101 = vmatmul.bf16.gmra.mxu0 %v2370
        %v3102 = vpop.f32.mrf.mxu0
        %v3103 = vadd.f32 %v3054, %v3102
        %v3104 = vpop.f32.mrf.mxu0
        %v3105 = vadd.f32 %v3056, %v3104
        %3106 = vmatmul.bf16.gmra.mxu0 %v2374
        %v3107 = vpop.f32.mrf.mxu0
        %v3108 = vadd.f32 %v3059, %v3107
        %v3109 = vpop.f32.mrf.mxu0
        %v3110 = vadd.f32 %v3061, %v3109
        %3111 = vmatmul.bf16.gmra.mxu0 %v2378
        %v3112 = vpop.f32.mrf.mxu0
        %v3113 = vadd.f32 %v3064, %v3112
        %v3114 = vpop.f32.mrf.mxu0
        %v3115 = vadd.f32 %v3066, %v3114
        %3116 = vmatmul.bf16.gmra.mxu0 %v2382
        %v3117 = vpop.f32.mrf.mxu0
        %v3118 = vadd.f32 %v3069, %v3117
        %v3119 = vpop.f32.mrf.mxu0
        %v3120 = vadd.f32 %v3071, %v3119
        %3121 = vmatmul.bf16.gmra.mxu0 %v2386
        %v3122 = vpop.f32.mrf.mxu0
        %v3123 = vadd.f32 %v3074, %v3122
        %v3124 = vpop.f32.mrf.mxu0
        %v3125 = vadd.f32 %v3076, %v3124
        %3126 = vdwg.mxu0
        %3127 = vmatpush.bf16.msra.mxu0 %v2761
        %3128 = vmatpush.bf16.msra.mxu0 %v2758
        %3129 = vmatpush.bf16.msra.mxu0 %v2755
        %3130 = vmatpush.bf16.msra.mxu0 %v2752
        %3131 = vmatpush.bf16.msra.mxu0 %v2749
        %3132 = vmatpush.bf16.msra.mxu0 %v2746
        %3133 = vmatpush.bf16.msra.mxu0 %v2743
        %3134 = vmatpush.bf16.msra.mxu0 %v2740
        %3135 = vmatmul.bf16.gmra.mxu0 %v2355
        %v3136 = vpop.f32.mrf.mxu0
        %v3137 = vadd.f32 %v2024, %v3136
        %v3138 = vpop.f32.mrf.mxu0
        %v3139 = vadd.f32 %v2026, %v3138
        %3140 = vmatmul.bf16.gmra.mxu0 %v2359
        %v3141 = vpop.f32.mrf.mxu0
        %v3142 = vadd.f32 %v2029, %v3141
        %v3143 = vpop.f32.mrf.mxu0
        %v3144 = vadd.f32 %v2031, %v3143
        %3145 = vmatmul.bf16.gmra.mxu0 %v2363
        %v3146 = vpop.f32.mrf.mxu0
        %v3147 = vadd.f32 %v2034, %v3146
        %v3148 = vpop.f32.mrf.mxu0
        %v3149 = vadd.f32 %v2036, %v3148
        %3150 = vmatmul.bf16.gmra.mxu0 %v2367
        %v3151 = vpop.f32.mrf.mxu0
        %v3152 = vadd.f32 %v2039, %v3151
        %v3153 = vpop.f32.mrf.mxu0
        %v3154 = vadd.f32 %v2041, %v3153
        %3155 = vmatmul.bf16.gmra.mxu0 %v2371
        %v3156 = vpop.f32.mrf.mxu0
        %v3157 = vadd.f32 %v2044, %v3156
        %v3158 = vpop.f32.mrf.mxu0
        %v3159 = vadd.f32 %v2046, %v3158
        %3160 = vmatmul.bf16.gmra.mxu0 %v2375
        %v3161 = vpop.f32.mrf.mxu0
        %v3162 = vadd.f32 %v2049, %v3161
        %v3163 = vpop.f32.mrf.mxu0
        %v3164 = vadd.f32 %v2051, %v3163
        %3165 = vmatmul.bf16.gmra.mxu0 %v2379
        %v3166 = vpop.f32.mrf.mxu0
        %v3167 = vadd.f32 %v2054, %v3166
        %v3168 = vpop.f32.mrf.mxu0
        %v3169 = vadd.f32 %v2056, %v3168
        %3170 = vmatmul.bf16.gmra.mxu0 %v2383
        %v3171 = vpop.f32.mrf.mxu0
        %v3172 = vadd.f32 %v2059, %v3171
        %v3173 = vpop.f32.mrf.mxu0
        %v3174 = vadd.f32 %v2061, %v3173
        %3175 = vdwg.mxu0
        %3176 = vmatpush.bf16.msra.mxu0 %v2785
        %3177 = vmatpush.bf16.msra.mxu0 %v2782
        %3178 = vmatpush.bf16.msra.mxu0 %v2779
        %3179 = vmatpush.bf16.msra.mxu0 %v2776
        %3180 = vmatpush.bf16.msra.mxu0 %v2773
        %3181 = vmatpush.bf16.msra.mxu0 %v2770
        %3182 = vmatpush.bf16.msra.mxu0 %v2767
        %3183 = vmatpush.bf16.msra.mxu0 %v2764
        %3184 = vmatmul.bf16.gmra.mxu0 %v2356
        %v3185 = vpop.f32.mrf.mxu0
        %v3186 = vadd.f32 %v3137, %v3185
        %v3187 = vpop.f32.mrf.mxu0
        %v3188 = vadd.f32 %v3139, %v3187
        %3189 = vmatmul.bf16.gmra.mxu0 %v2360
        %v3190 = vpop.f32.mrf.mxu0
        %v3191 = vadd.f32 %v3142, %v3190
        %v3192 = vpop.f32.mrf.mxu0
        %v3193 = vadd.f32 %v3144, %v3192
        %3194 = vmatmul.bf16.gmra.mxu0 %v2364
        %v3195 = vpop.f32.mrf.mxu0
        %v3196 = vadd.f32 %v3147, %v3195
        %v3197 = vpop.f32.mrf.mxu0
        %v3198 = vadd.f32 %v3149, %v3197
        %3199 = vmatmul.bf16.gmra.mxu0 %v2368
        %v3200 = vpop.f32.mrf.mxu0
        %v3201 = vadd.f32 %v3152, %v3200
        %v3202 = vpop.f32.mrf.mxu0
        %v3203 = vadd.f32 %v3154, %v3202
        %3204 = vmatmul.bf16.gmra.mxu0 %v2372
        %v3205 = vpop.f32.mrf.mxu0
        %v3206 = vadd.f32 %v3157, %v3205
        %v3207 = vpop.f32.mrf.mxu0
        %v3208 = vadd.f32 %v3159, %v3207
        %3209 = vmatmul.bf16.gmra.mxu0 %v2376
        %v3210 = vpop.f32.mrf.mxu0
        %v3211 = vadd.f32 %v3162, %v3210
        %v3212 = vpop.f32.mrf.mxu0
        %v3213 = vadd.f32 %v3164, %v3212
        %3214 = vmatmul.bf16.gmra.mxu0 %v2380
        %v3215 = vpop.f32.mrf.mxu0
        %v3216 = vadd.f32 %v3167, %v3215
        %v3217 = vpop.f32.mrf.mxu0
        %v3218 = vadd.f32 %v3169, %v3217
        %3219 = vmatmul.bf16.gmra.mxu0 %v2384
        %v3220 = vpop.f32.mrf.mxu0
        %v3221 = vadd.f32 %v3172, %v3220
        %v3222 = vpop.f32.mrf.mxu0
        %v3223 = vadd.f32 %v3174, %v3222
        %3224 = vdwg.mxu0
        %3225 = vmatpush.bf16.msra.mxu0 %v2809
        %3226 = vmatpush.bf16.msra.mxu0 %v2806
        %3227 = vmatpush.bf16.msra.mxu0 %v2803
        %3228 = vmatpush.bf16.msra.mxu0 %v2800
        %3229 = vmatpush.bf16.msra.mxu0 %v2797
        %3230 = vmatpush.bf16.msra.mxu0 %v2794
        %3231 = vmatpush.bf16.msra.mxu0 %v2791
        %3232 = vmatpush.bf16.msra.mxu0 %v2788
        %3233 = vmatmul.bf16.gmra.mxu0 %v2357
        %v3234 = vpop.f32.mrf.mxu0
        %v3235 = vadd.f32 %v3186, %v3234
        %v3236 = vpop.f32.mrf.mxu0
        %v3237 = vadd.f32 %v3188, %v3236
        %3238 = vmatmul.bf16.gmra.mxu0 %v2361
        %v3239 = vpop.f32.mrf.mxu0
        %v3240 = vadd.f32 %v3191, %v3239
        %v3241 = vpop.f32.mrf.mxu0
        %v3242 = vadd.f32 %v3193, %v3241
        %3243 = vmatmul.bf16.gmra.mxu0 %v2365
        %v3244 = vpop.f32.mrf.mxu0
        %v3245 = vadd.f32 %v3196, %v3244
        %v3246 = vpop.f32.mrf.mxu0
        %v3247 = vadd.f32 %v3198, %v3246
        %3248 = vmatmul.bf16.gmra.mxu0 %v2369
        %v3249 = vpop.f32.mrf.mxu0
        %v3250 = vadd.f32 %v3201, %v3249
        %v3251 = vpop.f32.mrf.mxu0
        %v3252 = vadd.f32 %v3203, %v3251
        %3253 = vmatmul.bf16.gmra.mxu0 %v2373
        %v3254 = vpop.f32.mrf.mxu0
        %v3255 = vadd.f32 %v3206, %v3254
        %v3256 = vpop.f32.mrf.mxu0
        %v3257 = vadd.f32 %v3208, %v3256
        %3258 = vmatmul.bf16.gmra.mxu0 %v2377
        %v3259 = vpop.f32.mrf.mxu0
        %v3260 = vadd.f32 %v3211, %v3259
        %v3261 = vpop.f32.mrf.mxu0
        %v3262 = vadd.f32 %v3213, %v3261
        %3263 = vmatmul.bf16.gmra.mxu0 %v2381
        %v3264 = vpop.f32.mrf.mxu0
        %v3265 = vadd.f32 %v3216, %v3264
        %v3266 = vpop.f32.mrf.mxu0
        %v3267 = vadd.f32 %v3218, %v3266
        %3268 = vmatmul.bf16.gmra.mxu0 %v2385
        %v3269 = vpop.f32.mrf.mxu0
        %v3270 = vadd.f32 %v3221, %v3269
        %v3271 = vpop.f32.mrf.mxu0
        %v3272 = vadd.f32 %v3223, %v3271
        %3273 = vdwg.mxu0
        %3274 = vmatpush.bf16.msra.mxu0 %v2833
        %3275 = vmatpush.bf16.msra.mxu0 %v2830
        %3276 = vmatpush.bf16.msra.mxu0 %v2827
        %3277 = vmatpush.bf16.msra.mxu0 %v2824
        %3278 = vmatpush.bf16.msra.mxu0 %v2821
        %3279 = vmatpush.bf16.msra.mxu0 %v2818
        %3280 = vmatpush.bf16.msra.mxu0 %v2815
        %3281 = vmatpush.bf16.msra.mxu0 %v2812
        %3282 = vmatmul.bf16.gmra.mxu0 %v2358
        %v3283 = vpop.f32.mrf.mxu0
        %v3284 = vadd.f32 %v3235, %v3283
        %v3285 = vpop.f32.mrf.mxu0
        %v3286 = vadd.f32 %v3237, %v3285
        %3287 = vmatmul.bf16.gmra.mxu0 %v2362
        %v3288 = vpop.f32.mrf.mxu0
        %v3289 = vadd.f32 %v3240, %v3288
        %v3290 = vpop.f32.mrf.mxu0
        %v3291 = vadd.f32 %v3242, %v3290
        %3292 = vmatmul.bf16.gmra.mxu0 %v2366
        %v3293 = vpop.f32.mrf.mxu0
        %v3294 = vadd.f32 %v3245, %v3293
        %v3295 = vpop.f32.mrf.mxu0
        %v3296 = vadd.f32 %v3247, %v3295
        %3297 = vmatmul.bf16.gmra.mxu0 %v2370
        %v3298 = vpop.f32.mrf.mxu0
        %v3299 = vadd.f32 %v3250, %v3298
        %v3300 = vpop.f32.mrf.mxu0
        %v3301 = vadd.f32 %v3252, %v3300
        %3302 = vmatmul.bf16.gmra.mxu0 %v2374
        %v3303 = vpop.f32.mrf.mxu0
        %v3304 = vadd.f32 %v3255, %v3303
        %v3305 = vpop.f32.mrf.mxu0
        %v3306 = vadd.f32 %v3257, %v3305
        %3307 = vmatmul.bf16.gmra.mxu0 %v2378
        %v3308 = vpop.f32.mrf.mxu0
        %v3309 = vadd.f32 %v3260, %v3308
        %v3310 = vpop.f32.mrf.mxu0
        %v3311 = vadd.f32 %v3262, %v3310
        %3312 = vmatmul.bf16.gmra.mxu0 %v2382
        %v3313 = vpop.f32.mrf.mxu0
        %v3314 = vadd.f32 %v3265, %v3313
        %v3315 = vpop.f32.mrf.mxu0
        %v3316 = vadd.f32 %v3267, %v3315
        %3317 = vmatmul.bf16.gmra.mxu0 %v2386
        %v3318 = vpop.f32.mrf.mxu0
        %v3319 = vadd.f32 %v3270, %v3318
        %v3320 = vpop.f32.mrf.mxu0
        %v3321 = vadd.f32 %v3272, %v3320
        %3322 = vdwg.mxu0
        %3323 = vmatpush.bf16.msra.mxu0 %v2762
        %3324 = vmatpush.bf16.msra.mxu0 %v2759
        %3325 = vmatpush.bf16.msra.mxu0 %v2756
        %3326 = vmatpush.bf16.msra.mxu0 %v2753
        %3327 = vmatpush.bf16.msra.mxu0 %v2750
        %3328 = vmatpush.bf16.msra.mxu0 %v2747
        %3329 = vmatpush.bf16.msra.mxu0 %v2744
        %3330 = vmatpush.bf16.msra.mxu0 %v2741
        %3331 = vmatmul.bf16.gmra.mxu0 %v2355
        %v3332 = vpop.f32.mrf.mxu0
        %v3333 = vadd.f32 %v2220, %v3332
        %v3334 = vpop.f32.mrf.mxu0
        %v3335 = vadd.f32 %v2222, %v3334
        %3336 = vmatmul.bf16.gmra.mxu0 %v2359
        %v3337 = vpop.f32.mrf.mxu0
        %v3338 = vadd.f32 %v2225, %v3337
        %v3339 = vpop.f32.mrf.mxu0
        %v3340 = vadd.f32 %v2227, %v3339
        %3341 = vmatmul.bf16.gmra.mxu0 %v2363
        %v3342 = vpop.f32.mrf.mxu0
        %v3343 = vadd.f32 %v2230, %v3342
        %v3344 = vpop.f32.mrf.mxu0
        %v3345 = vadd.f32 %v2232, %v3344
        %3346 = vmatmul.bf16.gmra.mxu0 %v2367
        %v3347 = vpop.f32.mrf.mxu0
        %v3348 = vadd.f32 %v2235, %v3347
        %v3349 = vpop.f32.mrf.mxu0
        %v3350 = vadd.f32 %v2237, %v3349
        %3351 = vmatmul.bf16.gmra.mxu0 %v2371
        %v3352 = vpop.f32.mrf.mxu0
        %v3353 = vadd.f32 %v2240, %v3352
        %v3354 = vpop.f32.mrf.mxu0
        %v3355 = vadd.f32 %v2242, %v3354
        %3356 = vmatmul.bf16.gmra.mxu0 %v2375
        %v3357 = vpop.f32.mrf.mxu0
        %v3358 = vadd.f32 %v2245, %v3357
        %v3359 = vpop.f32.mrf.mxu0
        %v3360 = vadd.f32 %v2247, %v3359
        %3361 = vmatmul.bf16.gmra.mxu0 %v2379
        %v3362 = vpop.f32.mrf.mxu0
        %v3363 = vadd.f32 %v2250, %v3362
        %v3364 = vpop.f32.mrf.mxu0
        %v3365 = vadd.f32 %v2252, %v3364
        %3366 = vmatmul.bf16.gmra.mxu0 %v2383
        %v3367 = vpop.f32.mrf.mxu0
        %v3368 = vadd.f32 %v2255, %v3367
        %v3369 = vpop.f32.mrf.mxu0
        %v3370 = vadd.f32 %v2257, %v3369
        %3371 = vdwg.mxu0
        %3372 = vmatpush.bf16.msra.mxu0 %v2786
        %3373 = vmatpush.bf16.msra.mxu0 %v2783
        %3374 = vmatpush.bf16.msra.mxu0 %v2780
        %3375 = vmatpush.bf16.msra.mxu0 %v2777
        %3376 = vmatpush.bf16.msra.mxu0 %v2774
        %3377 = vmatpush.bf16.msra.mxu0 %v2771
        %3378 = vmatpush.bf16.msra.mxu0 %v2768
        %3379 = vmatpush.bf16.msra.mxu0 %v2765
        %3380 = vmatmul.bf16.gmra.mxu0 %v2356
        %v3381 = vpop.f32.mrf.mxu0
        %v3382 = vadd.f32 %v3333, %v3381
        %v3383 = vpop.f32.mrf.mxu0
        %v3384 = vadd.f32 %v3335, %v3383
        %3385 = vmatmul.bf16.gmra.mxu0 %v2360
        %v3386 = vpop.f32.mrf.mxu0
        %v3387 = vadd.f32 %v3338, %v3386
        %v3388 = vpop.f32.mrf.mxu0
        %v3389 = vadd.f32 %v3340, %v3388
        %3390 = vmatmul.bf16.gmra.mxu0 %v2364
        %v3391 = vpop.f32.mrf.mxu0
        %v3392 = vadd.f32 %v3343, %v3391
        %v3393 = vpop.f32.mrf.mxu0
        %v3394 = vadd.f32 %v3345, %v3393
        %3395 = vmatmul.bf16.gmra.mxu0 %v2368
        %v3396 = vpop.f32.mrf.mxu0
        %v3397 = vadd.f32 %v3348, %v3396
        %v3398 = vpop.f32.mrf.mxu0
        %v3399 = vadd.f32 %v3350, %v3398
        %3400 = vmatmul.bf16.gmra.mxu0 %v2372
        %v3401 = vpop.f32.mrf.mxu0
        %v3402 = vadd.f32 %v3353, %v3401
        %v3403 = vpop.f32.mrf.mxu0
        %v3404 = vadd.f32 %v3355, %v3403
        %3405 = vmatmul.bf16.gmra.mxu0 %v2376
        %v3406 = vpop.f32.mrf.mxu0
        %v3407 = vadd.f32 %v3358, %v3406
        %v3408 = vpop.f32.mrf.mxu0
        %v3409 = vadd.f32 %v3360, %v3408
        %3410 = vmatmul.bf16.gmra.mxu0 %v2380
        %v3411 = vpop.f32.mrf.mxu0
        %v3412 = vadd.f32 %v3363, %v3411
        %v3413 = vpop.f32.mrf.mxu0
        %v3414 = vadd.f32 %v3365, %v3413
        %3415 = vmatmul.bf16.gmra.mxu0 %v2384
        %v3416 = vpop.f32.mrf.mxu0
        %v3417 = vadd.f32 %v3368, %v3416
        %v3418 = vpop.f32.mrf.mxu0
        %v3419 = vadd.f32 %v3370, %v3418
        %3420 = vdwg.mxu0
        %3421 = vmatpush.bf16.msra.mxu0 %v2810
        %3422 = vmatpush.bf16.msra.mxu0 %v2807
        %3423 = vmatpush.bf16.msra.mxu0 %v2804
        %3424 = vmatpush.bf16.msra.mxu0 %v2801
        %3425 = vmatpush.bf16.msra.mxu0 %v2798
        %3426 = vmatpush.bf16.msra.mxu0 %v2795
        %3427 = vmatpush.bf16.msra.mxu0 %v2792
        %3428 = vmatpush.bf16.msra.mxu0 %v2789
        %3429 = vmatmul.bf16.gmra.mxu0 %v2357
        %v3430 = vpop.f32.mrf.mxu0
        %v3431 = vadd.f32 %v3382, %v3430
        %v3432 = vpop.f32.mrf.mxu0
        %v3433 = vadd.f32 %v3384, %v3432
        %3434 = vmatmul.bf16.gmra.mxu0 %v2361
        %v3435 = vpop.f32.mrf.mxu0
        %v3436 = vadd.f32 %v3387, %v3435
        %v3437 = vpop.f32.mrf.mxu0
        %v3438 = vadd.f32 %v3389, %v3437
        %3439 = vmatmul.bf16.gmra.mxu0 %v2365
        %v3440 = vpop.f32.mrf.mxu0
        %v3441 = vadd.f32 %v3392, %v3440
        %v3442 = vpop.f32.mrf.mxu0
        %v3443 = vadd.f32 %v3394, %v3442
        %3444 = vmatmul.bf16.gmra.mxu0 %v2369
        %v3445 = vpop.f32.mrf.mxu0
        %v3446 = vadd.f32 %v3397, %v3445
        %v3447 = vpop.f32.mrf.mxu0
        %v3448 = vadd.f32 %v3399, %v3447
        %3449 = vmatmul.bf16.gmra.mxu0 %v2373
        %v3450 = vpop.f32.mrf.mxu0
        %v3451 = vadd.f32 %v3402, %v3450
        %v3452 = vpop.f32.mrf.mxu0
        %v3453 = vadd.f32 %v3404, %v3452
        %3454 = vmatmul.bf16.gmra.mxu0 %v2377
        %v3455 = vpop.f32.mrf.mxu0
        %v3456 = vadd.f32 %v3407, %v3455
        %v3457 = vpop.f32.mrf.mxu0
        %v3458 = vadd.f32 %v3409, %v3457
        %3459 = vmatmul.bf16.gmra.mxu0 %v2381
        %v3460 = vpop.f32.mrf.mxu0
        %v3461 = vadd.f32 %v3412, %v3460
        %v3462 = vpop.f32.mrf.mxu0
        %v3463 = vadd.f32 %v3414, %v3462
        %3464 = vmatmul.bf16.gmra.mxu0 %v2385
        %v3465 = vpop.f32.mrf.mxu0
        %v3466 = vadd.f32 %v3417, %v3465
        %v3467 = vpop.f32.mrf.mxu0
        %v3468 = vadd.f32 %v3419, %v3467
        %3469 = vdwg.mxu0
        %3470 = vmatpush.bf16.msra.mxu0 %v2834
        %3471 = vmatpush.bf16.msra.mxu0 %v2831
        %3472 = vmatpush.bf16.msra.mxu0 %v2828
        %3473 = vmatpush.bf16.msra.mxu0 %v2825
        %3474 = vmatpush.bf16.msra.mxu0 %v2822
        %3475 = vmatpush.bf16.msra.mxu0 %v2819
        %3476 = vmatpush.bf16.msra.mxu0 %v2816
        %3477 = vmatpush.bf16.msra.mxu0 %v2813
        %3478 = vmatmul.bf16.gmra.mxu0 %v2358
        %v3479 = vpop.f32.mrf.mxu0
        %v3480 = vadd.f32 %v3431, %v3479
        %v3481 = vpop.f32.mrf.mxu0
        %v3482 = vadd.f32 %v3433, %v3481
        %3483 = vmatmul.bf16.gmra.mxu0 %v2362
        %v3484 = vpop.f32.mrf.mxu0
        %v3485 = vadd.f32 %v3436, %v3484
        %v3486 = vpop.f32.mrf.mxu0
        %v3487 = vadd.f32 %v3438, %v3486
        %3488 = vmatmul.bf16.gmra.mxu0 %v2366
        %v3489 = vpop.f32.mrf.mxu0
        %v3490 = vadd.f32 %v3441, %v3489
        %v3491 = vpop.f32.mrf.mxu0
        %v3492 = vadd.f32 %v3443, %v3491
        %3493 = vmatmul.bf16.gmra.mxu0 %v2370
        %v3494 = vpop.f32.mrf.mxu0
        %v3495 = vadd.f32 %v3446, %v3494
        %v3496 = vpop.f32.mrf.mxu0
        %v3497 = vadd.f32 %v3448, %v3496
        %3498 = vmatmul.bf16.gmra.mxu0 %v2374
        %v3499 = vpop.f32.mrf.mxu0
        %v3500 = vadd.f32 %v3451, %v3499
        %v3501 = vpop.f32.mrf.mxu0
        %v3502 = vadd.f32 %v3453, %v3501
        %3503 = vmatmul.bf16.gmra.mxu0 %v2378
        %v3504 = vpop.f32.mrf.mxu0
        %v3505 = vadd.f32 %v3456, %v3504
        %v3506 = vpop.f32.mrf.mxu0
        %v3507 = vadd.f32 %v3458, %v3506
        %3508 = vmatmul.bf16.gmra.mxu0 %v2382
        %v3509 = vpop.f32.mrf.mxu0
        %v3510 = vadd.f32 %v3461, %v3509
        %v3511 = vpop.f32.mrf.mxu0
        %v3512 = vadd.f32 %v3463, %v3511
        %3513 = vmatmul.bf16.gmra.mxu0 %v2386
        %v3514 = vpop.f32.mrf.mxu0
        %v3515 = vadd.f32 %v3466, %v3514
        %v3516 = vpop.f32.mrf.mxu0
        %v3517 = vadd.f32 %v3468, %v3516
        %3518 = vdwg.mxu0
        %v3519 = vld [vmem:[%s258] sm:$0xee]
        %v3520 = vld [vmem:[%s258 + $0x8] sm:$0xee]
        %v3521 = vld [vmem:[%s258 + $0x30] sm:$0xee]
        %v3522 = vld [vmem:[%s258 + $0x38] sm:$0xee]
        %v3523 = vld [vmem:[%s258 + $0x60] sm:$0xee]
        %v3524 = vld [vmem:[%s258 + $0x68] sm:$0xee]
        %v3525 = vld [vmem:[%s258 + $0x90] sm:$0xee]
        %v3526 = vld [vmem:[%s258 + $0x98] sm:$0xee]
        %v3527 = vld [vmem:[%s258 + $0xc0] sm:$0xee]
        %v3528 = vld [vmem:[%s258 + $0xc8] sm:$0xee]
        %v3529 = vld [vmem:[%s258 + $0xf0] sm:$0xee]
        %v3530 = vld [vmem:[%s258 + $0xf8] sm:$0xee]
        %v3531 = vld [vmem:[%s258 + $0x120] sm:$0xee]
        %v3532 = vld [vmem:[%s258 + $0x128] sm:$0xee]
        %v3533 = vld [vmem:[%s258 + $0x150] sm:$0xee]
        %v3534 = vld [vmem:[%s258 + $0x158] sm:$0xee]
        %vm3583 = vcmask 1042432
        %vm3584 = vcmask 1046532
        %vm3585 = vmor %vm3583, %vm3584
        %v3586 = vrot.slane %v3519, 5
        %v3587 = vrot.slane %v3586, 4
        %v3588 = vrot.slane %v469, 5
        %v3589 = vsel %vm3585, %v3587, %v3588
        %v3590 = vrot.slane %v3520, 5
        %v3591 = vrot.slane %v3590, 4
        %v3592 = vrot.slane %v470, 5
        %v3593 = vsel %vm3585, %v3591, %v3592
        %v3594 = vrot.slane %v3588, 4
        %v3595 = vrot.slane %v471, 5
        %v3596 = vsel %vm3585, %v3594, %v3595
        %v3597 = vrot.slane %v3592, 4
        %v3598 = vrot.slane %v472, 5
        %v3599 = vsel %vm3585, %v3597, %v3598
        %v3600 = vrot.slane %v3521, 5
        %v3601 = vrot.slane %v3600, 4
        %v3602 = vrot.slane %v475, 5
        %v3603 = vsel %vm3585, %v3601, %v3602
        %v3604 = vrot.slane %v3522, 5
        %v3605 = vrot.slane %v3604, 4
        %v3606 = vrot.slane %v476, 5
        %v3607 = vsel %vm3585, %v3605, %v3606
        %v3608 = vrot.slane %v3602, 4
        %v3609 = vrot.slane %v477, 5
        %v3610 = vsel %vm3585, %v3608, %v3609
        %v3611 = vrot.slane %v3606, 4
        %v3612 = vrot.slane %v478, 5
        %v3613 = vsel %vm3585, %v3611, %v3612
        %v3614 = vrot.slane %v3523, 5
        %v3615 = vrot.slane %v3614, 4
        %v3616 = vrot.slane %v481, 5
        %v3617 = vsel %vm3585, %v3615, %v3616
        %v3618 = vrot.slane %v3524, 5
        %v3619 = vrot.slane %v3618, 4
        %v3620 = vrot.slane %v482, 5
        %v3621 = vsel %vm3585, %v3619, %v3620
        %v3622 = vrot.slane %v3616, 4
        %v3623 = vrot.slane %v483, 5
        %v3624 = vsel %vm3585, %v3622, %v3623
        %v3625 = vrot.slane %v3620, 4
        %v3626 = vrot.slane %v484, 5
        %v3627 = vsel %vm3585, %v3625, %v3626
        %v3628 = vrot.slane %v3525, 5
        %v3629 = vrot.slane %v3628, 4
        %v3630 = vrot.slane %v487, 5
        %v3631 = vsel %vm3585, %v3629, %v3630
        %v3632 = vrot.slane %v3526, 5
        %v3633 = vrot.slane %v3632, 4
        %v3634 = vrot.slane %v488, 5
        %v3635 = vsel %vm3585, %v3633, %v3634
        %v3636 = vrot.slane %v3630, 4
        %v3637 = vrot.slane %v489, 5
        %v3638 = vsel %vm3585, %v3636, %v3637
        %v3639 = vrot.slane %v3634, 4
        %v3640 = vrot.slane %v490, 5
        %v3641 = vsel %vm3585, %v3639, %v3640
        %v3642 = vrot.slane %v3527, 5
        %v3643 = vrot.slane %v3642, 4
        %v3644 = vrot.slane %v493, 5
        %v3645 = vsel %vm3585, %v3643, %v3644
        %v3646 = vrot.slane %v3528, 5
        %v3647 = vrot.slane %v3646, 4
        %v3648 = vrot.slane %v494, 5
        %v3649 = vsel %vm3585, %v3647, %v3648
        %v3650 = vrot.slane %v3644, 4
        %v3651 = vrot.slane %v495, 5
        %v3652 = vsel %vm3585, %v3650, %v3651
        %v3653 = vrot.slane %v3648, 4
        %v3654 = vrot.slane %v496, 5
        %v3655 = vsel %vm3585, %v3653, %v3654
        %v3656 = vrot.slane %v3529, 5
        %v3657 = vrot.slane %v3656, 4
        %v3658 = vrot.slane %v499, 5
        %v3659 = vsel %vm3585, %v3657, %v3658
        %v3660 = vrot.slane %v3530, 5
        %v3661 = vrot.slane %v3660, 4
        %v3662 = vrot.slane %v500, 5
        %v3663 = vsel %vm3585, %v3661, %v3662
        %v3664 = vrot.slane %v3658, 4
        %v3665 = vrot.slane %v501, 5
        %v3666 = vsel %vm3585, %v3664, %v3665
        %v3667 = vrot.slane %v3662, 4
        %v3668 = vrot.slane %v502, 5
        %v3669 = vsel %vm3585, %v3667, %v3668
        %v3670 = vrot.slane %v3531, 5
        %v3671 = vrot.slane %v3670, 4
        %v3672 = vrot.slane %v505, 5
        %v3673 = vsel %vm3585, %v3671, %v3672
        %v3674 = vrot.slane %v3532, 5
        %v3675 = vrot.slane %v3674, 4
        %v3676 = vrot.slane %v506, 5
        %v3677 = vsel %vm3585, %v3675, %v3676
        %v3678 = vrot.slane %v3672, 4
        %v3679 = vrot.slane %v507, 5
        %v3680 = vsel %vm3585, %v3678, %v3679
        %v3681 = vrot.slane %v3676, 4
        %v3682 = vrot.slane %v508, 5
        %v3683 = vsel %vm3585, %v3681, %v3682
        %v3684 = vrot.slane %v3533, 5
        %v3685 = vrot.slane %v3684, 4
        %v3686 = vrot.slane %v511, 5
        %v3687 = vsel %vm3585, %v3685, %v3686
        %v3688 = vrot.slane %v3534, 5
        %v3689 = vrot.slane %v3688, 4
        %v3690 = vrot.slane %v512, 5
        %v3691 = vsel %vm3585, %v3689, %v3690
        %v3692 = vrot.slane %v3686, 4
        %v3693 = vrot.slane %v513, 5
        %v3694 = vsel %vm3585, %v3692, %v3693
        %v3695 = vrot.slane %v3690, 4
        %v3696 = vrot.slane %v514, 5
        %v3697 = vsel %vm3585, %v3695, %v3696
        %s3698 = scalar_lea.vmem [#allocation5], 1536
        %v3699 = vld [vmem:[%s3698] sm:$0xff]
        %v3700 = vld [vmem:[%s3698 + $0x8] sm:$0xf]
        %v3701 = vld [vmem:[%s3698 + $0xc] sm:$0xff]
        %v3702 = vld [vmem:[%s3698 + $0x14] sm:$0xf]
        %v3703 = vld [vmem:[%s3698 + $0x18] sm:$0xff]
        %v3704 = vld [vmem:[%s3698 + $0x20] sm:$0xf]
        %v3705 = vld [vmem:[%s3698 + $0x24] sm:$0xff]
        %v3706 = vld [vmem:[%s3698 + $0x2c] sm:$0xf]
        %v3707 = vld [vmem:[%s3698 + $0x30] sm:$0xff]
        %v3708 = vld [vmem:[%s3698 + $0x38] sm:$0xf]
        %v3709 = vld [vmem:[%s3698 + $0x3c] sm:$0xff]
        %v3710 = vld [vmem:[%s3698 + $0x44] sm:$0xf]
        %v3711 = vld [vmem:[%s3698 + $0x48] sm:$0xff]
        %v3712 = vld [vmem:[%s3698 + $0x50] sm:$0xf]
        %v3713 = vld [vmem:[%s3698 + $0x54] sm:$0xff]
        %v3714 = vld [vmem:[%s3698 + $0x5c] sm:$0xf]
        %v3715 = vld [vmem:[%s3698 + $0x60] sm:$0xff]
        %v3716 = vld [vmem:[%s3698 + $0x68] sm:$0xf]
        %v3717 = vld [vmem:[%s3698 + $0x6c] sm:$0xff]
        %v3718 = vld [vmem:[%s3698 + $0x74] sm:$0xf]
        %v3719 = vld [vmem:[%s3698 + $0x78] sm:$0xff]
        %v3720 = vld [vmem:[%s3698 + $0x80] sm:$0xf]
        %v3721 = vld [vmem:[%s3698 + $0x84] sm:$0xff]
        %v3722 = vld [vmem:[%s3698 + $0x8c] sm:$0xf]
        %v3723 = vld [vmem:[%s3698 + $0x90] sm:$0xff]
        %v3724 = vld [vmem:[%s3698 + $0x98] sm:$0xf]
        %v3725 = vld [vmem:[%s3698 + $0x9c] sm:$0xff]
        %v3726 = vld [vmem:[%s3698 + $0xa4] sm:$0xf]
        %v3727 = vld [vmem:[%s3698 + $0xa8] sm:$0xff]
        %v3728 = vld [vmem:[%s3698 + $0xb0] sm:$0xf]
        %v3729 = vld [vmem:[%s3698 + $0xb4] sm:$0xff]
        %v3730 = vld [vmem:[%s3698 + $0xbc] sm:$0xf]
        %v3731 = vld [vmem:[%s3698 + $0xc0] sm:$0xff]
        %v3732 = vld [vmem:[%s3698 + $0xc8] sm:$0xf]
        %v3733 = vld [vmem:[%s3698 + $0xcc] sm:$0xff]
        %v3734 = vld [vmem:[%s3698 + $0xd4] sm:$0xf]
        %v3735 = vld [vmem:[%s3698 + $0xd8] sm:$0xff]
        %v3736 = vld [vmem:[%s3698 + $0xe0] sm:$0xf]
        %v3737 = vld [vmem:[%s3698 + $0xe4] sm:$0xff]
        %v3738 = vld [vmem:[%s3698 + $0xec] sm:$0xf]
        %v3739 = vld [vmem:[%s3698 + $0xf0] sm:$0xff]
        %v3740 = vld [vmem:[%s3698 + $0xf8] sm:$0xf]
        %v3741 = vld [vmem:[%s3698 + $0xfc] sm:$0xff]
        %v3742 = vld [vmem:[%s3698 + $0x104] sm:$0xf]
        %v3743 = vld [vmem:[%s3698 + $0x108] sm:$0xff]
        %v3744 = vld [vmem:[%s3698 + $0x110] sm:$0xf]
        %v3745 = vld [vmem:[%s3698 + $0x114] sm:$0xff]
        %v3746 = vld [vmem:[%s3698 + $0x11c] sm:$0xf]
        %v3747 = vld [vmem:[%s3698 + $0x120] sm:$0xff]
        %v3748 = vld [vmem:[%s3698 + $0x128] sm:$0xf]
        %v3749 = vld [vmem:[%s3698 + $0x12c] sm:$0xff]
        %v3750 = vld [vmem:[%s3698 + $0x134] sm:$0xf]
        %v3751 = vld [vmem:[%s3698 + $0x138] sm:$0xff]
        %v3752 = vld [vmem:[%s3698 + $0x140] sm:$0xf]
        %v3753 = vld [vmem:[%s3698 + $0x144] sm:$0xff]
        %v3754 = vld [vmem:[%s3698 + $0x14c] sm:$0xf]
        %v3755 = vld [vmem:[%s3698 + $0x150] sm:$0xff]
        %v3756 = vld [vmem:[%s3698 + $0x158] sm:$0xf]
        %v3757 = vld [vmem:[%s3698 + $0x15c] sm:$0xff]
        %v3758 = vld [vmem:[%s3698 + $0x164] sm:$0xf]
        %v3759 = vld [vmem:[%s3698 + $0x168] sm:$0xff]
        %v3760 = vld [vmem:[%s3698 + $0x170] sm:$0xf]
        %v3761 = vld [vmem:[%s3698 + $0x174] sm:$0xff]
        %v3762 = vld [vmem:[%s3698 + $0x17c] sm:$0xf]
        %v3763 = vld [vmem:[%s3698 + $0x180] sm:$0xff]
        %v3764 = vld [vmem:[%s3698 + $0x188] sm:$0xf]
        %v3765 = vld [vmem:[%s3698 + $0x18c] sm:$0xff]
        %v3766 = vld [vmem:[%s3698 + $0x194] sm:$0xf]
        %v3767 = vld [vmem:[%s3698 + $0x198] sm:$0xff]
        %v3768 = vld [vmem:[%s3698 + $0x1a0] sm:$0xf]
        %v3769 = vld [vmem:[%s3698 + $0x1a4] sm:$0xff]
        %v3770 = vld [vmem:[%s3698 + $0x1ac] sm:$0xf]
        %v3771 = vld [vmem:[%s3698 + $0x1b0] sm:$0xff]
        %v3772 = vld [vmem:[%s3698 + $0x1b8] sm:$0xf]
        %v3773 = vld [vmem:[%s3698 + $0x1bc] sm:$0xff]
        %v3774 = vld [vmem:[%s3698 + $0x1c4] sm:$0xf]
        %v3775 = vld [vmem:[%s3698 + $0x1c8] sm:$0xff]
        %v3776 = vld [vmem:[%s3698 + $0x1d0] sm:$0xf]
        %v3777 = vld [vmem:[%s3698 + $0x1d4] sm:$0xff]
        %v3778 = vld [vmem:[%s3698 + $0x1dc] sm:$0xf]
        %v3779 = vld [vmem:[%s3698 + $0x1e0] sm:$0xff]
        %v3780 = vld [vmem:[%s3698 + $0x1e8] sm:$0xf]
        %v3781 = vld [vmem:[%s3698 + $0x1ec] sm:$0xff]
        %v3782 = vld [vmem:[%s3698 + $0x1f4] sm:$0xf]
        %v3783 = vld [vmem:[%s3698 + $0x1f8] sm:$0xff]
        %v3784 = vld [vmem:[%s3698 + $0x200] sm:$0xf]
        %v3785 = vld [vmem:[%s3698 + $0x204] sm:$0xff]
        %v3786 = vld [vmem:[%s3698 + $0x20c] sm:$0xf]
        %v3787 = vld [vmem:[%s3698 + $0x210] sm:$0xff]
        %v3788 = vld [vmem:[%s3698 + $0x218] sm:$0xf]
        %v3789 = vld [vmem:[%s3698 + $0x21c] sm:$0xff]
        %v3790 = vld [vmem:[%s3698 + $0x224] sm:$0xf]
        %v3791 = vld [vmem:[%s3698 + $0x228] sm:$0xff]
        %v3792 = vld [vmem:[%s3698 + $0x230] sm:$0xf]
        %v3793 = vld [vmem:[%s3698 + $0x234] sm:$0xff]
        %v3794 = vld [vmem:[%s3698 + $0x23c] sm:$0xf]
        %v3795 = vld [vmem:[%s3698 + $0x240] sm:$0xff]
        %v3796 = vld [vmem:[%s3698 + $0x248] sm:$0xf]
        %v3797 = vld [vmem:[%s3698 + $0x24c] sm:$0xff]
        %v3798 = vld [vmem:[%s3698 + $0x254] sm:$0xf]
        %v3799 = vld [vmem:[%s3698 + $0x258] sm:$0xff]
        %v3800 = vld [vmem:[%s3698 + $0x260] sm:$0xf]
        %v3801 = vld [vmem:[%s3698 + $0x264] sm:$0xff]
        %v3802 = vld [vmem:[%s3698 + $0x26c] sm:$0xf]
        %v3803 = vld [vmem:[%s3698 + $0x270] sm:$0xff]
        %v3804 = vld [vmem:[%s3698 + $0x278] sm:$0xf]
        %v3805 = vld [vmem:[%s3698 + $0x27c] sm:$0xff]
        %v3806 = vld [vmem:[%s3698 + $0x284] sm:$0xf]
        %v3807 = vld [vmem:[%s3698 + $0x288] sm:$0xff]
        %v3808 = vld [vmem:[%s3698 + $0x290] sm:$0xf]
        %v3809 = vld [vmem:[%s3698 + $0x294] sm:$0xff]
        %v3810 = vld [vmem:[%s3698 + $0x29c] sm:$0xf]
        %v3811 = vld [vmem:[%s3698 + $0x2a0] sm:$0xff]
        %v3812 = vld [vmem:[%s3698 + $0x2a8] sm:$0xf]
        %v3813 = vld [vmem:[%s3698 + $0x2ac] sm:$0xff]
        %v3814 = vld [vmem:[%s3698 + $0x2b4] sm:$0xf]
        %v3815 = vld [vmem:[%s3698 + $0x2b8] sm:$0xff]
        %v3816 = vld [vmem:[%s3698 + $0x2c0] sm:$0xf]
        %v3817 = vld [vmem:[%s3698 + $0x2c4] sm:$0xff]
        %v3818 = vld [vmem:[%s3698 + $0x2cc] sm:$0xf]
        %v3819 = vld [vmem:[%s3698 + $0x2d0] sm:$0xff]
        %v3820 = vld [vmem:[%s3698 + $0x2d8] sm:$0xf]
        %v3821 = vld [vmem:[%s3698 + $0x2dc] sm:$0xff]
        %v3822 = vld [vmem:[%s3698 + $0x2e4] sm:$0xf]
        %v3823 = vld [vmem:[%s3698 + $0x2e8] sm:$0xff]
        %v3824 = vld [vmem:[%s3698 + $0x2f0] sm:$0xf]
        %v3825 = vld [vmem:[%s3698 + $0x2f4] sm:$0xff]
        %v3826 = vld [vmem:[%s3698 + $0x2fc] sm:$0xf]
        %v3827 = vunpack.c.l.b16 %v3589
        %v3828 = vunpack.c.h.b16 %v3589
        %v3829 = vunpack.c.l.b16 %v3593
        %v3830 = vunpack.c.h.b16 %v3593
        %v3831 = vunpack.c.l.b16 %v3596
        %v3832 = vunpack.c.h.b16 %v3596
        %v3833 = vunpack.c.l.b16 %v3599
        %v3834 = vunpack.c.h.b16 %v3599
        %v3835 = vunpack.c.l.b16 %v3603
        %v3836 = vunpack.c.h.b16 %v3603
        %v3837 = vunpack.c.l.b16 %v3607
        %v3838 = vunpack.c.h.b16 %v3607
        %v3839 = vunpack.c.l.b16 %v3610
        %v3840 = vunpack.c.h.b16 %v3610
        %v3841 = vunpack.c.l.b16 %v3613
        %v3842 = vunpack.c.h.b16 %v3613
        %v3843 = vunpack.c.l.b16 %v3617
        %v3844 = vunpack.c.h.b16 %v3617
        %v3845 = vunpack.c.l.b16 %v3621
        %v3846 = vunpack.c.h.b16 %v3621
        %v3847 = vunpack.c.l.b16 %v3624
        %v3848 = vunpack.c.h.b16 %v3624
        %v3849 = vunpack.c.l.b16 %v3627
        %v3850 = vunpack.c.h.b16 %v3627
        %v3851 = vunpack.c.l.b16 %v3631
        %v3852 = vunpack.c.h.b16 %v3631
        %v3853 = vunpack.c.l.b16 %v3635
        %v3854 = vunpack.c.h.b16 %v3635
        %v3855 = vunpack.c.l.b16 %v3638
        %v3856 = vunpack.c.h.b16 %v3638
        %v3857 = vunpack.c.l.b16 %v3641
        %v3858 = vunpack.c.h.b16 %v3641
        %v3859 = vunpack.c.l.b16 %v3645
        %v3860 = vunpack.c.h.b16 %v3645
        %v3861 = vunpack.c.l.b16 %v3649
        %v3862 = vunpack.c.h.b16 %v3649
        %v3863 = vunpack.c.l.b16 %v3652
        %v3864 = vunpack.c.h.b16 %v3652
        %v3865 = vunpack.c.l.b16 %v3655
        %v3866 = vunpack.c.h.b16 %v3655
        %v3867 = vunpack.c.l.b16 %v3659
        %v3868 = vunpack.c.h.b16 %v3659
        %v3869 = vunpack.c.l.b16 %v3663
        %v3870 = vunpack.c.h.b16 %v3663
        %v3871 = vunpack.c.l.b16 %v3666
        %v3872 = vunpack.c.h.b16 %v3666
        %v3873 = vunpack.c.l.b16 %v3669
        %v3874 = vunpack.c.h.b16 %v3669
        %v3875 = vunpack.c.l.b16 %v3673
        %v3876 = vunpack.c.h.b16 %v3673
        %v3877 = vunpack.c.l.b16 %v3677
        %v3878 = vunpack.c.h.b16 %v3677
        %v3879 = vunpack.c.l.b16 %v3680
        %v3880 = vunpack.c.h.b16 %v3680
        %v3881 = vunpack.c.l.b16 %v3683
        %v3882 = vunpack.c.h.b16 %v3683
        %v3883 = vunpack.c.l.b16 %v3687
        %v3884 = vunpack.c.h.b16 %v3687
        %v3885 = vunpack.c.l.b16 %v3691
        %v3886 = vunpack.c.h.b16 %v3691
        %v3887 = vunpack.c.l.b16 %v3694
        %v3888 = vunpack.c.h.b16 %v3694
        %v3889 = vunpack.c.l.b16 %v3697
        %v3890 = vunpack.c.h.b16 %v3697
        %v3891 = vpack.c.b16 %v3831, %v3827
        %v3892 = vpack.c.b16 %v3832, %v3828
        %v3893 = vpack.c.b16 %v3833, %v3829
        %v3894 = vpack.c.b16 %v3834, %v3830
        %v3895 = vpack.c.b16 %v3839, %v3835
        %v3896 = vpack.c.b16 %v3840, %v3836
        %v3897 = vpack.c.b16 %v3841, %v3837
        %v3898 = vpack.c.b16 %v3842, %v3838
        %v3899 = vpack.c.b16 %v3847, %v3843
        %v3900 = vpack.c.b16 %v3848, %v3844
        %v3901 = vpack.c.b16 %v3849, %v3845
        %v3902 = vpack.c.b16 %v3850, %v3846
        %v3903 = vpack.c.b16 %v3855, %v3851
        %v3904 = vpack.c.b16 %v3856, %v3852
        %v3905 = vpack.c.b16 %v3857, %v3853
        %v3906 = vpack.c.b16 %v3858, %v3854
        %v3907 = vpack.c.b16 %v3863, %v3859
        %v3908 = vpack.c.b16 %v3864, %v3860
        %v3909 = vpack.c.b16 %v3865, %v3861
        %v3910 = vpack.c.b16 %v3866, %v3862
        %v3911 = vpack.c.b16 %v3871, %v3867
        %v3912 = vpack.c.b16 %v3872, %v3868
        %v3913 = vpack.c.b16 %v3873, %v3869
        %v3914 = vpack.c.b16 %v3874, %v3870
        %v3915 = vpack.c.b16 %v3879, %v3875
        %v3916 = vpack.c.b16 %v3880, %v3876
        %v3917 = vpack.c.b16 %v3881, %v3877
        %v3918 = vpack.c.b16 %v3882, %v3878
        %v3919 = vpack.c.b16 %v3887, %v3883
        %v3920 = vpack.c.b16 %v3888, %v3884
        %v3921 = vpack.c.b16 %v3889, %v3885
        %v3922 = vpack.c.b16 %v3890, %v3886
        %v4083 = vunpack.c.l.b16 %v3699
        %v4084 = vunpack.c.h.b16 %v3699
        %v4085 = vunpack.c.l.b16 %v3700
        %v4086 = vunpack.c.l.b16 %v3701
        %v4087 = vunpack.c.h.b16 %v3701
        %v4088 = vunpack.c.l.b16 %v3702
        %v4089 = vunpack.c.l.b16 %v3703
        %v4090 = vunpack.c.h.b16 %v3703
        %v4091 = vunpack.c.l.b16 %v3704
        %v4092 = vunpack.c.l.b16 %v3705
        %v4093 = vunpack.c.h.b16 %v3705
        %v4094 = vunpack.c.l.b16 %v3706
        %v4095 = vunpack.c.l.b16 %v3707
        %v4096 = vunpack.c.h.b16 %v3707
        %v4097 = vunpack.c.l.b16 %v3708
        %v4098 = vunpack.c.l.b16 %v3709
        %v4099 = vunpack.c.h.b16 %v3709
        %v4100 = vunpack.c.l.b16 %v3710
        %v4101 = vunpack.c.l.b16 %v3711
        %v4102 = vunpack.c.h.b16 %v3711
        %v4103 = vunpack.c.l.b16 %v3712
        %v4104 = vunpack.c.l.b16 %v3713
        %v4105 = vunpack.c.h.b16 %v3713
        %v4106 = vunpack.c.l.b16 %v3714
        %v4107 = vunpack.c.l.b16 %v3715
        %v4108 = vunpack.c.h.b16 %v3715
        %v4109 = vunpack.c.l.b16 %v3716
        %v4110 = vunpack.c.l.b16 %v3717
        %v4111 = vunpack.c.h.b16 %v3717
        %v4112 = vunpack.c.l.b16 %v3718
        %v4113 = vunpack.c.l.b16 %v3719
        %v4114 = vunpack.c.h.b16 %v3719
        %v4115 = vunpack.c.l.b16 %v3720
        %v4116 = vunpack.c.l.b16 %v3721
        %v4117 = vunpack.c.h.b16 %v3721
        %v4118 = vunpack.c.l.b16 %v3722
        %v4119 = vunpack.c.l.b16 %v3723
        %v4120 = vunpack.c.h.b16 %v3723
        %v4121 = vunpack.c.l.b16 %v3724
        %v4122 = vunpack.c.l.b16 %v3725
        %v4123 = vunpack.c.h.b16 %v3725
        %v4124 = vunpack.c.l.b16 %v3726
        %v4125 = vunpack.c.l.b16 %v3727
        %v4126 = vunpack.c.h.b16 %v3727
        %v4127 = vunpack.c.l.b16 %v3728
        %v4128 = vunpack.c.l.b16 %v3729
        %v4129 = vunpack.c.h.b16 %v3729
        %v4130 = vunpack.c.l.b16 %v3730
        %v4131 = vunpack.c.l.b16 %v3731
        %v4132 = vunpack.c.h.b16 %v3731
        %v4133 = vunpack.c.l.b16 %v3732
        %v4134 = vunpack.c.l.b16 %v3733
        %v4135 = vunpack.c.h.b16 %v3733
        %v4136 = vunpack.c.l.b16 %v3734
        %v4137 = vunpack.c.l.b16 %v3735
        %v4138 = vunpack.c.h.b16 %v3735
        %v4139 = vunpack.c.l.b16 %v3736
        %v4140 = vunpack.c.l.b16 %v3737
        %v4141 = vunpack.c.h.b16 %v3737
        %v4142 = vunpack.c.l.b16 %v3738
        %v4143 = vunpack.c.l.b16 %v3739
        %v4144 = vunpack.c.h.b16 %v3739
        %v4145 = vunpack.c.l.b16 %v3740
        %v4146 = vunpack.c.l.b16 %v3741
        %v4147 = vunpack.c.h.b16 %v3741
        %v4148 = vunpack.c.l.b16 %v3742
        %v4149 = vunpack.c.l.b16 %v3743
        %v4150 = vunpack.c.h.b16 %v3743
        %v4151 = vunpack.c.l.b16 %v3744
        %v4152 = vunpack.c.l.b16 %v3745
        %v4153 = vunpack.c.h.b16 %v3745
        %v4154 = vunpack.c.l.b16 %v3746
        %v4155 = vunpack.c.l.b16 %v3747
        %v4156 = vunpack.c.h.b16 %v3747
        %v4157 = vunpack.c.l.b16 %v3748
        %v4158 = vunpack.c.l.b16 %v3749
        %v4159 = vunpack.c.h.b16 %v3749
        %v4160 = vunpack.c.l.b16 %v3750
        %v4161 = vunpack.c.l.b16 %v3751
        %v4162 = vunpack.c.h.b16 %v3751
        %v4163 = vunpack.c.l.b16 %v3752
        %v4164 = vunpack.c.l.b16 %v3753
        %v4165 = vunpack.c.h.b16 %v3753
        %v4166 = vunpack.c.l.b16 %v3754
        %v4167 = vunpack.c.l.b16 %v3755
        %v4168 = vunpack.c.h.b16 %v3755
        %v4169 = vunpack.c.l.b16 %v3756
        %v4170 = vunpack.c.l.b16 %v3757
        %v4171 = vunpack.c.h.b16 %v3757
        %v4172 = vunpack.c.l.b16 %v3758
        %v4173 = vunpack.c.l.b16 %v3759
        %v4174 = vunpack.c.h.b16 %v3759
        %v4175 = vunpack.c.l.b16 %v3760
        %v4176 = vunpack.c.l.b16 %v3761
        %v4177 = vunpack.c.h.b16 %v3761
        %v4178 = vunpack.c.l.b16 %v3762
        %v4179 = vunpack.c.l.b16 %v3763
        %v4180 = vunpack.c.h.b16 %v3763
        %v4181 = vunpack.c.l.b16 %v3764
        %v4182 = vunpack.c.l.b16 %v3765
        %v4183 = vunpack.c.h.b16 %v3765
        %v4184 = vunpack.c.l.b16 %v3766
        %v4185 = vunpack.c.l.b16 %v3767
        %v4186 = vunpack.c.h.b16 %v3767
        %v4187 = vunpack.c.l.b16 %v3768
        %v4188 = vunpack.c.l.b16 %v3769
        %v4189 = vunpack.c.h.b16 %v3769
        %v4190 = vunpack.c.l.b16 %v3770
        %v4191 = vunpack.c.l.b16 %v3771
        %v4192 = vunpack.c.h.b16 %v3771
        %v4193 = vunpack.c.l.b16 %v3772
        %v4194 = vunpack.c.l.b16 %v3773
        %v4195 = vunpack.c.h.b16 %v3773
        %v4196 = vunpack.c.l.b16 %v3774
        %v4197 = vunpack.c.l.b16 %v3775
        %v4198 = vunpack.c.h.b16 %v3775
        %v4199 = vunpack.c.l.b16 %v3776
        %v4200 = vunpack.c.l.b16 %v3777
        %v4201 = vunpack.c.h.b16 %v3777
        %v4202 = vunpack.c.l.b16 %v3778
        %v4203 = vunpack.c.l.b16 %v3779
        %v4204 = vunpack.c.h.b16 %v3779
        %v4205 = vunpack.c.l.b16 %v3780
        %v4206 = vunpack.c.l.b16 %v3781
        %v4207 = vunpack.c.h.b16 %v3781
        %v4208 = vunpack.c.l.b16 %v3782
        %v4209 = vunpack.c.l.b16 %v3783
        %v4210 = vunpack.c.h.b16 %v3783
        %v4211 = vunpack.c.l.b16 %v3784
        %v4212 = vunpack.c.l.b16 %v3785
        %v4213 = vunpack.c.h.b16 %v3785
        %v4214 = vunpack.c.l.b16 %v3786
        %v4215 = vunpack.c.l.b16 %v3787
        %v4216 = vunpack.c.h.b16 %v3787
        %v4217 = vunpack.c.l.b16 %v3788
        %v4218 = vunpack.c.l.b16 %v3789
        %v4219 = vunpack.c.h.b16 %v3789
        %v4220 = vunpack.c.l.b16 %v3790
        %v4221 = vunpack.c.l.b16 %v3791
        %v4222 = vunpack.c.h.b16 %v3791
        %v4223 = vunpack.c.l.b16 %v3792
        %v4224 = vunpack.c.l.b16 %v3793
        %v4225 = vunpack.c.h.b16 %v3793
        %v4226 = vunpack.c.l.b16 %v3794
        %v4227 = vunpack.c.l.b16 %v3795
        %v4228 = vunpack.c.h.b16 %v3795
        %v4229 = vunpack.c.l.b16 %v3796
        %v4230 = vunpack.c.l.b16 %v3797
        %v4231 = vunpack.c.h.b16 %v3797
        %v4232 = vunpack.c.l.b16 %v3798
        %v4233 = vunpack.c.l.b16 %v3799
        %v4234 = vunpack.c.h.b16 %v3799
        %v4235 = vunpack.c.l.b16 %v3800
        %v4236 = vunpack.c.l.b16 %v3801
        %v4237 = vunpack.c.h.b16 %v3801
        %v4238 = vunpack.c.l.b16 %v3802
        %v4239 = vunpack.c.l.b16 %v3803
        %v4240 = vunpack.c.h.b16 %v3803
        %v4241 = vunpack.c.l.b16 %v3804
        %v4242 = vunpack.c.l.b16 %v3805
        %v4243 = vunpack.c.h.b16 %v3805
        %v4244 = vunpack.c.l.b16 %v3806
        %v4245 = vunpack.c.l.b16 %v3807
        %v4246 = vunpack.c.h.b16 %v3807
        %v4247 = vunpack.c.l.b16 %v3808
        %v4248 = vunpack.c.l.b16 %v3809
        %v4249 = vunpack.c.h.b16 %v3809
        %v4250 = vunpack.c.l.b16 %v3810
        %v4251 = vunpack.c.l.b16 %v3811
        %v4252 = vunpack.c.h.b16 %v3811
        %v4253 = vunpack.c.l.b16 %v3812
        %v4254 = vunpack.c.l.b16 %v3813
        %v4255 = vunpack.c.h.b16 %v3813
        %v4256 = vunpack.c.l.b16 %v3814
        %v4257 = vunpack.c.l.b16 %v3815
        %v4258 = vunpack.c.h.b16 %v3815
        %v4259 = vunpack.c.l.b16 %v3816
        %v4260 = vunpack.c.l.b16 %v3817
        %v4261 = vunpack.c.h.b16 %v3817
        %v4262 = vunpack.c.l.b16 %v3818
        %v4263 = vunpack.c.l.b16 %v3819
        %v4264 = vunpack.c.h.b16 %v3819
        %v4265 = vunpack.c.l.b16 %v3820
        %v4266 = vunpack.c.l.b16 %v3821
        %v4267 = vunpack.c.h.b16 %v3821
        %v4268 = vunpack.c.l.b16 %v3822
        %v4269 = vunpack.c.l.b16 %v3823
        %v4270 = vunpack.c.h.b16 %v3823
        %v4271 = vunpack.c.l.b16 %v3824
        %v4272 = vunpack.c.l.b16 %v3825
        %v4273 = vunpack.c.h.b16 %v3825
        %v4274 = vunpack.c.l.b16 %v3826
        %v4275 = vpack.c.b16 %v4086, %v4083
        %v4276 = vpack.c.b16 %v4087, %v4084
        %v4277 = vpack.c.b16 %v4088, %v4085
        %v4278 = vpack.c.b16 %v4092, %v4089
        %v4279 = vpack.c.b16 %v4093, %v4090
        %v4280 = vpack.c.b16 %v4094, %v4091
        %v4281 = vpack.c.b16 %v4098, %v4095
        %v4282 = vpack.c.b16 %v4099, %v4096
        %v4283 = vpack.c.b16 %v4100, %v4097
        %v4284 = vpack.c.b16 %v4104, %v4101
        %v4285 = vpack.c.b16 %v4105, %v4102
        %v4286 = vpack.c.b16 %v4106, %v4103
        %v4287 = vpack.c.b16 %v4110, %v4107
        %v4288 = vpack.c.b16 %v4111, %v4108
        %v4289 = vpack.c.b16 %v4112, %v4109
        %v4290 = vpack.c.b16 %v4116, %v4113
        %v4291 = vpack.c.b16 %v4117, %v4114
        %v4292 = vpack.c.b16 %v4118, %v4115
        %v4293 = vpack.c.b16 %v4122, %v4119
        %v4294 = vpack.c.b16 %v4123, %v4120
        %v4295 = vpack.c.b16 %v4124, %v4121
        %v4296 = vpack.c.b16 %v4128, %v4125
        %v4297 = vpack.c.b16 %v4129, %v4126
        %v4298 = vpack.c.b16 %v4130, %v4127
        %v4299 = vpack.c.b16 %v4134, %v4131
        %v4300 = vpack.c.b16 %v4135, %v4132
        %v4301 = vpack.c.b16 %v4136, %v4133
        %v4302 = vpack.c.b16 %v4140, %v4137
        %v4303 = vpack.c.b16 %v4141, %v4138
        %v4304 = vpack.c.b16 %v4142, %v4139
        %v4305 = vpack.c.b16 %v4146, %v4143
        %v4306 = vpack.c.b16 %v4147, %v4144
        %v4307 = vpack.c.b16 %v4148, %v4145
        %v4308 = vpack.c.b16 %v4152, %v4149
        %v4309 = vpack.c.b16 %v4153, %v4150
        %v4310 = vpack.c.b16 %v4154, %v4151
        %v4311 = vpack.c.b16 %v4158, %v4155
        %v4312 = vpack.c.b16 %v4159, %v4156
        %v4313 = vpack.c.b16 %v4160, %v4157
        %v4314 = vpack.c.b16 %v4164, %v4161
        %v4315 = vpack.c.b16 %v4165, %v4162
        %v4316 = vpack.c.b16 %v4166, %v4163
        %v4317 = vpack.c.b16 %v4170, %v4167
        %v4318 = vpack.c.b16 %v4171, %v4168
        %v4319 = vpack.c.b16 %v4172, %v4169
        %v4320 = vpack.c.b16 %v4176, %v4173
        %v4321 = vpack.c.b16 %v4177, %v4174
        %v4322 = vpack.c.b16 %v4178, %v4175
        %v4323 = vpack.c.b16 %v4182, %v4179
        %v4324 = vpack.c.b16 %v4183, %v4180
        %v4325 = vpack.c.b16 %v4184, %v4181
        %v4326 = vpack.c.b16 %v4188, %v4185
        %v4327 = vpack.c.b16 %v4189, %v4186
        %v4328 = vpack.c.b16 %v4190, %v4187
        %v4329 = vpack.c.b16 %v4194, %v4191
        %v4330 = vpack.c.b16 %v4195, %v4192
        %v4331 = vpack.c.b16 %v4196, %v4193
        %v4332 = vpack.c.b16 %v4200, %v4197
        %v4333 = vpack.c.b16 %v4201, %v4198
        %v4334 = vpack.c.b16 %v4202, %v4199
        %v4335 = vpack.c.b16 %v4206, %v4203
        %v4336 = vpack.c.b16 %v4207, %v4204
        %v4337 = vpack.c.b16 %v4208, %v4205
        %v4338 = vpack.c.b16 %v4212, %v4209
        %v4339 = vpack.c.b16 %v4213, %v4210
        %v4340 = vpack.c.b16 %v4214, %v4211
        %v4341 = vpack.c.b16 %v4218, %v4215
        %v4342 = vpack.c.b16 %v4219, %v4216
        %v4343 = vpack.c.b16 %v4220, %v4217
        %v4344 = vpack.c.b16 %v4224, %v4221
        %v4345 = vpack.c.b16 %v4225, %v4222
        %v4346 = vpack.c.b16 %v4226, %v4223
        %v4347 = vpack.c.b16 %v4230, %v4227
        %v4348 = vpack.c.b16 %v4231, %v4228
        %v4349 = vpack.c.b16 %v4232, %v4229
        %v4350 = vpack.c.b16 %v4236, %v4233
        %v4351 = vpack.c.b16 %v4237, %v4234
        %v4352 = vpack.c.b16 %v4238, %v4235
        %v4353 = vpack.c.b16 %v4242, %v4239
        %v4354 = vpack.c.b16 %v4243, %v4240
        %v4355 = vpack.c.b16 %v4244, %v4241
        %v4356 = vpack.c.b16 %v4248, %v4245
        %v4357 = vpack.c.b16 %v4249, %v4246
        %v4358 = vpack.c.b16 %v4250, %v4247
        %v4359 = vpack.c.b16 %v4254, %v4251
        %v4360 = vpack.c.b16 %v4255, %v4252
        %v4361 = vpack.c.b16 %v4256, %v4253
        %v4362 = vpack.c.b16 %v4260, %v4257
        %v4363 = vpack.c.b16 %v4261, %v4258
        %v4364 = vpack.c.b16 %v4262, %v4259
        %v4365 = vpack.c.b16 %v4266, %v4263
        %v4366 = vpack.c.b16 %v4267, %v4264
        %v4367 = vpack.c.b16 %v4268, %v4265
        %v4368 = vpack.c.b16 %v4272, %v4269
        %v4369 = vpack.c.b16 %v4273, %v4270
        %v4370 = vpack.c.b16 %v4274, %v4271
        %4467 = vmatpush.bf16.msra.mxu0 %v4296
        %4468 = vmatpush.bf16.msra.mxu0 %v4293
        %4469 = vmatpush.bf16.msra.mxu0 %v4290
        %4470 = vmatpush.bf16.msra.mxu0 %v4287
        %4471 = vmatpush.bf16.msra.mxu0 %v4284
        %4472 = vmatpush.bf16.msra.mxu0 %v4281
        %4473 = vmatpush.bf16.msra.mxu0 %v4278
        %4474 = vmatpush.bf16.msra.mxu0 %v4275
        %4475 = vmatmul.bf16.gmra.mxu0 %v3891
        %v4476 = vpop.f32.mrf.mxu0
        %v4477 = vadd.f32 0.0, %v4476
        %v4478 = vpop.f32.mrf.mxu0
        %v4479 = vadd.f32 0.0, %v4478
        %4480 = vmatmul.bf16.gmra.mxu0 %v3895
        %v4481 = vpop.f32.mrf.mxu0
        %v4482 = vadd.f32 0.0, %v4481
        %v4483 = vpop.f32.mrf.mxu0
        %v4484 = vadd.f32 0.0, %v4483
        %4485 = vmatmul.bf16.gmra.mxu0 %v3899
        %v4486 = vpop.f32.mrf.mxu0
        %v4487 = vadd.f32 0.0, %v4486
        %v4488 = vpop.f32.mrf.mxu0
        %v4489 = vadd.f32 0.0, %v4488
        %4490 = vmatmul.bf16.gmra.mxu0 %v3903
        %v4491 = vpop.f32.mrf.mxu0
        %v4492 = vadd.f32 0.0, %v4491
        %v4493 = vpop.f32.mrf.mxu0
        %v4494 = vadd.f32 0.0, %v4493
        %4495 = vmatmul.bf16.gmra.mxu0 %v3907
        %v4496 = vpop.f32.mrf.mxu0
        %v4497 = vadd.f32 0.0, %v4496
        %v4498 = vpop.f32.mrf.mxu0
        %v4499 = vadd.f32 0.0, %v4498
        %4500 = vmatmul.bf16.gmra.mxu0 %v3911
        %v4501 = vpop.f32.mrf.mxu0
        %v4502 = vadd.f32 0.0, %v4501
        %v4503 = vpop.f32.mrf.mxu0
        %v4504 = vadd.f32 0.0, %v4503
        %4505 = vmatmul.bf16.gmra.mxu0 %v3915
        %v4506 = vpop.f32.mrf.mxu0
        %v4507 = vadd.f32 0.0, %v4506
        %v4508 = vpop.f32.mrf.mxu0
        %v4509 = vadd.f32 0.0, %v4508
        %4510 = vmatmul.bf16.gmra.mxu0 %v3919
        %v4511 = vpop.f32.mrf.mxu0
        %v4512 = vadd.f32 0.0, %v4511
        %v4513 = vpop.f32.mrf.mxu0
        %v4514 = vadd.f32 0.0, %v4513
        %4515 = vdwg.mxu0
        %4516 = vmatpush.bf16.msra.mxu0 %v4320
        %4517 = vmatpush.bf16.msra.mxu0 %v4317
        %4518 = vmatpush.bf16.msra.mxu0 %v4314
        %4519 = vmatpush.bf16.msra.mxu0 %v4311
        %4520 = vmatpush.bf16.msra.mxu0 %v4308
        %4521 = vmatpush.bf16.msra.mxu0 %v4305
        %4522 = vmatpush.bf16.msra.mxu0 %v4302
        %4523 = vmatpush.bf16.msra.mxu0 %v4299
        %4524 = vmatmul.bf16.gmra.mxu0 %v3892
        %v4525 = vpop.f32.mrf.mxu0
        %v4526 = vadd.f32 %v4477, %v4525
        %v4527 = vpop.f32.mrf.mxu0
        %v4528 = vadd.f32 %v4479, %v4527
        %4529 = vmatmul.bf16.gmra.mxu0 %v3896
        %v4530 = vpop.f32.mrf.mxu0
        %v4531 = vadd.f32 %v4482, %v4530
        %v4532 = vpop.f32.mrf.mxu0
        %v4533 = vadd.f32 %v4484, %v4532
        %4534 = vmatmul.bf16.gmra.mxu0 %v3900
        %v4535 = vpop.f32.mrf.mxu0
        %v4536 = vadd.f32 %v4487, %v4535
        %v4537 = vpop.f32.mrf.mxu0
        %v4538 = vadd.f32 %v4489, %v4537
        %4539 = vmatmul.bf16.gmra.mxu0 %v3904
        %v4540 = vpop.f32.mrf.mxu0
        %v4541 = vadd.f32 %v4492, %v4540
        %v4542 = vpop.f32.mrf.mxu0
        %v4543 = vadd.f32 %v4494, %v4542
        %4544 = vmatmul.bf16.gmra.mxu0 %v3908
        %v4545 = vpop.f32.mrf.mxu0
        %v4546 = vadd.f32 %v4497, %v4545
        %v4547 = vpop.f32.mrf.mxu0
        %v4548 = vadd.f32 %v4499, %v4547
        %4549 = vmatmul.bf16.gmra.mxu0 %v3912
        %v4550 = vpop.f32.mrf.mxu0
        %v4551 = vadd.f32 %v4502, %v4550
        %v4552 = vpop.f32.mrf.mxu0
        %v4553 = vadd.f32 %v4504, %v4552
        %4554 = vmatmul.bf16.gmra.mxu0 %v3916
        %v4555 = vpop.f32.mrf.mxu0
        %v4556 = vadd.f32 %v4507, %v4555
        %v4557 = vpop.f32.mrf.mxu0
        %v4558 = vadd.f32 %v4509, %v4557
        %4559 = vmatmul.bf16.gmra.mxu0 %v3920
        %v4560 = vpop.f32.mrf.mxu0
        %v4561 = vadd.f32 %v4512, %v4560
        %v4562 = vpop.f32.mrf.mxu0
        %v4563 = vadd.f32 %v4514, %v4562
        %4564 = vdwg.mxu0
        %4565 = vmatpush.bf16.msra.mxu0 %v4344
        %4566 = vmatpush.bf16.msra.mxu0 %v4341
        %4567 = vmatpush.bf16.msra.mxu0 %v4338
        %4568 = vmatpush.bf16.msra.mxu0 %v4335
        %4569 = vmatpush.bf16.msra.mxu0 %v4332
        %4570 = vmatpush.bf16.msra.mxu0 %v4329
        %4571 = vmatpush.bf16.msra.mxu0 %v4326
        %4572 = vmatpush.bf16.msra.mxu0 %v4323
        %4573 = vmatmul.bf16.gmra.mxu0 %v3893
        %v4574 = vpop.f32.mrf.mxu0
        %v4575 = vadd.f32 %v4526, %v4574
        %v4576 = vpop.f32.mrf.mxu0
        %v4577 = vadd.f32 %v4528, %v4576
        %4578 = vmatmul.bf16.gmra.mxu0 %v3897
        %v4579 = vpop.f32.mrf.mxu0
        %v4580 = vadd.f32 %v4531, %v4579
        %v4581 = vpop.f32.mrf.mxu0
        %v4582 = vadd.f32 %v4533, %v4581
        %4583 = vmatmul.bf16.gmra.mxu0 %v3901
        %v4584 = vpop.f32.mrf.mxu0
        %v4585 = vadd.f32 %v4536, %v4584
        %v4586 = vpop.f32.mrf.mxu0
        %v4587 = vadd.f32 %v4538, %v4586
        %4588 = vmatmul.bf16.gmra.mxu0 %v3905
        %v4589 = vpop.f32.mrf.mxu0
        %v4590 = vadd.f32 %v4541, %v4589
        %v4591 = vpop.f32.mrf.mxu0
        %v4592 = vadd.f32 %v4543, %v4591
        %4593 = vmatmul.bf16.gmra.mxu0 %v3909
        %v4594 = vpop.f32.mrf.mxu0
        %v4595 = vadd.f32 %v4546, %v4594
        %v4596 = vpop.f32.mrf.mxu0
        %v4597 = vadd.f32 %v4548, %v4596
        %4598 = vmatmul.bf16.gmra.mxu0 %v3913
        %v4599 = vpop.f32.mrf.mxu0
        %v4600 = vadd.f32 %v4551, %v4599
        %v4601 = vpop.f32.mrf.mxu0
        %v4602 = vadd.f32 %v4553, %v4601
        %4603 = vmatmul.bf16.gmra.mxu0 %v3917
        %v4604 = vpop.f32.mrf.mxu0
        %v4605 = vadd.f32 %v4556, %v4604
        %v4606 = vpop.f32.mrf.mxu0
        %v4607 = vadd.f32 %v4558, %v4606
        %4608 = vmatmul.bf16.gmra.mxu0 %v3921
        %v4609 = vpop.f32.mrf.mxu0
        %v4610 = vadd.f32 %v4561, %v4609
        %v4611 = vpop.f32.mrf.mxu0
        %v4612 = vadd.f32 %v4563, %v4611
        %4613 = vdwg.mxu0
        %4614 = vmatpush.bf16.msra.mxu0 %v4368
        %4615 = vmatpush.bf16.msra.mxu0 %v4365
        %4616 = vmatpush.bf16.msra.mxu0 %v4362
        %4617 = vmatpush.bf16.msra.mxu0 %v4359
        %4618 = vmatpush.bf16.msra.mxu0 %v4356
        %4619 = vmatpush.bf16.msra.mxu0 %v4353
        %4620 = vmatpush.bf16.msra.mxu0 %v4350
        %4621 = vmatpush.bf16.msra.mxu0 %v4347
        %4622 = vmatmul.bf16.gmra.mxu0 %v3894
        %v4623 = vpop.f32.mrf.mxu0
        %v4624 = vadd.f32 %v4575, %v4623
        %v4625 = vpop.f32.mrf.mxu0
        %v4626 = vadd.f32 %v4577, %v4625
        %4627 = vmatmul.bf16.gmra.mxu0 %v3898
        %v4628 = vpop.f32.mrf.mxu0
        %v4629 = vadd.f32 %v4580, %v4628
        %v4630 = vpop.f32.mrf.mxu0
        %v4631 = vadd.f32 %v4582, %v4630
        %4632 = vmatmul.bf16.gmra.mxu0 %v3902
        %v4633 = vpop.f32.mrf.mxu0
        %v4634 = vadd.f32 %v4585, %v4633
        %v4635 = vpop.f32.mrf.mxu0
        %v4636 = vadd.f32 %v4587, %v4635
        %4637 = vmatmul.bf16.gmra.mxu0 %v3906
        %v4638 = vpop.f32.mrf.mxu0
        %v4639 = vadd.f32 %v4590, %v4638
        %v4640 = vpop.f32.mrf.mxu0
        %v4641 = vadd.f32 %v4592, %v4640
        %4642 = vmatmul.bf16.gmra.mxu0 %v3910
        %v4643 = vpop.f32.mrf.mxu0
        %v4644 = vadd.f32 %v4595, %v4643
        %v4645 = vpop.f32.mrf.mxu0
        %v4646 = vadd.f32 %v4597, %v4645
        %4647 = vmatmul.bf16.gmra.mxu0 %v3914
        %v4648 = vpop.f32.mrf.mxu0
        %v4649 = vadd.f32 %v4600, %v4648
        %v4650 = vpop.f32.mrf.mxu0
        %v4651 = vadd.f32 %v4602, %v4650
        %4652 = vmatmul.bf16.gmra.mxu0 %v3918
        %v4653 = vpop.f32.mrf.mxu0
        %v4654 = vadd.f32 %v4605, %v4653
        %v4655 = vpop.f32.mrf.mxu0
        %v4656 = vadd.f32 %v4607, %v4655
        %4657 = vmatmul.bf16.gmra.mxu0 %v3922
        %v4658 = vpop.f32.mrf.mxu0
        %v4659 = vadd.f32 %v4610, %v4658
        %v4660 = vpop.f32.mrf.mxu0
        %v4661 = vadd.f32 %v4612, %v4660
        %4662 = vdwg.mxu0
        %4663 = vmatpush.bf16.msra.mxu0 %v4297
        %4664 = vmatpush.bf16.msra.mxu0 %v4294
        %4665 = vmatpush.bf16.msra.mxu0 %v4291
        %4666 = vmatpush.bf16.msra.mxu0 %v4288
        %4667 = vmatpush.bf16.msra.mxu0 %v4285
        %4668 = vmatpush.bf16.msra.mxu0 %v4282
        %4669 = vmatpush.bf16.msra.mxu0 %v4279
        %4670 = vmatpush.bf16.msra.mxu0 %v4276
        %4671 = vmatmul.bf16.gmra.mxu0 %v3891
        %v4672 = vpop.f32.mrf.mxu0
        %v4673 = vadd.f32 0.0, %v4672
        %v4674 = vpop.f32.mrf.mxu0
        %v4675 = vadd.f32 0.0, %v4674
        %4676 = vmatmul.bf16.gmra.mxu0 %v3895
        %v4677 = vpop.f32.mrf.mxu0
        %v4678 = vadd.f32 0.0, %v4677
        %v4679 = vpop.f32.mrf.mxu0
        %v4680 = vadd.f32 0.0, %v4679
        %4681 = vmatmul.bf16.gmra.mxu0 %v3899
        %v4682 = vpop.f32.mrf.mxu0
        %v4683 = vadd.f32 0.0, %v4682
        %v4684 = vpop.f32.mrf.mxu0
        %v4685 = vadd.f32 0.0, %v4684
        %4686 = vmatmul.bf16.gmra.mxu0 %v3903
        %v4687 = vpop.f32.mrf.mxu0
        %v4688 = vadd.f32 0.0, %v4687
        %v4689 = vpop.f32.mrf.mxu0
        %v4690 = vadd.f32 0.0, %v4689
        %4691 = vmatmul.bf16.gmra.mxu0 %v3907
        %v4692 = vpop.f32.mrf.mxu0
        %v4693 = vadd.f32 0.0, %v4692
        %v4694 = vpop.f32.mrf.mxu0
        %v4695 = vadd.f32 0.0, %v4694
        %4696 = vmatmul.bf16.gmra.mxu0 %v3911
        %v4697 = vpop.f32.mrf.mxu0
        %v4698 = vadd.f32 0.0, %v4697
        %v4699 = vpop.f32.mrf.mxu0
        %v4700 = vadd.f32 0.0, %v4699
        %4701 = vmatmul.bf16.gmra.mxu0 %v3915
        %v4702 = vpop.f32.mrf.mxu0
        %v4703 = vadd.f32 0.0, %v4702
        %v4704 = vpop.f32.mrf.mxu0
        %v4705 = vadd.f32 0.0, %v4704
        %4706 = vmatmul.bf16.gmra.mxu0 %v3919
        %v4707 = vpop.f32.mrf.mxu0
        %v4708 = vadd.f32 0.0, %v4707
        %v4709 = vpop.f32.mrf.mxu0
        %v4710 = vadd.f32 0.0, %v4709
        %4711 = vdwg.mxu0
        %4712 = vmatpush.bf16.msra.mxu0 %v4321
        %4713 = vmatpush.bf16.msra.mxu0 %v4318
        %4714 = vmatpush.bf16.msra.mxu0 %v4315
        %4715 = vmatpush.bf16.msra.mxu0 %v4312
        %4716 = vmatpush.bf16.msra.mxu0 %v4309
        %4717 = vmatpush.bf16.msra.mxu0 %v4306
        %4718 = vmatpush.bf16.msra.mxu0 %v4303
        %4719 = vmatpush.bf16.msra.mxu0 %v4300
        %4720 = vmatmul.bf16.gmra.mxu0 %v3892
        %v4721 = vpop.f32.mrf.mxu0
        %v4722 = vadd.f32 %v4673, %v4721
        %v4723 = vpop.f32.mrf.mxu0
        %v4724 = vadd.f32 %v4675, %v4723
        %4725 = vmatmul.bf16.gmra.mxu0 %v3896
        %v4726 = vpop.f32.mrf.mxu0
        %v4727 = vadd.f32 %v4678, %v4726
        %v4728 = vpop.f32.mrf.mxu0
        %v4729 = vadd.f32 %v4680, %v4728
        %4730 = vmatmul.bf16.gmra.mxu0 %v3900
        %v4731 = vpop.f32.mrf.mxu0
        %v4732 = vadd.f32 %v4683, %v4731
        %v4733 = vpop.f32.mrf.mxu0
        %v4734 = vadd.f32 %v4685, %v4733
        %4735 = vmatmul.bf16.gmra.mxu0 %v3904
        %v4736 = vpop.f32.mrf.mxu0
        %v4737 = vadd.f32 %v4688, %v4736
        %v4738 = vpop.f32.mrf.mxu0
        %v4739 = vadd.f32 %v4690, %v4738
        %4740 = vmatmul.bf16.gmra.mxu0 %v3908
        %v4741 = vpop.f32.mrf.mxu0
        %v4742 = vadd.f32 %v4693, %v4741
        %v4743 = vpop.f32.mrf.mxu0
        %v4744 = vadd.f32 %v4695, %v4743
        %4745 = vmatmul.bf16.gmra.mxu0 %v3912
        %v4746 = vpop.f32.mrf.mxu0
        %v4747 = vadd.f32 %v4698, %v4746
        %v4748 = vpop.f32.mrf.mxu0
        %v4749 = vadd.f32 %v4700, %v4748
        %4750 = vmatmul.bf16.gmra.mxu0 %v3916
        %v4751 = vpop.f32.mrf.mxu0
        %v4752 = vadd.f32 %v4703, %v4751
        %v4753 = vpop.f32.mrf.mxu0
        %v4754 = vadd.f32 %v4705, %v4753
        %4755 = vmatmul.bf16.gmra.mxu0 %v3920
        %v4756 = vpop.f32.mrf.mxu0
        %v4757 = vadd.f32 %v4708, %v4756
        %v4758 = vpop.f32.mrf.mxu0
        %v4759 = vadd.f32 %v4710, %v4758
        %4760 = vdwg.mxu0
        %4761 = vmatpush.bf16.msra.mxu0 %v4345
        %4762 = vmatpush.bf16.msra.mxu0 %v4342
        %4763 = vmatpush.bf16.msra.mxu0 %v4339
        %4764 = vmatpush.bf16.msra.mxu0 %v4336
        %4765 = vmatpush.bf16.msra.mxu0 %v4333
        %4766 = vmatpush.bf16.msra.mxu0 %v4330
        %4767 = vmatpush.bf16.msra.mxu0 %v4327
        %4768 = vmatpush.bf16.msra.mxu0 %v4324
        %4769 = vmatmul.bf16.gmra.mxu0 %v3893
        %v4770 = vpop.f32.mrf.mxu0
        %v4771 = vadd.f32 %v4722, %v4770
        %v4772 = vpop.f32.mrf.mxu0
        %v4773 = vadd.f32 %v4724, %v4772
        %4774 = vmatmul.bf16.gmra.mxu0 %v3897
        %v4775 = vpop.f32.mrf.mxu0
        %v4776 = vadd.f32 %v4727, %v4775
        %v4777 = vpop.f32.mrf.mxu0
        %v4778 = vadd.f32 %v4729, %v4777
        %4779 = vmatmul.bf16.gmra.mxu0 %v3901
        %v4780 = vpop.f32.mrf.mxu0
        %v4781 = vadd.f32 %v4732, %v4780
        %v4782 = vpop.f32.mrf.mxu0
        %v4783 = vadd.f32 %v4734, %v4782
        %4784 = vmatmul.bf16.gmra.mxu0 %v3905
        %v4785 = vpop.f32.mrf.mxu0
        %v4786 = vadd.f32 %v4737, %v4785
        %v4787 = vpop.f32.mrf.mxu0
        %v4788 = vadd.f32 %v4739, %v4787
        %4789 = vmatmul.bf16.gmra.mxu0 %v3909
        %v4790 = vpop.f32.mrf.mxu0
        %v4791 = vadd.f32 %v4742, %v4790
        %v4792 = vpop.f32.mrf.mxu0
        %v4793 = vadd.f32 %v4744, %v4792
        %4794 = vmatmul.bf16.gmra.mxu0 %v3913
        %v4795 = vpop.f32.mrf.mxu0
        %v4796 = vadd.f32 %v4747, %v4795
        %v4797 = vpop.f32.mrf.mxu0
        %v4798 = vadd.f32 %v4749, %v4797
        %4799 = vmatmul.bf16.gmra.mxu0 %v3917
        %v4800 = vpop.f32.mrf.mxu0
        %v4801 = vadd.f32 %v4752, %v4800
        %v4802 = vpop.f32.mrf.mxu0
        %v4803 = vadd.f32 %v4754, %v4802
        %4804 = vmatmul.bf16.gmra.mxu0 %v3921
        %v4805 = vpop.f32.mrf.mxu0
        %v4806 = vadd.f32 %v4757, %v4805
        %v4807 = vpop.f32.mrf.mxu0
        %v4808 = vadd.f32 %v4759, %v4807
        %4809 = vdwg.mxu0
        %4810 = vmatpush.bf16.msra.mxu0 %v4369
        %4811 = vmatpush.bf16.msra.mxu0 %v4366
        %4812 = vmatpush.bf16.msra.mxu0 %v4363
        %4813 = vmatpush.bf16.msra.mxu0 %v4360
        %4814 = vmatpush.bf16.msra.mxu0 %v4357
        %4815 = vmatpush.bf16.msra.mxu0 %v4354
        %4816 = vmatpush.bf16.msra.mxu0 %v4351
        %4817 = vmatpush.bf16.msra.mxu0 %v4348
        %4818 = vmatmul.bf16.gmra.mxu0 %v3894
        %v4819 = vpop.f32.mrf.mxu0
        %v4820 = vadd.f32 %v4771, %v4819
        %v4821 = vpop.f32.mrf.mxu0
        %v4822 = vadd.f32 %v4773, %v4821
        %4823 = vmatmul.bf16.gmra.mxu0 %v3898
        %v4824 = vpop.f32.mrf.mxu0
        %v4825 = vadd.f32 %v4776, %v4824
        %v4826 = vpop.f32.mrf.mxu0
        %v4827 = vadd.f32 %v4778, %v4826
        %4828 = vmatmul.bf16.gmra.mxu0 %v3902
        %v4829 = vpop.f32.mrf.mxu0
        %v4830 = vadd.f32 %v4781, %v4829
        %v4831 = vpop.f32.mrf.mxu0
        %v4832 = vadd.f32 %v4783, %v4831
        %4833 = vmatmul.bf16.gmra.mxu0 %v3906
        %v4834 = vpop.f32.mrf.mxu0
        %v4835 = vadd.f32 %v4786, %v4834
        %v4836 = vpop.f32.mrf.mxu0
        %v4837 = vadd.f32 %v4788, %v4836
        %4838 = vmatmul.bf16.gmra.mxu0 %v3910
        %v4839 = vpop.f32.mrf.mxu0
        %v4840 = vadd.f32 %v4791, %v4839
        %v4841 = vpop.f32.mrf.mxu0
        %v4842 = vadd.f32 %v4793, %v4841
        %4843 = vmatmul.bf16.gmra.mxu0 %v3914
        %v4844 = vpop.f32.mrf.mxu0
        %v4845 = vadd.f32 %v4796, %v4844
        %v4846 = vpop.f32.mrf.mxu0
        %v4847 = vadd.f32 %v4798, %v4846
        %4848 = vmatmul.bf16.gmra.mxu0 %v3918
        %v4849 = vpop.f32.mrf.mxu0
        %v4850 = vadd.f32 %v4801, %v4849
        %v4851 = vpop.f32.mrf.mxu0
        %v4852 = vadd.f32 %v4803, %v4851
        %4853 = vmatmul.bf16.gmra.mxu0 %v3922
        %v4854 = vpop.f32.mrf.mxu0
        %v4855 = vadd.f32 %v4806, %v4854
        %v4856 = vpop.f32.mrf.mxu0
        %v4857 = vadd.f32 %v4808, %v4856
        %4858 = vdwg.mxu0
        %4859 = vmatpush.bf16.msra.mxu0 %v4298
        %4860 = vmatpush.bf16.msra.mxu0 %v4295
        %4861 = vmatpush.bf16.msra.mxu0 %v4292
        %4862 = vmatpush.bf16.msra.mxu0 %v4289
        %4863 = vmatpush.bf16.msra.mxu0 %v4286
        %4864 = vmatpush.bf16.msra.mxu0 %v4283
        %4865 = vmatpush.bf16.msra.mxu0 %v4280
        %4866 = vmatpush.bf16.msra.mxu0 %v4277
        %4867 = vmatmul.bf16.gmra.mxu0 %v3891
        %v4868 = vpop.f32.mrf.mxu0
        %v4869 = vadd.f32 0.0, %v4868
        %v4870 = vpop.f32.mrf.mxu0
        %v4871 = vadd.f32 0.0, %v4870
        %4872 = vmatmul.bf16.gmra.mxu0 %v3895
        %v4873 = vpop.f32.mrf.mxu0
        %v4874 = vadd.f32 0.0, %v4873
        %v4875 = vpop.f32.mrf.mxu0
        %v4876 = vadd.f32 0.0, %v4875
        %4877 = vmatmul.bf16.gmra.mxu0 %v3899
        %v4878 = vpop.f32.mrf.mxu0
        %v4879 = vadd.f32 0.0, %v4878
        %v4880 = vpop.f32.mrf.mxu0
        %v4881 = vadd.f32 0.0, %v4880
        %4882 = vmatmul.bf16.gmra.mxu0 %v3903
        %v4883 = vpop.f32.mrf.mxu0
        %v4884 = vadd.f32 0.0, %v4883
        %v4885 = vpop.f32.mrf.mxu0
        %v4886 = vadd.f32 0.0, %v4885
        %4887 = vmatmul.bf16.gmra.mxu0 %v3907
        %v4888 = vpop.f32.mrf.mxu0
        %v4889 = vadd.f32 0.0, %v4888
        %v4890 = vpop.f32.mrf.mxu0
        %v4891 = vadd.f32 0.0, %v4890
        %4892 = vmatmul.bf16.gmra.mxu0 %v3911
        %v4893 = vpop.f32.mrf.mxu0
        %v4894 = vadd.f32 0.0, %v4893
        %v4895 = vpop.f32.mrf.mxu0
        %v4896 = vadd.f32 0.0, %v4895
        %4897 = vmatmul.bf16.gmra.mxu0 %v3915
        %v4898 = vpop.f32.mrf.mxu0
        %v4899 = vadd.f32 0.0, %v4898
        %v4900 = vpop.f32.mrf.mxu0
        %v4901 = vadd.f32 0.0, %v4900
        %4902 = vmatmul.bf16.gmra.mxu0 %v3919
        %v4903 = vpop.f32.mrf.mxu0
        %v4904 = vadd.f32 0.0, %v4903
        %v4905 = vpop.f32.mrf.mxu0
        %v4906 = vadd.f32 0.0, %v4905
        %4907 = vdwg.mxu0
        %4908 = vmatpush.bf16.msra.mxu0 %v4322
        %4909 = vmatpush.bf16.msra.mxu0 %v4319
        %4910 = vmatpush.bf16.msra.mxu0 %v4316
        %4911 = vmatpush.bf16.msra.mxu0 %v4313
        %4912 = vmatpush.bf16.msra.mxu0 %v4310
        %4913 = vmatpush.bf16.msra.mxu0 %v4307
        %4914 = vmatpush.bf16.msra.mxu0 %v4304
        %4915 = vmatpush.bf16.msra.mxu0 %v4301
        %4916 = vmatmul.bf16.gmra.mxu0 %v3892
        %v4917 = vpop.f32.mrf.mxu0
        %v4918 = vadd.f32 %v4869, %v4917
        %v4919 = vpop.f32.mrf.mxu0
        %v4920 = vadd.f32 %v4871, %v4919
        %4921 = vmatmul.bf16.gmra.mxu0 %v3896
        %v4922 = vpop.f32.mrf.mxu0
        %v4923 = vadd.f32 %v4874, %v4922
        %v4924 = vpop.f32.mrf.mxu0
        %v4925 = vadd.f32 %v4876, %v4924
        %4926 = vmatmul.bf16.gmra.mxu0 %v3900
        %v4927 = vpop.f32.mrf.mxu0
        %v4928 = vadd.f32 %v4879, %v4927
        %v4929 = vpop.f32.mrf.mxu0
        %v4930 = vadd.f32 %v4881, %v4929
        %4931 = vmatmul.bf16.gmra.mxu0 %v3904
        %v4932 = vpop.f32.mrf.mxu0
        %v4933 = vadd.f32 %v4884, %v4932
        %v4934 = vpop.f32.mrf.mxu0
        %v4935 = vadd.f32 %v4886, %v4934
        %4936 = vmatmul.bf16.gmra.mxu0 %v3908
        %v4937 = vpop.f32.mrf.mxu0
        %v4938 = vadd.f32 %v4889, %v4937
        %v4939 = vpop.f32.mrf.mxu0
        %v4940 = vadd.f32 %v4891, %v4939
        %4941 = vmatmul.bf16.gmra.mxu0 %v3912
        %v4942 = vpop.f32.mrf.mxu0
        %v4943 = vadd.f32 %v4894, %v4942
        %v4944 = vpop.f32.mrf.mxu0
        %v4945 = vadd.f32 %v4896, %v4944
        %4946 = vmatmul.bf16.gmra.mxu0 %v3916
        %v4947 = vpop.f32.mrf.mxu0
        %v4948 = vadd.f32 %v4899, %v4947
        %v4949 = vpop.f32.mrf.mxu0
        %v4950 = vadd.f32 %v4901, %v4949
        %4951 = vmatmul.bf16.gmra.mxu0 %v3920
        %v4952 = vpop.f32.mrf.mxu0
        %v4953 = vadd.f32 %v4904, %v4952
        %v4954 = vpop.f32.mrf.mxu0
        %v4955 = vadd.f32 %v4906, %v4954
        %4956 = vdwg.mxu0
        %4957 = vmatpush.bf16.msra.mxu0 %v4346
        %4958 = vmatpush.bf16.msra.mxu0 %v4343
        %4959 = vmatpush.bf16.msra.mxu0 %v4340
        %4960 = vmatpush.bf16.msra.mxu0 %v4337
        %4961 = vmatpush.bf16.msra.mxu0 %v4334
        %4962 = vmatpush.bf16.msra.mxu0 %v4331
        %4963 = vmatpush.bf16.msra.mxu0 %v4328
        %4964 = vmatpush.bf16.msra.mxu0 %v4325
        %4965 = vmatmul.bf16.gmra.mxu0 %v3893
        %v4966 = vpop.f32.mrf.mxu0
        %v4967 = vadd.f32 %v4918, %v4966
        %v4968 = vpop.f32.mrf.mxu0
        %v4969 = vadd.f32 %v4920, %v4968
        %4970 = vmatmul.bf16.gmra.mxu0 %v3897
        %v4971 = vpop.f32.mrf.mxu0
        %v4972 = vadd.f32 %v4923, %v4971
        %v4973 = vpop.f32.mrf.mxu0
        %v4974 = vadd.f32 %v4925, %v4973
        %4975 = vmatmul.bf16.gmra.mxu0 %v3901
        %v4976 = vpop.f32.mrf.mxu0
        %v4977 = vadd.f32 %v4928, %v4976
        %v4978 = vpop.f32.mrf.mxu0
        %v4979 = vadd.f32 %v4930, %v4978
        %4980 = vmatmul.bf16.gmra.mxu0 %v3905
        %v4981 = vpop.f32.mrf.mxu0
        %v4982 = vadd.f32 %v4933, %v4981
        %v4983 = vpop.f32.mrf.mxu0
        %v4984 = vadd.f32 %v4935, %v4983
        %4985 = vmatmul.bf16.gmra.mxu0 %v3909
        %v4986 = vpop.f32.mrf.mxu0
        %v4987 = vadd.f32 %v4938, %v4986
        %v4988 = vpop.f32.mrf.mxu0
        %v4989 = vadd.f32 %v4940, %v4988
        %4990 = vmatmul.bf16.gmra.mxu0 %v3913
        %v4991 = vpop.f32.mrf.mxu0
        %v4992 = vadd.f32 %v4943, %v4991
        %v4993 = vpop.f32.mrf.mxu0
        %v4994 = vadd.f32 %v4945, %v4993
        %4995 = vmatmul.bf16.gmra.mxu0 %v3917
        %v4996 = vpop.f32.mrf.mxu0
        %v4997 = vadd.f32 %v4948, %v4996
        %v4998 = vpop.f32.mrf.mxu0
        %v4999 = vadd.f32 %v4950, %v4998
        %5000 = vmatmul.bf16.gmra.mxu0 %v3921
        %v5001 = vpop.f32.mrf.mxu0
        %v5002 = vadd.f32 %v4953, %v5001
        %v5003 = vpop.f32.mrf.mxu0
        %v5004 = vadd.f32 %v4955, %v5003
        %5005 = vdwg.mxu0
        %5006 = vmatpush.bf16.msra.mxu0 %v4370
        %5007 = vmatpush.bf16.msra.mxu0 %v4367
        %5008 = vmatpush.bf16.msra.mxu0 %v4364
        %5009 = vmatpush.bf16.msra.mxu0 %v4361
        %5010 = vmatpush.bf16.msra.mxu0 %v4358
        %5011 = vmatpush.bf16.msra.mxu0 %v4355
        %5012 = vmatpush.bf16.msra.mxu0 %v4352
        %5013 = vmatpush.bf16.msra.mxu0 %v4349
        %5014 = vmatmul.bf16.gmra.mxu0 %v3894
        %v5015 = vpop.f32.mrf.mxu0
        %v5016 = vadd.f32 %v4967, %v5015
        %v5017 = vpop.f32.mrf.mxu0
        %v5018 = vadd.f32 %v4969, %v5017
        %5019 = vmatmul.bf16.gmra.mxu0 %v3898
        %v5020 = vpop.f32.mrf.mxu0
        %v5021 = vadd.f32 %v4972, %v5020
        %v5022 = vpop.f32.mrf.mxu0
        %v5023 = vadd.f32 %v4974, %v5022
        %5024 = vmatmul.bf16.gmra.mxu0 %v3902
        %v5025 = vpop.f32.mrf.mxu0
        %v5026 = vadd.f32 %v4977, %v5025
        %v5027 = vpop.f32.mrf.mxu0
        %v5028 = vadd.f32 %v4979, %v5027
        %5029 = vmatmul.bf16.gmra.mxu0 %v3906
        %v5030 = vpop.f32.mrf.mxu0
        %v5031 = vadd.f32 %v4982, %v5030
        %v5032 = vpop.f32.mrf.mxu0
        %v5033 = vadd.f32 %v4984, %v5032
        %5034 = vmatmul.bf16.gmra.mxu0 %v3910
        %v5035 = vpop.f32.mrf.mxu0
        %v5036 = vadd.f32 %v4987, %v5035
        %v5037 = vpop.f32.mrf.mxu0
        %v5038 = vadd.f32 %v4989, %v5037
        %5039 = vmatmul.bf16.gmra.mxu0 %v3914
        %v5040 = vpop.f32.mrf.mxu0
        %v5041 = vadd.f32 %v4992, %v5040
        %v5042 = vpop.f32.mrf.mxu0
        %v5043 = vadd.f32 %v4994, %v5042
        %5044 = vmatmul.bf16.gmra.mxu0 %v3918
        %v5045 = vpop.f32.mrf.mxu0
        %v5046 = vadd.f32 %v4997, %v5045
        %v5047 = vpop.f32.mrf.mxu0
        %v5048 = vadd.f32 %v4999, %v5047
        %5049 = vmatmul.bf16.gmra.mxu0 %v3922
        %v5050 = vpop.f32.mrf.mxu0
        %v5051 = vadd.f32 %v5002, %v5050
        %v5052 = vpop.f32.mrf.mxu0
        %v5053 = vadd.f32 %v5004, %v5052
        %5054 = vdwg.mxu0
        %v5055 = vadd.f32 %v3088, %v4624
        %v5056 = vadd.f32 %v3284, %v4820
        %v5057 = vadd.f32 %v3480, %v5016
        %v5058 = vadd.f32 %v3090, %v4626
        %v5059 = vadd.f32 %v3286, %v4822
        %v5060 = vadd.f32 %v3482, %v5018
        %v5061 = vadd.f32 %v3093, %v4629
        %v5062 = vadd.f32 %v3289, %v4825
        %v5063 = vadd.f32 %v3485, %v5021
        %v5064 = vadd.f32 %v3095, %v4631
        %v5065 = vadd.f32 %v3291, %v4827
        %v5066 = vadd.f32 %v3487, %v5023
        %v5067 = vadd.f32 %v3098, %v4634
        %v5068 = vadd.f32 %v3294, %v4830
        %v5069 = vadd.f32 %v3490, %v5026
        %v5070 = vadd.f32 %v3100, %v4636
        %v5071 = vadd.f32 %v3296, %v4832
        %v5072 = vadd.f32 %v3492, %v5028
        %v5073 = vadd.f32 %v3103, %v4639
        %v5074 = vadd.f32 %v3299, %v4835
        %v5075 = vadd.f32 %v3495, %v5031
        %v5076 = vadd.f32 %v3105, %v4641
        %v5077 = vadd.f32 %v3301, %v4837
        %v5078 = vadd.f32 %v3497, %v5033
        %v5079 = vadd.f32 %v3108, %v4644
        %v5080 = vadd.f32 %v3304, %v4840
        %v5081 = vadd.f32 %v3500, %v5036
        %v5082 = vadd.f32 %v3110, %v4646
        %v5083 = vadd.f32 %v3306, %v4842
        %v5084 = vadd.f32 %v3502, %v5038
        %v5085 = vadd.f32 %v3113, %v4649
        %v5086 = vadd.f32 %v3309, %v4845
        %v5087 = vadd.f32 %v3505, %v5041
        %v5088 = vadd.f32 %v3115, %v4651
        %v5089 = vadd.f32 %v3311, %v4847
        %v5090 = vadd.f32 %v3507, %v5043
        %v5091 = vadd.f32 %v3118, %v4654
        %v5092 = vadd.f32 %v3314, %v4850
        %v5093 = vadd.f32 %v3510, %v5046
        %v5094 = vadd.f32 %v3120, %v4656
        %v5095 = vadd.f32 %v3316, %v4852
        %v5096 = vadd.f32 %v3512, %v5048
        %v5097 = vadd.f32 %v3123, %v4659
        %v5098 = vadd.f32 %v3319, %v4855
        %v5099 = vadd.f32 %v3515, %v5051
        %v5100 = vadd.f32 %v3125, %v4661
        %v5101 = vadd.f32 %v3321, %v4857
        %v5102 = vadd.f32 %v3517, %v5053
        %v5103 = vld [vmem:[%s258 + $0x20] sm:$0x33]
        %v5104 = vld [vmem:[%s258 + $0x28] sm:$0x33]
        %v5105 = vld [vmem:[%s258 + $0x50] sm:$0x33]
        %v5106 = vld [vmem:[%s258 + $0x58] sm:$0x33]
        %v5107 = vld [vmem:[%s258 + $0x80] sm:$0x33]
        %v5108 = vld [vmem:[%s258 + $0x88] sm:$0x33]
        %v5109 = vld [vmem:[%s258 + $0xb0] sm:$0x33]
        %v5110 = vld [vmem:[%s258 + $0xb8] sm:$0x33]
        %v5111 = vld [vmem:[%s258 + $0xe0] sm:$0x33]
        %v5112 = vld [vmem:[%s258 + $0xe8] sm:$0x33]
        %v5113 = vld [vmem:[%s258 + $0x110] sm:$0x33]
        %v5114 = vld [vmem:[%s258 + $0x118] sm:$0x33]
        %v5115 = vld [vmem:[%s258 + $0x140] sm:$0x33]
        %v5116 = vld [vmem:[%s258 + $0x148] sm:$0x33]
        %v5117 = vld [vmem:[%s258 + $0x170] sm:$0x33]
        %v5118 = vld [vmem:[%s258 + $0x178] sm:$0x33]
        %vm5119 = vsmask.f32 2304
        %vm5120 = vsmask.f32 6416
        %vm5121 = vmor %vm5119, %vm5120
        %v5123 = vshrl.u32 %v3519, 16
        %v5125 = vrot.slane %v5123, 5
        %v5126 = vshll.u32 %v3519, 16
        %v5128 = vrot.slane %v5126, 6
        %v5129 = vor.u32 %v5125, %v5128
        %v5130 = vrot.slane %v5129, 4
        %v5131 = vrot.slane %v546, 5
        %v5132 = vrot.slane %v528, 6
        %v5133 = vor.u32 %v5131, %v5132
        %v5134 = vsel %vm5121, %v5130, %v5133
        %v5136 = vshrl.u32 %v3520, 16
        %v5138 = vrot.slane %v5136, 5
        %v5139 = vshll.u32 %v3520, 16
        %v5141 = vrot.slane %v5139, 6
        %v5142 = vor.u32 %v5138, %v5141
        %v5143 = vrot.slane %v5142, 4
        %v5144 = vrot.slane %v556, 5
        %v5145 = vrot.slane %v542, 6
        %v5146 = vor.u32 %v5144, %v5145
        %v5147 = vsel %vm5121, %v5143, %v5146
        %v5148 = vrot.slane %v5133, 4
        %v5150 = vshrl.u32 %v5103, 16
        %v5152 = vrot.slane %v5150, 5
        %v5153 = vshll.u32 %v5103, 16
        %v5155 = vrot.slane %v5153, 6
        %v5156 = vor.u32 %v5152, %v5155
        %v5157 = vsel %vm5121, %v5148, %v5156
        %v5158 = vrot.slane %v5146, 4
        %v5160 = vshrl.u32 %v5104, 16
        %v5162 = vrot.slane %v5160, 5
        %v5163 = vshll.u32 %v5104, 16
        %v5165 = vrot.slane %v5163, 6
        %v5166 = vor.u32 %v5162, %v5165
        %v5167 = vsel %vm5121, %v5158, %v5166
        %v5169 = vshrl.u32 %v3521, 16
        %v5171 = vrot.slane %v5169, 5
        %v5172 = vshll.u32 %v3521, 16
        %v5174 = vrot.slane %v5172, 6
        %v5175 = vor.u32 %v5171, %v5174
        %v5176 = vrot.slane %v5175, 4
        %v5177 = vrot.slane %v594, 5
        %v5178 = vrot.slane %v576, 6
        %v5179 = vor.u32 %v5177, %v5178
        %v5180 = vsel %vm5121, %v5176, %v5179
        %v5182 = vshrl.u32 %v3522, 16
        %v5184 = vrot.slane %v5182, 5
        %v5185 = vshll.u32 %v3522, 16
        %v5187 = vrot.slane %v5185, 6
        %v5188 = vor.u32 %v5184, %v5187
        %v5189 = vrot.slane %v5188, 4
        %v5190 = vrot.slane %v604, 5
        %v5191 = vrot.slane %v590, 6
        %v5192 = vor.u32 %v5190, %v5191
        %v5193 = vsel %vm5121, %v5189, %v5192
        %v5194 = vrot.slane %v5179, 4
        %v5196 = vshrl.u32 %v5105, 16
        %v5198 = vrot.slane %v5196, 5
        %v5199 = vshll.u32 %v5105, 16
        %v5201 = vrot.slane %v5199, 6
        %v5202 = vor.u32 %v5198, %v5201
        %v5203 = vsel %vm5121, %v5194, %v5202
        %v5204 = vrot.slane %v5192, 4
        %v5206 = vshrl.u32 %v5106, 16
        %v5208 = vrot.slane %v5206, 5
        %v5209 = vshll.u32 %v5106, 16
        %v5211 = vrot.slane %v5209, 6
        %v5212 = vor.u32 %v5208, %v5211
        %v5213 = vsel %vm5121, %v5204, %v5212
        %v5215 = vshrl.u32 %v3523, 16
        %v5217 = vrot.slane %v5215, 5
        %v5218 = vshll.u32 %v3523, 16
        %v5220 = vrot.slane %v5218, 6
        %v5221 = vor.u32 %v5217, %v5220
        %v5222 = vrot.slane %v5221, 4
        %v5223 = vrot.slane %v642, 5
        %v5224 = vrot.slane %v624, 6
        %v5225 = vor.u32 %v5223, %v5224
        %v5226 = vsel %vm5121, %v5222, %v5225
        %v5228 = vshrl.u32 %v3524, 16
        %v5230 = vrot.slane %v5228, 5
        %v5231 = vshll.u32 %v3524, 16
        %v5233 = vrot.slane %v5231, 6
        %v5234 = vor.u32 %v5230, %v5233
        %v5235 = vrot.slane %v5234, 4
        %v5236 = vrot.slane %v652, 5
        %v5237 = vrot.slane %v638, 6
        %v5238 = vor.u32 %v5236, %v5237
        %v5239 = vsel %vm5121, %v5235, %v5238
        %v5240 = vrot.slane %v5225, 4
        %v5242 = vshrl.u32 %v5107, 16
        %v5244 = vrot.slane %v5242, 5
        %v5245 = vshll.u32 %v5107, 16
        %v5247 = vrot.slane %v5245, 6
        %v5248 = vor.u32 %v5244, %v5247
        %v5249 = vsel %vm5121, %v5240, %v5248
        %v5250 = vrot.slane %v5238, 4
        %v5252 = vshrl.u32 %v5108, 16
        %v5254 = vrot.slane %v5252, 5
        %v5255 = vshll.u32 %v5108, 16
        %v5257 = vrot.slane %v5255, 6
        %v5258 = vor.u32 %v5254, %v5257
        %v5259 = vsel %vm5121, %v5250, %v5258
        %v5261 = vshrl.u32 %v3525, 16
        %v5263 = vrot.slane %v5261, 5
        %v5264 = vshll.u32 %v3525, 16
        %v5266 = vrot.slane %v5264, 6
        %v5267 = vor.u32 %v5263, %v5266
        %v5268 = vrot.slane %v5267, 4
        %v5269 = vrot.slane %v690, 5
        %v5270 = vrot.slane %v672, 6
        %v5271 = vor.u32 %v5269, %v5270
        %v5272 = vsel %vm5121, %v5268, %v5271
        %v5274 = vshrl.u32 %v3526, 16
        %v5276 = vrot.slane %v5274, 5
        %v5277 = vshll.u32 %v3526, 16
        %v5279 = vrot.slane %v5277, 6
        %v5280 = vor.u32 %v5276, %v5279
        %v5281 = vrot.slane %v5280, 4
        %v5282 = vrot.slane %v700, 5
        %v5283 = vrot.slane %v686, 6
        %v5284 = vor.u32 %v5282, %v5283
        %v5285 = vsel %vm5121, %v5281, %v5284
        %v5286 = vrot.slane %v5271, 4
        %v5288 = vshrl.u32 %v5109, 16
        %v5290 = vrot.slane %v5288, 5
        %v5291 = vshll.u32 %v5109, 16
        %v5293 = vrot.slane %v5291, 6
        %v5294 = vor.u32 %v5290, %v5293
        %v5295 = vsel %vm5121, %v5286, %v5294
        %v5296 = vrot.slane %v5284, 4
        %v5298 = vshrl.u32 %v5110, 16
        %v5300 = vrot.slane %v5298, 5
        %v5301 = vshll.u32 %v5110, 16
        %v5303 = vrot.slane %v5301, 6
        %v5304 = vor.u32 %v5300, %v5303
        %v5305 = vsel %vm5121, %v5296, %v5304
        %v5307 = vshrl.u32 %v3527, 16
        %v5309 = vrot.slane %v5307, 5
        %v5310 = vshll.u32 %v3527, 16
        %v5312 = vrot.slane %v5310, 6
        %v5313 = vor.u32 %v5309, %v5312
        %v5314 = vrot.slane %v5313, 4
        %v5315 = vrot.slane %v738, 5
        %v5316 = vrot.slane %v720, 6
        %v5317 = vor.u32 %v5315, %v5316
        %v5318 = vsel %vm5121, %v5314, %v5317
        %v5320 = vshrl.u32 %v3528, 16
        %v5322 = vrot.slane %v5320, 5
        %v5323 = vshll.u32 %v3528, 16
        %v5325 = vrot.slane %v5323, 6
        %v5326 = vor.u32 %v5322, %v5325
        %v5327 = vrot.slane %v5326, 4
        %v5328 = vrot.slane %v748, 5
        %v5329 = vrot.slane %v734, 6
        %v5330 = vor.u32 %v5328, %v5329
        %v5331 = vsel %vm5121, %v5327, %v5330
        %v5332 = vrot.slane %v5317, 4
        %v5334 = vshrl.u32 %v5111, 16
        %v5336 = vrot.slane %v5334, 5
        %v5337 = vshll.u32 %v5111, 16
        %v5339 = vrot.slane %v5337, 6
        %v5340 = vor.u32 %v5336, %v5339
        %v5341 = vsel %vm5121, %v5332, %v5340
        %v5342 = vrot.slane %v5330, 4
        %v5344 = vshrl.u32 %v5112, 16
        %v5346 = vrot.slane %v5344, 5
        %v5347 = vshll.u32 %v5112, 16
        %v5349 = vrot.slane %v5347, 6
        %v5350 = vor.u32 %v5346, %v5349
        %v5351 = vsel %vm5121, %v5342, %v5350
        %v5353 = vshrl.u32 %v3529, 16
        %v5355 = vrot.slane %v5353, 5
        %v5356 = vshll.u32 %v3529, 16
        %v5358 = vrot.slane %v5356, 6
        %v5359 = vor.u32 %v5355, %v5358
        %v5360 = vrot.slane %v5359, 4
        %v5361 = vrot.slane %v786, 5
        %v5362 = vrot.slane %v768, 6
        %v5363 = vor.u32 %v5361, %v5362
        %v5364 = vsel %vm5121, %v5360, %v5363
        %v5366 = vshrl.u32 %v3530, 16
        %v5368 = vrot.slane %v5366, 5
        %v5369 = vshll.u32 %v3530, 16
        %v5371 = vrot.slane %v5369, 6
        %v5372 = vor.u32 %v5368, %v5371
        %v5373 = vrot.slane %v5372, 4
        %v5374 = vrot.slane %v796, 5
        %v5375 = vrot.slane %v782, 6
        %v5376 = vor.u32 %v5374, %v5375
        %v5377 = vsel %vm5121, %v5373, %v5376
        %v5378 = vrot.slane %v5363, 4
        %v5380 = vshrl.u32 %v5113, 16
        %v5382 = vrot.slane %v5380, 5
        %v5383 = vshll.u32 %v5113, 16
        %v5385 = vrot.slane %v5383, 6
        %v5386 = vor.u32 %v5382, %v5385
        %v5387 = vsel %vm5121, %v5378, %v5386
        %v5388 = vrot.slane %v5376, 4
        %v5390 = vshrl.u32 %v5114, 16
        %v5392 = vrot.slane %v5390, 5
        %v5393 = vshll.u32 %v5114, 16
        %v5395 = vrot.slane %v5393, 6
        %v5396 = vor.u32 %v5392, %v5395
        %v5397 = vsel %vm5121, %v5388, %v5396
        %v5399 = vshrl.u32 %v3531, 16
        %v5401 = vrot.slane %v5399, 5
        %v5402 = vshll.u32 %v3531, 16
        %v5404 = vrot.slane %v5402, 6
        %v5405 = vor.u32 %v5401, %v5404
        %v5406 = vrot.slane %v5405, 4
        %v5407 = vrot.slane %v834, 5
        %v5408 = vrot.slane %v816, 6
        %v5409 = vor.u32 %v5407, %v5408
        %v5410 = vsel %vm5121, %v5406, %v5409
        %v5412 = vshrl.u32 %v3532, 16
        %v5414 = vrot.slane %v5412, 5
        %v5415 = vshll.u32 %v3532, 16
        %v5417 = vrot.slane %v5415, 6
        %v5418 = vor.u32 %v5414, %v5417
        %v5419 = vrot.slane %v5418, 4
        %v5420 = vrot.slane %v844, 5
        %v5421 = vrot.slane %v830, 6
        %v5422 = vor.u32 %v5420, %v5421
        %v5423 = vsel %vm5121, %v5419, %v5422
        %v5424 = vrot.slane %v5409, 4
        %v5426 = vshrl.u32 %v5115, 16
        %v5428 = vrot.slane %v5426, 5
        %v5429 = vshll.u32 %v5115, 16
        %v5431 = vrot.slane %v5429, 6
        %v5432 = vor.u32 %v5428, %v5431
        %v5433 = vsel %vm5121, %v5424, %v5432
        %v5434 = vrot.slane %v5422, 4
        %v5436 = vshrl.u32 %v5116, 16
        %v5438 = vrot.slane %v5436, 5
        %v5439 = vshll.u32 %v5116, 16
        %v5441 = vrot.slane %v5439, 6
        %v5442 = vor.u32 %v5438, %v5441
        %v5443 = vsel %vm5121, %v5434, %v5442
        %v5445 = vshrl.u32 %v3533, 16
        %v5447 = vrot.slane %v5445, 5
        %v5448 = vshll.u32 %v3533, 16
        %v5450 = vrot.slane %v5448, 6
        %v5451 = vor.u32 %v5447, %v5450
        %v5452 = vrot.slane %v5451, 4
        %v5453 = vrot.slane %v882, 5
        %v5454 = vrot.slane %v864, 6
        %v5455 = vor.u32 %v5453, %v5454
        %v5456 = vsel %vm5121, %v5452, %v5455
        %v5458 = vshrl.u32 %v3534, 16
        %v5460 = vrot.slane %v5458, 5
        %v5461 = vshll.u32 %v3534, 16
        %v5463 = vrot.slane %v5461, 6
        %v5464 = vor.u32 %v5460, %v5463
        %v5465 = vrot.slane %v5464, 4
        %v5466 = vrot.slane %v892, 5
        %v5467 = vrot.slane %v878, 6
        %v5468 = vor.u32 %v5466, %v5467
        %v5469 = vsel %vm5121, %v5465, %v5468
        %v5470 = vrot.slane %v5455, 4
        %v5472 = vshrl.u32 %v5117, 16
        %v5474 = vrot.slane %v5472, 5
        %v5475 = vshll.u32 %v5117, 16
        %v5477 = vrot.slane %v5475, 6
        %v5478 = vor.u32 %v5474, %v5477
        %v5479 = vsel %vm5121, %v5470, %v5478
        %v5480 = vrot.slane %v5468, 4
        %v5482 = vshrl.u32 %v5118, 16
        %v5484 = vrot.slane %v5482, 5
        %v5485 = vshll.u32 %v5118, 16
        %v5487 = vrot.slane %v5485, 6
        %v5488 = vor.u32 %v5484, %v5487
        %v5489 = vsel %vm5121, %v5480, %v5488
        %s5490 = scalar_lea.vmem [#allocation5], 2304
        %v5491 = vld [vmem:[%s5490] sm:$0xff]
        %v5492 = vld [vmem:[%s5490 + $0x8] sm:$0xf]
        %v5493 = vld [vmem:[%s5490 + $0xc] sm:$0xff]
        %v5494 = vld [vmem:[%s5490 + $0x14] sm:$0xf]
        %v5495 = vld [vmem:[%s5490 + $0x18] sm:$0xff]
        %v5496 = vld [vmem:[%s5490 + $0x20] sm:$0xf]
        %v5497 = vld [vmem:[%s5490 + $0x24] sm:$0xff]
        %v5498 = vld [vmem:[%s5490 + $0x2c] sm:$0xf]
        %v5499 = vld [vmem:[%s5490 + $0x30] sm:$0xff]
        %v5500 = vld [vmem:[%s5490 + $0x38] sm:$0xf]
        %v5501 = vld [vmem:[%s5490 + $0x3c] sm:$0xff]
        %v5502 = vld [vmem:[%s5490 + $0x44] sm:$0xf]
        %v5503 = vld [vmem:[%s5490 + $0x48] sm:$0xff]
        %v5504 = vld [vmem:[%s5490 + $0x50] sm:$0xf]
        %v5505 = vld [vmem:[%s5490 + $0x54] sm:$0xff]
        %v5506 = vld [vmem:[%s5490 + $0x5c] sm:$0xf]
        %v5507 = vld [vmem:[%s5490 + $0x60] sm:$0xff]
        %v5508 = vld [vmem:[%s5490 + $0x68] sm:$0xf]
        %v5509 = vld [vmem:[%s5490 + $0x6c] sm:$0xff]
        %v5510 = vld [vmem:[%s5490 + $0x74] sm:$0xf]
        %v5511 = vld [vmem:[%s5490 + $0x78] sm:$0xff]
        %v5512 = vld [vmem:[%s5490 + $0x80] sm:$0xf]
        %v5513 = vld [vmem:[%s5490 + $0x84] sm:$0xff]
        %v5514 = vld [vmem:[%s5490 + $0x8c] sm:$0xf]
        %v5515 = vld [vmem:[%s5490 + $0x90] sm:$0xff]
        %v5516 = vld [vmem:[%s5490 + $0x98] sm:$0xf]
        %v5517 = vld [vmem:[%s5490 + $0x9c] sm:$0xff]
        %v5518 = vld [vmem:[%s5490 + $0xa4] sm:$0xf]
        %v5519 = vld [vmem:[%s5490 + $0xa8] sm:$0xff]
        %v5520 = vld [vmem:[%s5490 + $0xb0] sm:$0xf]
        %v5521 = vld [vmem:[%s5490 + $0xb4] sm:$0xff]
        %v5522 = vld [vmem:[%s5490 + $0xbc] sm:$0xf]
        %v5523 = vld [vmem:[%s5490 + $0xc0] sm:$0xff]
        %v5524 = vld [vmem:[%s5490 + $0xc8] sm:$0xf]
        %v5525 = vld [vmem:[%s5490 + $0xcc] sm:$0xff]
        %v5526 = vld [vmem:[%s5490 + $0xd4] sm:$0xf]
        %v5527 = vld [vmem:[%s5490 + $0xd8] sm:$0xff]
        %v5528 = vld [vmem:[%s5490 + $0xe0] sm:$0xf]
        %v5529 = vld [vmem:[%s5490 + $0xe4] sm:$0xff]
        %v5530 = vld [vmem:[%s5490 + $0xec] sm:$0xf]
        %v5531 = vld [vmem:[%s5490 + $0xf0] sm:$0xff]
        %v5532 = vld [vmem:[%s5490 + $0xf8] sm:$0xf]
        %v5533 = vld [vmem:[%s5490 + $0xfc] sm:$0xff]
        %v5534 = vld [vmem:[%s5490 + $0x104] sm:$0xf]
        %v5535 = vld [vmem:[%s5490 + $0x108] sm:$0xff]
        %v5536 = vld [vmem:[%s5490 + $0x110] sm:$0xf]
        %v5537 = vld [vmem:[%s5490 + $0x114] sm:$0xff]
        %v5538 = vld [vmem:[%s5490 + $0x11c] sm:$0xf]
        %v5539 = vld [vmem:[%s5490 + $0x120] sm:$0xff]
        %v5540 = vld [vmem:[%s5490 + $0x128] sm:$0xf]
        %v5541 = vld [vmem:[%s5490 + $0x12c] sm:$0xff]
        %v5542 = vld [vmem:[%s5490 + $0x134] sm:$0xf]
        %v5543 = vld [vmem:[%s5490 + $0x138] sm:$0xff]
        %v5544 = vld [vmem:[%s5490 + $0x140] sm:$0xf]
        %v5545 = vld [vmem:[%s5490 + $0x144] sm:$0xff]
        %v5546 = vld [vmem:[%s5490 + $0x14c] sm:$0xf]
        %v5547 = vld [vmem:[%s5490 + $0x150] sm:$0xff]
        %v5548 = vld [vmem:[%s5490 + $0x158] sm:$0xf]
        %v5549 = vld [vmem:[%s5490 + $0x15c] sm:$0xff]
        %v5550 = vld [vmem:[%s5490 + $0x164] sm:$0xf]
        %v5551 = vld [vmem:[%s5490 + $0x168] sm:$0xff]
        %v5552 = vld [vmem:[%s5490 + $0x170] sm:$0xf]
        %v5553 = vld [vmem:[%s5490 + $0x174] sm:$0xff]
        %v5554 = vld [vmem:[%s5490 + $0x17c] sm:$0xf]
        %v5555 = vld [vmem:[%s5490 + $0x180] sm:$0xff]
        %v5556 = vld [vmem:[%s5490 + $0x188] sm:$0xf]
        %v5557 = vld [vmem:[%s5490 + $0x18c] sm:$0xff]
        %v5558 = vld [vmem:[%s5490 + $0x194] sm:$0xf]
        %v5559 = vld [vmem:[%s5490 + $0x198] sm:$0xff]
        %v5560 = vld [vmem:[%s5490 + $0x1a0] sm:$0xf]
        %v5561 = vld [vmem:[%s5490 + $0x1a4] sm:$0xff]
        %v5562 = vld [vmem:[%s5490 + $0x1ac] sm:$0xf]
        %v5563 = vld [vmem:[%s5490 + $0x1b0] sm:$0xff]
        %v5564 = vld [vmem:[%s5490 + $0x1b8] sm:$0xf]
        %v5565 = vld [vmem:[%s5490 + $0x1bc] sm:$0xff]
        %v5566 = vld [vmem:[%s5490 + $0x1c4] sm:$0xf]
        %v5567 = vld [vmem:[%s5490 + $0x1c8] sm:$0xff]
        %v5568 = vld [vmem:[%s5490 + $0x1d0] sm:$0xf]
        %v5569 = vld [vmem:[%s5490 + $0x1d4] sm:$0xff]
        %v5570 = vld [vmem:[%s5490 + $0x1dc] sm:$0xf]
        %v5571 = vld [vmem:[%s5490 + $0x1e0] sm:$0xff]
        %v5572 = vld [vmem:[%s5490 + $0x1e8] sm:$0xf]
        %v5573 = vld [vmem:[%s5490 + $0x1ec] sm:$0xff]
        %v5574 = vld [vmem:[%s5490 + $0x1f4] sm:$0xf]
        %v5575 = vld [vmem:[%s5490 + $0x1f8] sm:$0xff]
        %v5576 = vld [vmem:[%s5490 + $0x200] sm:$0xf]
        %v5577 = vld [vmem:[%s5490 + $0x204] sm:$0xff]
        %v5578 = vld [vmem:[%s5490 + $0x20c] sm:$0xf]
        %v5579 = vld [vmem:[%s5490 + $0x210] sm:$0xff]
        %v5580 = vld [vmem:[%s5490 + $0x218] sm:$0xf]
        %v5581 = vld [vmem:[%s5490 + $0x21c] sm:$0xff]
        %v5582 = vld [vmem:[%s5490 + $0x224] sm:$0xf]
        %v5583 = vld [vmem:[%s5490 + $0x228] sm:$0xff]
        %v5584 = vld [vmem:[%s5490 + $0x230] sm:$0xf]
        %v5585 = vld [vmem:[%s5490 + $0x234] sm:$0xff]
        %v5586 = vld [vmem:[%s5490 + $0x23c] sm:$0xf]
        %v5587 = vld [vmem:[%s5490 + $0x240] sm:$0xff]
        %v5588 = vld [vmem:[%s5490 + $0x248] sm:$0xf]
        %v5589 = vld [vmem:[%s5490 + $0x24c] sm:$0xff]
        %v5590 = vld [vmem:[%s5490 + $0x254] sm:$0xf]
        %v5591 = vld [vmem:[%s5490 + $0x258] sm:$0xff]
        %v5592 = vld [vmem:[%s5490 + $0x260] sm:$0xf]
        %v5593 = vld [vmem:[%s5490 + $0x264] sm:$0xff]
        %v5594 = vld [vmem:[%s5490 + $0x26c] sm:$0xf]
        %v5595 = vld [vmem:[%s5490 + $0x270] sm:$0xff]
        %v5596 = vld [vmem:[%s5490 + $0x278] sm:$0xf]
        %v5597 = vld [vmem:[%s5490 + $0x27c] sm:$0xff]
        %v5598 = vld [vmem:[%s5490 + $0x284] sm:$0xf]
        %v5599 = vld [vmem:[%s5490 + $0x288] sm:$0xff]
        %v5600 = vld [vmem:[%s5490 + $0x290] sm:$0xf]
        %v5601 = vld [vmem:[%s5490 + $0x294] sm:$0xff]
        %v5602 = vld [vmem:[%s5490 + $0x29c] sm:$0xf]
        %v5603 = vld [vmem:[%s5490 + $0x2a0] sm:$0xff]
        %v5604 = vld [vmem:[%s5490 + $0x2a8] sm:$0xf]
        %v5605 = vld [vmem:[%s5490 + $0x2ac] sm:$0xff]
        %v5606 = vld [vmem:[%s5490 + $0x2b4] sm:$0xf]
        %v5607 = vld [vmem:[%s5490 + $0x2b8] sm:$0xff]
        %v5608 = vld [vmem:[%s5490 + $0x2c0] sm:$0xf]
        %v5609 = vld [vmem:[%s5490 + $0x2c4] sm:$0xff]
        %v5610 = vld [vmem:[%s5490 + $0x2cc] sm:$0xf]
        %v5611 = vld [vmem:[%s5490 + $0x2d0] sm:$0xff]
        %v5612 = vld [vmem:[%s5490 + $0x2d8] sm:$0xf]
        %v5613 = vld [vmem:[%s5490 + $0x2dc] sm:$0xff]
        %v5614 = vld [vmem:[%s5490 + $0x2e4] sm:$0xf]
        %v5615 = vld [vmem:[%s5490 + $0x2e8] sm:$0xff]
        %v5616 = vld [vmem:[%s5490 + $0x2f0] sm:$0xf]
        %v5617 = vld [vmem:[%s5490 + $0x2f4] sm:$0xff]
        %v5618 = vld [vmem:[%s5490 + $0x2fc] sm:$0xf]
        %v5619 = vunpack.c.l.b16 %v5134
        %v5620 = vunpack.c.h.b16 %v5134
        %v5621 = vunpack.c.l.b16 %v5147
        %v5622 = vunpack.c.h.b16 %v5147
        %v5623 = vunpack.c.l.b16 %v5157
        %v5624 = vunpack.c.h.b16 %v5157
        %v5625 = vunpack.c.l.b16 %v5167
        %v5626 = vunpack.c.h.b16 %v5167
        %v5627 = vunpack.c.l.b16 %v5180
        %v5628 = vunpack.c.h.b16 %v5180
        %v5629 = vunpack.c.l.b16 %v5193
        %v5630 = vunpack.c.h.b16 %v5193
        %v5631 = vunpack.c.l.b16 %v5203
        %v5632 = vunpack.c.h.b16 %v5203
        %v5633 = vunpack.c.l.b16 %v5213
        %v5634 = vunpack.c.h.b16 %v5213
        %v5635 = vunpack.c.l.b16 %v5226
        %v5636 = vunpack.c.h.b16 %v5226
        %v5637 = vunpack.c.l.b16 %v5239
        %v5638 = vunpack.c.h.b16 %v5239
        %v5639 = vunpack.c.l.b16 %v5249
        %v5640 = vunpack.c.h.b16 %v5249
        %v5641 = vunpack.c.l.b16 %v5259
        %v5642 = vunpack.c.h.b16 %v5259
        %v5643 = vunpack.c.l.b16 %v5272
        %v5644 = vunpack.c.h.b16 %v5272
        %v5645 = vunpack.c.l.b16 %v5285
        %v5646 = vunpack.c.h.b16 %v5285
        %v5647 = vunpack.c.l.b16 %v5295
        %v5648 = vunpack.c.h.b16 %v5295
        %v5649 = vunpack.c.l.b16 %v5305
        %v5650 = vunpack.c.h.b16 %v5305
        %v5651 = vunpack.c.l.b16 %v5318
        %v5652 = vunpack.c.h.b16 %v5318
        %v5653 = vunpack.c.l.b16 %v5331
        %v5654 = vunpack.c.h.b16 %v5331
        %v5655 = vunpack.c.l.b16 %v5341
        %v5656 = vunpack.c.h.b16 %v5341
        %v5657 = vunpack.c.l.b16 %v5351
        %v5658 = vunpack.c.h.b16 %v5351
        %v5659 = vunpack.c.l.b16 %v5364
        %v5660 = vunpack.c.h.b16 %v5364
        %v5661 = vunpack.c.l.b16 %v5377
        %v5662 = vunpack.c.h.b16 %v5377
        %v5663 = vunpack.c.l.b16 %v5387
        %v5664 = vunpack.c.h.b16 %v5387
        %v5665 = vunpack.c.l.b16 %v5397
        %v5666 = vunpack.c.h.b16 %v5397
        %v5667 = vunpack.c.l.b16 %v5410
        %v5668 = vunpack.c.h.b16 %v5410
        %v5669 = vunpack.c.l.b16 %v5423
        %v5670 = vunpack.c.h.b16 %v5423
        %v5671 = vunpack.c.l.b16 %v5433
        %v5672 = vunpack.c.h.b16 %v5433
        %v5673 = vunpack.c.l.b16 %v5443
        %v5674 = vunpack.c.h.b16 %v5443
        %v5675 = vunpack.c.l.b16 %v5456
        %v5676 = vunpack.c.h.b16 %v5456
        %v5677 = vunpack.c.l.b16 %v5469
        %v5678 = vunpack.c.h.b16 %v5469
        %v5679 = vunpack.c.l.b16 %v5479
        %v5680 = vunpack.c.h.b16 %v5479
        %v5681 = vunpack.c.l.b16 %v5489
        %v5682 = vunpack.c.h.b16 %v5489
        %v5683 = vpack.c.b16 %v5623, %v5619
        %v5684 = vpack.c.b16 %v5624, %v5620
        %v5685 = vpack.c.b16 %v5625, %v5621
        %v5686 = vpack.c.b16 %v5626, %v5622
        %v5687 = vpack.c.b16 %v5631, %v5627
        %v5688 = vpack.c.b16 %v5632, %v5628
        %v5689 = vpack.c.b16 %v5633, %v5629
        %v5690 = vpack.c.b16 %v5634, %v5630
        %v5691 = vpack.c.b16 %v5639, %v5635
        %v5692 = vpack.c.b16 %v5640, %v5636
        %v5693 = vpack.c.b16 %v5641, %v5637
        %v5694 = vpack.c.b16 %v5642, %v5638
        %v5695 = vpack.c.b16 %v5647, %v5643
        %v5696 = vpack.c.b16 %v5648, %v5644
        %v5697 = vpack.c.b16 %v5649, %v5645
        %v5698 = vpack.c.b16 %v5650, %v5646
        %v5699 = vpack.c.b16 %v5655, %v5651
        %v5700 = vpack.c.b16 %v5656, %v5652
        %v5701 = vpack.c.b16 %v5657, %v5653
        %v5702 = vpack.c.b16 %v5658, %v5654
        %v5703 = vpack.c.b16 %v5663, %v5659
        %v5704 = vpack.c.b16 %v5664, %v5660
        %v5705 = vpack.c.b16 %v5665, %v5661
        %v5706 = vpack.c.b16 %v5666, %v5662
        %v5707 = vpack.c.b16 %v5671, %v5667
        %v5708 = vpack.c.b16 %v5672, %v5668
        %v5709 = vpack.c.b16 %v5673, %v5669
        %v5710 = vpack.c.b16 %v5674, %v5670
        %v5711 = vpack.c.b16 %v5679, %v5675
        %v5712 = vpack.c.b16 %v5680, %v5676
        %v5713 = vpack.c.b16 %v5681, %v5677
        %v5714 = vpack.c.b16 %v5682, %v5678
        %v5875 = vunpack.c.l.b16 %v5491
        %v5876 = vunpack.c.h.b16 %v5491
        %v5877 = vunpack.c.l.b16 %v5492
        %v5878 = vunpack.c.l.b16 %v5493
        %v5879 = vunpack.c.h.b16 %v5493
        %v5880 = vunpack.c.l.b16 %v5494
        %v5881 = vunpack.c.l.b16 %v5495
        %v5882 = vunpack.c.h.b16 %v5495
        %v5883 = vunpack.c.l.b16 %v5496
        %v5884 = vunpack.c.l.b16 %v5497
        %v5885 = vunpack.c.h.b16 %v5497
        %v5886 = vunpack.c.l.b16 %v5498
        %v5887 = vunpack.c.l.b16 %v5499
        %v5888 = vunpack.c.h.b16 %v5499
        %v5889 = vunpack.c.l.b16 %v5500
        %v5890 = vunpack.c.l.b16 %v5501
        %v5891 = vunpack.c.h.b16 %v5501
        %v5892 = vunpack.c.l.b16 %v5502
        %v5893 = vunpack.c.l.b16 %v5503
        %v5894 = vunpack.c.h.b16 %v5503
        %v5895 = vunpack.c.l.b16 %v5504
        %v5896 = vunpack.c.l.b16 %v5505
        %v5897 = vunpack.c.h.b16 %v5505
        %v5898 = vunpack.c.l.b16 %v5506
        %v5899 = vunpack.c.l.b16 %v5507
        %v5900 = vunpack.c.h.b16 %v5507
        %v5901 = vunpack.c.l.b16 %v5508
        %v5902 = vunpack.c.l.b16 %v5509
        %v5903 = vunpack.c.h.b16 %v5509
        %v5904 = vunpack.c.l.b16 %v5510
        %v5905 = vunpack.c.l.b16 %v5511
        %v5906 = vunpack.c.h.b16 %v5511
        %v5907 = vunpack.c.l.b16 %v5512
        %v5908 = vunpack.c.l.b16 %v5513
        %v5909 = vunpack.c.h.b16 %v5513
        %v5910 = vunpack.c.l.b16 %v5514
        %v5911 = vunpack.c.l.b16 %v5515
        %v5912 = vunpack.c.h.b16 %v5515
        %v5913 = vunpack.c.l.b16 %v5516
        %v5914 = vunpack.c.l.b16 %v5517
        %v5915 = vunpack.c.h.b16 %v5517
        %v5916 = vunpack.c.l.b16 %v5518
        %v5917 = vunpack.c.l.b16 %v5519
        %v5918 = vunpack.c.h.b16 %v5519
        %v5919 = vunpack.c.l.b16 %v5520
        %v5920 = vunpack.c.l.b16 %v5521
        %v5921 = vunpack.c.h.b16 %v5521
        %v5922 = vunpack.c.l.b16 %v5522
        %v5923 = vunpack.c.l.b16 %v5523
        %v5924 = vunpack.c.h.b16 %v5523
        %v5925 = vunpack.c.l.b16 %v5524
        %v5926 = vunpack.c.l.b16 %v5525
        %v5927 = vunpack.c.h.b16 %v5525
        %v5928 = vunpack.c.l.b16 %v5526
        %v5929 = vunpack.c.l.b16 %v5527
        %v5930 = vunpack.c.h.b16 %v5527
        %v5931 = vunpack.c.l.b16 %v5528
        %v5932 = vunpack.c.l.b16 %v5529
        %v5933 = vunpack.c.h.b16 %v5529
        %v5934 = vunpack.c.l.b16 %v5530
        %v5935 = vunpack.c.l.b16 %v5531
        %v5936 = vunpack.c.h.b16 %v5531
        %v5937 = vunpack.c.l.b16 %v5532
        %v5938 = vunpack.c.l.b16 %v5533
        %v5939 = vunpack.c.h.b16 %v5533
        %v5940 = vunpack.c.l.b16 %v5534
        %v5941 = vunpack.c.l.b16 %v5535
        %v5942 = vunpack.c.h.b16 %v5535
        %v5943 = vunpack.c.l.b16 %v5536
        %v5944 = vunpack.c.l.b16 %v5537
        %v5945 = vunpack.c.h.b16 %v5537
        %v5946 = vunpack.c.l.b16 %v5538
        %v5947 = vunpack.c.l.b16 %v5539
        %v5948 = vunpack.c.h.b16 %v5539
        %v5949 = vunpack.c.l.b16 %v5540
        %v5950 = vunpack.c.l.b16 %v5541
        %v5951 = vunpack.c.h.b16 %v5541
        %v5952 = vunpack.c.l.b16 %v5542
        %v5953 = vunpack.c.l.b16 %v5543
        %v5954 = vunpack.c.h.b16 %v5543
        %v5955 = vunpack.c.l.b16 %v5544
        %v5956 = vunpack.c.l.b16 %v5545
        %v5957 = vunpack.c.h.b16 %v5545
        %v5958 = vunpack.c.l.b16 %v5546
        %v5959 = vunpack.c.l.b16 %v5547
        %v5960 = vunpack.c.h.b16 %v5547
        %v5961 = vunpack.c.l.b16 %v5548
        %v5962 = vunpack.c.l.b16 %v5549
        %v5963 = vunpack.c.h.b16 %v5549
        %v5964 = vunpack.c.l.b16 %v5550
        %v5965 = vunpack.c.l.b16 %v5551
        %v5966 = vunpack.c.h.b16 %v5551
        %v5967 = vunpack.c.l.b16 %v5552
        %v5968 = vunpack.c.l.b16 %v5553
        %v5969 = vunpack.c.h.b16 %v5553
        %v5970 = vunpack.c.l.b16 %v5554
        %v5971 = vunpack.c.l.b16 %v5555
        %v5972 = vunpack.c.h.b16 %v5555
        %v5973 = vunpack.c.l.b16 %v5556
        %v5974 = vunpack.c.l.b16 %v5557
        %v5975 = vunpack.c.h.b16 %v5557
        %v5976 = vunpack.c.l.b16 %v5558
        %v5977 = vunpack.c.l.b16 %v5559
        %v5978 = vunpack.c.h.b16 %v5559
        %v5979 = vunpack.c.l.b16 %v5560
        %v5980 = vunpack.c.l.b16 %v5561
        %v5981 = vunpack.c.h.b16 %v5561
        %v5982 = vunpack.c.l.b16 %v5562
        %v5983 = vunpack.c.l.b16 %v5563
        %v5984 = vunpack.c.h.b16 %v5563
        %v5985 = vunpack.c.l.b16 %v5564
        %v5986 = vunpack.c.l.b16 %v5565
        %v5987 = vunpack.c.h.b16 %v5565
        %v5988 = vunpack.c.l.b16 %v5566
        %v5989 = vunpack.c.l.b16 %v5567
        %v5990 = vunpack.c.h.b16 %v5567
        %v5991 = vunpack.c.l.b16 %v5568
        %v5992 = vunpack.c.l.b16 %v5569
        %v5993 = vunpack.c.h.b16 %v5569
        %v5994 = vunpack.c.l.b16 %v5570
        %v5995 = vunpack.c.l.b16 %v5571
        %v5996 = vunpack.c.h.b16 %v5571
        %v5997 = vunpack.c.l.b16 %v5572
        %v5998 = vunpack.c.l.b16 %v5573
        %v5999 = vunpack.c.h.b16 %v5573
        %v6000 = vunpack.c.l.b16 %v5574
        %v6001 = vunpack.c.l.b16 %v5575
        %v6002 = vunpack.c.h.b16 %v5575
        %v6003 = vunpack.c.l.b16 %v5576
        %v6004 = vunpack.c.l.b16 %v5577
        %v6005 = vunpack.c.h.b16 %v5577
        %v6006 = vunpack.c.l.b16 %v5578
        %v6007 = vunpack.c.l.b16 %v5579
        %v6008 = vunpack.c.h.b16 %v5579
        %v6009 = vunpack.c.l.b16 %v5580
        %v6010 = vunpack.c.l.b16 %v5581
        %v6011 = vunpack.c.h.b16 %v5581
        %v6012 = vunpack.c.l.b16 %v5582
        %v6013 = vunpack.c.l.b16 %v5583
        %v6014 = vunpack.c.h.b16 %v5583
        %v6015 = vunpack.c.l.b16 %v5584
        %v6016 = vunpack.c.l.b16 %v5585
        %v6017 = vunpack.c.h.b16 %v5585
        %v6018 = vunpack.c.l.b16 %v5586
        %v6019 = vunpack.c.l.b16 %v5587
        %v6020 = vunpack.c.h.b16 %v5587
        %v6021 = vunpack.c.l.b16 %v5588
        %v6022 = vunpack.c.l.b16 %v5589
        %v6023 = vunpack.c.h.b16 %v5589
        %v6024 = vunpack.c.l.b16 %v5590
        %v6025 = vunpack.c.l.b16 %v5591
        %v6026 = vunpack.c.h.b16 %v5591
        %v6027 = vunpack.c.l.b16 %v5592
        %v6028 = vunpack.c.l.b16 %v5593
        %v6029 = vunpack.c.h.b16 %v5593
        %v6030 = vunpack.c.l.b16 %v5594
        %v6031 = vunpack.c.l.b16 %v5595
        %v6032 = vunpack.c.h.b16 %v5595
        %v6033 = vunpack.c.l.b16 %v5596
        %v6034 = vunpack.c.l.b16 %v5597
        %v6035 = vunpack.c.h.b16 %v5597
        %v6036 = vunpack.c.l.b16 %v5598
        %v6037 = vunpack.c.l.b16 %v5599
        %v6038 = vunpack.c.h.b16 %v5599
        %v6039 = vunpack.c.l.b16 %v5600
        %v6040 = vunpack.c.l.b16 %v5601
        %v6041 = vunpack.c.h.b16 %v5601
        %v6042 = vunpack.c.l.b16 %v5602
        %v6043 = vunpack.c.l.b16 %v5603
        %v6044 = vunpack.c.h.b16 %v5603
        %v6045 = vunpack.c.l.b16 %v5604
        %v6046 = vunpack.c.l.b16 %v5605
        %v6047 = vunpack.c.h.b16 %v5605
        %v6048 = vunpack.c.l.b16 %v5606
        %v6049 = vunpack.c.l.b16 %v5607
        %v6050 = vunpack.c.h.b16 %v5607
        %v6051 = vunpack.c.l.b16 %v5608
        %v6052 = vunpack.c.l.b16 %v5609
        %v6053 = vunpack.c.h.b16 %v5609
        %v6054 = vunpack.c.l.b16 %v5610
        %v6055 = vunpack.c.l.b16 %v5611
        %v6056 = vunpack.c.h.b16 %v5611
        %v6057 = vunpack.c.l.b16 %v5612
        %v6058 = vunpack.c.l.b16 %v5613
        %v6059 = vunpack.c.h.b16 %v5613
        %v6060 = vunpack.c.l.b16 %v5614
        %v6061 = vunpack.c.l.b16 %v5615
        %v6062 = vunpack.c.h.b16 %v5615
        %v6063 = vunpack.c.l.b16 %v5616
        %v6064 = vunpack.c.l.b16 %v5617
        %v6065 = vunpack.c.h.b16 %v5617
        %v6066 = vunpack.c.l.b16 %v5618
        %v6067 = vpack.c.b16 %v5878, %v5875
        %v6068 = vpack.c.b16 %v5879, %v5876
        %v6069 = vpack.c.b16 %v5880, %v5877
        %v6070 = vpack.c.b16 %v5884, %v5881
        %v6071 = vpack.c.b16 %v5885, %v5882
        %v6072 = vpack.c.b16 %v5886, %v5883
        %v6073 = vpack.c.b16 %v5890, %v5887
        %v6074 = vpack.c.b16 %v5891, %v5888
        %v6075 = vpack.c.b16 %v5892, %v5889
        %v6076 = vpack.c.b16 %v5896, %v5893
        %v6077 = vpack.c.b16 %v5897, %v5894
        %v6078 = vpack.c.b16 %v5898, %v5895
        %v6079 = vpack.c.b16 %v5902, %v5899
        %v6080 = vpack.c.b16 %v5903, %v5900
        %v6081 = vpack.c.b16 %v5904, %v5901
        %v6082 = vpack.c.b16 %v5908, %v5905
        %v6083 = vpack.c.b16 %v5909, %v5906
        %v6084 = vpack.c.b16 %v5910, %v5907
        %v6085 = vpack.c.b16 %v5914, %v5911
        %v6086 = vpack.c.b16 %v5915, %v5912
        %v6087 = vpack.c.b16 %v5916, %v5913
        %v6088 = vpack.c.b16 %v5920, %v5917
        %v6089 = vpack.c.b16 %v5921, %v5918
        %v6090 = vpack.c.b16 %v5922, %v5919
        %v6091 = vpack.c.b16 %v5926, %v5923
        %v6092 = vpack.c.b16 %v5927, %v5924
        %v6093 = vpack.c.b16 %v5928, %v5925
        %v6094 = vpack.c.b16 %v5932, %v5929
        %v6095 = vpack.c.b16 %v5933, %v5930
        %v6096 = vpack.c.b16 %v5934, %v5931
        %v6097 = vpack.c.b16 %v5938, %v5935
        %v6098 = vpack.c.b16 %v5939, %v5936
        %v6099 = vpack.c.b16 %v5940, %v5937
        %v6100 = vpack.c.b16 %v5944, %v5941
        %v6101 = vpack.c.b16 %v5945, %v5942
        %v6102 = vpack.c.b16 %v5946, %v5943
        %v6103 = vpack.c.b16 %v5950, %v5947
        %v6104 = vpack.c.b16 %v5951, %v5948
        %v6105 = vpack.c.b16 %v5952, %v5949
        %v6106 = vpack.c.b16 %v5956, %v5953
        %v6107 = vpack.c.b16 %v5957, %v5954
        %v6108 = vpack.c.b16 %v5958, %v5955
        %v6109 = vpack.c.b16 %v5962, %v5959
        %v6110 = vpack.c.b16 %v5963, %v5960
        %v6111 = vpack.c.b16 %v5964, %v5961
        %v6112 = vpack.c.b16 %v5968, %v5965
        %v6113 = vpack.c.b16 %v5969, %v5966
        %v6114 = vpack.c.b16 %v5970, %v5967
        %v6115 = vpack.c.b16 %v5974, %v5971
        %v6116 = vpack.c.b16 %v5975, %v5972
        %v6117 = vpack.c.b16 %v5976, %v5973
        %v6118 = vpack.c.b16 %v5980, %v5977
        %v6119 = vpack.c.b16 %v5981, %v5978
        %v6120 = vpack.c.b16 %v5982, %v5979
        %v6121 = vpack.c.b16 %v5986, %v5983
        %v6122 = vpack.c.b16 %v5987, %v5984
        %v6123 = vpack.c.b16 %v5988, %v5985
        %v6124 = vpack.c.b16 %v5992, %v5989
        %v6125 = vpack.c.b16 %v5993, %v5990
        %v6126 = vpack.c.b16 %v5994, %v5991
        %v6127 = vpack.c.b16 %v5998, %v5995
        %v6128 = vpack.c.b16 %v5999, %v5996
        %v6129 = vpack.c.b16 %v6000, %v5997
        %v6130 = vpack.c.b16 %v6004, %v6001
        %v6131 = vpack.c.b16 %v6005, %v6002
        %v6132 = vpack.c.b16 %v6006, %v6003
        %v6133 = vpack.c.b16 %v6010, %v6007
        %v6134 = vpack.c.b16 %v6011, %v6008
        %v6135 = vpack.c.b16 %v6012, %v6009
        %v6136 = vpack.c.b16 %v6016, %v6013
        %v6137 = vpack.c.b16 %v6017, %v6014
        %v6138 = vpack.c.b16 %v6018, %v6015
        %v6139 = vpack.c.b16 %v6022, %v6019
        %v6140 = vpack.c.b16 %v6023, %v6020
        %v6141 = vpack.c.b16 %v6024, %v6021
        %v6142 = vpack.c.b16 %v6028, %v6025
        %v6143 = vpack.c.b16 %v6029, %v6026
        %v6144 = vpack.c.b16 %v6030, %v6027
        %v6145 = vpack.c.b16 %v6034, %v6031
        %v6146 = vpack.c.b16 %v6035, %v6032
        %v6147 = vpack.c.b16 %v6036, %v6033
        %v6148 = vpack.c.b16 %v6040, %v6037
        %v6149 = vpack.c.b16 %v6041, %v6038
        %v6150 = vpack.c.b16 %v6042, %v6039
        %v6151 = vpack.c.b16 %v6046, %v6043
        %v6152 = vpack.c.b16 %v6047, %v6044
        %v6153 = vpack.c.b16 %v6048, %v6045
        %v6154 = vpack.c.b16 %v6052, %v6049
        %v6155 = vpack.c.b16 %v6053, %v6050
        %v6156 = vpack.c.b16 %v6054, %v6051
        %v6157 = vpack.c.b16 %v6058, %v6055
        %v6158 = vpack.c.b16 %v6059, %v6056
        %v6159 = vpack.c.b16 %v6060, %v6057
        %v6160 = vpack.c.b16 %v6064, %v6061
        %v6161 = vpack.c.b16 %v6065, %v6062
        %v6162 = vpack.c.b16 %v6066, %v6063
        %6259 = vmatpush.bf16.msra.mxu0 %v6088
        %6260 = vmatpush.bf16.msra.mxu0 %v6085
        %6261 = vmatpush.bf16.msra.mxu0 %v6082
        %6262 = vmatpush.bf16.msra.mxu0 %v6079
        %6263 = vmatpush.bf16.msra.mxu0 %v6076
        %6264 = vmatpush.bf16.msra.mxu0 %v6073
        %6265 = vmatpush.bf16.msra.mxu0 %v6070
        %6266 = vmatpush.bf16.msra.mxu0 %v6067
        %6267 = vmatmul.bf16.gmra.mxu0 %v5683
        %v6268 = vpop.f32.mrf.mxu0
        %v6269 = vadd.f32 0.0, %v6268
        %v6270 = vpop.f32.mrf.mxu0
        %v6271 = vadd.f32 0.0, %v6270
        %6272 = vmatmul.bf16.gmra.mxu0 %v5687
        %v6273 = vpop.f32.mrf.mxu0
        %v6274 = vadd.f32 0.0, %v6273
        %v6275 = vpop.f32.mrf.mxu0
        %v6276 = vadd.f32 0.0, %v6275
        %6277 = vmatmul.bf16.gmra.mxu0 %v5691
        %v6278 = vpop.f32.mrf.mxu0
        %v6279 = vadd.f32 0.0, %v6278
        %v6280 = vpop.f32.mrf.mxu0
        %v6281 = vadd.f32 0.0, %v6280
        %6282 = vmatmul.bf16.gmra.mxu0 %v5695
        %v6283 = vpop.f32.mrf.mxu0
        %v6284 = vadd.f32 0.0, %v6283
        %v6285 = vpop.f32.mrf.mxu0
        %v6286 = vadd.f32 0.0, %v6285
        %6287 = vmatmul.bf16.gmra.mxu0 %v5699
        %v6288 = vpop.f32.mrf.mxu0
        %v6289 = vadd.f32 0.0, %v6288
        %v6290 = vpop.f32.mrf.mxu0
        %v6291 = vadd.f32 0.0, %v6290
        %6292 = vmatmul.bf16.gmra.mxu0 %v5703
        %v6293 = vpop.f32.mrf.mxu0
        %v6294 = vadd.f32 0.0, %v6293
        %v6295 = vpop.f32.mrf.mxu0
        %v6296 = vadd.f32 0.0, %v6295
        %6297 = vmatmul.bf16.gmra.mxu0 %v5707
        %v6298 = vpop.f32.mrf.mxu0
        %v6299 = vadd.f32 0.0, %v6298
        %v6300 = vpop.f32.mrf.mxu0
        %v6301 = vadd.f32 0.0, %v6300
        %6302 = vmatmul.bf16.gmra.mxu0 %v5711
        %v6303 = vpop.f32.mrf.mxu0
        %v6304 = vadd.f32 0.0, %v6303
        %v6305 = vpop.f32.mrf.mxu0
        %v6306 = vadd.f32 0.0, %v6305
        %6307 = vdwg.mxu0
        %6308 = vmatpush.bf16.msra.mxu0 %v6112
        %6309 = vmatpush.bf16.msra.mxu0 %v6109
        %6310 = vmatpush.bf16.msra.mxu0 %v6106
        %6311 = vmatpush.bf16.msra.mxu0 %v6103
        %6312 = vmatpush.bf16.msra.mxu0 %v6100
        %6313 = vmatpush.bf16.msra.mxu0 %v6097
        %6314 = vmatpush.bf16.msra.mxu0 %v6094
        %6315 = vmatpush.bf16.msra.mxu0 %v6091
        %6316 = vmatmul.bf16.gmra.mxu0 %v5684
        %v6317 = vpop.f32.mrf.mxu0
        %v6318 = vadd.f32 %v6269, %v6317
        %v6319 = vpop.f32.mrf.mxu0
        %v6320 = vadd.f32 %v6271, %v6319
        %6321 = vmatmul.bf16.gmra.mxu0 %v5688
        %v6322 = vpop.f32.mrf.mxu0
        %v6323 = vadd.f32 %v6274, %v6322
        %v6324 = vpop.f32.mrf.mxu0
        %v6325 = vadd.f32 %v6276, %v6324
        %6326 = vmatmul.bf16.gmra.mxu0 %v5692
        %v6327 = vpop.f32.mrf.mxu0
        %v6328 = vadd.f32 %v6279, %v6327
        %v6329 = vpop.f32.mrf.mxu0
        %v6330 = vadd.f32 %v6281, %v6329
        %6331 = vmatmul.bf16.gmra.mxu0 %v5696
        %v6332 = vpop.f32.mrf.mxu0
        %v6333 = vadd.f32 %v6284, %v6332
        %v6334 = vpop.f32.mrf.mxu0
        %v6335 = vadd.f32 %v6286, %v6334
        %6336 = vmatmul.bf16.gmra.mxu0 %v5700
        %v6337 = vpop.f32.mrf.mxu0
        %v6338 = vadd.f32 %v6289, %v6337
        %v6339 = vpop.f32.mrf.mxu0
        %v6340 = vadd.f32 %v6291, %v6339
        %6341 = vmatmul.bf16.gmra.mxu0 %v5704
        %v6342 = vpop.f32.mrf.mxu0
        %v6343 = vadd.f32 %v6294, %v6342
        %v6344 = vpop.f32.mrf.mxu0
        %v6345 = vadd.f32 %v6296, %v6344
        %6346 = vmatmul.bf16.gmra.mxu0 %v5708
        %v6347 = vpop.f32.mrf.mxu0
        %v6348 = vadd.f32 %v6299, %v6347
        %v6349 = vpop.f32.mrf.mxu0
        %v6350 = vadd.f32 %v6301, %v6349
        %6351 = vmatmul.bf16.gmra.mxu0 %v5712
        %v6352 = vpop.f32.mrf.mxu0
        %v6353 = vadd.f32 %v6304, %v6352
        %v6354 = vpop.f32.mrf.mxu0
        %v6355 = vadd.f32 %v6306, %v6354
        %6356 = vdwg.mxu0
        %6357 = vmatpush.bf16.msra.mxu0 %v6136
        %6358 = vmatpush.bf16.msra.mxu0 %v6133
        %6359 = vmatpush.bf16.msra.mxu0 %v6130
        %6360 = vmatpush.bf16.msra.mxu0 %v6127
        %6361 = vmatpush.bf16.msra.mxu0 %v6124
        %6362 = vmatpush.bf16.msra.mxu0 %v6121
        %6363 = vmatpush.bf16.msra.mxu0 %v6118
        %6364 = vmatpush.bf16.msra.mxu0 %v6115
        %6365 = vmatmul.bf16.gmra.mxu0 %v5685
        %v6366 = vpop.f32.mrf.mxu0
        %v6367 = vadd.f32 %v6318, %v6366
        %v6368 = vpop.f32.mrf.mxu0
        %v6369 = vadd.f32 %v6320, %v6368
        %6370 = vmatmul.bf16.gmra.mxu0 %v5689
        %v6371 = vpop.f32.mrf.mxu0
        %v6372 = vadd.f32 %v6323, %v6371
        %v6373 = vpop.f32.mrf.mxu0
        %v6374 = vadd.f32 %v6325, %v6373
        %6375 = vmatmul.bf16.gmra.mxu0 %v5693
        %v6376 = vpop.f32.mrf.mxu0
        %v6377 = vadd.f32 %v6328, %v6376
        %v6378 = vpop.f32.mrf.mxu0
        %v6379 = vadd.f32 %v6330, %v6378
        %6380 = vmatmul.bf16.gmra.mxu0 %v5697
        %v6381 = vpop.f32.mrf.mxu0
        %v6382 = vadd.f32 %v6333, %v6381
        %v6383 = vpop.f32.mrf.mxu0
        %v6384 = vadd.f32 %v6335, %v6383
        %6385 = vmatmul.bf16.gmra.mxu0 %v5701
        %v6386 = vpop.f32.mrf.mxu0
        %v6387 = vadd.f32 %v6338, %v6386
        %v6388 = vpop.f32.mrf.mxu0
        %v6389 = vadd.f32 %v6340, %v6388
        %6390 = vmatmul.bf16.gmra.mxu0 %v5705
        %v6391 = vpop.f32.mrf.mxu0
        %v6392 = vadd.f32 %v6343, %v6391
        %v6393 = vpop.f32.mrf.mxu0
        %v6394 = vadd.f32 %v6345, %v6393
        %6395 = vmatmul.bf16.gmra.mxu0 %v5709
        %v6396 = vpop.f32.mrf.mxu0
        %v6397 = vadd.f32 %v6348, %v6396
        %v6398 = vpop.f32.mrf.mxu0
        %v6399 = vadd.f32 %v6350, %v6398
        %6400 = vmatmul.bf16.gmra.mxu0 %v5713
        %v6401 = vpop.f32.mrf.mxu0
        %v6402 = vadd.f32 %v6353, %v6401
        %v6403 = vpop.f32.mrf.mxu0
        %v6404 = vadd.f32 %v6355, %v6403
        %6405 = vdwg.mxu0
        %6406 = vmatpush.bf16.msra.mxu0 %v6160
        %6407 = vmatpush.bf16.msra.mxu0 %v6157
        %6408 = vmatpush.bf16.msra.mxu0 %v6154
        %6409 = vmatpush.bf16.msra.mxu0 %v6151
        %6410 = vmatpush.bf16.msra.mxu0 %v6148
        %6411 = vmatpush.bf16.msra.mxu0 %v6145
        %6412 = vmatpush.bf16.msra.mxu0 %v6142
        %6413 = vmatpush.bf16.msra.mxu0 %v6139
        %6414 = vmatmul.bf16.gmra.mxu0 %v5686
        %v6415 = vpop.f32.mrf.mxu0
        %v6416 = vadd.f32 %v6367, %v6415
        %v6417 = vpop.f32.mrf.mxu0
        %v6418 = vadd.f32 %v6369, %v6417
        %6419 = vmatmul.bf16.gmra.mxu0 %v5690
        %v6420 = vpop.f32.mrf.mxu0
        %v6421 = vadd.f32 %v6372, %v6420
        %v6422 = vpop.f32.mrf.mxu0
        %v6423 = vadd.f32 %v6374, %v6422
        %6424 = vmatmul.bf16.gmra.mxu0 %v5694
        %v6425 = vpop.f32.mrf.mxu0
        %v6426 = vadd.f32 %v6377, %v6425
        %v6427 = vpop.f32.mrf.mxu0
        %v6428 = vadd.f32 %v6379, %v6427
        %6429 = vmatmul.bf16.gmra.mxu0 %v5698
        %v6430 = vpop.f32.mrf.mxu0
        %v6431 = vadd.f32 %v6382, %v6430
        %v6432 = vpop.f32.mrf.mxu0
        %v6433 = vadd.f32 %v6384, %v6432
        %6434 = vmatmul.bf16.gmra.mxu0 %v5702
        %v6435 = vpop.f32.mrf.mxu0
        %v6436 = vadd.f32 %v6387, %v6435
        %v6437 = vpop.f32.mrf.mxu0
        %v6438 = vadd.f32 %v6389, %v6437
        %6439 = vmatmul.bf16.gmra.mxu0 %v5706
        %v6440 = vpop.f32.mrf.mxu0
        %v6441 = vadd.f32 %v6392, %v6440
        %v6442 = vpop.f32.mrf.mxu0
        %v6443 = vadd.f32 %v6394, %v6442
        %6444 = vmatmul.bf16.gmra.mxu0 %v5710
        %v6445 = vpop.f32.mrf.mxu0
        %v6446 = vadd.f32 %v6397, %v6445
        %v6447 = vpop.f32.mrf.mxu0
        %v6448 = vadd.f32 %v6399, %v6447
        %6449 = vmatmul.bf16.gmra.mxu0 %v5714
        %v6450 = vpop.f32.mrf.mxu0
        %v6451 = vadd.f32 %v6402, %v6450
        %v6452 = vpop.f32.mrf.mxu0
        %v6453 = vadd.f32 %v6404, %v6452
        %6454 = vdwg.mxu0
        %6455 = vmatpush.bf16.msra.mxu0 %v6089
        %6456 = vmatpush.bf16.msra.mxu0 %v6086
        %6457 = vmatpush.bf16.msra.mxu0 %v6083
        %6458 = vmatpush.bf16.msra.mxu0 %v6080
        %6459 = vmatpush.bf16.msra.mxu0 %v6077
        %6460 = vmatpush.bf16.msra.mxu0 %v6074
        %6461 = vmatpush.bf16.msra.mxu0 %v6071
        %6462 = vmatpush.bf16.msra.mxu0 %v6068
        %6463 = vmatmul.bf16.gmra.mxu0 %v5683
        %v6464 = vpop.f32.mrf.mxu0
        %v6465 = vadd.f32 0.0, %v6464
        %v6466 = vpop.f32.mrf.mxu0
        %v6467 = vadd.f32 0.0, %v6466
        %6468 = vmatmul.bf16.gmra.mxu0 %v5687
        %v6469 = vpop.f32.mrf.mxu0
        %v6470 = vadd.f32 0.0, %v6469
        %v6471 = vpop.f32.mrf.mxu0
        %v6472 = vadd.f32 0.0, %v6471
        %6473 = vmatmul.bf16.gmra.mxu0 %v5691
        %v6474 = vpop.f32.mrf.mxu0
        %v6475 = vadd.f32 0.0, %v6474
        %v6476 = vpop.f32.mrf.mxu0
        %v6477 = vadd.f32 0.0, %v6476
        %6478 = vmatmul.bf16.gmra.mxu0 %v5695
        %v6479 = vpop.f32.mrf.mxu0
        %v6480 = vadd.f32 0.0, %v6479
        %v6481 = vpop.f32.mrf.mxu0
        %v6482 = vadd.f32 0.0, %v6481
        %6483 = vmatmul.bf16.gmra.mxu0 %v5699
        %v6484 = vpop.f32.mrf.mxu0
        %v6485 = vadd.f32 0.0, %v6484
        %v6486 = vpop.f32.mrf.mxu0
        %v6487 = vadd.f32 0.0, %v6486
        %6488 = vmatmul.bf16.gmra.mxu0 %v5703
        %v6489 = vpop.f32.mrf.mxu0
        %v6490 = vadd.f32 0.0, %v6489
        %v6491 = vpop.f32.mrf.mxu0
        %v6492 = vadd.f32 0.0, %v6491
        %6493 = vmatmul.bf16.gmra.mxu0 %v5707
        %v6494 = vpop.f32.mrf.mxu0
        %v6495 = vadd.f32 0.0, %v6494
        %v6496 = vpop.f32.mrf.mxu0
        %v6497 = vadd.f32 0.0, %v6496
        %6498 = vmatmul.bf16.gmra.mxu0 %v5711
        %v6499 = vpop.f32.mrf.mxu0
        %v6500 = vadd.f32 0.0, %v6499
        %v6501 = vpop.f32.mrf.mxu0
        %v6502 = vadd.f32 0.0, %v6501
        %6503 = vdwg.mxu0
        %6504 = vmatpush.bf16.msra.mxu0 %v6113
        %6505 = vmatpush.bf16.msra.mxu0 %v6110
        %6506 = vmatpush.bf16.msra.mxu0 %v6107
        %6507 = vmatpush.bf16.msra.mxu0 %v6104
        %6508 = vmatpush.bf16.msra.mxu0 %v6101
        %6509 = vmatpush.bf16.msra.mxu0 %v6098
        %6510 = vmatpush.bf16.msra.mxu0 %v6095
        %6511 = vmatpush.bf16.msra.mxu0 %v6092
        %6512 = vmatmul.bf16.gmra.mxu0 %v5684
        %v6513 = vpop.f32.mrf.mxu0
        %v6514 = vadd.f32 %v6465, %v6513
        %v6515 = vpop.f32.mrf.mxu0
        %v6516 = vadd.f32 %v6467, %v6515
        %6517 = vmatmul.bf16.gmra.mxu0 %v5688
        %v6518 = vpop.f32.mrf.mxu0
        %v6519 = vadd.f32 %v6470, %v6518
        %v6520 = vpop.f32.mrf.mxu0
        %v6521 = vadd.f32 %v6472, %v6520
        %6522 = vmatmul.bf16.gmra.mxu0 %v5692
        %v6523 = vpop.f32.mrf.mxu0
        %v6524 = vadd.f32 %v6475, %v6523
        %v6525 = vpop.f32.mrf.mxu0
        %v6526 = vadd.f32 %v6477, %v6525
        %6527 = vmatmul.bf16.gmra.mxu0 %v5696
        %v6528 = vpop.f32.mrf.mxu0
        %v6529 = vadd.f32 %v6480, %v6528
        %v6530 = vpop.f32.mrf.mxu0
        %v6531 = vadd.f32 %v6482, %v6530
        %6532 = vmatmul.bf16.gmra.mxu0 %v5700
        %v6533 = vpop.f32.mrf.mxu0
        %v6534 = vadd.f32 %v6485, %v6533
        %v6535 = vpop.f32.mrf.mxu0
        %v6536 = vadd.f32 %v6487, %v6535
        %6537 = vmatmul.bf16.gmra.mxu0 %v5704
        %v6538 = vpop.f32.mrf.mxu0
        %v6539 = vadd.f32 %v6490, %v6538
        %v6540 = vpop.f32.mrf.mxu0
        %v6541 = vadd.f32 %v6492, %v6540
        %6542 = vmatmul.bf16.gmra.mxu0 %v5708
        %v6543 = vpop.f32.mrf.mxu0
        %v6544 = vadd.f32 %v6495, %v6543
        %v6545 = vpop.f32.mrf.mxu0
        %v6546 = vadd.f32 %v6497, %v6545
        %6547 = vmatmul.bf16.gmra.mxu0 %v5712
        %v6548 = vpop.f32.mrf.mxu0
        %v6549 = vadd.f32 %v6500, %v6548
        %v6550 = vpop.f32.mrf.mxu0
        %v6551 = vadd.f32 %v6502, %v6550
        %6552 = vdwg.mxu0
        %6553 = vmatpush.bf16.msra.mxu0 %v6137
        %6554 = vmatpush.bf16.msra.mxu0 %v6134
        %6555 = vmatpush.bf16.msra.mxu0 %v6131
        %6556 = vmatpush.bf16.msra.mxu0 %v6128
        %6557 = vmatpush.bf16.msra.mxu0 %v6125
        %6558 = vmatpush.bf16.msra.mxu0 %v6122
        %6559 = vmatpush.bf16.msra.mxu0 %v6119
        %6560 = vmatpush.bf16.msra.mxu0 %v6116
        %6561 = vmatmul.bf16.gmra.mxu0 %v5685
        %v6562 = vpop.f32.mrf.mxu0
        %v6563 = vadd.f32 %v6514, %v6562
        %v6564 = vpop.f32.mrf.mxu0
        %v6565 = vadd.f32 %v6516, %v6564
        %6566 = vmatmul.bf16.gmra.mxu0 %v5689
        %v6567 = vpop.f32.mrf.mxu0
        %v6568 = vadd.f32 %v6519, %v6567
        %v6569 = vpop.f32.mrf.mxu0
        %v6570 = vadd.f32 %v6521, %v6569
        %6571 = vmatmul.bf16.gmra.mxu0 %v5693
        %v6572 = vpop.f32.mrf.mxu0
        %v6573 = vadd.f32 %v6524, %v6572
        %v6574 = vpop.f32.mrf.mxu0
        %v6575 = vadd.f32 %v6526, %v6574
        %6576 = vmatmul.bf16.gmra.mxu0 %v5697
        %v6577 = vpop.f32.mrf.mxu0
        %v6578 = vadd.f32 %v6529, %v6577
        %v6579 = vpop.f32.mrf.mxu0
        %v6580 = vadd.f32 %v6531, %v6579
        %6581 = vmatmul.bf16.gmra.mxu0 %v5701
        %v6582 = vpop.f32.mrf.mxu0
        %v6583 = vadd.f32 %v6534, %v6582
        %v6584 = vpop.f32.mrf.mxu0
        %v6585 = vadd.f32 %v6536, %v6584
        %6586 = vmatmul.bf16.gmra.mxu0 %v5705
        %v6587 = vpop.f32.mrf.mxu0
        %v6588 = vadd.f32 %v6539, %v6587
        %v6589 = vpop.f32.mrf.mxu0
        %v6590 = vadd.f32 %v6541, %v6589
        %6591 = vmatmul.bf16.gmra.mxu0 %v5709
        %v6592 = vpop.f32.mrf.mxu0
        %v6593 = vadd.f32 %v6544, %v6592
        %v6594 = vpop.f32.mrf.mxu0
        %v6595 = vadd.f32 %v6546, %v6594
        %6596 = vmatmul.bf16.gmra.mxu0 %v5713
        %v6597 = vpop.f32.mrf.mxu0
        %v6598 = vadd.f32 %v6549, %v6597
        %v6599 = vpop.f32.mrf.mxu0
        %v6600 = vadd.f32 %v6551, %v6599
        %6601 = vdwg.mxu0
        %6602 = vmatpush.bf16.msra.mxu0 %v6161
        %6603 = vmatpush.bf16.msra.mxu0 %v6158
        %6604 = vmatpush.bf16.msra.mxu0 %v6155
        %6605 = vmatpush.bf16.msra.mxu0 %v6152
        %6606 = vmatpush.bf16.msra.mxu0 %v6149
        %6607 = vmatpush.bf16.msra.mxu0 %v6146
        %6608 = vmatpush.bf16.msra.mxu0 %v6143
        %6609 = vmatpush.bf16.msra.mxu0 %v6140
        %6610 = vmatmul.bf16.gmra.mxu0 %v5686
        %v6611 = vpop.f32.mrf.mxu0
        %v6612 = vadd.f32 %v6563, %v6611
        %v6613 = vpop.f32.mrf.mxu0
        %v6614 = vadd.f32 %v6565, %v6613
        %6615 = vmatmul.bf16.gmra.mxu0 %v5690
        %v6616 = vpop.f32.mrf.mxu0
        %v6617 = vadd.f32 %v6568, %v6616
        %v6618 = vpop.f32.mrf.mxu0
        %v6619 = vadd.f32 %v6570, %v6618
        %6620 = vmatmul.bf16.gmra.mxu0 %v5694
        %v6621 = vpop.f32.mrf.mxu0
        %v6622 = vadd.f32 %v6573, %v6621
        %v6623 = vpop.f32.mrf.mxu0
        %v6624 = vadd.f32 %v6575, %v6623
        %6625 = vmatmul.bf16.gmra.mxu0 %v5698
        %v6626 = vpop.f32.mrf.mxu0
        %v6627 = vadd.f32 %v6578, %v6626
        %v6628 = vpop.f32.mrf.mxu0
        %v6629 = vadd.f32 %v6580, %v6628
        %6630 = vmatmul.bf16.gmra.mxu0 %v5702
        %v6631 = vpop.f32.mrf.mxu0
        %v6632 = vadd.f32 %v6583, %v6631
        %v6633 = vpop.f32.mrf.mxu0
        %v6634 = vadd.f32 %v6585, %v6633
        %6635 = vmatmul.bf16.gmra.mxu0 %v5706
        %v6636 = vpop.f32.mrf.mxu0
        %v6637 = vadd.f32 %v6588, %v6636
        %v6638 = vpop.f32.mrf.mxu0
        %v6639 = vadd.f32 %v6590, %v6638
        %6640 = vmatmul.bf16.gmra.mxu0 %v5710
        %v6641 = vpop.f32.mrf.mxu0
        %v6642 = vadd.f32 %v6593, %v6641
        %v6643 = vpop.f32.mrf.mxu0
        %v6644 = vadd.f32 %v6595, %v6643
        %6645 = vmatmul.bf16.gmra.mxu0 %v5714
        %v6646 = vpop.f32.mrf.mxu0
        %v6647 = vadd.f32 %v6598, %v6646
        %v6648 = vpop.f32.mrf.mxu0
        %v6649 = vadd.f32 %v6600, %v6648
        %6650 = vdwg.mxu0
        %6651 = vmatpush.bf16.msra.mxu0 %v6090
        %6652 = vmatpush.bf16.msra.mxu0 %v6087
        %6653 = vmatpush.bf16.msra.mxu0 %v6084
        %6654 = vmatpush.bf16.msra.mxu0 %v6081
        %6655 = vmatpush.bf16.msra.mxu0 %v6078
        %6656 = vmatpush.bf16.msra.mxu0 %v6075
        %6657 = vmatpush.bf16.msra.mxu0 %v6072
        %6658 = vmatpush.bf16.msra.mxu0 %v6069
        %6659 = vmatmul.bf16.gmra.mxu0 %v5683
        %v6660 = vpop.f32.mrf.mxu0
        %v6661 = vadd.f32 0.0, %v6660
        %v6662 = vpop.f32.mrf.mxu0
        %v6663 = vadd.f32 0.0, %v6662
        %6664 = vmatmul.bf16.gmra.mxu0 %v5687
        %v6665 = vpop.f32.mrf.mxu0
        %v6666 = vadd.f32 0.0, %v6665
        %v6667 = vpop.f32.mrf.mxu0
        %v6668 = vadd.f32 0.0, %v6667
        %6669 = vmatmul.bf16.gmra.mxu0 %v5691
        %v6670 = vpop.f32.mrf.mxu0
        %v6671 = vadd.f32 0.0, %v6670
        %v6672 = vpop.f32.mrf.mxu0
        %v6673 = vadd.f32 0.0, %v6672
        %6674 = vmatmul.bf16.gmra.mxu0 %v5695
        %v6675 = vpop.f32.mrf.mxu0
        %v6676 = vadd.f32 0.0, %v6675
        %v6677 = vpop.f32.mrf.mxu0
        %v6678 = vadd.f32 0.0, %v6677
        %6679 = vmatmul.bf16.gmra.mxu0 %v5699
        %v6680 = vpop.f32.mrf.mxu0
        %v6681 = vadd.f32 0.0, %v6680
        %v6682 = vpop.f32.mrf.mxu0
        %v6683 = vadd.f32 0.0, %v6682
        %6684 = vmatmul.bf16.gmra.mxu0 %v5703
        %v6685 = vpop.f32.mrf.mxu0
        %v6686 = vadd.f32 0.0, %v6685
        %v6687 = vpop.f32.mrf.mxu0
        %v6688 = vadd.f32 0.0, %v6687
        %6689 = vmatmul.bf16.gmra.mxu0 %v5707
        %v6690 = vpop.f32.mrf.mxu0
        %v6691 = vadd.f32 0.0, %v6690
        %v6692 = vpop.f32.mrf.mxu0
        %v6693 = vadd.f32 0.0, %v6692
        %6694 = vmatmul.bf16.gmra.mxu0 %v5711
        %v6695 = vpop.f32.mrf.mxu0
        %v6696 = vadd.f32 0.0, %v6695
        %v6697 = vpop.f32.mrf.mxu0
        %v6698 = vadd.f32 0.0, %v6697
        %6699 = vdwg.mxu0
        %6700 = vmatpush.bf16.msra.mxu0 %v6114
        %6701 = vmatpush.bf16.msra.mxu0 %v6111
        %6702 = vmatpush.bf16.msra.mxu0 %v6108
        %6703 = vmatpush.bf16.msra.mxu0 %v6105
        %6704 = vmatpush.bf16.msra.mxu0 %v6102
        %6705 = vmatpush.bf16.msra.mxu0 %v6099
        %6706 = vmatpush.bf16.msra.mxu0 %v6096
        %6707 = vmatpush.bf16.msra.mxu0 %v6093
        %6708 = vmatmul.bf16.gmra.mxu0 %v5684
        %v6709 = vpop.f32.mrf.mxu0
        %v6710 = vadd.f32 %v6661, %v6709
        %v6711 = vpop.f32.mrf.mxu0
        %v6712 = vadd.f32 %v6663, %v6711
        %6713 = vmatmul.bf16.gmra.mxu0 %v5688
        %v6714 = vpop.f32.mrf.mxu0
        %v6715 = vadd.f32 %v6666, %v6714
        %v6716 = vpop.f32.mrf.mxu0
        %v6717 = vadd.f32 %v6668, %v6716
        %6718 = vmatmul.bf16.gmra.mxu0 %v5692
        %v6719 = vpop.f32.mrf.mxu0
        %v6720 = vadd.f32 %v6671, %v6719
        %v6721 = vpop.f32.mrf.mxu0
        %v6722 = vadd.f32 %v6673, %v6721
        %6723 = vmatmul.bf16.gmra.mxu0 %v5696
        %v6724 = vpop.f32.mrf.mxu0
        %v6725 = vadd.f32 %v6676, %v6724
        %v6726 = vpop.f32.mrf.mxu0
        %v6727 = vadd.f32 %v6678, %v6726
        %6728 = vmatmul.bf16.gmra.mxu0 %v5700
        %v6729 = vpop.f32.mrf.mxu0
        %v6730 = vadd.f32 %v6681, %v6729
        %v6731 = vpop.f32.mrf.mxu0
        %v6732 = vadd.f32 %v6683, %v6731
        %6733 = vmatmul.bf16.gmra.mxu0 %v5704
        %v6734 = vpop.f32.mrf.mxu0
        %v6735 = vadd.f32 %v6686, %v6734
        %v6736 = vpop.f32.mrf.mxu0
        %v6737 = vadd.f32 %v6688, %v6736
        %6738 = vmatmul.bf16.gmra.mxu0 %v5708
        %v6739 = vpop.f32.mrf.mxu0
        %v6740 = vadd.f32 %v6691, %v6739
        %v6741 = vpop.f32.mrf.mxu0
        %v6742 = vadd.f32 %v6693, %v6741
        %6743 = vmatmul.bf16.gmra.mxu0 %v5712
        %v6744 = vpop.f32.mrf.mxu0
        %v6745 = vadd.f32 %v6696, %v6744
        %v6746 = vpop.f32.mrf.mxu0
        %v6747 = vadd.f32 %v6698, %v6746
        %6748 = vdwg.mxu0
        %6749 = vmatpush.bf16.msra.mxu0 %v6138
        %6750 = vmatpush.bf16.msra.mxu0 %v6135
        %6751 = vmatpush.bf16.msra.mxu0 %v6132
        %6752 = vmatpush.bf16.msra.mxu0 %v6129
        %6753 = vmatpush.bf16.msra.mxu0 %v6126
        %6754 = vmatpush.bf16.msra.mxu0 %v6123
        %6755 = vmatpush.bf16.msra.mxu0 %v6120
        %6756 = vmatpush.bf16.msra.mxu0 %v6117
        %6757 = vmatmul.bf16.gmra.mxu0 %v5685
        %v6758 = vpop.f32.mrf.mxu0
        %v6759 = vadd.f32 %v6710, %v6758
        %v6760 = vpop.f32.mrf.mxu0
        %v6761 = vadd.f32 %v6712, %v6760
        %6762 = vmatmul.bf16.gmra.mxu0 %v5689
        %v6763 = vpop.f32.mrf.mxu0
        %v6764 = vadd.f32 %v6715, %v6763
        %v6765 = vpop.f32.mrf.mxu0
        %v6766 = vadd.f32 %v6717, %v6765
        %6767 = vmatmul.bf16.gmra.mxu0 %v5693
        %v6768 = vpop.f32.mrf.mxu0
        %v6769 = vadd.f32 %v6720, %v6768
        %v6770 = vpop.f32.mrf.mxu0
        %v6771 = vadd.f32 %v6722, %v6770
        %6772 = vmatmul.bf16.gmra.mxu0 %v5697
        %v6773 = vpop.f32.mrf.mxu0
        %v6774 = vadd.f32 %v6725, %v6773
        %v6775 = vpop.f32.mrf.mxu0
        %v6776 = vadd.f32 %v6727, %v6775
        %6777 = vmatmul.bf16.gmra.mxu0 %v5701
        %v6778 = vpop.f32.mrf.mxu0
        %v6779 = vadd.f32 %v6730, %v6778
        %v6780 = vpop.f32.mrf.mxu0
        %v6781 = vadd.f32 %v6732, %v6780
        %6782 = vmatmul.bf16.gmra.mxu0 %v5705
        %v6783 = vpop.f32.mrf.mxu0
        %v6784 = vadd.f32 %v6735, %v6783
        %v6785 = vpop.f32.mrf.mxu0
        %v6786 = vadd.f32 %v6737, %v6785
        %6787 = vmatmul.bf16.gmra.mxu0 %v5709
        %v6788 = vpop.f32.mrf.mxu0
        %v6789 = vadd.f32 %v6740, %v6788
        %v6790 = vpop.f32.mrf.mxu0
        %v6791 = vadd.f32 %v6742, %v6790
        %6792 = vmatmul.bf16.gmra.mxu0 %v5713
        %v6793 = vpop.f32.mrf.mxu0
        %v6794 = vadd.f32 %v6745, %v6793
        %v6795 = vpop.f32.mrf.mxu0
        %v6796 = vadd.f32 %v6747, %v6795
        %6797 = vdwg.mxu0
        %6798 = vmatpush.bf16.msra.mxu0 %v6162
        %6799 = vmatpush.bf16.msra.mxu0 %v6159
        %6800 = vmatpush.bf16.msra.mxu0 %v6156
        %6801 = vmatpush.bf16.msra.mxu0 %v6153
        %6802 = vmatpush.bf16.msra.mxu0 %v6150
        %6803 = vmatpush.bf16.msra.mxu0 %v6147
        %6804 = vmatpush.bf16.msra.mxu0 %v6144
        %6805 = vmatpush.bf16.msra.mxu0 %v6141
        %6806 = vmatmul.bf16.gmra.mxu0 %v5686
        %v6807 = vpop.f32.mrf.mxu0
        %v6808 = vadd.f32 %v6759, %v6807
        %v6809 = vpop.f32.mrf.mxu0
        %v6810 = vadd.f32 %v6761, %v6809
        %6811 = vmatmul.bf16.gmra.mxu0 %v5690
        %v6812 = vpop.f32.mrf.mxu0
        %v6813 = vadd.f32 %v6764, %v6812
        %v6814 = vpop.f32.mrf.mxu0
        %v6815 = vadd.f32 %v6766, %v6814
        %6816 = vmatmul.bf16.gmra.mxu0 %v5694
        %v6817 = vpop.f32.mrf.mxu0
        %v6818 = vadd.f32 %v6769, %v6817
        %v6819 = vpop.f32.mrf.mxu0
        %v6820 = vadd.f32 %v6771, %v6819
        %6821 = vmatmul.bf16.gmra.mxu0 %v5698
        %v6822 = vpop.f32.mrf.mxu0
        %v6823 = vadd.f32 %v6774, %v6822
        %v6824 = vpop.f32.mrf.mxu0
        %v6825 = vadd.f32 %v6776, %v6824
        %6826 = vmatmul.bf16.gmra.mxu0 %v5702
        %v6827 = vpop.f32.mrf.mxu0
        %v6828 = vadd.f32 %v6779, %v6827
        %v6829 = vpop.f32.mrf.mxu0
        %v6830 = vadd.f32 %v6781, %v6829
        %6831 = vmatmul.bf16.gmra.mxu0 %v5706
        %v6832 = vpop.f32.mrf.mxu0
        %v6833 = vadd.f32 %v6784, %v6832
        %v6834 = vpop.f32.mrf.mxu0
        %v6835 = vadd.f32 %v6786, %v6834
        %6836 = vmatmul.bf16.gmra.mxu0 %v5710
        %v6837 = vpop.f32.mrf.mxu0
        %v6838 = vadd.f32 %v6789, %v6837
        %v6839 = vpop.f32.mrf.mxu0
        %v6840 = vadd.f32 %v6791, %v6839
        %6841 = vmatmul.bf16.gmra.mxu0 %v5714
        %v6842 = vpop.f32.mrf.mxu0
        %v6843 = vadd.f32 %v6794, %v6842
        %v6844 = vpop.f32.mrf.mxu0
        %v6845 = vadd.f32 %v6796, %v6844
        %6846 = vdwg.mxu0
        %v6847 = vadd.f32 %v5055, %v6416
        %v6848 = vadd.f32 %v5056, %v6612
        %v6849 = vadd.f32 %v5057, %v6808
        %v6850 = vadd.f32 %v5058, %v6418
        %v6851 = vadd.f32 %v5059, %v6614
        %v6852 = vadd.f32 %v5060, %v6810
        %v6853 = vadd.f32 %v5061, %v6421
        %v6854 = vadd.f32 %v5062, %v6617
        %v6855 = vadd.f32 %v5063, %v6813
        %v6856 = vadd.f32 %v5064, %v6423
        %v6857 = vadd.f32 %v5065, %v6619
        %v6858 = vadd.f32 %v5066, %v6815
        %v6859 = vadd.f32 %v5067, %v6426
        %v6860 = vadd.f32 %v5068, %v6622
        %v6861 = vadd.f32 %v5069, %v6818
        %v6862 = vadd.f32 %v5070, %v6428
        %v6863 = vadd.f32 %v5071, %v6624
        %v6864 = vadd.f32 %v5072, %v6820
        %v6865 = vadd.f32 %v5073, %v6431
        %v6866 = vadd.f32 %v5074, %v6627
        %v6867 = vadd.f32 %v5075, %v6823
        %v6868 = vadd.f32 %v5076, %v6433
        %v6869 = vadd.f32 %v5077, %v6629
        %v6870 = vadd.f32 %v5078, %v6825
        %v6871 = vadd.f32 %v5079, %v6436
        %v6872 = vadd.f32 %v5080, %v6632
        %v6873 = vadd.f32 %v5081, %v6828
        %v6874 = vadd.f32 %v5082, %v6438
        %v6875 = vadd.f32 %v5083, %v6634
        %v6876 = vadd.f32 %v5084, %v6830
        %v6877 = vadd.f32 %v5085, %v6441
        %v6878 = vadd.f32 %v5086, %v6637
        %v6879 = vadd.f32 %v5087, %v6833
        %v6880 = vadd.f32 %v5088, %v6443
        %v6881 = vadd.f32 %v5089, %v6639
        %v6882 = vadd.f32 %v5090, %v6835
        %v6883 = vadd.f32 %v5091, %v6446
        %v6884 = vadd.f32 %v5092, %v6642
        %v6885 = vadd.f32 %v5093, %v6838
        %v6886 = vadd.f32 %v5094, %v6448
        %v6887 = vadd.f32 %v5095, %v6644
        %v6888 = vadd.f32 %v5096, %v6840
        %v6889 = vadd.f32 %v5097, %v6451
        %v6890 = vadd.f32 %v5098, %v6647
        %v6891 = vadd.f32 %v5099, %v6843
        %v6892 = vadd.f32 %v5100, %v6453
        %v6893 = vadd.f32 %v5101, %v6649
        %v6894 = vadd.f32 %v5102, %v6845
        %v6895 = vld [vmem:[%s258] sm:$0xcc]
        %v6896 = vld [vmem:[%s258 + $0x8] sm:$0xcc]
        %v6897 = vld [vmem:[%s258 + $0x30] sm:$0xcc]
        %v6898 = vld [vmem:[%s258 + $0x38] sm:$0xcc]
        %v6899 = vld [vmem:[%s258 + $0x60] sm:$0xcc]
        %v6900 = vld [vmem:[%s258 + $0x68] sm:$0xcc]
        %v6901 = vld [vmem:[%s258 + $0x90] sm:$0xcc]
        %v6902 = vld [vmem:[%s258 + $0x98] sm:$0xcc]
        %v6903 = vld [vmem:[%s258 + $0xc0] sm:$0xcc]
        %v6904 = vld [vmem:[%s258 + $0xc8] sm:$0xcc]
        %v6905 = vld [vmem:[%s258 + $0xf0] sm:$0xcc]
        %v6906 = vld [vmem:[%s258 + $0xf8] sm:$0xcc]
        %v6907 = vld [vmem:[%s258 + $0x120] sm:$0xcc]
        %v6908 = vld [vmem:[%s258 + $0x128] sm:$0xcc]
        %v6909 = vld [vmem:[%s258 + $0x150] sm:$0xcc]
        %v6910 = vld [vmem:[%s258 + $0x158] sm:$0xcc]
        %vm6943 = vcmask 1041408
        %vm6944 = vcmask 1045508
        %vm6945 = vmor %vm6943, %vm6944
        %v6946 = vrot.slane %v6895, 6
        %v6947 = vrot.slane %v6946, 4
        %v6948 = vrot.slane %v469, 6
        %v6949 = vsel %vm6945, %v6947, %v6948
        %v6950 = vrot.slane %v6896, 6
        %v6951 = vrot.slane %v6950, 4
        %v6952 = vrot.slane %v470, 6
        %v6953 = vsel %vm6945, %v6951, %v6952
        %v6954 = vrot.slane %v6948, 4
        %v6955 = vrot.slane %v5103, 6
        %v6956 = vsel %vm6945, %v6954, %v6955
        %v6957 = vrot.slane %v6952, 4
        %v6958 = vrot.slane %v5104, 6
        %v6959 = vsel %vm6945, %v6957, %v6958
        %v6960 = vrot.slane %v6897, 6
        %v6961 = vrot.slane %v6960, 4
        %v6962 = vrot.slane %v475, 6
        %v6963 = vsel %vm6945, %v6961, %v6962
        %v6964 = vrot.slane %v6898, 6
        %v6965 = vrot.slane %v6964, 4
        %v6966 = vrot.slane %v476, 6
        %v6967 = vsel %vm6945, %v6965, %v6966
        %v6968 = vrot.slane %v6962, 4
        %v6969 = vrot.slane %v5105, 6
        %v6970 = vsel %vm6945, %v6968, %v6969
        %v6971 = vrot.slane %v6966, 4
        %v6972 = vrot.slane %v5106, 6
        %v6973 = vsel %vm6945, %v6971, %v6972
        %v6974 = vrot.slane %v6899, 6
        %v6975 = vrot.slane %v6974, 4
        %v6976 = vrot.slane %v481, 6
        %v6977 = vsel %vm6945, %v6975, %v6976
        %v6978 = vrot.slane %v6900, 6
        %v6979 = vrot.slane %v6978, 4
        %v6980 = vrot.slane %v482, 6
        %v6981 = vsel %vm6945, %v6979, %v6980
        %v6982 = vrot.slane %v6976, 4
        %v6983 = vrot.slane %v5107, 6
        %v6984 = vsel %vm6945, %v6982, %v6983
        %v6985 = vrot.slane %v6980, 4
        %v6986 = vrot.slane %v5108, 6
        %v6987 = vsel %vm6945, %v6985, %v6986
        %v6988 = vrot.slane %v6901, 6
        %v6989 = vrot.slane %v6988, 4
        %v6990 = vrot.slane %v487, 6
        %v6991 = vsel %vm6945, %v6989, %v6990
        %v6992 = vrot.slane %v6902, 6
        %v6993 = vrot.slane %v6992, 4
        %v6994 = vrot.slane %v488, 6
        %v6995 = vsel %vm6945, %v6993, %v6994
        %v6996 = vrot.slane %v6990, 4
        %v6997 = vrot.slane %v5109, 6
        %v6998 = vsel %vm6945, %v6996, %v6997
        %v6999 = vrot.slane %v6994, 4
        %v7000 = vrot.slane %v5110, 6
        %v7001 = vsel %vm6945, %v6999, %v7000
        %v7002 = vrot.slane %v6903, 6
        %v7003 = vrot.slane %v7002, 4
        %v7004 = vrot.slane %v493, 6
        %v7005 = vsel %vm6945, %v7003, %v7004
        %v7006 = vrot.slane %v6904, 6
        %v7007 = vrot.slane %v7006, 4
        %v7008 = vrot.slane %v494, 6
        %v7009 = vsel %vm6945, %v7007, %v7008
        %v7010 = vrot.slane %v7004, 4
        %v7011 = vrot.slane %v5111, 6
        %v7012 = vsel %vm6945, %v7010, %v7011
        %v7013 = vrot.slane %v7008, 4
        %v7014 = vrot.slane %v5112, 6
        %v7015 = vsel %vm6945, %v7013, %v7014
        %v7016 = vrot.slane %v6905, 6
        %v7017 = vrot.slane %v7016, 4
        %v7018 = vrot.slane %v499, 6
        %v7019 = vsel %vm6945, %v7017, %v7018
        %v7020 = vrot.slane %v6906, 6
        %v7021 = vrot.slane %v7020, 4
        %v7022 = vrot.slane %v500, 6
        %v7023 = vsel %vm6945, %v7021, %v7022
        %v7024 = vrot.slane %v7018, 4
        %v7025 = vrot.slane %v5113, 6
        %v7026 = vsel %vm6945, %v7024, %v7025
        %v7027 = vrot.slane %v7022, 4
        %v7028 = vrot.slane %v5114, 6
        %v7029 = vsel %vm6945, %v7027, %v7028
        %v7030 = vrot.slane %v6907, 6
        %v7031 = vrot.slane %v7030, 4
        %v7032 = vrot.slane %v505, 6
        %v7033 = vsel %vm6945, %v7031, %v7032
        %v7034 = vrot.slane %v6908, 6
        %v7035 = vrot.slane %v7034, 4
        %v7036 = vrot.slane %v506, 6
        %v7037 = vsel %vm6945, %v7035, %v7036
        %v7038 = vrot.slane %v7032, 4
        %v7039 = vrot.slane %v5115, 6
        %v7040 = vsel %vm6945, %v7038, %v7039
        %v7041 = vrot.slane %v7036, 4
        %v7042 = vrot.slane %v5116, 6
        %v7043 = vsel %vm6945, %v7041, %v7042
        %v7044 = vrot.slane %v6909, 6
        %v7045 = vrot.slane %v7044, 4
        %v7046 = vrot.slane %v511, 6
        %v7047 = vsel %vm6945, %v7045, %v7046
        %v7048 = vrot.slane %v6910, 6
        %v7049 = vrot.slane %v7048, 4
        %v7050 = vrot.slane %v512, 6
        %v7051 = vsel %vm6945, %v7049, %v7050
        %v7052 = vrot.slane %v7046, 4
        %v7053 = vrot.slane %v5117, 6
        %v7054 = vsel %vm6945, %v7052, %v7053
        %v7055 = vrot.slane %v7050, 4
        %v7056 = vrot.slane %v5118, 6
        %v7057 = vsel %vm6945, %v7055, %v7056
        %s7058 = scalar_lea.vmem [#allocation5], 3072
        %v7059 = vld [vmem:[%s7058] sm:$0xff]
        %v7060 = vld [vmem:[%s7058 + $0x8] sm:$0xf]
        %v7061 = vld [vmem:[%s7058 + $0xc] sm:$0xff]
        %v7062 = vld [vmem:[%s7058 + $0x14] sm:$0xf]
        %v7063 = vld [vmem:[%s7058 + $0x18] sm:$0xff]
        %v7064 = vld [vmem:[%s7058 + $0x20] sm:$0xf]
        %v7065 = vld [vmem:[%s7058 + $0x24] sm:$0xff]
        %v7066 = vld [vmem:[%s7058 + $0x2c] sm:$0xf]
        %v7067 = vld [vmem:[%s7058 + $0x30] sm:$0xff]
        %v7068 = vld [vmem:[%s7058 + $0x38] sm:$0xf]
        %v7069 = vld [vmem:[%s7058 + $0x3c] sm:$0xff]
        %v7070 = vld [vmem:[%s7058 + $0x44] sm:$0xf]
        %v7071 = vld [vmem:[%s7058 + $0x48] sm:$0xff]
        %v7072 = vld [vmem:[%s7058 + $0x50] sm:$0xf]
        %v7073 = vld [vmem:[%s7058 + $0x54] sm:$0xff]
        %v7074 = vld [vmem:[%s7058 + $0x5c] sm:$0xf]
        %v7075 = vld [vmem:[%s7058 + $0x60] sm:$0xff]
        %v7076 = vld [vmem:[%s7058 + $0x68] sm:$0xf]
        %v7077 = vld [vmem:[%s7058 + $0x6c] sm:$0xff]
        %v7078 = vld [vmem:[%s7058 + $0x74] sm:$0xf]
        %v7079 = vld [vmem:[%s7058 + $0x78] sm:$0xff]
        %v7080 = vld [vmem:[%s7058 + $0x80] sm:$0xf]
        %v7081 = vld [vmem:[%s7058 + $0x84] sm:$0xff]
        %v7082 = vld [vmem:[%s7058 + $0x8c] sm:$0xf]
        %v7083 = vld [vmem:[%s7058 + $0x90] sm:$0xff]
        %v7084 = vld [vmem:[%s7058 + $0x98] sm:$0xf]
        %v7085 = vld [vmem:[%s7058 + $0x9c] sm:$0xff]
        %v7086 = vld [vmem:[%s7058 + $0xa4] sm:$0xf]
        %v7087 = vld [vmem:[%s7058 + $0xa8] sm:$0xff]
        %v7088 = vld [vmem:[%s7058 + $0xb0] sm:$0xf]
        %v7089 = vld [vmem:[%s7058 + $0xb4] sm:$0xff]
        %v7090 = vld [vmem:[%s7058 + $0xbc] sm:$0xf]
        %v7091 = vld [vmem:[%s7058 + $0xc0] sm:$0xff]
        %v7092 = vld [vmem:[%s7058 + $0xc8] sm:$0xf]
        %v7093 = vld [vmem:[%s7058 + $0xcc] sm:$0xff]
        %v7094 = vld [vmem:[%s7058 + $0xd4] sm:$0xf]
        %v7095 = vld [vmem:[%s7058 + $0xd8] sm:$0xff]
        %v7096 = vld [vmem:[%s7058 + $0xe0] sm:$0xf]
        %v7097 = vld [vmem:[%s7058 + $0xe4] sm:$0xff]
        %v7098 = vld [vmem:[%s7058 + $0xec] sm:$0xf]
        %v7099 = vld [vmem:[%s7058 + $0xf0] sm:$0xff]
        %v7100 = vld [vmem:[%s7058 + $0xf8] sm:$0xf]
        %v7101 = vld [vmem:[%s7058 + $0xfc] sm:$0xff]
        %v7102 = vld [vmem:[%s7058 + $0x104] sm:$0xf]
        %v7103 = vld [vmem:[%s7058 + $0x108] sm:$0xff]
        %v7104 = vld [vmem:[%s7058 + $0x110] sm:$0xf]
        %v7105 = vld [vmem:[%s7058 + $0x114] sm:$0xff]
        %v7106 = vld [vmem:[%s7058 + $0x11c] sm:$0xf]
        %v7107 = vld [vmem:[%s7058 + $0x120] sm:$0xff]
        %v7108 = vld [vmem:[%s7058 + $0x128] sm:$0xf]
        %v7109 = vld [vmem:[%s7058 + $0x12c] sm:$0xff]
        %v7110 = vld [vmem:[%s7058 + $0x134] sm:$0xf]
        %v7111 = vld [vmem:[%s7058 + $0x138] sm:$0xff]
        %v7112 = vld [vmem:[%s7058 + $0x140] sm:$0xf]
        %v7113 = vld [vmem:[%s7058 + $0x144] sm:$0xff]
        %v7114 = vld [vmem:[%s7058 + $0x14c] sm:$0xf]
        %v7115 = vld [vmem:[%s7058 + $0x150] sm:$0xff]
        %v7116 = vld [vmem:[%s7058 + $0x158] sm:$0xf]
        %v7117 = vld [vmem:[%s7058 + $0x15c] sm:$0xff]
        %v7118 = vld [vmem:[%s7058 + $0x164] sm:$0xf]
        %v7119 = vld [vmem:[%s7058 + $0x168] sm:$0xff]
        %v7120 = vld [vmem:[%s7058 + $0x170] sm:$0xf]
        %v7121 = vld [vmem:[%s7058 + $0x174] sm:$0xff]
        %v7122 = vld [vmem:[%s7058 + $0x17c] sm:$0xf]
        %v7123 = vld [vmem:[%s7058 + $0x180] sm:$0xff]
        %v7124 = vld [vmem:[%s7058 + $0x188] sm:$0xf]
        %v7125 = vld [vmem:[%s7058 + $0x18c] sm:$0xff]
        %v7126 = vld [vmem:[%s7058 + $0x194] sm:$0xf]
        %v7127 = vld [vmem:[%s7058 + $0x198] sm:$0xff]
        %v7128 = vld [vmem:[%s7058 + $0x1a0] sm:$0xf]
        %v7129 = vld [vmem:[%s7058 + $0x1a4] sm:$0xff]
        %v7130 = vld [vmem:[%s7058 + $0x1ac] sm:$0xf]
        %v7131 = vld [vmem:[%s7058 + $0x1b0] sm:$0xff]
        %v7132 = vld [vmem:[%s7058 + $0x1b8] sm:$0xf]
        %v7133 = vld [vmem:[%s7058 + $0x1bc] sm:$0xff]
        %v7134 = vld [vmem:[%s7058 + $0x1c4] sm:$0xf]
        %v7135 = vld [vmem:[%s7058 + $0x1c8] sm:$0xff]
        %v7136 = vld [vmem:[%s7058 + $0x1d0] sm:$0xf]
        %v7137 = vld [vmem:[%s7058 + $0x1d4] sm:$0xff]
        %v7138 = vld [vmem:[%s7058 + $0x1dc] sm:$0xf]
        %v7139 = vld [vmem:[%s7058 + $0x1e0] sm:$0xff]
        %v7140 = vld [vmem:[%s7058 + $0x1e8] sm:$0xf]
        %v7141 = vld [vmem:[%s7058 + $0x1ec] sm:$0xff]
        %v7142 = vld [vmem:[%s7058 + $0x1f4] sm:$0xf]
        %v7143 = vld [vmem:[%s7058 + $0x1f8] sm:$0xff]
        %v7144 = vld [vmem:[%s7058 + $0x200] sm:$0xf]
        %v7145 = vld [vmem:[%s7058 + $0x204] sm:$0xff]
        %v7146 = vld [vmem:[%s7058 + $0x20c] sm:$0xf]
        %v7147 = vld [vmem:[%s7058 + $0x210] sm:$0xff]
        %v7148 = vld [vmem:[%s7058 + $0x218] sm:$0xf]
        %v7149 = vld [vmem:[%s7058 + $0x21c] sm:$0xff]
        %v7150 = vld [vmem:[%s7058 + $0x224] sm:$0xf]
        %v7151 = vld [vmem:[%s7058 + $0x228] sm:$0xff]
        %v7152 = vld [vmem:[%s7058 + $0x230] sm:$0xf]
        %v7153 = vld [vmem:[%s7058 + $0x234] sm:$0xff]
        %v7154 = vld [vmem:[%s7058 + $0x23c] sm:$0xf]
        %v7155 = vld [vmem:[%s7058 + $0x240] sm:$0xff]
        %v7156 = vld [vmem:[%s7058 + $0x248] sm:$0xf]
        %v7157 = vld [vmem:[%s7058 + $0x24c] sm:$0xff]
        %v7158 = vld [vmem:[%s7058 + $0x254] sm:$0xf]
        %v7159 = vld [vmem:[%s7058 + $0x258] sm:$0xff]
        %v7160 = vld [vmem:[%s7058 + $0x260] sm:$0xf]
        %v7161 = vld [vmem:[%s7058 + $0x264] sm:$0xff]
        %v7162 = vld [vmem:[%s7058 + $0x26c] sm:$0xf]
        %v7163 = vld [vmem:[%s7058 + $0x270] sm:$0xff]
        %v7164 = vld [vmem:[%s7058 + $0x278] sm:$0xf]
        %v7165 = vld [vmem:[%s7058 + $0x27c] sm:$0xff]
        %v7166 = vld [vmem:[%s7058 + $0x284] sm:$0xf]
        %v7167 = vld [vmem:[%s7058 + $0x288] sm:$0xff]
        %v7168 = vld [vmem:[%s7058 + $0x290] sm:$0xf]
        %v7169 = vld [vmem:[%s7058 + $0x294] sm:$0xff]
        %v7170 = vld [vmem:[%s7058 + $0x29c] sm:$0xf]
        %v7171 = vld [vmem:[%s7058 + $0x2a0] sm:$0xff]
        %v7172 = vld [vmem:[%s7058 + $0x2a8] sm:$0xf]
        %v7173 = vld [vmem:[%s7058 + $0x2ac] sm:$0xff]
        %v7174 = vld [vmem:[%s7058 + $0x2b4] sm:$0xf]
        %v7175 = vld [vmem:[%s7058 + $0x2b8] sm:$0xff]
        %v7176 = vld [vmem:[%s7058 + $0x2c0] sm:$0xf]
        %v7177 = vld [vmem:[%s7058 + $0x2c4] sm:$0xff]
        %v7178 = vld [vmem:[%s7058 + $0x2cc] sm:$0xf]
        %v7179 = vld [vmem:[%s7058 + $0x2d0] sm:$0xff]
        %v7180 = vld [vmem:[%s7058 + $0x2d8] sm:$0xf]
        %v7181 = vld [vmem:[%s7058 + $0x2dc] sm:$0xff]
        %v7182 = vld [vmem:[%s7058 + $0x2e4] sm:$0xf]
        %v7183 = vld [vmem:[%s7058 + $0x2e8] sm:$0xff]
        %v7184 = vld [vmem:[%s7058 + $0x2f0] sm:$0xf]
        %v7185 = vld [vmem:[%s7058 + $0x2f4] sm:$0xff]
        %v7186 = vld [vmem:[%s7058 + $0x2fc] sm:$0xf]
        %v7187 = vunpack.c.l.b16 %v6949
        %v7188 = vunpack.c.h.b16 %v6949
        %v7189 = vunpack.c.l.b16 %v6953
        %v7190 = vunpack.c.h.b16 %v6953
        %v7191 = vunpack.c.l.b16 %v6956
        %v7192 = vunpack.c.h.b16 %v6956
        %v7193 = vunpack.c.l.b16 %v6959
        %v7194 = vunpack.c.h.b16 %v6959
        %v7195 = vunpack.c.l.b16 %v6963
        %v7196 = vunpack.c.h.b16 %v6963
        %v7197 = vunpack.c.l.b16 %v6967
        %v7198 = vunpack.c.h.b16 %v6967
        %v7199 = vunpack.c.l.b16 %v6970
        %v7200 = vunpack.c.h.b16 %v6970
        %v7201 = vunpack.c.l.b16 %v6973
        %v7202 = vunpack.c.h.b16 %v6973
        %v7203 = vunpack.c.l.b16 %v6977
        %v7204 = vunpack.c.h.b16 %v6977
        %v7205 = vunpack.c.l.b16 %v6981
        %v7206 = vunpack.c.h.b16 %v6981
        %v7207 = vunpack.c.l.b16 %v6984
        %v7208 = vunpack.c.h.b16 %v6984
        %v7209 = vunpack.c.l.b16 %v6987
        %v7210 = vunpack.c.h.b16 %v6987
        %v7211 = vunpack.c.l.b16 %v6991
        %v7212 = vunpack.c.h.b16 %v6991
        %v7213 = vunpack.c.l.b16 %v6995
        %v7214 = vunpack.c.h.b16 %v6995
        %v7215 = vunpack.c.l.b16 %v6998
        %v7216 = vunpack.c.h.b16 %v6998
        %v7217 = vunpack.c.l.b16 %v7001
        %v7218 = vunpack.c.h.b16 %v7001
        %v7219 = vunpack.c.l.b16 %v7005
        %v7220 = vunpack.c.h.b16 %v7005
        %v7221 = vunpack.c.l.b16 %v7009
        %v7222 = vunpack.c.h.b16 %v7009
        %v7223 = vunpack.c.l.b16 %v7012
        %v7224 = vunpack.c.h.b16 %v7012
        %v7225 = vunpack.c.l.b16 %v7015
        %v7226 = vunpack.c.h.b16 %v7015
        %v7227 = vunpack.c.l.b16 %v7019
        %v7228 = vunpack.c.h.b16 %v7019
        %v7229 = vunpack.c.l.b16 %v7023
        %v7230 = vunpack.c.h.b16 %v7023
        %v7231 = vunpack.c.l.b16 %v7026
        %v7232 = vunpack.c.h.b16 %v7026
        %v7233 = vunpack.c.l.b16 %v7029
        %v7234 = vunpack.c.h.b16 %v7029
        %v7235 = vunpack.c.l.b16 %v7033
        %v7236 = vunpack.c.h.b16 %v7033
        %v7237 = vunpack.c.l.b16 %v7037
        %v7238 = vunpack.c.h.b16 %v7037
        %v7239 = vunpack.c.l.b16 %v7040
        %v7240 = vunpack.c.h.b16 %v7040
        %v7241 = vunpack.c.l.b16 %v7043
        %v7242 = vunpack.c.h.b16 %v7043
        %v7243 = vunpack.c.l.b16 %v7047
        %v7244 = vunpack.c.h.b16 %v7047
        %v7245 = vunpack.c.l.b16 %v7051
        %v7246 = vunpack.c.h.b16 %v7051
        %v7247 = vunpack.c.l.b16 %v7054
        %v7248 = vunpack.c.h.b16 %v7054
        %v7249 = vunpack.c.l.b16 %v7057
        %v7250 = vunpack.c.h.b16 %v7057
        %v7251 = vpack.c.b16 %v7191, %v7187
        %v7252 = vpack.c.b16 %v7192, %v7188
        %v7253 = vpack.c.b16 %v7193, %v7189
        %v7254 = vpack.c.b16 %v7194, %v7190
        %v7255 = vpack.c.b16 %v7199, %v7195
        %v7256 = vpack.c.b16 %v7200, %v7196
        %v7257 = vpack.c.b16 %v7201, %v7197
        %v7258 = vpack.c.b16 %v7202, %v7198
        %v7259 = vpack.c.b16 %v7207, %v7203
        %v7260 = vpack.c.b16 %v7208, %v7204
        %v7261 = vpack.c.b16 %v7209, %v7205
        %v7262 = vpack.c.b16 %v7210, %v7206
        %v7263 = vpack.c.b16 %v7215, %v7211
        %v7264 = vpack.c.b16 %v7216, %v7212
        %v7265 = vpack.c.b16 %v7217, %v7213
        %v7266 = vpack.c.b16 %v7218, %v7214
        %v7267 = vpack.c.b16 %v7223, %v7219
        %v7268 = vpack.c.b16 %v7224, %v7220
        %v7269 = vpack.c.b16 %v7225, %v7221
        %v7270 = vpack.c.b16 %v7226, %v7222
        %v7271 = vpack.c.b16 %v7231, %v7227
        %v7272 = vpack.c.b16 %v7232, %v7228
        %v7273 = vpack.c.b16 %v7233, %v7229
        %v7274 = vpack.c.b16 %v7234, %v7230
        %v7275 = vpack.c.b16 %v7239, %v7235
        %v7276 = vpack.c.b16 %v7240, %v7236
        %v7277 = vpack.c.b16 %v7241, %v7237
        %v7278 = vpack.c.b16 %v7242, %v7238
        %v7279 = vpack.c.b16 %v7247, %v7243
        %v7280 = vpack.c.b16 %v7248, %v7244
        %v7281 = vpack.c.b16 %v7249, %v7245
        %v7282 = vpack.c.b16 %v7250, %v7246
        %v7443 = vunpack.c.l.b16 %v7059
        %v7444 = vunpack.c.h.b16 %v7059
        %v7445 = vunpack.c.l.b16 %v7060
        %v7446 = vunpack.c.l.b16 %v7061
        %v7447 = vunpack.c.h.b16 %v7061
        %v7448 = vunpack.c.l.b16 %v7062
        %v7449 = vunpack.c.l.b16 %v7063
        %v7450 = vunpack.c.h.b16 %v7063
        %v7451 = vunpack.c.l.b16 %v7064
        %v7452 = vunpack.c.l.b16 %v7065
        %v7453 = vunpack.c.h.b16 %v7065
        %v7454 = vunpack.c.l.b16 %v7066
        %v7455 = vunpack.c.l.b16 %v7067
        %v7456 = vunpack.c.h.b16 %v7067
        %v7457 = vunpack.c.l.b16 %v7068
        %v7458 = vunpack.c.l.b16 %v7069
        %v7459 = vunpack.c.h.b16 %v7069
        %v7460 = vunpack.c.l.b16 %v7070
        %v7461 = vunpack.c.l.b16 %v7071
        %v7462 = vunpack.c.h.b16 %v7071
        %v7463 = vunpack.c.l.b16 %v7072
        %v7464 = vunpack.c.l.b16 %v7073
        %v7465 = vunpack.c.h.b16 %v7073
        %v7466 = vunpack.c.l.b16 %v7074
        %v7467 = vunpack.c.l.b16 %v7075
        %v7468 = vunpack.c.h.b16 %v7075
        %v7469 = vunpack.c.l.b16 %v7076
        %v7470 = vunpack.c.l.b16 %v7077
        %v7471 = vunpack.c.h.b16 %v7077
        %v7472 = vunpack.c.l.b16 %v7078
        %v7473 = vunpack.c.l.b16 %v7079
        %v7474 = vunpack.c.h.b16 %v7079
        %v7475 = vunpack.c.l.b16 %v7080
        %v7476 = vunpack.c.l.b16 %v7081
        %v7477 = vunpack.c.h.b16 %v7081
        %v7478 = vunpack.c.l.b16 %v7082
        %v7479 = vunpack.c.l.b16 %v7083
        %v7480 = vunpack.c.h.b16 %v7083
        %v7481 = vunpack.c.l.b16 %v7084
        %v7482 = vunpack.c.l.b16 %v7085
        %v7483 = vunpack.c.h.b16 %v7085
        %v7484 = vunpack.c.l.b16 %v7086
        %v7485 = vunpack.c.l.b16 %v7087
        %v7486 = vunpack.c.h.b16 %v7087
        %v7487 = vunpack.c.l.b16 %v7088
        %v7488 = vunpack.c.l.b16 %v7089
        %v7489 = vunpack.c.h.b16 %v7089
        %v7490 = vunpack.c.l.b16 %v7090
        %v7491 = vunpack.c.l.b16 %v7091
        %v7492 = vunpack.c.h.b16 %v7091
        %v7493 = vunpack.c.l.b16 %v7092
        %v7494 = vunpack.c.l.b16 %v7093
        %v7495 = vunpack.c.h.b16 %v7093
        %v7496 = vunpack.c.l.b16 %v7094
        %v7497 = vunpack.c.l.b16 %v7095
        %v7498 = vunpack.c.h.b16 %v7095
        %v7499 = vunpack.c.l.b16 %v7096
        %v7500 = vunpack.c.l.b16 %v7097
        %v7501 = vunpack.c.h.b16 %v7097
        %v7502 = vunpack.c.l.b16 %v7098
        %v7503 = vunpack.c.l.b16 %v7099
        %v7504 = vunpack.c.h.b16 %v7099
        %v7505 = vunpack.c.l.b16 %v7100
        %v7506 = vunpack.c.l.b16 %v7101
        %v7507 = vunpack.c.h.b16 %v7101
        %v7508 = vunpack.c.l.b16 %v7102
        %v7509 = vunpack.c.l.b16 %v7103
        %v7510 = vunpack.c.h.b16 %v7103
        %v7511 = vunpack.c.l.b16 %v7104
        %v7512 = vunpack.c.l.b16 %v7105
        %v7513 = vunpack.c.h.b16 %v7105
        %v7514 = vunpack.c.l.b16 %v7106
        %v7515 = vunpack.c.l.b16 %v7107
        %v7516 = vunpack.c.h.b16 %v7107
        %v7517 = vunpack.c.l.b16 %v7108
        %v7518 = vunpack.c.l.b16 %v7109
        %v7519 = vunpack.c.h.b16 %v7109
        %v7520 = vunpack.c.l.b16 %v7110
        %v7521 = vunpack.c.l.b16 %v7111
        %v7522 = vunpack.c.h.b16 %v7111
        %v7523 = vunpack.c.l.b16 %v7112
        %v7524 = vunpack.c.l.b16 %v7113
        %v7525 = vunpack.c.h.b16 %v7113
        %v7526 = vunpack.c.l.b16 %v7114
        %v7527 = vunpack.c.l.b16 %v7115
        %v7528 = vunpack.c.h.b16 %v7115
        %v7529 = vunpack.c.l.b16 %v7116
        %v7530 = vunpack.c.l.b16 %v7117
        %v7531 = vunpack.c.h.b16 %v7117
        %v7532 = vunpack.c.l.b16 %v7118
        %v7533 = vunpack.c.l.b16 %v7119
        %v7534 = vunpack.c.h.b16 %v7119
        %v7535 = vunpack.c.l.b16 %v7120
        %v7536 = vunpack.c.l.b16 %v7121
        %v7537 = vunpack.c.h.b16 %v7121
        %v7538 = vunpack.c.l.b16 %v7122
        %v7539 = vunpack.c.l.b16 %v7123
        %v7540 = vunpack.c.h.b16 %v7123
        %v7541 = vunpack.c.l.b16 %v7124
        %v7542 = vunpack.c.l.b16 %v7125
        %v7543 = vunpack.c.h.b16 %v7125
        %v7544 = vunpack.c.l.b16 %v7126
        %v7545 = vunpack.c.l.b16 %v7127
        %v7546 = vunpack.c.h.b16 %v7127
        %v7547 = vunpack.c.l.b16 %v7128
        %v7548 = vunpack.c.l.b16 %v7129
        %v7549 = vunpack.c.h.b16 %v7129
        %v7550 = vunpack.c.l.b16 %v7130
        %v7551 = vunpack.c.l.b16 %v7131
        %v7552 = vunpack.c.h.b16 %v7131
        %v7553 = vunpack.c.l.b16 %v7132
        %v7554 = vunpack.c.l.b16 %v7133
        %v7555 = vunpack.c.h.b16 %v7133
        %v7556 = vunpack.c.l.b16 %v7134
        %v7557 = vunpack.c.l.b16 %v7135
        %v7558 = vunpack.c.h.b16 %v7135
        %v7559 = vunpack.c.l.b16 %v7136
        %v7560 = vunpack.c.l.b16 %v7137
        %v7561 = vunpack.c.h.b16 %v7137
        %v7562 = vunpack.c.l.b16 %v7138
        %v7563 = vunpack.c.l.b16 %v7139
        %v7564 = vunpack.c.h.b16 %v7139
        %v7565 = vunpack.c.l.b16 %v7140
        %v7566 = vunpack.c.l.b16 %v7141
        %v7567 = vunpack.c.h.b16 %v7141
        %v7568 = vunpack.c.l.b16 %v7142
        %v7569 = vunpack.c.l.b16 %v7143
        %v7570 = vunpack.c.h.b16 %v7143
        %v7571 = vunpack.c.l.b16 %v7144
        %v7572 = vunpack.c.l.b16 %v7145
        %v7573 = vunpack.c.h.b16 %v7145
        %v7574 = vunpack.c.l.b16 %v7146
        %v7575 = vunpack.c.l.b16 %v7147
        %v7576 = vunpack.c.h.b16 %v7147
        %v7577 = vunpack.c.l.b16 %v7148
        %v7578 = vunpack.c.l.b16 %v7149
        %v7579 = vunpack.c.h.b16 %v7149
        %v7580 = vunpack.c.l.b16 %v7150
        %v7581 = vunpack.c.l.b16 %v7151
        %v7582 = vunpack.c.h.b16 %v7151
        %v7583 = vunpack.c.l.b16 %v7152
        %v7584 = vunpack.c.l.b16 %v7153
        %v7585 = vunpack.c.h.b16 %v7153
        %v7586 = vunpack.c.l.b16 %v7154
        %v7587 = vunpack.c.l.b16 %v7155
        %v7588 = vunpack.c.h.b16 %v7155
        %v7589 = vunpack.c.l.b16 %v7156
        %v7590 = vunpack.c.l.b16 %v7157
        %v7591 = vunpack.c.h.b16 %v7157
        %v7592 = vunpack.c.l.b16 %v7158
        %v7593 = vunpack.c.l.b16 %v7159
        %v7594 = vunpack.c.h.b16 %v7159
        %v7595 = vunpack.c.l.b16 %v7160
        %v7596 = vunpack.c.l.b16 %v7161
        %v7597 = vunpack.c.h.b16 %v7161
        %v7598 = vunpack.c.l.b16 %v7162
        %v7599 = vunpack.c.l.b16 %v7163
        %v7600 = vunpack.c.h.b16 %v7163
        %v7601 = vunpack.c.l.b16 %v7164
        %v7602 = vunpack.c.l.b16 %v7165
        %v7603 = vunpack.c.h.b16 %v7165
        %v7604 = vunpack.c.l.b16 %v7166
        %v7605 = vunpack.c.l.b16 %v7167
        %v7606 = vunpack.c.h.b16 %v7167
        %v7607 = vunpack.c.l.b16 %v7168
        %v7608 = vunpack.c.l.b16 %v7169
        %v7609 = vunpack.c.h.b16 %v7169
        %v7610 = vunpack.c.l.b16 %v7170
        %v7611 = vunpack.c.l.b16 %v7171
        %v7612 = vunpack.c.h.b16 %v7171
        %v7613 = vunpack.c.l.b16 %v7172
        %v7614 = vunpack.c.l.b16 %v7173
        %v7615 = vunpack.c.h.b16 %v7173
        %v7616 = vunpack.c.l.b16 %v7174
        %v7617 = vunpack.c.l.b16 %v7175
        %v7618 = vunpack.c.h.b16 %v7175
        %v7619 = vunpack.c.l.b16 %v7176
        %v7620 = vunpack.c.l.b16 %v7177
        %v7621 = vunpack.c.h.b16 %v7177
        %v7622 = vunpack.c.l.b16 %v7178
        %v7623 = vunpack.c.l.b16 %v7179
        %v7624 = vunpack.c.h.b16 %v7179
        %v7625 = vunpack.c.l.b16 %v7180
        %v7626 = vunpack.c.l.b16 %v7181
        %v7627 = vunpack.c.h.b16 %v7181
        %v7628 = vunpack.c.l.b16 %v7182
        %v7629 = vunpack.c.l.b16 %v7183
        %v7630 = vunpack.c.h.b16 %v7183
        %v7631 = vunpack.c.l.b16 %v7184
        %v7632 = vunpack.c.l.b16 %v7185
        %v7633 = vunpack.c.h.b16 %v7185
        %v7634 = vunpack.c.l.b16 %v7186
        %v7635 = vpack.c.b16 %v7446, %v7443
        %v7636 = vpack.c.b16 %v7447, %v7444
        %v7637 = vpack.c.b16 %v7448, %v7445
        %v7638 = vpack.c.b16 %v7452, %v7449
        %v7639 = vpack.c.b16 %v7453, %v7450
        %v7640 = vpack.c.b16 %v7454, %v7451
        %v7641 = vpack.c.b16 %v7458, %v7455
        %v7642 = vpack.c.b16 %v7459, %v7456
        %v7643 = vpack.c.b16 %v7460, %v7457
        %v7644 = vpack.c.b16 %v7464, %v7461
        %v7645 = vpack.c.b16 %v7465, %v7462
        %v7646 = vpack.c.b16 %v7466, %v7463
        %v7647 = vpack.c.b16 %v7470, %v7467
        %v7648 = vpack.c.b16 %v7471, %v7468
        %v7649 = vpack.c.b16 %v7472, %v7469
        %v7650 = vpack.c.b16 %v7476, %v7473
        %v7651 = vpack.c.b16 %v7477, %v7474
        %v7652 = vpack.c.b16 %v7478, %v7475
        %v7653 = vpack.c.b16 %v7482, %v7479
        %v7654 = vpack.c.b16 %v7483, %v7480
        %v7655 = vpack.c.b16 %v7484, %v7481
        %v7656 = vpack.c.b16 %v7488, %v7485
        %v7657 = vpack.c.b16 %v7489, %v7486
        %v7658 = vpack.c.b16 %v7490, %v7487
        %v7659 = vpack.c.b16 %v7494, %v7491
        %v7660 = vpack.c.b16 %v7495, %v7492
        %v7661 = vpack.c.b16 %v7496, %v7493
        %v7662 = vpack.c.b16 %v7500, %v7497
        %v7663 = vpack.c.b16 %v7501, %v7498
        %v7664 = vpack.c.b16 %v7502, %v7499
        %v7665 = vpack.c.b16 %v7506, %v7503
        %v7666 = vpack.c.b16 %v7507, %v7504
        %v7667 = vpack.c.b16 %v7508, %v7505
        %v7668 = vpack.c.b16 %v7512, %v7509
        %v7669 = vpack.c.b16 %v7513, %v7510
        %v7670 = vpack.c.b16 %v7514, %v7511
        %v7671 = vpack.c.b16 %v7518, %v7515
        %v7672 = vpack.c.b16 %v7519, %v7516
        %v7673 = vpack.c.b16 %v7520, %v7517
        %v7674 = vpack.c.b16 %v7524, %v7521
        %v7675 = vpack.c.b16 %v7525, %v7522
        %v7676 = vpack.c.b16 %v7526, %v7523
        %v7677 = vpack.c.b16 %v7530, %v7527
        %v7678 = vpack.c.b16 %v7531, %v7528
        %v7679 = vpack.c.b16 %v7532, %v7529
        %v7680 = vpack.c.b16 %v7536, %v7533
        %v7681 = vpack.c.b16 %v7537, %v7534
        %v7682 = vpack.c.b16 %v7538, %v7535
        %v7683 = vpack.c.b16 %v7542, %v7539
        %v7684 = vpack.c.b16 %v7543, %v7540
        %v7685 = vpack.c.b16 %v7544, %v7541
        %v7686 = vpack.c.b16 %v7548, %v7545
        %v7687 = vpack.c.b16 %v7549, %v7546
        %v7688 = vpack.c.b16 %v7550, %v7547
        %v7689 = vpack.c.b16 %v7554, %v7551
        %v7690 = vpack.c.b16 %v7555, %v7552
        %v7691 = vpack.c.b16 %v7556, %v7553
        %v7692 = vpack.c.b16 %v7560, %v7557
        %v7693 = vpack.c.b16 %v7561, %v7558
        %v7694 = vpack.c.b16 %v7562, %v7559
        %v7695 = vpack.c.b16 %v7566, %v7563
        %v7696 = vpack.c.b16 %v7567, %v7564
        %v7697 = vpack.c.b16 %v7568, %v7565
        %v7698 = vpack.c.b16 %v7572, %v7569
        %v7699 = vpack.c.b16 %v7573, %v7570
        %v7700 = vpack.c.b16 %v7574, %v7571
        %v7701 = vpack.c.b16 %v7578, %v7575
        %v7702 = vpack.c.b16 %v7579, %v7576
        %v7703 = vpack.c.b16 %v7580, %v7577
        %v7704 = vpack.c.b16 %v7584, %v7581
        %v7705 = vpack.c.b16 %v7585, %v7582
        %v7706 = vpack.c.b16 %v7586, %v7583
        %v7707 = vpack.c.b16 %v7590, %v7587
        %v7708 = vpack.c.b16 %v7591, %v7588
        %v7709 = vpack.c.b16 %v7592, %v7589
        %v7710 = vpack.c.b16 %v7596, %v7593
        %v7711 = vpack.c.b16 %v7597, %v7594
        %v7712 = vpack.c.b16 %v7598, %v7595
        %v7713 = vpack.c.b16 %v7602, %v7599
        %v7714 = vpack.c.b16 %v7603, %v7600
        %v7715 = vpack.c.b16 %v7604, %v7601
        %v7716 = vpack.c.b16 %v7608, %v7605
        %v7717 = vpack.c.b16 %v7609, %v7606
        %v7718 = vpack.c.b16 %v7610, %v7607
        %v7719 = vpack.c.b16 %v7614, %v7611
        %v7720 = vpack.c.b16 %v7615, %v7612
        %v7721 = vpack.c.b16 %v7616, %v7613
        %v7722 = vpack.c.b16 %v7620, %v7617
        %v7723 = vpack.c.b16 %v7621, %v7618
        %v7724 = vpack.c.b16 %v7622, %v7619
        %v7725 = vpack.c.b16 %v7626, %v7623
        %v7726 = vpack.c.b16 %v7627, %v7624
        %v7727 = vpack.c.b16 %v7628, %v7625
        %v7728 = vpack.c.b16 %v7632, %v7629
        %v7729 = vpack.c.b16 %v7633, %v7630
        %v7730 = vpack.c.b16 %v7634, %v7631
        %7827 = vmatpush.bf16.msra.mxu0 %v7656
        %7828 = vmatpush.bf16.msra.mxu0 %v7653
        %7829 = vmatpush.bf16.msra.mxu0 %v7650
        %7830 = vmatpush.bf16.msra.mxu0 %v7647
        %7831 = vmatpush.bf16.msra.mxu0 %v7644
        %7832 = vmatpush.bf16.msra.mxu0 %v7641
        %7833 = vmatpush.bf16.msra.mxu0 %v7638
        %7834 = vmatpush.bf16.msra.mxu0 %v7635
        %7835 = vmatmul.bf16.gmra.mxu0 %v7251
        %v7836 = vpop.f32.mrf.mxu0
        %v7837 = vadd.f32 0.0, %v7836
        %v7838 = vpop.f32.mrf.mxu0
        %v7839 = vadd.f32 0.0, %v7838
        %7840 = vmatmul.bf16.gmra.mxu0 %v7255
        %v7841 = vpop.f32.mrf.mxu0
        %v7842 = vadd.f32 0.0, %v7841
        %v7843 = vpop.f32.mrf.mxu0
        %v7844 = vadd.f32 0.0, %v7843
        %7845 = vmatmul.bf16.gmra.mxu0 %v7259
        %v7846 = vpop.f32.mrf.mxu0
        %v7847 = vadd.f32 0.0, %v7846
        %v7848 = vpop.f32.mrf.mxu0
        %v7849 = vadd.f32 0.0, %v7848
        %7850 = vmatmul.bf16.gmra.mxu0 %v7263
        %v7851 = vpop.f32.mrf.mxu0
        %v7852 = vadd.f32 0.0, %v7851
        %v7853 = vpop.f32.mrf.mxu0
        %v7854 = vadd.f32 0.0, %v7853
        %7855 = vmatmul.bf16.gmra.mxu0 %v7267
        %v7856 = vpop.f32.mrf.mxu0
        %v7857 = vadd.f32 0.0, %v7856
        %v7858 = vpop.f32.mrf.mxu0
        %v7859 = vadd.f32 0.0, %v7858
        %7860 = vmatmul.bf16.gmra.mxu0 %v7271
        %v7861 = vpop.f32.mrf.mxu0
        %v7862 = vadd.f32 0.0, %v7861
        %v7863 = vpop.f32.mrf.mxu0
        %v7864 = vadd.f32 0.0, %v7863
        %7865 = vmatmul.bf16.gmra.mxu0 %v7275
        %v7866 = vpop.f32.mrf.mxu0
        %v7867 = vadd.f32 0.0, %v7866
        %v7868 = vpop.f32.mrf.mxu0
        %v7869 = vadd.f32 0.0, %v7868
        %7870 = vmatmul.bf16.gmra.mxu0 %v7279
        %v7871 = vpop.f32.mrf.mxu0
        %v7872 = vadd.f32 0.0, %v7871
        %v7873 = vpop.f32.mrf.mxu0
        %v7874 = vadd.f32 0.0, %v7873
        %7875 = vdwg.mxu0
        %7876 = vmatpush.bf16.msra.mxu0 %v7680
        %7877 = vmatpush.bf16.msra.mxu0 %v7677
        %7878 = vmatpush.bf16.msra.mxu0 %v7674
        %7879 = vmatpush.bf16.msra.mxu0 %v7671
        %7880 = vmatpush.bf16.msra.mxu0 %v7668
        %7881 = vmatpush.bf16.msra.mxu0 %v7665
        %7882 = vmatpush.bf16.msra.mxu0 %v7662
        %7883 = vmatpush.bf16.msra.mxu0 %v7659
        %7884 = vmatmul.bf16.gmra.mxu0 %v7252
        %v7885 = vpop.f32.mrf.mxu0
        %v7886 = vadd.f32 %v7837, %v7885
        %v7887 = vpop.f32.mrf.mxu0
        %v7888 = vadd.f32 %v7839, %v7887
        %7889 = vmatmul.bf16.gmra.mxu0 %v7256
        %v7890 = vpop.f32.mrf.mxu0
        %v7891 = vadd.f32 %v7842, %v7890
        %v7892 = vpop.f32.mrf.mxu0
        %v7893 = vadd.f32 %v7844, %v7892
        %7894 = vmatmul.bf16.gmra.mxu0 %v7260
        %v7895 = vpop.f32.mrf.mxu0
        %v7896 = vadd.f32 %v7847, %v7895
        %v7897 = vpop.f32.mrf.mxu0
        %v7898 = vadd.f32 %v7849, %v7897
        %7899 = vmatmul.bf16.gmra.mxu0 %v7264
        %v7900 = vpop.f32.mrf.mxu0
        %v7901 = vadd.f32 %v7852, %v7900
        %v7902 = vpop.f32.mrf.mxu0
        %v7903 = vadd.f32 %v7854, %v7902
        %7904 = vmatmul.bf16.gmra.mxu0 %v7268
        %v7905 = vpop.f32.mrf.mxu0
        %v7906 = vadd.f32 %v7857, %v7905
        %v7907 = vpop.f32.mrf.mxu0
        %v7908 = vadd.f32 %v7859, %v7907
        %7909 = vmatmul.bf16.gmra.mxu0 %v7272
        %v7910 = vpop.f32.mrf.mxu0
        %v7911 = vadd.f32 %v7862, %v7910
        %v7912 = vpop.f32.mrf.mxu0
        %v7913 = vadd.f32 %v7864, %v7912
        %7914 = vmatmul.bf16.gmra.mxu0 %v7276
        %v7915 = vpop.f32.mrf.mxu0
        %v7916 = vadd.f32 %v7867, %v7915
        %v7917 = vpop.f32.mrf.mxu0
        %v7918 = vadd.f32 %v7869, %v7917
        %7919 = vmatmul.bf16.gmra.mxu0 %v7280
        %v7920 = vpop.f32.mrf.mxu0
        %v7921 = vadd.f32 %v7872, %v7920
        %v7922 = vpop.f32.mrf.mxu0
        %v7923 = vadd.f32 %v7874, %v7922
        %7924 = vdwg.mxu0
        %7925 = vmatpush.bf16.msra.mxu0 %v7704
        %7926 = vmatpush.bf16.msra.mxu0 %v7701
        %7927 = vmatpush.bf16.msra.mxu0 %v7698
        %7928 = vmatpush.bf16.msra.mxu0 %v7695
        %7929 = vmatpush.bf16.msra.mxu0 %v7692
        %7930 = vmatpush.bf16.msra.mxu0 %v7689
        %7931 = vmatpush.bf16.msra.mxu0 %v7686
        %7932 = vmatpush.bf16.msra.mxu0 %v7683
        %7933 = vmatmul.bf16.gmra.mxu0 %v7253
        %v7934 = vpop.f32.mrf.mxu0
        %v7935 = vadd.f32 %v7886, %v7934
        %v7936 = vpop.f32.mrf.mxu0
        %v7937 = vadd.f32 %v7888, %v7936
        %7938 = vmatmul.bf16.gmra.mxu0 %v7257
        %v7939 = vpop.f32.mrf.mxu0
        %v7940 = vadd.f32 %v7891, %v7939
        %v7941 = vpop.f32.mrf.mxu0
        %v7942 = vadd.f32 %v7893, %v7941
        %7943 = vmatmul.bf16.gmra.mxu0 %v7261
        %v7944 = vpop.f32.mrf.mxu0
        %v7945 = vadd.f32 %v7896, %v7944
        %v7946 = vpop.f32.mrf.mxu0
        %v7947 = vadd.f32 %v7898, %v7946
        %7948 = vmatmul.bf16.gmra.mxu0 %v7265
        %v7949 = vpop.f32.mrf.mxu0
        %v7950 = vadd.f32 %v7901, %v7949
        %v7951 = vpop.f32.mrf.mxu0
        %v7952 = vadd.f32 %v7903, %v7951
        %7953 = vmatmul.bf16.gmra.mxu0 %v7269
        %v7954 = vpop.f32.mrf.mxu0
        %v7955 = vadd.f32 %v7906, %v7954
        %v7956 = vpop.f32.mrf.mxu0
        %v7957 = vadd.f32 %v7908, %v7956
        %7958 = vmatmul.bf16.gmra.mxu0 %v7273
        %v7959 = vpop.f32.mrf.mxu0
        %v7960 = vadd.f32 %v7911, %v7959
        %v7961 = vpop.f32.mrf.mxu0
        %v7962 = vadd.f32 %v7913, %v7961
        %7963 = vmatmul.bf16.gmra.mxu0 %v7277
        %v7964 = vpop.f32.mrf.mxu0
        %v7965 = vadd.f32 %v7916, %v7964
        %v7966 = vpop.f32.mrf.mxu0
        %v7967 = vadd.f32 %v7918, %v7966
        %7968 = vmatmul.bf16.gmra.mxu0 %v7281
        %v7969 = vpop.f32.mrf.mxu0
        %v7970 = vadd.f32 %v7921, %v7969
        %v7971 = vpop.f32.mrf.mxu0
        %v7972 = vadd.f32 %v7923, %v7971
        %7973 = vdwg.mxu0
        %7974 = vmatpush.bf16.msra.mxu0 %v7728
        %7975 = vmatpush.bf16.msra.mxu0 %v7725
        %7976 = vmatpush.bf16.msra.mxu0 %v7722
        %7977 = vmatpush.bf16.msra.mxu0 %v7719
        %7978 = vmatpush.bf16.msra.mxu0 %v7716
        %7979 = vmatpush.bf16.msra.mxu0 %v7713
        %7980 = vmatpush.bf16.msra.mxu0 %v7710
        %7981 = vmatpush.bf16.msra.mxu0 %v7707
        %7982 = vmatmul.bf16.gmra.mxu0 %v7254
        %v7983 = vpop.f32.mrf.mxu0
        %v7984 = vadd.f32 %v7935, %v7983
        %v7985 = vpop.f32.mrf.mxu0
        %v7986 = vadd.f32 %v7937, %v7985
        %7987 = vmatmul.bf16.gmra.mxu0 %v7258
        %v7988 = vpop.f32.mrf.mxu0
        %v7989 = vadd.f32 %v7940, %v7988
        %v7990 = vpop.f32.mrf.mxu0
        %v7991 = vadd.f32 %v7942, %v7990
        %7992 = vmatmul.bf16.gmra.mxu0 %v7262
        %v7993 = vpop.f32.mrf.mxu0
        %v7994 = vadd.f32 %v7945, %v7993
        %v7995 = vpop.f32.mrf.mxu0
        %v7996 = vadd.f32 %v7947, %v7995
        %7997 = vmatmul.bf16.gmra.mxu0 %v7266
        %v7998 = vpop.f32.mrf.mxu0
        %v7999 = vadd.f32 %v7950, %v7998
        %v8000 = vpop.f32.mrf.mxu0
        %v8001 = vadd.f32 %v7952, %v8000
        %8002 = vmatmul.bf16.gmra.mxu0 %v7270
        %v8003 = vpop.f32.mrf.mxu0
        %v8004 = vadd.f32 %v7955, %v8003
        %v8005 = vpop.f32.mrf.mxu0
        %v8006 = vadd.f32 %v7957, %v8005
        %8007 = vmatmul.bf16.gmra.mxu0 %v7274
        %v8008 = vpop.f32.mrf.mxu0
        %v8009 = vadd.f32 %v7960, %v8008
        %v8010 = vpop.f32.mrf.mxu0
        %v8011 = vadd.f32 %v7962, %v8010
        %8012 = vmatmul.bf16.gmra.mxu0 %v7278
        %v8013 = vpop.f32.mrf.mxu0
        %v8014 = vadd.f32 %v7965, %v8013
        %v8015 = vpop.f32.mrf.mxu0
        %v8016 = vadd.f32 %v7967, %v8015
        %8017 = vmatmul.bf16.gmra.mxu0 %v7282
        %v8018 = vpop.f32.mrf.mxu0
        %v8019 = vadd.f32 %v7970, %v8018
        %v8020 = vpop.f32.mrf.mxu0
        %v8021 = vadd.f32 %v7972, %v8020
        %8022 = vdwg.mxu0
        %8023 = vmatpush.bf16.msra.mxu0 %v7657
        %8024 = vmatpush.bf16.msra.mxu0 %v7654
        %8025 = vmatpush.bf16.msra.mxu0 %v7651
        %8026 = vmatpush.bf16.msra.mxu0 %v7648
        %8027 = vmatpush.bf16.msra.mxu0 %v7645
        %8028 = vmatpush.bf16.msra.mxu0 %v7642
        %8029 = vmatpush.bf16.msra.mxu0 %v7639
        %8030 = vmatpush.bf16.msra.mxu0 %v7636
        %8031 = vmatmul.bf16.gmra.mxu0 %v7251
        %v8032 = vpop.f32.mrf.mxu0
        %v8033 = vadd.f32 0.0, %v8032
        %v8034 = vpop.f32.mrf.mxu0
        %v8035 = vadd.f32 0.0, %v8034
        %8036 = vmatmul.bf16.gmra.mxu0 %v7255
        %v8037 = vpop.f32.mrf.mxu0
        %v8038 = vadd.f32 0.0, %v8037
        %v8039 = vpop.f32.mrf.mxu0
        %v8040 = vadd.f32 0.0, %v8039
        %8041 = vmatmul.bf16.gmra.mxu0 %v7259
        %v8042 = vpop.f32.mrf.mxu0
        %v8043 = vadd.f32 0.0, %v8042
        %v8044 = vpop.f32.mrf.mxu0
        %v8045 = vadd.f32 0.0, %v8044
        %8046 = vmatmul.bf16.gmra.mxu0 %v7263
        %v8047 = vpop.f32.mrf.mxu0
        %v8048 = vadd.f32 0.0, %v8047
        %v8049 = vpop.f32.mrf.mxu0
        %v8050 = vadd.f32 0.0, %v8049
        %8051 = vmatmul.bf16.gmra.mxu0 %v7267
        %v8052 = vpop.f32.mrf.mxu0
        %v8053 = vadd.f32 0.0, %v8052
        %v8054 = vpop.f32.mrf.mxu0
        %v8055 = vadd.f32 0.0, %v8054
        %8056 = vmatmul.bf16.gmra.mxu0 %v7271
        %v8057 = vpop.f32.mrf.mxu0
        %v8058 = vadd.f32 0.0, %v8057
        %v8059 = vpop.f32.mrf.mxu0
        %v8060 = vadd.f32 0.0, %v8059
        %8061 = vmatmul.bf16.gmra.mxu0 %v7275
        %v8062 = vpop.f32.mrf.mxu0
        %v8063 = vadd.f32 0.0, %v8062
        %v8064 = vpop.f32.mrf.mxu0
        %v8065 = vadd.f32 0.0, %v8064
        %8066 = vmatmul.bf16.gmra.mxu0 %v7279
        %v8067 = vpop.f32.mrf.mxu0
        %v8068 = vadd.f32 0.0, %v8067
        %v8069 = vpop.f32.mrf.mxu0
        %v8070 = vadd.f32 0.0, %v8069
        %8071 = vdwg.mxu0
        %8072 = vmatpush.bf16.msra.mxu0 %v7681
        %8073 = vmatpush.bf16.msra.mxu0 %v7678
        %8074 = vmatpush.bf16.msra.mxu0 %v7675
        %8075 = vmatpush.bf16.msra.mxu0 %v7672
        %8076 = vmatpush.bf16.msra.mxu0 %v7669
        %8077 = vmatpush.bf16.msra.mxu0 %v7666
        %8078 = vmatpush.bf16.msra.mxu0 %v7663
        %8079 = vmatpush.bf16.msra.mxu0 %v7660
        %8080 = vmatmul.bf16.gmra.mxu0 %v7252
        %v8081 = vpop.f32.mrf.mxu0
        %v8082 = vadd.f32 %v8033, %v8081
        %v8083 = vpop.f32.mrf.mxu0
        %v8084 = vadd.f32 %v8035, %v8083
        %8085 = vmatmul.bf16.gmra.mxu0 %v7256
        %v8086 = vpop.f32.mrf.mxu0
        %v8087 = vadd.f32 %v8038, %v8086
        %v8088 = vpop.f32.mrf.mxu0
        %v8089 = vadd.f32 %v8040, %v8088
        %8090 = vmatmul.bf16.gmra.mxu0 %v7260
        %v8091 = vpop.f32.mrf.mxu0
        %v8092 = vadd.f32 %v8043, %v8091
        %v8093 = vpop.f32.mrf.mxu0
        %v8094 = vadd.f32 %v8045, %v8093
        %8095 = vmatmul.bf16.gmra.mxu0 %v7264
        %v8096 = vpop.f32.mrf.mxu0
        %v8097 = vadd.f32 %v8048, %v8096
        %v8098 = vpop.f32.mrf.mxu0
        %v8099 = vadd.f32 %v8050, %v8098
        %8100 = vmatmul.bf16.gmra.mxu0 %v7268
        %v8101 = vpop.f32.mrf.mxu0
        %v8102 = vadd.f32 %v8053, %v8101
        %v8103 = vpop.f32.mrf.mxu0
        %v8104 = vadd.f32 %v8055, %v8103
        %8105 = vmatmul.bf16.gmra.mxu0 %v7272
        %v8106 = vpop.f32.mrf.mxu0
        %v8107 = vadd.f32 %v8058, %v8106
        %v8108 = vpop.f32.mrf.mxu0
        %v8109 = vadd.f32 %v8060, %v8108
        %8110 = vmatmul.bf16.gmra.mxu0 %v7276
        %v8111 = vpop.f32.mrf.mxu0
        %v8112 = vadd.f32 %v8063, %v8111
        %v8113 = vpop.f32.mrf.mxu0
        %v8114 = vadd.f32 %v8065, %v8113
        %8115 = vmatmul.bf16.gmra.mxu0 %v7280
        %v8116 = vpop.f32.mrf.mxu0
        %v8117 = vadd.f32 %v8068, %v8116
        %v8118 = vpop.f32.mrf.mxu0
        %v8119 = vadd.f32 %v8070, %v8118
        %8120 = vdwg.mxu0
        %8121 = vmatpush.bf16.msra.mxu0 %v7705
        %8122 = vmatpush.bf16.msra.mxu0 %v7702
        %8123 = vmatpush.bf16.msra.mxu0 %v7699
        %8124 = vmatpush.bf16.msra.mxu0 %v7696
        %8125 = vmatpush.bf16.msra.mxu0 %v7693
        %8126 = vmatpush.bf16.msra.mxu0 %v7690
        %8127 = vmatpush.bf16.msra.mxu0 %v7687
        %8128 = vmatpush.bf16.msra.mxu0 %v7684
        %8129 = vmatmul.bf16.gmra.mxu0 %v7253
        %v8130 = vpop.f32.mrf.mxu0
        %v8131 = vadd.f32 %v8082, %v8130
        %v8132 = vpop.f32.mrf.mxu0
        %v8133 = vadd.f32 %v8084, %v8132
        %8134 = vmatmul.bf16.gmra.mxu0 %v7257
        %v8135 = vpop.f32.mrf.mxu0
        %v8136 = vadd.f32 %v8087, %v8135
        %v8137 = vpop.f32.mrf.mxu0
        %v8138 = vadd.f32 %v8089, %v8137
        %8139 = vmatmul.bf16.gmra.mxu0 %v7261
        %v8140 = vpop.f32.mrf.mxu0
        %v8141 = vadd.f32 %v8092, %v8140
        %v8142 = vpop.f32.mrf.mxu0
        %v8143 = vadd.f32 %v8094, %v8142
        %8144 = vmatmul.bf16.gmra.mxu0 %v7265
        %v8145 = vpop.f32.mrf.mxu0
        %v8146 = vadd.f32 %v8097, %v8145
        %v8147 = vpop.f32.mrf.mxu0
        %v8148 = vadd.f32 %v8099, %v8147
        %8149 = vmatmul.bf16.gmra.mxu0 %v7269
        %v8150 = vpop.f32.mrf.mxu0
        %v8151 = vadd.f32 %v8102, %v8150
        %v8152 = vpop.f32.mrf.mxu0
        %v8153 = vadd.f32 %v8104, %v8152
        %8154 = vmatmul.bf16.gmra.mxu0 %v7273
        %v8155 = vpop.f32.mrf.mxu0
        %v8156 = vadd.f32 %v8107, %v8155
        %v8157 = vpop.f32.mrf.mxu0
        %v8158 = vadd.f32 %v8109, %v8157
        %8159 = vmatmul.bf16.gmra.mxu0 %v7277
        %v8160 = vpop.f32.mrf.mxu0
        %v8161 = vadd.f32 %v8112, %v8160
        %v8162 = vpop.f32.mrf.mxu0
        %v8163 = vadd.f32 %v8114, %v8162
        %8164 = vmatmul.bf16.gmra.mxu0 %v7281
        %v8165 = vpop.f32.mrf.mxu0
        %v8166 = vadd.f32 %v8117, %v8165
        %v8167 = vpop.f32.mrf.mxu0
        %v8168 = vadd.f32 %v8119, %v8167
        %8169 = vdwg.mxu0
        %8170 = vmatpush.bf16.msra.mxu0 %v7729
        %8171 = vmatpush.bf16.msra.mxu0 %v7726
        %8172 = vmatpush.bf16.msra.mxu0 %v7723
        %8173 = vmatpush.bf16.msra.mxu0 %v7720
        %8174 = vmatpush.bf16.msra.mxu0 %v7717
        %8175 = vmatpush.bf16.msra.mxu0 %v7714
        %8176 = vmatpush.bf16.msra.mxu0 %v7711
        %8177 = vmatpush.bf16.msra.mxu0 %v7708
        %8178 = vmatmul.bf16.gmra.mxu0 %v7254
        %v8179 = vpop.f32.mrf.mxu0
        %v8180 = vadd.f32 %v8131, %v8179
        %v8181 = vpop.f32.mrf.mxu0
        %v8182 = vadd.f32 %v8133, %v8181
        %8183 = vmatmul.bf16.gmra.mxu0 %v7258
        %v8184 = vpop.f32.mrf.mxu0
        %v8185 = vadd.f32 %v8136, %v8184
        %v8186 = vpop.f32.mrf.mxu0
        %v8187 = vadd.f32 %v8138, %v8186
        %8188 = vmatmul.bf16.gmra.mxu0 %v7262
        %v8189 = vpop.f32.mrf.mxu0
        %v8190 = vadd.f32 %v8141, %v8189
        %v8191 = vpop.f32.mrf.mxu0
        %v8192 = vadd.f32 %v8143, %v8191
        %8193 = vmatmul.bf16.gmra.mxu0 %v7266
        %v8194 = vpop.f32.mrf.mxu0
        %v8195 = vadd.f32 %v8146, %v8194
        %v8196 = vpop.f32.mrf.mxu0
        %v8197 = vadd.f32 %v8148, %v8196
        %8198 = vmatmul.bf16.gmra.mxu0 %v7270
        %v8199 = vpop.f32.mrf.mxu0
        %v8200 = vadd.f32 %v8151, %v8199
        %v8201 = vpop.f32.mrf.mxu0
        %v8202 = vadd.f32 %v8153, %v8201
        %8203 = vmatmul.bf16.gmra.mxu0 %v7274
        %v8204 = vpop.f32.mrf.mxu0
        %v8205 = vadd.f32 %v8156, %v8204
        %v8206 = vpop.f32.mrf.mxu0
        %v8207 = vadd.f32 %v8158, %v8206
        %8208 = vmatmul.bf16.gmra.mxu0 %v7278
        %v8209 = vpop.f32.mrf.mxu0
        %v8210 = vadd.f32 %v8161, %v8209
        %v8211 = vpop.f32.mrf.mxu0
        %v8212 = vadd.f32 %v8163, %v8211
        %8213 = vmatmul.bf16.gmra.mxu0 %v7282
        %v8214 = vpop.f32.mrf.mxu0
        %v8215 = vadd.f32 %v8166, %v8214
        %v8216 = vpop.f32.mrf.mxu0
        %v8217 = vadd.f32 %v8168, %v8216
        %8218 = vdwg.mxu0
        %8219 = vmatpush.bf16.msra.mxu0 %v7658
        %8220 = vmatpush.bf16.msra.mxu0 %v7655
        %8221 = vmatpush.bf16.msra.mxu0 %v7652
        %8222 = vmatpush.bf16.msra.mxu0 %v7649
        %8223 = vmatpush.bf16.msra.mxu0 %v7646
        %8224 = vmatpush.bf16.msra.mxu0 %v7643
        %8225 = vmatpush.bf16.msra.mxu0 %v7640
        %8226 = vmatpush.bf16.msra.mxu0 %v7637
        %8227 = vmatmul.bf16.gmra.mxu0 %v7251
        %v8228 = vpop.f32.mrf.mxu0
        %v8229 = vadd.f32 0.0, %v8228
        %v8230 = vpop.f32.mrf.mxu0
        %v8231 = vadd.f32 0.0, %v8230
        %8232 = vmatmul.bf16.gmra.mxu0 %v7255
        %v8233 = vpop.f32.mrf.mxu0
        %v8234 = vadd.f32 0.0, %v8233
        %v8235 = vpop.f32.mrf.mxu0
        %v8236 = vadd.f32 0.0, %v8235
        %8237 = vmatmul.bf16.gmra.mxu0 %v7259
        %v8238 = vpop.f32.mrf.mxu0
        %v8239 = vadd.f32 0.0, %v8238
        %v8240 = vpop.f32.mrf.mxu0
        %v8241 = vadd.f32 0.0, %v8240
        %8242 = vmatmul.bf16.gmra.mxu0 %v7263
        %v8243 = vpop.f32.mrf.mxu0
        %v8244 = vadd.f32 0.0, %v8243
        %v8245 = vpop.f32.mrf.mxu0
        %v8246 = vadd.f32 0.0, %v8245
        %8247 = vmatmul.bf16.gmra.mxu0 %v7267
        %v8248 = vpop.f32.mrf.mxu0
        %v8249 = vadd.f32 0.0, %v8248
        %v8250 = vpop.f32.mrf.mxu0
        %v8251 = vadd.f32 0.0, %v8250
        %8252 = vmatmul.bf16.gmra.mxu0 %v7271
        %v8253 = vpop.f32.mrf.mxu0
        %v8254 = vadd.f32 0.0, %v8253
        %v8255 = vpop.f32.mrf.mxu0
        %v8256 = vadd.f32 0.0, %v8255
        %8257 = vmatmul.bf16.gmra.mxu0 %v7275
        %v8258 = vpop.f32.mrf.mxu0
        %v8259 = vadd.f32 0.0, %v8258
        %v8260 = vpop.f32.mrf.mxu0
        %v8261 = vadd.f32 0.0, %v8260
        %8262 = vmatmul.bf16.gmra.mxu0 %v7279
        %v8263 = vpop.f32.mrf.mxu0
        %v8264 = vadd.f32 0.0, %v8263
        %v8265 = vpop.f32.mrf.mxu0
        %v8266 = vadd.f32 0.0, %v8265
        %8267 = vdwg.mxu0
        %8268 = vmatpush.bf16.msra.mxu0 %v7682
        %8269 = vmatpush.bf16.msra.mxu0 %v7679
        %8270 = vmatpush.bf16.msra.mxu0 %v7676
        %8271 = vmatpush.bf16.msra.mxu0 %v7673
        %8272 = vmatpush.bf16.msra.mxu0 %v7670
        %8273 = vmatpush.bf16.msra.mxu0 %v7667
        %8274 = vmatpush.bf16.msra.mxu0 %v7664
        %8275 = vmatpush.bf16.msra.mxu0 %v7661
        %8276 = vmatmul.bf16.gmra.mxu0 %v7252
        %v8277 = vpop.f32.mrf.mxu0
        %v8278 = vadd.f32 %v8229, %v8277
        %v8279 = vpop.f32.mrf.mxu0
        %v8280 = vadd.f32 %v8231, %v8279
        %8281 = vmatmul.bf16.gmra.mxu0 %v7256
        %v8282 = vpop.f32.mrf.mxu0
        %v8283 = vadd.f32 %v8234, %v8282
        %v8284 = vpop.f32.mrf.mxu0
        %v8285 = vadd.f32 %v8236, %v8284
        %8286 = vmatmul.bf16.gmra.mxu0 %v7260
        %v8287 = vpop.f32.mrf.mxu0
        %v8288 = vadd.f32 %v8239, %v8287
        %v8289 = vpop.f32.mrf.mxu0
        %v8290 = vadd.f32 %v8241, %v8289
        %8291 = vmatmul.bf16.gmra.mxu0 %v7264
        %v8292 = vpop.f32.mrf.mxu0
        %v8293 = vadd.f32 %v8244, %v8292
        %v8294 = vpop.f32.mrf.mxu0
        %v8295 = vadd.f32 %v8246, %v8294
        %8296 = vmatmul.bf16.gmra.mxu0 %v7268
        %v8297 = vpop.f32.mrf.mxu0
        %v8298 = vadd.f32 %v8249, %v8297
        %v8299 = vpop.f32.mrf.mxu0
        %v8300 = vadd.f32 %v8251, %v8299
        %8301 = vmatmul.bf16.gmra.mxu0 %v7272
        %v8302 = vpop.f32.mrf.mxu0
        %v8303 = vadd.f32 %v8254, %v8302
        %v8304 = vpop.f32.mrf.mxu0
        %v8305 = vadd.f32 %v8256, %v8304
        %8306 = vmatmul.bf16.gmra.mxu0 %v7276
        %v8307 = vpop.f32.mrf.mxu0
        %v8308 = vadd.f32 %v8259, %v8307
        %v8309 = vpop.f32.mrf.mxu0
        %v8310 = vadd.f32 %v8261, %v8309
        %8311 = vmatmul.bf16.gmra.mxu0 %v7280
        %v8312 = vpop.f32.mrf.mxu0
        %v8313 = vadd.f32 %v8264, %v8312
        %v8314 = vpop.f32.mrf.mxu0
        %v8315 = vadd.f32 %v8266, %v8314
        %8316 = vdwg.mxu0
        %8317 = vmatpush.bf16.msra.mxu0 %v7706
        %8318 = vmatpush.bf16.msra.mxu0 %v7703
        %8319 = vmatpush.bf16.msra.mxu0 %v7700
        %8320 = vmatpush.bf16.msra.mxu0 %v7697
        %8321 = vmatpush.bf16.msra.mxu0 %v7694
        %8322 = vmatpush.bf16.msra.mxu0 %v7691
        %8323 = vmatpush.bf16.msra.mxu0 %v7688
        %8324 = vmatpush.bf16.msra.mxu0 %v7685
        %8325 = vmatmul.bf16.gmra.mxu0 %v7253
        %v8326 = vpop.f32.mrf.mxu0
        %v8327 = vadd.f32 %v8278, %v8326
        %v8328 = vpop.f32.mrf.mxu0
        %v8329 = vadd.f32 %v8280, %v8328
        %8330 = vmatmul.bf16.gmra.mxu0 %v7257
        %v8331 = vpop.f32.mrf.mxu0
        %v8332 = vadd.f32 %v8283, %v8331
        %v8333 = vpop.f32.mrf.mxu0
        %v8334 = vadd.f32 %v8285, %v8333
        %8335 = vmatmul.bf16.gmra.mxu0 %v7261
        %v8336 = vpop.f32.mrf.mxu0
        %v8337 = vadd.f32 %v8288, %v8336
        %v8338 = vpop.f32.mrf.mxu0
        %v8339 = vadd.f32 %v8290, %v8338
        %8340 = vmatmul.bf16.gmra.mxu0 %v7265
        %v8341 = vpop.f32.mrf.mxu0
        %v8342 = vadd.f32 %v8293, %v8341
        %v8343 = vpop.f32.mrf.mxu0
        %v8344 = vadd.f32 %v8295, %v8343
        %8345 = vmatmul.bf16.gmra.mxu0 %v7269
        %v8346 = vpop.f32.mrf.mxu0
        %v8347 = vadd.f32 %v8298, %v8346
        %v8348 = vpop.f32.mrf.mxu0
        %v8349 = vadd.f32 %v8300, %v8348
        %8350 = vmatmul.bf16.gmra.mxu0 %v7273
        %v8351 = vpop.f32.mrf.mxu0
        %v8352 = vadd.f32 %v8303, %v8351
        %v8353 = vpop.f32.mrf.mxu0
        %v8354 = vadd.f32 %v8305, %v8353
        %8355 = vmatmul.bf16.gmra.mxu0 %v7277
        %v8356 = vpop.f32.mrf.mxu0
        %v8357 = vadd.f32 %v8308, %v8356
        %v8358 = vpop.f32.mrf.mxu0
        %v8359 = vadd.f32 %v8310, %v8358
        %8360 = vmatmul.bf16.gmra.mxu0 %v7281
        %v8361 = vpop.f32.mrf.mxu0
        %v8362 = vadd.f32 %v8313, %v8361
        %v8363 = vpop.f32.mrf.mxu0
        %v8364 = vadd.f32 %v8315, %v8363
        %8365 = vdwg.mxu0
        %8366 = vmatpush.bf16.msra.mxu0 %v7730
        %8367 = vmatpush.bf16.msra.mxu0 %v7727
        %8368 = vmatpush.bf16.msra.mxu0 %v7724
        %8369 = vmatpush.bf16.msra.mxu0 %v7721
        %8370 = vmatpush.bf16.msra.mxu0 %v7718
        %8371 = vmatpush.bf16.msra.mxu0 %v7715
        %8372 = vmatpush.bf16.msra.mxu0 %v7712
        %8373 = vmatpush.bf16.msra.mxu0 %v7709
        %8374 = vmatmul.bf16.gmra.mxu0 %v7254
        %v8375 = vpop.f32.mrf.mxu0
        %v8376 = vadd.f32 %v8327, %v8375
        %v8377 = vpop.f32.mrf.mxu0
        %v8378 = vadd.f32 %v8329, %v8377
        %8379 = vmatmul.bf16.gmra.mxu0 %v7258
        %v8380 = vpop.f32.mrf.mxu0
        %v8381 = vadd.f32 %v8332, %v8380
        %v8382 = vpop.f32.mrf.mxu0
        %v8383 = vadd.f32 %v8334, %v8382
        %8384 = vmatmul.bf16.gmra.mxu0 %v7262
        %v8385 = vpop.f32.mrf.mxu0
        %v8386 = vadd.f32 %v8337, %v8385
        %v8387 = vpop.f32.mrf.mxu0
        %v8388 = vadd.f32 %v8339, %v8387
        %8389 = vmatmul.bf16.gmra.mxu0 %v7266
        %v8390 = vpop.f32.mrf.mxu0
        %v8391 = vadd.f32 %v8342, %v8390
        %v8392 = vpop.f32.mrf.mxu0
        %v8393 = vadd.f32 %v8344, %v8392
        %8394 = vmatmul.bf16.gmra.mxu0 %v7270
        %v8395 = vpop.f32.mrf.mxu0
        %v8396 = vadd.f32 %v8347, %v8395
        %v8397 = vpop.f32.mrf.mxu0
        %v8398 = vadd.f32 %v8349, %v8397
        %8399 = vmatmul.bf16.gmra.mxu0 %v7274
        %v8400 = vpop.f32.mrf.mxu0
        %v8401 = vadd.f32 %v8352, %v8400
        %v8402 = vpop.f32.mrf.mxu0
        %v8403 = vadd.f32 %v8354, %v8402
        %8404 = vmatmul.bf16.gmra.mxu0 %v7278
        %v8405 = vpop.f32.mrf.mxu0
        %v8406 = vadd.f32 %v8357, %v8405
        %v8407 = vpop.f32.mrf.mxu0
        %v8408 = vadd.f32 %v8359, %v8407
        %8409 = vmatmul.bf16.gmra.mxu0 %v7282
        %v8410 = vpop.f32.mrf.mxu0
        %v8411 = vadd.f32 %v8362, %v8410
        %v8412 = vpop.f32.mrf.mxu0
        %v8413 = vadd.f32 %v8364, %v8412
        %8414 = vdwg.mxu0
        %v8415 = vadd.f32 %v6847, %v7984
        %v8416 = vadd.f32 %v6848, %v8180
        %v8417 = vadd.f32 %v6849, %v8376
        %v8418 = vadd.f32 %v6850, %v7986
        %v8419 = vadd.f32 %v6851, %v8182
        %v8420 = vadd.f32 %v6852, %v8378
        %v8421 = vadd.f32 %v6853, %v7989
        %v8422 = vadd.f32 %v6854, %v8185
        %v8423 = vadd.f32 %v6855, %v8381
        %v8424 = vadd.f32 %v6856, %v7991
        %v8425 = vadd.f32 %v6857, %v8187
        %v8426 = vadd.f32 %v6858, %v8383
        %v8427 = vadd.f32 %v6859, %v7994
        %v8428 = vadd.f32 %v6860, %v8190
        %v8429 = vadd.f32 %v6861, %v8386
        %v8430 = vadd.f32 %v6862, %v7996
        %v8431 = vadd.f32 %v6863, %v8192
        %v8432 = vadd.f32 %v6864, %v8388
        %v8433 = vadd.f32 %v6865, %v7999
        %v8434 = vadd.f32 %v6866, %v8195
        %v8435 = vadd.f32 %v6867, %v8391
        %v8436 = vadd.f32 %v6868, %v8001
        %v8437 = vadd.f32 %v6869, %v8197
        %v8438 = vadd.f32 %v6870, %v8393
        %v8439 = vadd.f32 %v6871, %v8004
        %v8440 = vadd.f32 %v6872, %v8200
        %v8441 = vadd.f32 %v6873, %v8396
        %v8442 = vadd.f32 %v6874, %v8006
        %v8443 = vadd.f32 %v6875, %v8202
        %v8444 = vadd.f32 %v6876, %v8398
        %v8445 = vadd.f32 %v6877, %v8009
        %v8446 = vadd.f32 %v6878, %v8205
        %v8447 = vadd.f32 %v6879, %v8401
        %v8448 = vadd.f32 %v6880, %v8011
        %v8449 = vadd.f32 %v6881, %v8207
        %v8450 = vadd.f32 %v6882, %v8403
        %v8451 = vadd.f32 %v6883, %v8014
        %v8452 = vadd.f32 %v6884, %v8210
        %v8453 = vadd.f32 %v6885, %v8406
        %v8454 = vadd.f32 %v6886, %v8016
        %v8455 = vadd.f32 %v6887, %v8212
        %v8456 = vadd.f32 %v6888, %v8408
        %v8457 = vadd.f32 %v6889, %v8019
        %v8458 = vadd.f32 %v6890, %v8215
        %v8459 = vadd.f32 %v6891, %v8411
        %v8460 = vadd.f32 %v6892, %v8021
        %v8461 = vadd.f32 %v6893, %v8217
        %v8462 = vadd.f32 %v6894, %v8413
        %v8463 = vld [vmem:[%s258 + $0x20] sm:$0x77]
        %v8464 = vld [vmem:[%s258 + $0x28] sm:$0x77]
        %v8465 = vld [vmem:[%s258 + $0x50] sm:$0x77]
        %v8466 = vld [vmem:[%s258 + $0x58] sm:$0x77]
        %v8467 = vld [vmem:[%s258 + $0x80] sm:$0x77]
        %v8468 = vld [vmem:[%s258 + $0x88] sm:$0x77]
        %v8469 = vld [vmem:[%s258 + $0xb0] sm:$0x77]
        %v8470 = vld [vmem:[%s258 + $0xb8] sm:$0x77]
        %v8471 = vld [vmem:[%s258 + $0xe0] sm:$0x77]
        %v8472 = vld [vmem:[%s258 + $0xe8] sm:$0x77]
        %v8473 = vld [vmem:[%s258 + $0x110] sm:$0x77]
        %v8474 = vld [vmem:[%s258 + $0x118] sm:$0x77]
        %v8475 = vld [vmem:[%s258 + $0x140] sm:$0x77]
        %v8476 = vld [vmem:[%s258 + $0x148] sm:$0x77]
        %v8477 = vld [vmem:[%s258 + $0x170] sm:$0x77]
        %v8478 = vld [vmem:[%s258 + $0x178] sm:$0x77]
        %vm8479 = vsmask.f32 1280
        %vm8480 = vsmask.f32 5392
        %vm8481 = vmor %vm8479, %vm8480
        %v8483 = vshrl.u32 %v6895, 16
        %v8485 = vrot.slane %v8483, 6
        %v8486 = vshll.u32 %v6895, 16
        %v8488 = vrot.slane %v8486, 7
        %v8489 = vor.u32 %v8485, %v8488
        %v8490 = vrot.slane %v8489, 4
        %v8491 = vrot.slane %v546, 6
        %v8492 = vrot.slane %v528, 7
        %v8493 = vor.u32 %v8491, %v8492
        %v8494 = vsel %vm8481, %v8490, %v8493
        %v8496 = vshrl.u32 %v6896, 16
        %v8498 = vrot.slane %v8496, 6
        %v8499 = vshll.u32 %v6896, 16
        %v8501 = vrot.slane %v8499, 7
        %v8502 = vor.u32 %v8498, %v8501
        %v8503 = vrot.slane %v8502, 4
        %v8504 = vrot.slane %v556, 6
        %v8505 = vrot.slane %v542, 7
        %v8506 = vor.u32 %v8504, %v8505
        %v8507 = vsel %vm8481, %v8503, %v8506
        %v8508 = vrot.slane %v8493, 4
        %v8510 = vshrl.u32 %v8463, 16
        %v8512 = vrot.slane %v8510, 6
        %v8513 = vshll.u32 %v8463, 16
        %v8515 = vrot.slane %v8513, 7
        %v8516 = vor.u32 %v8512, %v8515
        %v8517 = vsel %vm8481, %v8508, %v8516
        %v8518 = vrot.slane %v8506, 4
        %v8520 = vshrl.u32 %v8464, 16
        %v8522 = vrot.slane %v8520, 6
        %v8523 = vshll.u32 %v8464, 16
        %v8525 = vrot.slane %v8523, 7
        %v8526 = vor.u32 %v8522, %v8525
        %v8527 = vsel %vm8481, %v8518, %v8526
        %v8529 = vshrl.u32 %v6897, 16
        %v8531 = vrot.slane %v8529, 6
        %v8532 = vshll.u32 %v6897, 16
        %v8534 = vrot.slane %v8532, 7
        %v8535 = vor.u32 %v8531, %v8534
        %v8536 = vrot.slane %v8535, 4
        %v8537 = vrot.slane %v594, 6
        %v8538 = vrot.slane %v576, 7
        %v8539 = vor.u32 %v8537, %v8538
        %v8540 = vsel %vm8481, %v8536, %v8539
        %v8542 = vshrl.u32 %v6898, 16
        %v8544 = vrot.slane %v8542, 6
        %v8545 = vshll.u32 %v6898, 16
        %v8547 = vrot.slane %v8545, 7
        %v8548 = vor.u32 %v8544, %v8547
        %v8549 = vrot.slane %v8548, 4
        %v8550 = vrot.slane %v604, 6
        %v8551 = vrot.slane %v590, 7
        %v8552 = vor.u32 %v8550, %v8551
        %v8553 = vsel %vm8481, %v8549, %v8552
        %v8554 = vrot.slane %v8539, 4
        %v8556 = vshrl.u32 %v8465, 16
        %v8558 = vrot.slane %v8556, 6
        %v8559 = vshll.u32 %v8465, 16
        %v8561 = vrot.slane %v8559, 7
        %v8562 = vor.u32 %v8558, %v8561
        %v8563 = vsel %vm8481, %v8554, %v8562
        %v8564 = vrot.slane %v8552, 4
        %v8566 = vshrl.u32 %v8466, 16
        %v8568 = vrot.slane %v8566, 6
        %v8569 = vshll.u32 %v8466, 16
        %v8571 = vrot.slane %v8569, 7
        %v8572 = vor.u32 %v8568, %v8571
        %v8573 = vsel %vm8481, %v8564, %v8572
        %v8575 = vshrl.u32 %v6899, 16
        %v8577 = vrot.slane %v8575, 6
        %v8578 = vshll.u32 %v6899, 16
        %v8580 = vrot.slane %v8578, 7
        %v8581 = vor.u32 %v8577, %v8580
        %v8582 = vrot.slane %v8581, 4
        %v8583 = vrot.slane %v642, 6
        %v8584 = vrot.slane %v624, 7
        %v8585 = vor.u32 %v8583, %v8584
        %v8586 = vsel %vm8481, %v8582, %v8585
        %v8588 = vshrl.u32 %v6900, 16
        %v8590 = vrot.slane %v8588, 6
        %v8591 = vshll.u32 %v6900, 16
        %v8593 = vrot.slane %v8591, 7
        %v8594 = vor.u32 %v8590, %v8593
        %v8595 = vrot.slane %v8594, 4
        %v8596 = vrot.slane %v652, 6
        %v8597 = vrot.slane %v638, 7
        %v8598 = vor.u32 %v8596, %v8597
        %v8599 = vsel %vm8481, %v8595, %v8598
        %v8600 = vrot.slane %v8585, 4
        %v8602 = vshrl.u32 %v8467, 16
        %v8604 = vrot.slane %v8602, 6
        %v8605 = vshll.u32 %v8467, 16
        %v8607 = vrot.slane %v8605, 7
        %v8608 = vor.u32 %v8604, %v8607
        %v8609 = vsel %vm8481, %v8600, %v8608
        %v8610 = vrot.slane %v8598, 4
        %v8612 = vshrl.u32 %v8468, 16
        %v8614 = vrot.slane %v8612, 6
        %v8615 = vshll.u32 %v8468, 16
        %v8617 = vrot.slane %v8615, 7
        %v8618 = vor.u32 %v8614, %v8617
        %v8619 = vsel %vm8481, %v8610, %v8618
        %v8621 = vshrl.u32 %v6901, 16
        %v8623 = vrot.slane %v8621, 6
        %v8624 = vshll.u32 %v6901, 16
        %v8626 = vrot.slane %v8624, 7
        %v8627 = vor.u32 %v8623, %v8626
        %v8628 = vrot.slane %v8627, 4
        %v8629 = vrot.slane %v690, 6
        %v8630 = vrot.slane %v672, 7
        %v8631 = vor.u32 %v8629, %v8630
        %v8632 = vsel %vm8481, %v8628, %v8631
        %v8634 = vshrl.u32 %v6902, 16
        %v8636 = vrot.slane %v8634, 6
        %v8637 = vshll.u32 %v6902, 16
        %v8639 = vrot.slane %v8637, 7
        %v8640 = vor.u32 %v8636, %v8639
        %v8641 = vrot.slane %v8640, 4
        %v8642 = vrot.slane %v700, 6
        %v8643 = vrot.slane %v686, 7
        %v8644 = vor.u32 %v8642, %v8643
        %v8645 = vsel %vm8481, %v8641, %v8644
        %v8646 = vrot.slane %v8631, 4
        %v8648 = vshrl.u32 %v8469, 16
        %v8650 = vrot.slane %v8648, 6
        %v8651 = vshll.u32 %v8469, 16
        %v8653 = vrot.slane %v8651, 7
        %v8654 = vor.u32 %v8650, %v8653
        %v8655 = vsel %vm8481, %v8646, %v8654
        %v8656 = vrot.slane %v8644, 4
        %v8658 = vshrl.u32 %v8470, 16
        %v8660 = vrot.slane %v8658, 6
        %v8661 = vshll.u32 %v8470, 16
        %v8663 = vrot.slane %v8661, 7
        %v8664 = vor.u32 %v8660, %v8663
        %v8665 = vsel %vm8481, %v8656, %v8664
        %v8667 = vshrl.u32 %v6903, 16
        %v8669 = vrot.slane %v8667, 6
        %v8670 = vshll.u32 %v6903, 16
        %v8672 = vrot.slane %v8670, 7
        %v8673 = vor.u32 %v8669, %v8672
        %v8674 = vrot.slane %v8673, 4
        %v8675 = vrot.slane %v738, 6
        %v8676 = vrot.slane %v720, 7
        %v8677 = vor.u32 %v8675, %v8676
        %v8678 = vsel %vm8481, %v8674, %v8677
        %v8680 = vshrl.u32 %v6904, 16
        %v8682 = vrot.slane %v8680, 6
        %v8683 = vshll.u32 %v6904, 16
        %v8685 = vrot.slane %v8683, 7
        %v8686 = vor.u32 %v8682, %v8685
        %v8687 = vrot.slane %v8686, 4
        %v8688 = vrot.slane %v748, 6
        %v8689 = vrot.slane %v734, 7
        %v8690 = vor.u32 %v8688, %v8689
        %v8691 = vsel %vm8481, %v8687, %v8690
        %v8692 = vrot.slane %v8677, 4
        %v8694 = vshrl.u32 %v8471, 16
        %v8696 = vrot.slane %v8694, 6
        %v8697 = vshll.u32 %v8471, 16
        %v8699 = vrot.slane %v8697, 7
        %v8700 = vor.u32 %v8696, %v8699
        %v8701 = vsel %vm8481, %v8692, %v8700
        %v8702 = vrot.slane %v8690, 4
        %v8704 = vshrl.u32 %v8472, 16
        %v8706 = vrot.slane %v8704, 6
        %v8707 = vshll.u32 %v8472, 16
        %v8709 = vrot.slane %v8707, 7
        %v8710 = vor.u32 %v8706, %v8709
        %v8711 = vsel %vm8481, %v8702, %v8710
        %v8713 = vshrl.u32 %v6905, 16
        %v8715 = vrot.slane %v8713, 6
        %v8716 = vshll.u32 %v6905, 16
        %v8718 = vrot.slane %v8716, 7
        %v8719 = vor.u32 %v8715, %v8718
        %v8720 = vrot.slane %v8719, 4
        %v8721 = vrot.slane %v786, 6
        %v8722 = vrot.slane %v768, 7
        %v8723 = vor.u32 %v8721, %v8722
        %v8724 = vsel %vm8481, %v8720, %v8723
        %v8726 = vshrl.u32 %v6906, 16
        %v8728 = vrot.slane %v8726, 6
        %v8729 = vshll.u32 %v6906, 16
        %v8731 = vrot.slane %v8729, 7
        %v8732 = vor.u32 %v8728, %v8731
        %v8733 = vrot.slane %v8732, 4
        %v8734 = vrot.slane %v796, 6
        %v8735 = vrot.slane %v782, 7
        %v8736 = vor.u32 %v8734, %v8735
        %v8737 = vsel %vm8481, %v8733, %v8736
        %v8738 = vrot.slane %v8723, 4
        %v8740 = vshrl.u32 %v8473, 16
        %v8742 = vrot.slane %v8740, 6
        %v8743 = vshll.u32 %v8473, 16
        %v8745 = vrot.slane %v8743, 7
        %v8746 = vor.u32 %v8742, %v8745
        %v8747 = vsel %vm8481, %v8738, %v8746
        %v8748 = vrot.slane %v8736, 4
        %v8750 = vshrl.u32 %v8474, 16
        %v8752 = vrot.slane %v8750, 6
        %v8753 = vshll.u32 %v8474, 16
        %v8755 = vrot.slane %v8753, 7
        %v8756 = vor.u32 %v8752, %v8755
        %v8757 = vsel %vm8481, %v8748, %v8756
        %v8759 = vshrl.u32 %v6907, 16
        %v8761 = vrot.slane %v8759, 6
        %v8762 = vshll.u32 %v6907, 16
        %v8764 = vrot.slane %v8762, 7
        %v8765 = vor.u32 %v8761, %v8764
        %v8766 = vrot.slane %v8765, 4
        %v8767 = vrot.slane %v834, 6
        %v8768 = vrot.slane %v816, 7
        %v8769 = vor.u32 %v8767, %v8768
        %v8770 = vsel %vm8481, %v8766, %v8769
        %v8772 = vshrl.u32 %v6908, 16
        %v8774 = vrot.slane %v8772, 6
        %v8775 = vshll.u32 %v6908, 16
        %v8777 = vrot.slane %v8775, 7
        %v8778 = vor.u32 %v8774, %v8777
        %v8779 = vrot.slane %v8778, 4
        %v8780 = vrot.slane %v844, 6
        %v8781 = vrot.slane %v830, 7
        %v8782 = vor.u32 %v8780, %v8781
        %v8783 = vsel %vm8481, %v8779, %v8782
        %v8784 = vrot.slane %v8769, 4
        %v8786 = vshrl.u32 %v8475, 16
        %v8788 = vrot.slane %v8786, 6
        %v8789 = vshll.u32 %v8475, 16
        %v8791 = vrot.slane %v8789, 7
        %v8792 = vor.u32 %v8788, %v8791
        %v8793 = vsel %vm8481, %v8784, %v8792
        %v8794 = vrot.slane %v8782, 4
        %v8796 = vshrl.u32 %v8476, 16
        %v8798 = vrot.slane %v8796, 6
        %v8799 = vshll.u32 %v8476, 16
        %v8801 = vrot.slane %v8799, 7
        %v8802 = vor.u32 %v8798, %v8801
        %v8803 = vsel %vm8481, %v8794, %v8802
        %v8805 = vshrl.u32 %v6909, 16
        %v8807 = vrot.slane %v8805, 6
        %v8808 = vshll.u32 %v6909, 16
        %v8810 = vrot.slane %v8808, 7
        %v8811 = vor.u32 %v8807, %v8810
        %v8812 = vrot.slane %v8811, 4
        %v8813 = vrot.slane %v882, 6
        %v8814 = vrot.slane %v864, 7
        %v8815 = vor.u32 %v8813, %v8814
        %v8816 = vsel %vm8481, %v8812, %v8815
        %v8818 = vshrl.u32 %v6910, 16
        %v8820 = vrot.slane %v8818, 6
        %v8821 = vshll.u32 %v6910, 16
        %v8823 = vrot.slane %v8821, 7
        %v8824 = vor.u32 %v8820, %v8823
        %v8825 = vrot.slane %v8824, 4
        %v8826 = vrot.slane %v892, 6
        %v8827 = vrot.slane %v878, 7
        %v8828 = vor.u32 %v8826, %v8827
        %v8829 = vsel %vm8481, %v8825, %v8828
        %v8830 = vrot.slane %v8815, 4
        %v8832 = vshrl.u32 %v8477, 16
        %v8834 = vrot.slane %v8832, 6
        %v8835 = vshll.u32 %v8477, 16
        %v8837 = vrot.slane %v8835, 7
        %v8838 = vor.u32 %v8834, %v8837
        %v8839 = vsel %vm8481, %v8830, %v8838
        %v8840 = vrot.slane %v8828, 4
        %v8842 = vshrl.u32 %v8478, 16
        %v8844 = vrot.slane %v8842, 6
        %v8845 = vshll.u32 %v8478, 16
        %v8847 = vrot.slane %v8845, 7
        %v8848 = vor.u32 %v8844, %v8847
        %v8849 = vsel %vm8481, %v8840, %v8848
        %s8850 = scalar_lea.vmem [#allocation5], 3840
        %v8851 = vld [vmem:[%s8850] sm:$0xff]
        %v8852 = vld [vmem:[%s8850 + $0x8] sm:$0xf]
        %v8853 = vld [vmem:[%s8850 + $0xc] sm:$0xff]
        %v8854 = vld [vmem:[%s8850 + $0x14] sm:$0xf]
        %v8855 = vld [vmem:[%s8850 + $0x18] sm:$0xff]
        %v8856 = vld [vmem:[%s8850 + $0x20] sm:$0xf]
        %v8857 = vld [vmem:[%s8850 + $0x24] sm:$0xff]
        %v8858 = vld [vmem:[%s8850 + $0x2c] sm:$0xf]
        %v8859 = vld [vmem:[%s8850 + $0x30] sm:$0xff]
        %v8860 = vld [vmem:[%s8850 + $0x38] sm:$0xf]
        %v8861 = vld [vmem:[%s8850 + $0x3c] sm:$0xff]
        %v8862 = vld [vmem:[%s8850 + $0x44] sm:$0xf]
        %v8863 = vld [vmem:[%s8850 + $0x48] sm:$0xff]
        %v8864 = vld [vmem:[%s8850 + $0x50] sm:$0xf]
        %v8865 = vld [vmem:[%s8850 + $0x54] sm:$0xff]
        %v8866 = vld [vmem:[%s8850 + $0x5c] sm:$0xf]
        %v8867 = vld [vmem:[%s8850 + $0x60] sm:$0xff]
        %v8868 = vld [vmem:[%s8850 + $0x68] sm:$0xf]
        %v8869 = vld [vmem:[%s8850 + $0x6c] sm:$0xff]
        %v8870 = vld [vmem:[%s8850 + $0x74] sm:$0xf]
        %v8871 = vld [vmem:[%s8850 + $0x78] sm:$0xff]
        %v8872 = vld [vmem:[%s8850 + $0x80] sm:$0xf]
        %v8873 = vld [vmem:[%s8850 + $0x84] sm:$0xff]
        %v8874 = vld [vmem:[%s8850 + $0x8c] sm:$0xf]
        %v8875 = vld [vmem:[%s8850 + $0x90] sm:$0xff]
        %v8876 = vld [vmem:[%s8850 + $0x98] sm:$0xf]
        %v8877 = vld [vmem:[%s8850 + $0x9c] sm:$0xff]
        %v8878 = vld [vmem:[%s8850 + $0xa4] sm:$0xf]
        %v8879 = vld [vmem:[%s8850 + $0xa8] sm:$0xff]
        %v8880 = vld [vmem:[%s8850 + $0xb0] sm:$0xf]
        %v8881 = vld [vmem:[%s8850 + $0xb4] sm:$0xff]
        %v8882 = vld [vmem:[%s8850 + $0xbc] sm:$0xf]
        %v8883 = vld [vmem:[%s8850 + $0xc0] sm:$0xff]
        %v8884 = vld [vmem:[%s8850 + $0xc8] sm:$0xf]
        %v8885 = vld [vmem:[%s8850 + $0xcc] sm:$0xff]
        %v8886 = vld [vmem:[%s8850 + $0xd4] sm:$0xf]
        %v8887 = vld [vmem:[%s8850 + $0xd8] sm:$0xff]
        %v8888 = vld [vmem:[%s8850 + $0xe0] sm:$0xf]
        %v8889 = vld [vmem:[%s8850 + $0xe4] sm:$0xff]
        %v8890 = vld [vmem:[%s8850 + $0xec] sm:$0xf]
        %v8891 = vld [vmem:[%s8850 + $0xf0] sm:$0xff]
        %v8892 = vld [vmem:[%s8850 + $0xf8] sm:$0xf]
        %v8893 = vld [vmem:[%s8850 + $0xfc] sm:$0xff]
        %v8894 = vld [vmem:[%s8850 + $0x104] sm:$0xf]
        %v8895 = vld [vmem:[%s8850 + $0x108] sm:$0xff]
        %v8896 = vld [vmem:[%s8850 + $0x110] sm:$0xf]
        %v8897 = vld [vmem:[%s8850 + $0x114] sm:$0xff]
        %v8898 = vld [vmem:[%s8850 + $0x11c] sm:$0xf]
        %v8899 = vld [vmem:[%s8850 + $0x120] sm:$0xff]
        %v8900 = vld [vmem:[%s8850 + $0x128] sm:$0xf]
        %v8901 = vld [vmem:[%s8850 + $0x12c] sm:$0xff]
        %v8902 = vld [vmem:[%s8850 + $0x134] sm:$0xf]
        %v8903 = vld [vmem:[%s8850 + $0x138] sm:$0xff]
        %v8904 = vld [vmem:[%s8850 + $0x140] sm:$0xf]
        %v8905 = vld [vmem:[%s8850 + $0x144] sm:$0xff]
        %v8906 = vld [vmem:[%s8850 + $0x14c] sm:$0xf]
        %v8907 = vld [vmem:[%s8850 + $0x150] sm:$0xff]
        %v8908 = vld [vmem:[%s8850 + $0x158] sm:$0xf]
        %v8909 = vld [vmem:[%s8850 + $0x15c] sm:$0xff]
        %v8910 = vld [vmem:[%s8850 + $0x164] sm:$0xf]
        %v8911 = vld [vmem:[%s8850 + $0x168] sm:$0xff]
        %v8912 = vld [vmem:[%s8850 + $0x170] sm:$0xf]
        %v8913 = vld [vmem:[%s8850 + $0x174] sm:$0xff]
        %v8914 = vld [vmem:[%s8850 + $0x17c] sm:$0xf]
        %v8915 = vld [vmem:[%s8850 + $0x180] sm:$0xff]
        %v8916 = vld [vmem:[%s8850 + $0x188] sm:$0xf]
        %v8917 = vld [vmem:[%s8850 + $0x18c] sm:$0xff]
        %v8918 = vld [vmem:[%s8850 + $0x194] sm:$0xf]
        %v8919 = vld [vmem:[%s8850 + $0x198] sm:$0xff]
        %v8920 = vld [vmem:[%s8850 + $0x1a0] sm:$0xf]
        %v8921 = vld [vmem:[%s8850 + $0x1a4] sm:$0xff]
        %v8922 = vld [vmem:[%s8850 + $0x1ac] sm:$0xf]
        %v8923 = vld [vmem:[%s8850 + $0x1b0] sm:$0xff]
        %v8924 = vld [vmem:[%s8850 + $0x1b8] sm:$0xf]
        %v8925 = vld [vmem:[%s8850 + $0x1bc] sm:$0xff]
        %v8926 = vld [vmem:[%s8850 + $0x1c4] sm:$0xf]
        %v8927 = vld [vmem:[%s8850 + $0x1c8] sm:$0xff]
        %v8928 = vld [vmem:[%s8850 + $0x1d0] sm:$0xf]
        %v8929 = vld [vmem:[%s8850 + $0x1d4] sm:$0xff]
        %v8930 = vld [vmem:[%s8850 + $0x1dc] sm:$0xf]
        %v8931 = vld [vmem:[%s8850 + $0x1e0] sm:$0xff]
        %v8932 = vld [vmem:[%s8850 + $0x1e8] sm:$0xf]
        %v8933 = vld [vmem:[%s8850 + $0x1ec] sm:$0xff]
        %v8934 = vld [vmem:[%s8850 + $0x1f4] sm:$0xf]
        %v8935 = vld [vmem:[%s8850 + $0x1f8] sm:$0xff]
        %v8936 = vld [vmem:[%s8850 + $0x200] sm:$0xf]
        %v8937 = vld [vmem:[%s8850 + $0x204] sm:$0xff]
        %v8938 = vld [vmem:[%s8850 + $0x20c] sm:$0xf]
        %v8939 = vld [vmem:[%s8850 + $0x210] sm:$0xff]
        %v8940 = vld [vmem:[%s8850 + $0x218] sm:$0xf]
        %v8941 = vld [vmem:[%s8850 + $0x21c] sm:$0xff]
        %v8942 = vld [vmem:[%s8850 + $0x224] sm:$0xf]
        %v8943 = vld [vmem:[%s8850 + $0x228] sm:$0xff]
        %v8944 = vld [vmem:[%s8850 + $0x230] sm:$0xf]
        %v8945 = vld [vmem:[%s8850 + $0x234] sm:$0xff]
        %v8946 = vld [vmem:[%s8850 + $0x23c] sm:$0xf]
        %v8947 = vld [vmem:[%s8850 + $0x240] sm:$0xff]
        %v8948 = vld [vmem:[%s8850 + $0x248] sm:$0xf]
        %v8949 = vld [vmem:[%s8850 + $0x24c] sm:$0xff]
        %v8950 = vld [vmem:[%s8850 + $0x254] sm:$0xf]
        %v8951 = vld [vmem:[%s8850 + $0x258] sm:$0xff]
        %v8952 = vld [vmem:[%s8850 + $0x260] sm:$0xf]
        %v8953 = vld [vmem:[%s8850 + $0x264] sm:$0xff]
        %v8954 = vld [vmem:[%s8850 + $0x26c] sm:$0xf]
        %v8955 = vld [vmem:[%s8850 + $0x270] sm:$0xff]
        %v8956 = vld [vmem:[%s8850 + $0x278] sm:$0xf]
        %v8957 = vld [vmem:[%s8850 + $0x27c] sm:$0xff]
        %v8958 = vld [vmem:[%s8850 + $0x284] sm:$0xf]
        %v8959 = vld [vmem:[%s8850 + $0x288] sm:$0xff]
        %v8960 = vld [vmem:[%s8850 + $0x290] sm:$0xf]
        %v8961 = vld [vmem:[%s8850 + $0x294] sm:$0xff]
        %v8962 = vld [vmem:[%s8850 + $0x29c] sm:$0xf]
        %v8963 = vld [vmem:[%s8850 + $0x2a0] sm:$0xff]
        %v8964 = vld [vmem:[%s8850 + $0x2a8] sm:$0xf]
        %v8965 = vld [vmem:[%s8850 + $0x2ac] sm:$0xff]
        %v8966 = vld [vmem:[%s8850 + $0x2b4] sm:$0xf]
        %v8967 = vld [vmem:[%s8850 + $0x2b8] sm:$0xff]
        %v8968 = vld [vmem:[%s8850 + $0x2c0] sm:$0xf]
        %v8969 = vld [vmem:[%s8850 + $0x2c4] sm:$0xff]
        %v8970 = vld [vmem:[%s8850 + $0x2cc] sm:$0xf]
        %v8971 = vld [vmem:[%s8850 + $0x2d0] sm:$0xff]
        %v8972 = vld [vmem:[%s8850 + $0x2d8] sm:$0xf]
        %v8973 = vld [vmem:[%s8850 + $0x2dc] sm:$0xff]
        %v8974 = vld [vmem:[%s8850 + $0x2e4] sm:$0xf]
        %v8975 = vld [vmem:[%s8850 + $0x2e8] sm:$0xff]
        %v8976 = vld [vmem:[%s8850 + $0x2f0] sm:$0xf]
        %v8977 = vld [vmem:[%s8850 + $0x2f4] sm:$0xff]
        %v8978 = vld [vmem:[%s8850 + $0x2fc] sm:$0xf]
        %v8979 = vunpack.c.l.b16 %v8494
        %v8980 = vunpack.c.h.b16 %v8494
        %v8981 = vunpack.c.l.b16 %v8507
        %v8982 = vunpack.c.h.b16 %v8507
        %v8983 = vunpack.c.l.b16 %v8517
        %v8984 = vunpack.c.h.b16 %v8517
        %v8985 = vunpack.c.l.b16 %v8527
        %v8986 = vunpack.c.h.b16 %v8527
        %v8987 = vunpack.c.l.b16 %v8540
        %v8988 = vunpack.c.h.b16 %v8540
        %v8989 = vunpack.c.l.b16 %v8553
        %v8990 = vunpack.c.h.b16 %v8553
        %v8991 = vunpack.c.l.b16 %v8563
        %v8992 = vunpack.c.h.b16 %v8563
        %v8993 = vunpack.c.l.b16 %v8573
        %v8994 = vunpack.c.h.b16 %v8573
        %v8995 = vunpack.c.l.b16 %v8586
        %v8996 = vunpack.c.h.b16 %v8586
        %v8997 = vunpack.c.l.b16 %v8599
        %v8998 = vunpack.c.h.b16 %v8599
        %v8999 = vunpack.c.l.b16 %v8609
        %v9000 = vunpack.c.h.b16 %v8609
        %v9001 = vunpack.c.l.b16 %v8619
        %v9002 = vunpack.c.h.b16 %v8619
        %v9003 = vunpack.c.l.b16 %v8632
        %v9004 = vunpack.c.h.b16 %v8632
        %v9005 = vunpack.c.l.b16 %v8645
        %v9006 = vunpack.c.h.b16 %v8645
        %v9007 = vunpack.c.l.b16 %v8655
        %v9008 = vunpack.c.h.b16 %v8655
        %v9009 = vunpack.c.l.b16 %v8665
        %v9010 = vunpack.c.h.b16 %v8665
        %v9011 = vunpack.c.l.b16 %v8678
        %v9012 = vunpack.c.h.b16 %v8678
        %v9013 = vunpack.c.l.b16 %v8691
        %v9014 = vunpack.c.h.b16 %v8691
        %v9015 = vunpack.c.l.b16 %v8701
        %v9016 = vunpack.c.h.b16 %v8701
        %v9017 = vunpack.c.l.b16 %v8711
        %v9018 = vunpack.c.h.b16 %v8711
        %v9019 = vunpack.c.l.b16 %v8724
        %v9020 = vunpack.c.h.b16 %v8724
        %v9021 = vunpack.c.l.b16 %v8737
        %v9022 = vunpack.c.h.b16 %v8737
        %v9023 = vunpack.c.l.b16 %v8747
        %v9024 = vunpack.c.h.b16 %v8747
        %v9025 = vunpack.c.l.b16 %v8757
        %v9026 = vunpack.c.h.b16 %v8757
        %v9027 = vunpack.c.l.b16 %v8770
        %v9028 = vunpack.c.h.b16 %v8770
        %v9029 = vunpack.c.l.b16 %v8783
        %v9030 = vunpack.c.h.b16 %v8783
        %v9031 = vunpack.c.l.b16 %v8793
        %v9032 = vunpack.c.h.b16 %v8793
        %v9033 = vunpack.c.l.b16 %v8803
        %v9034 = vunpack.c.h.b16 %v8803
        %v9035 = vunpack.c.l.b16 %v8816
        %v9036 = vunpack.c.h.b16 %v8816
        %v9037 = vunpack.c.l.b16 %v8829
        %v9038 = vunpack.c.h.b16 %v8829
        %v9039 = vunpack.c.l.b16 %v8839
        %v9040 = vunpack.c.h.b16 %v8839
        %v9041 = vunpack.c.l.b16 %v8849
        %v9042 = vunpack.c.h.b16 %v8849
        %v9043 = vpack.c.b16 %v8983, %v8979
        %v9044 = vpack.c.b16 %v8984, %v8980
        %v9045 = vpack.c.b16 %v8985, %v8981
        %v9046 = vpack.c.b16 %v8986, %v8982
        %v9047 = vpack.c.b16 %v8991, %v8987
        %v9048 = vpack.c.b16 %v8992, %v8988
        %v9049 = vpack.c.b16 %v8993, %v8989
        %v9050 = vpack.c.b16 %v8994, %v8990
        %v9051 = vpack.c.b16 %v8999, %v8995
        %v9052 = vpack.c.b16 %v9000, %v8996
        %v9053 = vpack.c.b16 %v9001, %v8997
        %v9054 = vpack.c.b16 %v9002, %v8998
        %v9055 = vpack.c.b16 %v9007, %v9003
        %v9056 = vpack.c.b16 %v9008, %v9004
        %v9057 = vpack.c.b16 %v9009, %v9005
        %v9058 = vpack.c.b16 %v9010, %v9006
        %v9059 = vpack.c.b16 %v9015, %v9011
        %v9060 = vpack.c.b16 %v9016, %v9012
        %v9061 = vpack.c.b16 %v9017, %v9013
        %v9062 = vpack.c.b16 %v9018, %v9014
        %v9063 = vpack.c.b16 %v9023, %v9019
        %v9064 = vpack.c.b16 %v9024, %v9020
        %v9065 = vpack.c.b16 %v9025, %v9021
        %v9066 = vpack.c.b16 %v9026, %v9022
        %v9067 = vpack.c.b16 %v9031, %v9027
        %v9068 = vpack.c.b16 %v9032, %v9028
        %v9069 = vpack.c.b16 %v9033, %v9029
        %v9070 = vpack.c.b16 %v9034, %v9030
        %v9071 = vpack.c.b16 %v9039, %v9035
        %v9072 = vpack.c.b16 %v9040, %v9036
        %v9073 = vpack.c.b16 %v9041, %v9037
        %v9074 = vpack.c.b16 %v9042, %v9038
        %v9235 = vunpack.c.l.b16 %v8851
        %v9236 = vunpack.c.h.b16 %v8851
        %v9237 = vunpack.c.l.b16 %v8852
        %v9238 = vunpack.c.l.b16 %v8853
        %v9239 = vunpack.c.h.b16 %v8853
        %v9240 = vunpack.c.l.b16 %v8854
        %v9241 = vunpack.c.l.b16 %v8855
        %v9242 = vunpack.c.h.b16 %v8855
        %v9243 = vunpack.c.l.b16 %v8856
        %v9244 = vunpack.c.l.b16 %v8857
        %v9245 = vunpack.c.h.b16 %v8857
        %v9246 = vunpack.c.l.b16 %v8858
        %v9247 = vunpack.c.l.b16 %v8859
        %v9248 = vunpack.c.h.b16 %v8859
        %v9249 = vunpack.c.l.b16 %v8860
        %v9250 = vunpack.c.l.b16 %v8861
        %v9251 = vunpack.c.h.b16 %v8861
        %v9252 = vunpack.c.l.b16 %v8862
        %v9253 = vunpack.c.l.b16 %v8863
        %v9254 = vunpack.c.h.b16 %v8863
        %v9255 = vunpack.c.l.b16 %v8864
        %v9256 = vunpack.c.l.b16 %v8865
        %v9257 = vunpack.c.h.b16 %v8865
        %v9258 = vunpack.c.l.b16 %v8866
        %v9259 = vunpack.c.l.b16 %v8867
        %v9260 = vunpack.c.h.b16 %v8867
        %v9261 = vunpack.c.l.b16 %v8868
        %v9262 = vunpack.c.l.b16 %v8869
        %v9263 = vunpack.c.h.b16 %v8869
        %v9264 = vunpack.c.l.b16 %v8870
        %v9265 = vunpack.c.l.b16 %v8871
        %v9266 = vunpack.c.h.b16 %v8871
        %v9267 = vunpack.c.l.b16 %v8872
        %v9268 = vunpack.c.l.b16 %v8873
        %v9269 = vunpack.c.h.b16 %v8873
        %v9270 = vunpack.c.l.b16 %v8874
        %v9271 = vunpack.c.l.b16 %v8875
        %v9272 = vunpack.c.h.b16 %v8875
        %v9273 = vunpack.c.l.b16 %v8876
        %v9274 = vunpack.c.l.b16 %v8877
        %v9275 = vunpack.c.h.b16 %v8877
        %v9276 = vunpack.c.l.b16 %v8878
        %v9277 = vunpack.c.l.b16 %v8879
        %v9278 = vunpack.c.h.b16 %v8879
        %v9279 = vunpack.c.l.b16 %v8880
        %v9280 = vunpack.c.l.b16 %v8881
        %v9281 = vunpack.c.h.b16 %v8881
        %v9282 = vunpack.c.l.b16 %v8882
        %v9283 = vunpack.c.l.b16 %v8883
        %v9284 = vunpack.c.h.b16 %v8883
        %v9285 = vunpack.c.l.b16 %v8884
        %v9286 = vunpack.c.l.b16 %v8885
        %v9287 = vunpack.c.h.b16 %v8885
        %v9288 = vunpack.c.l.b16 %v8886
        %v9289 = vunpack.c.l.b16 %v8887
        %v9290 = vunpack.c.h.b16 %v8887
        %v9291 = vunpack.c.l.b16 %v8888
        %v9292 = vunpack.c.l.b16 %v8889
        %v9293 = vunpack.c.h.b16 %v8889
        %v9294 = vunpack.c.l.b16 %v8890
        %v9295 = vunpack.c.l.b16 %v8891
        %v9296 = vunpack.c.h.b16 %v8891
        %v9297 = vunpack.c.l.b16 %v8892
        %v9298 = vunpack.c.l.b16 %v8893
        %v9299 = vunpack.c.h.b16 %v8893
        %v9300 = vunpack.c.l.b16 %v8894
        %v9301 = vunpack.c.l.b16 %v8895
        %v9302 = vunpack.c.h.b16 %v8895
        %v9303 = vunpack.c.l.b16 %v8896
        %v9304 = vunpack.c.l.b16 %v8897
        %v9305 = vunpack.c.h.b16 %v8897
        %v9306 = vunpack.c.l.b16 %v8898
        %v9307 = vunpack.c.l.b16 %v8899
        %v9308 = vunpack.c.h.b16 %v8899
        %v9309 = vunpack.c.l.b16 %v8900
        %v9310 = vunpack.c.l.b16 %v8901
        %v9311 = vunpack.c.h.b16 %v8901
        %v9312 = vunpack.c.l.b16 %v8902
        %v9313 = vunpack.c.l.b16 %v8903
        %v9314 = vunpack.c.h.b16 %v8903
        %v9315 = vunpack.c.l.b16 %v8904
        %v9316 = vunpack.c.l.b16 %v8905
        %v9317 = vunpack.c.h.b16 %v8905
        %v9318 = vunpack.c.l.b16 %v8906
        %v9319 = vunpack.c.l.b16 %v8907
        %v9320 = vunpack.c.h.b16 %v8907
        %v9321 = vunpack.c.l.b16 %v8908
        %v9322 = vunpack.c.l.b16 %v8909
        %v9323 = vunpack.c.h.b16 %v8909
        %v9324 = vunpack.c.l.b16 %v8910
        %v9325 = vunpack.c.l.b16 %v8911
        %v9326 = vunpack.c.h.b16 %v8911
        %v9327 = vunpack.c.l.b16 %v8912
        %v9328 = vunpack.c.l.b16 %v8913
        %v9329 = vunpack.c.h.b16 %v8913
        %v9330 = vunpack.c.l.b16 %v8914
        %v9331 = vunpack.c.l.b16 %v8915
        %v9332 = vunpack.c.h.b16 %v8915
        %v9333 = vunpack.c.l.b16 %v8916
        %v9334 = vunpack.c.l.b16 %v8917
        %v9335 = vunpack.c.h.b16 %v8917
        %v9336 = vunpack.c.l.b16 %v8918
        %v9337 = vunpack.c.l.b16 %v8919
        %v9338 = vunpack.c.h.b16 %v8919
        %v9339 = vunpack.c.l.b16 %v8920
        %v9340 = vunpack.c.l.b16 %v8921
        %v9341 = vunpack.c.h.b16 %v8921
        %v9342 = vunpack.c.l.b16 %v8922
        %v9343 = vunpack.c.l.b16 %v8923
        %v9344 = vunpack.c.h.b16 %v8923
        %v9345 = vunpack.c.l.b16 %v8924
        %v9346 = vunpack.c.l.b16 %v8925
        %v9347 = vunpack.c.h.b16 %v8925
        %v9348 = vunpack.c.l.b16 %v8926
        %v9349 = vunpack.c.l.b16 %v8927
        %v9350 = vunpack.c.h.b16 %v8927
        %v9351 = vunpack.c.l.b16 %v8928
        %v9352 = vunpack.c.l.b16 %v8929
        %v9353 = vunpack.c.h.b16 %v8929
        %v9354 = vunpack.c.l.b16 %v8930
        %v9355 = vunpack.c.l.b16 %v8931
        %v9356 = vunpack.c.h.b16 %v8931
        %v9357 = vunpack.c.l.b16 %v8932
        %v9358 = vunpack.c.l.b16 %v8933
        %v9359 = vunpack.c.h.b16 %v8933
        %v9360 = vunpack.c.l.b16 %v8934
        %v9361 = vunpack.c.l.b16 %v8935
        %v9362 = vunpack.c.h.b16 %v8935
        %v9363 = vunpack.c.l.b16 %v8936
        %v9364 = vunpack.c.l.b16 %v8937
        %v9365 = vunpack.c.h.b16 %v8937
        %v9366 = vunpack.c.l.b16 %v8938
        %v9367 = vunpack.c.l.b16 %v8939
        %v9368 = vunpack.c.h.b16 %v8939
        %v9369 = vunpack.c.l.b16 %v8940
        %v9370 = vunpack.c.l.b16 %v8941
        %v9371 = vunpack.c.h.b16 %v8941
        %v9372 = vunpack.c.l.b16 %v8942
        %v9373 = vunpack.c.l.b16 %v8943
        %v9374 = vunpack.c.h.b16 %v8943
        %v9375 = vunpack.c.l.b16 %v8944
        %v9376 = vunpack.c.l.b16 %v8945
        %v9377 = vunpack.c.h.b16 %v8945
        %v9378 = vunpack.c.l.b16 %v8946
        %v9379 = vunpack.c.l.b16 %v8947
        %v9380 = vunpack.c.h.b16 %v8947
        %v9381 = vunpack.c.l.b16 %v8948
        %v9382 = vunpack.c.l.b16 %v8949
        %v9383 = vunpack.c.h.b16 %v8949
        %v9384 = vunpack.c.l.b16 %v8950
        %v9385 = vunpack.c.l.b16 %v8951
        %v9386 = vunpack.c.h.b16 %v8951
        %v9387 = vunpack.c.l.b16 %v8952
        %v9388 = vunpack.c.l.b16 %v8953
        %v9389 = vunpack.c.h.b16 %v8953
        %v9390 = vunpack.c.l.b16 %v8954
        %v9391 = vunpack.c.l.b16 %v8955
        %v9392 = vunpack.c.h.b16 %v8955
        %v9393 = vunpack.c.l.b16 %v8956
        %v9394 = vunpack.c.l.b16 %v8957
        %v9395 = vunpack.c.h.b16 %v8957
        %v9396 = vunpack.c.l.b16 %v8958
        %v9397 = vunpack.c.l.b16 %v8959
        %v9398 = vunpack.c.h.b16 %v8959
        %v9399 = vunpack.c.l.b16 %v8960
        %v9400 = vunpack.c.l.b16 %v8961
        %v9401 = vunpack.c.h.b16 %v8961
        %v9402 = vunpack.c.l.b16 %v8962
        %v9403 = vunpack.c.l.b16 %v8963
        %v9404 = vunpack.c.h.b16 %v8963
        %v9405 = vunpack.c.l.b16 %v8964
        %v9406 = vunpack.c.l.b16 %v8965
        %v9407 = vunpack.c.h.b16 %v8965
        %v9408 = vunpack.c.l.b16 %v8966
        %v9409 = vunpack.c.l.b16 %v8967
        %v9410 = vunpack.c.h.b16 %v8967
        %v9411 = vunpack.c.l.b16 %v8968
        %v9412 = vunpack.c.l.b16 %v8969
        %v9413 = vunpack.c.h.b16 %v8969
        %v9414 = vunpack.c.l.b16 %v8970
        %v9415 = vunpack.c.l.b16 %v8971
        %v9416 = vunpack.c.h.b16 %v8971
        %v9417 = vunpack.c.l.b16 %v8972
        %v9418 = vunpack.c.l.b16 %v8973
        %v9419 = vunpack.c.h.b16 %v8973
        %v9420 = vunpack.c.l.b16 %v8974
        %v9421 = vunpack.c.l.b16 %v8975
        %v9422 = vunpack.c.h.b16 %v8975
        %v9423 = vunpack.c.l.b16 %v8976
        %v9424 = vunpack.c.l.b16 %v8977
        %v9425 = vunpack.c.h.b16 %v8977
        %v9426 = vunpack.c.l.b16 %v8978
        %v9427 = vpack.c.b16 %v9238, %v9235
        %v9428 = vpack.c.b16 %v9239, %v9236
        %v9429 = vpack.c.b16 %v9240, %v9237
        %v9430 = vpack.c.b16 %v9244, %v9241
        %v9431 = vpack.c.b16 %v9245, %v9242
        %v9432 = vpack.c.b16 %v9246, %v9243
        %v9433 = vpack.c.b16 %v9250, %v9247
        %v9434 = vpack.c.b16 %v9251, %v9248
        %v9435 = vpack.c.b16 %v9252, %v9249
        %v9436 = vpack.c.b16 %v9256, %v9253
        %v9437 = vpack.c.b16 %v9257, %v9254
        %v9438 = vpack.c.b16 %v9258, %v9255
        %v9439 = vpack.c.b16 %v9262, %v9259
        %v9440 = vpack.c.b16 %v9263, %v9260
        %v9441 = vpack.c.b16 %v9264, %v9261
        %v9442 = vpack.c.b16 %v9268, %v9265
        %v9443 = vpack.c.b16 %v9269, %v9266
        %v9444 = vpack.c.b16 %v9270, %v9267
        %v9445 = vpack.c.b16 %v9274, %v9271
        %v9446 = vpack.c.b16 %v9275, %v9272
        %v9447 = vpack.c.b16 %v9276, %v9273
        %v9448 = vpack.c.b16 %v9280, %v9277
        %v9449 = vpack.c.b16 %v9281, %v9278
        %v9450 = vpack.c.b16 %v9282, %v9279
        %v9451 = vpack.c.b16 %v9286, %v9283
        %v9452 = vpack.c.b16 %v9287, %v9284
        %v9453 = vpack.c.b16 %v9288, %v9285
        %v9454 = vpack.c.b16 %v9292, %v9289
        %v9455 = vpack.c.b16 %v9293, %v9290
        %v9456 = vpack.c.b16 %v9294, %v9291
        %v9457 = vpack.c.b16 %v9298, %v9295
        %v9458 = vpack.c.b16 %v9299, %v9296
        %v9459 = vpack.c.b16 %v9300, %v9297
        %v9460 = vpack.c.b16 %v9304, %v9301
        %v9461 = vpack.c.b16 %v9305, %v9302
        %v9462 = vpack.c.b16 %v9306, %v9303
        %v9463 = vpack.c.b16 %v9310, %v9307
        %v9464 = vpack.c.b16 %v9311, %v9308
        %v9465 = vpack.c.b16 %v9312, %v9309
        %v9466 = vpack.c.b16 %v9316, %v9313
        %v9467 = vpack.c.b16 %v9317, %v9314
        %v9468 = vpack.c.b16 %v9318, %v9315
        %v9469 = vpack.c.b16 %v9322, %v9319
        %v9470 = vpack.c.b16 %v9323, %v9320
        %v9471 = vpack.c.b16 %v9324, %v9321
        %v9472 = vpack.c.b16 %v9328, %v9325
        %v9473 = vpack.c.b16 %v9329, %v9326
        %v9474 = vpack.c.b16 %v9330, %v9327
        %v9475 = vpack.c.b16 %v9334, %v9331
        %v9476 = vpack.c.b16 %v9335, %v9332
        %v9477 = vpack.c.b16 %v9336, %v9333
        %v9478 = vpack.c.b16 %v9340, %v9337
        %v9479 = vpack.c.b16 %v9341, %v9338
        %v9480 = vpack.c.b16 %v9342, %v9339
        %v9481 = vpack.c.b16 %v9346, %v9343
        %v9482 = vpack.c.b16 %v9347, %v9344
        %v9483 = vpack.c.b16 %v9348, %v9345
        %v9484 = vpack.c.b16 %v9352, %v9349
        %v9485 = vpack.c.b16 %v9353, %v9350
        %v9486 = vpack.c.b16 %v9354, %v9351
        %v9487 = vpack.c.b16 %v9358, %v9355
        %v9488 = vpack.c.b16 %v9359, %v9356
        %v9489 = vpack.c.b16 %v9360, %v9357
        %v9490 = vpack.c.b16 %v9364, %v9361
        %v9491 = vpack.c.b16 %v9365, %v9362
        %v9492 = vpack.c.b16 %v9366, %v9363
        %v9493 = vpack.c.b16 %v9370, %v9367
        %v9494 = vpack.c.b16 %v9371, %v9368
        %v9495 = vpack.c.b16 %v9372, %v9369
        %v9496 = vpack.c.b16 %v9376, %v9373
        %v9497 = vpack.c.b16 %v9377, %v9374
        %v9498 = vpack.c.b16 %v9378, %v9375
        %v9499 = vpack.c.b16 %v9382, %v9379
        %v9500 = vpack.c.b16 %v9383, %v9380
        %v9501 = vpack.c.b16 %v9384, %v9381
        %v9502 = vpack.c.b16 %v9388, %v9385
        %v9503 = vpack.c.b16 %v9389, %v9386
        %v9504 = vpack.c.b16 %v9390, %v9387
        %v9505 = vpack.c.b16 %v9394, %v9391
        %v9506 = vpack.c.b16 %v9395, %v9392
        %v9507 = vpack.c.b16 %v9396, %v9393
        %v9508 = vpack.c.b16 %v9400, %v9397
        %v9509 = vpack.c.b16 %v9401, %v9398
        %v9510 = vpack.c.b16 %v9402, %v9399
        %v9511 = vpack.c.b16 %v9406, %v9403
        %v9512 = vpack.c.b16 %v9407, %v9404
        %v9513 = vpack.c.b16 %v9408, %v9405
        %v9514 = vpack.c.b16 %v9412, %v9409
        %v9515 = vpack.c.b16 %v9413, %v9410
        %v9516 = vpack.c.b16 %v9414, %v9411
        %v9517 = vpack.c.b16 %v9418, %v9415
        %v9518 = vpack.c.b16 %v9419, %v9416
        %v9519 = vpack.c.b16 %v9420, %v9417
        %v9520 = vpack.c.b16 %v9424, %v9421
        %v9521 = vpack.c.b16 %v9425, %v9422
        %v9522 = vpack.c.b16 %v9426, %v9423
        %9619 = vmatpush.bf16.msra.mxu0 %v9448
        %9620 = vmatpush.bf16.msra.mxu0 %v9445
        %9621 = vmatpush.bf16.msra.mxu0 %v9442
        %9622 = vmatpush.bf16.msra.mxu0 %v9439
        %9623 = vmatpush.bf16.msra.mxu0 %v9436
        %9624 = vmatpush.bf16.msra.mxu0 %v9433
        %9625 = vmatpush.bf16.msra.mxu0 %v9430
        %9626 = vmatpush.bf16.msra.mxu0 %v9427
        %9627 = vmatmul.bf16.gmra.mxu0 %v9043
        %v9628 = vpop.f32.mrf.mxu0
        %v9629 = vadd.f32 0.0, %v9628
        %v9630 = vpop.f32.mrf.mxu0
        %v9631 = vadd.f32 0.0, %v9630
        %9632 = vmatmul.bf16.gmra.mxu0 %v9047
        %v9633 = vpop.f32.mrf.mxu0
        %v9634 = vadd.f32 0.0, %v9633
        %v9635 = vpop.f32.mrf.mxu0
        %v9636 = vadd.f32 0.0, %v9635
        %9637 = vmatmul.bf16.gmra.mxu0 %v9051
        %v9638 = vpop.f32.mrf.mxu0
        %v9639 = vadd.f32 0.0, %v9638
        %v9640 = vpop.f32.mrf.mxu0
        %v9641 = vadd.f32 0.0, %v9640
        %9642 = vmatmul.bf16.gmra.mxu0 %v9055
        %v9643 = vpop.f32.mrf.mxu0
        %v9644 = vadd.f32 0.0, %v9643
        %v9645 = vpop.f32.mrf.mxu0
        %v9646 = vadd.f32 0.0, %v9645
        %9647 = vmatmul.bf16.gmra.mxu0 %v9059
        %v9648 = vpop.f32.mrf.mxu0
        %v9649 = vadd.f32 0.0, %v9648
        %v9650 = vpop.f32.mrf.mxu0
        %v9651 = vadd.f32 0.0, %v9650
        %9652 = vmatmul.bf16.gmra.mxu0 %v9063
        %v9653 = vpop.f32.mrf.mxu0
        %v9654 = vadd.f32 0.0, %v9653
        %v9655 = vpop.f32.mrf.mxu0
        %v9656 = vadd.f32 0.0, %v9655
        %9657 = vmatmul.bf16.gmra.mxu0 %v9067
        %v9658 = vpop.f32.mrf.mxu0
        %v9659 = vadd.f32 0.0, %v9658
        %v9660 = vpop.f32.mrf.mxu0
        %v9661 = vadd.f32 0.0, %v9660
        %9662 = vmatmul.bf16.gmra.mxu0 %v9071
        %v9663 = vpop.f32.mrf.mxu0
        %v9664 = vadd.f32 0.0, %v9663
        %v9665 = vpop.f32.mrf.mxu0
        %v9666 = vadd.f32 0.0, %v9665
        %9667 = vdwg.mxu0
        %9668 = vmatpush.bf16.msra.mxu0 %v9472
        %9669 = vmatpush.bf16.msra.mxu0 %v9469
        %9670 = vmatpush.bf16.msra.mxu0 %v9466
        %9671 = vmatpush.bf16.msra.mxu0 %v9463
        %9672 = vmatpush.bf16.msra.mxu0 %v9460
        %9673 = vmatpush.bf16.msra.mxu0 %v9457
        %9674 = vmatpush.bf16.msra.mxu0 %v9454
        %9675 = vmatpush.bf16.msra.mxu0 %v9451
        %9676 = vmatmul.bf16.gmra.mxu0 %v9044
        %v9677 = vpop.f32.mrf.mxu0
        %v9678 = vadd.f32 %v9629, %v9677
        %v9679 = vpop.f32.mrf.mxu0
        %v9680 = vadd.f32 %v9631, %v9679
        %9681 = vmatmul.bf16.gmra.mxu0 %v9048
        %v9682 = vpop.f32.mrf.mxu0
        %v9683 = vadd.f32 %v9634, %v9682
        %v9684 = vpop.f32.mrf.mxu0
        %v9685 = vadd.f32 %v9636, %v9684
        %9686 = vmatmul.bf16.gmra.mxu0 %v9052
        %v9687 = vpop.f32.mrf.mxu0
        %v9688 = vadd.f32 %v9639, %v9687
        %v9689 = vpop.f32.mrf.mxu0
        %v9690 = vadd.f32 %v9641, %v9689
        %9691 = vmatmul.bf16.gmra.mxu0 %v9056
        %v9692 = vpop.f32.mrf.mxu0
        %v9693 = vadd.f32 %v9644, %v9692
        %v9694 = vpop.f32.mrf.mxu0
        %v9695 = vadd.f32 %v9646, %v9694
        %9696 = vmatmul.bf16.gmra.mxu0 %v9060
        %v9697 = vpop.f32.mrf.mxu0
        %v9698 = vadd.f32 %v9649, %v9697
        %v9699 = vpop.f32.mrf.mxu0
        %v9700 = vadd.f32 %v9651, %v9699
        %9701 = vmatmul.bf16.gmra.mxu0 %v9064
        %v9702 = vpop.f32.mrf.mxu0
        %v9703 = vadd.f32 %v9654, %v9702
        %v9704 = vpop.f32.mrf.mxu0
        %v9705 = vadd.f32 %v9656, %v9704
        %9706 = vmatmul.bf16.gmra.mxu0 %v9068
        %v9707 = vpop.f32.mrf.mxu0
        %v9708 = vadd.f32 %v9659, %v9707
        %v9709 = vpop.f32.mrf.mxu0
        %v9710 = vadd.f32 %v9661, %v9709
        %9711 = vmatmul.bf16.gmra.mxu0 %v9072
        %v9712 = vpop.f32.mrf.mxu0
        %v9713 = vadd.f32 %v9664, %v9712
        %v9714 = vpop.f32.mrf.mxu0
        %v9715 = vadd.f32 %v9666, %v9714
        %9716 = vdwg.mxu0
        %9717 = vmatpush.bf16.msra.mxu0 %v9496
        %9718 = vmatpush.bf16.msra.mxu0 %v9493
        %9719 = vmatpush.bf16.msra.mxu0 %v9490
        %9720 = vmatpush.bf16.msra.mxu0 %v9487
        %9721 = vmatpush.bf16.msra.mxu0 %v9484
        %9722 = vmatpush.bf16.msra.mxu0 %v9481
        %9723 = vmatpush.bf16.msra.mxu0 %v9478
        %9724 = vmatpush.bf16.msra.mxu0 %v9475
        %9725 = vmatmul.bf16.gmra.mxu0 %v9045
        %v9726 = vpop.f32.mrf.mxu0
        %v9727 = vadd.f32 %v9678, %v9726
        %v9728 = vpop.f32.mrf.mxu0
        %v9729 = vadd.f32 %v9680, %v9728
        %9730 = vmatmul.bf16.gmra.mxu0 %v9049
        %v9731 = vpop.f32.mrf.mxu0
        %v9732 = vadd.f32 %v9683, %v9731
        %v9733 = vpop.f32.mrf.mxu0
        %v9734 = vadd.f32 %v9685, %v9733
        %9735 = vmatmul.bf16.gmra.mxu0 %v9053
        %v9736 = vpop.f32.mrf.mxu0
        %v9737 = vadd.f32 %v9688, %v9736
        %v9738 = vpop.f32.mrf.mxu0
        %v9739 = vadd.f32 %v9690, %v9738
        %9740 = vmatmul.bf16.gmra.mxu0 %v9057
        %v9741 = vpop.f32.mrf.mxu0
        %v9742 = vadd.f32 %v9693, %v9741
        %v9743 = vpop.f32.mrf.mxu0
        %v9744 = vadd.f32 %v9695, %v9743
        %9745 = vmatmul.bf16.gmra.mxu0 %v9061
        %v9746 = vpop.f32.mrf.mxu0
        %v9747 = vadd.f32 %v9698, %v9746
        %v9748 = vpop.f32.mrf.mxu0
        %v9749 = vadd.f32 %v9700, %v9748
        %9750 = vmatmul.bf16.gmra.mxu0 %v9065
        %v9751 = vpop.f32.mrf.mxu0
        %v9752 = vadd.f32 %v9703, %v9751
        %v9753 = vpop.f32.mrf.mxu0
        %v9754 = vadd.f32 %v9705, %v9753
        %9755 = vmatmul.bf16.gmra.mxu0 %v9069
        %v9756 = vpop.f32.mrf.mxu0
        %v9757 = vadd.f32 %v9708, %v9756
        %v9758 = vpop.f32.mrf.mxu0
        %v9759 = vadd.f32 %v9710, %v9758
        %9760 = vmatmul.bf16.gmra.mxu0 %v9073
        %v9761 = vpop.f32.mrf.mxu0
        %v9762 = vadd.f32 %v9713, %v9761
        %v9763 = vpop.f32.mrf.mxu0
        %v9764 = vadd.f32 %v9715, %v9763
        %9765 = vdwg.mxu0
        %9766 = vmatpush.bf16.msra.mxu0 %v9520
        %9767 = vmatpush.bf16.msra.mxu0 %v9517
        %9768 = vmatpush.bf16.msra.mxu0 %v9514
        %9769 = vmatpush.bf16.msra.mxu0 %v9511
        %9770 = vmatpush.bf16.msra.mxu0 %v9508
        %9771 = vmatpush.bf16.msra.mxu0 %v9505
        %9772 = vmatpush.bf16.msra.mxu0 %v9502
        %9773 = vmatpush.bf16.msra.mxu0 %v9499
        %9774 = vmatmul.bf16.gmra.mxu0 %v9046
        %v9775 = vpop.f32.mrf.mxu0
        %v9776 = vadd.f32 %v9727, %v9775
        %v9777 = vpop.f32.mrf.mxu0
        %v9778 = vadd.f32 %v9729, %v9777
        %9779 = vmatmul.bf16.gmra.mxu0 %v9050
        %v9780 = vpop.f32.mrf.mxu0
        %v9781 = vadd.f32 %v9732, %v9780
        %v9782 = vpop.f32.mrf.mxu0
        %v9783 = vadd.f32 %v9734, %v9782
        %9784 = vmatmul.bf16.gmra.mxu0 %v9054
        %v9785 = vpop.f32.mrf.mxu0
        %v9786 = vadd.f32 %v9737, %v9785
        %v9787 = vpop.f32.mrf.mxu0
        %v9788 = vadd.f32 %v9739, %v9787
        %9789 = vmatmul.bf16.gmra.mxu0 %v9058
        %v9790 = vpop.f32.mrf.mxu0
        %v9791 = vadd.f32 %v9742, %v9790
        %v9792 = vpop.f32.mrf.mxu0
        %v9793 = vadd.f32 %v9744, %v9792
        %9794 = vmatmul.bf16.gmra.mxu0 %v9062
        %v9795 = vpop.f32.mrf.mxu0
        %v9796 = vadd.f32 %v9747, %v9795
        %v9797 = vpop.f32.mrf.mxu0
        %v9798 = vadd.f32 %v9749, %v9797
        %9799 = vmatmul.bf16.gmra.mxu0 %v9066
        %v9800 = vpop.f32.mrf.mxu0
        %v9801 = vadd.f32 %v9752, %v9800
        %v9802 = vpop.f32.mrf.mxu0
        %v9803 = vadd.f32 %v9754, %v9802
        %9804 = vmatmul.bf16.gmra.mxu0 %v9070
        %v9805 = vpop.f32.mrf.mxu0
        %v9806 = vadd.f32 %v9757, %v9805
        %v9807 = vpop.f32.mrf.mxu0
        %v9808 = vadd.f32 %v9759, %v9807
        %9809 = vmatmul.bf16.gmra.mxu0 %v9074
        %v9810 = vpop.f32.mrf.mxu0
        %v9811 = vadd.f32 %v9762, %v9810
        %v9812 = vpop.f32.mrf.mxu0
        %v9813 = vadd.f32 %v9764, %v9812
        %9814 = vdwg.mxu0
        %9815 = vmatpush.bf16.msra.mxu0 %v9449
        %9816 = vmatpush.bf16.msra.mxu0 %v9446
        %9817 = vmatpush.bf16.msra.mxu0 %v9443
        %9818 = vmatpush.bf16.msra.mxu0 %v9440
        %9819 = vmatpush.bf16.msra.mxu0 %v9437
        %9820 = vmatpush.bf16.msra.mxu0 %v9434
        %9821 = vmatpush.bf16.msra.mxu0 %v9431
        %9822 = vmatpush.bf16.msra.mxu0 %v9428
        %9823 = vmatmul.bf16.gmra.mxu0 %v9043
        %v9824 = vpop.f32.mrf.mxu0
        %v9825 = vadd.f32 0.0, %v9824
        %v9826 = vpop.f32.mrf.mxu0
        %v9827 = vadd.f32 0.0, %v9826
        %9828 = vmatmul.bf16.gmra.mxu0 %v9047
        %v9829 = vpop.f32.mrf.mxu0
        %v9830 = vadd.f32 0.0, %v9829
        %v9831 = vpop.f32.mrf.mxu0
        %v9832 = vadd.f32 0.0, %v9831
        %9833 = vmatmul.bf16.gmra.mxu0 %v9051
        %v9834 = vpop.f32.mrf.mxu0
        %v9835 = vadd.f32 0.0, %v9834
        %v9836 = vpop.f32.mrf.mxu0
        %v9837 = vadd.f32 0.0, %v9836
        %9838 = vmatmul.bf16.gmra.mxu0 %v9055
        %v9839 = vpop.f32.mrf.mxu0
        %v9840 = vadd.f32 0.0, %v9839
        %v9841 = vpop.f32.mrf.mxu0
        %v9842 = vadd.f32 0.0, %v9841
        %9843 = vmatmul.bf16.gmra.mxu0 %v9059
        %v9844 = vpop.f32.mrf.mxu0
        %v9845 = vadd.f32 0.0, %v9844
        %v9846 = vpop.f32.mrf.mxu0
        %v9847 = vadd.f32 0.0, %v9846
        %9848 = vmatmul.bf16.gmra.mxu0 %v9063
        %v9849 = vpop.f32.mrf.mxu0
        %v9850 = vadd.f32 0.0, %v9849
        %v9851 = vpop.f32.mrf.mxu0
        %v9852 = vadd.f32 0.0, %v9851
        %9853 = vmatmul.bf16.gmra.mxu0 %v9067
        %v9854 = vpop.f32.mrf.mxu0
        %v9855 = vadd.f32 0.0, %v9854
        %v9856 = vpop.f32.mrf.mxu0
        %v9857 = vadd.f32 0.0, %v9856
        %9858 = vmatmul.bf16.gmra.mxu0 %v9071
        %v9859 = vpop.f32.mrf.mxu0
        %v9860 = vadd.f32 0.0, %v9859
        %v9861 = vpop.f32.mrf.mxu0
        %v9862 = vadd.f32 0.0, %v9861
        %9863 = vdwg.mxu0
        %9864 = vmatpush.bf16.msra.mxu0 %v9473
        %9865 = vmatpush.bf16.msra.mxu0 %v9470
        %9866 = vmatpush.bf16.msra.mxu0 %v9467
        %9867 = vmatpush.bf16.msra.mxu0 %v9464
        %9868 = vmatpush.bf16.msra.mxu0 %v9461
        %9869 = vmatpush.bf16.msra.mxu0 %v9458
        %9870 = vmatpush.bf16.msra.mxu0 %v9455
        %9871 = vmatpush.bf16.msra.mxu0 %v9452
        %9872 = vmatmul.bf16.gmra.mxu0 %v9044
        %v9873 = vpop.f32.mrf.mxu0
        %v9874 = vadd.f32 %v9825, %v9873
        %v9875 = vpop.f32.mrf.mxu0
        %v9876 = vadd.f32 %v9827, %v9875
        %9877 = vmatmul.bf16.gmra.mxu0 %v9048
        %v9878 = vpop.f32.mrf.mxu0
        %v9879 = vadd.f32 %v9830, %v9878
        %v9880 = vpop.f32.mrf.mxu0
        %v9881 = vadd.f32 %v9832, %v9880
        %9882 = vmatmul.bf16.gmra.mxu0 %v9052
        %v9883 = vpop.f32.mrf.mxu0
        %v9884 = vadd.f32 %v9835, %v9883
        %v9885 = vpop.f32.mrf.mxu0
        %v9886 = vadd.f32 %v9837, %v9885
        %9887 = vmatmul.bf16.gmra.mxu0 %v9056
        %v9888 = vpop.f32.mrf.mxu0
        %v9889 = vadd.f32 %v9840, %v9888
        %v9890 = vpop.f32.mrf.mxu0
        %v9891 = vadd.f32 %v9842, %v9890
        %9892 = vmatmul.bf16.gmra.mxu0 %v9060
        %v9893 = vpop.f32.mrf.mxu0
        %v9894 = vadd.f32 %v9845, %v9893
        %v9895 = vpop.f32.mrf.mxu0
        %v9896 = vadd.f32 %v9847, %v9895
        %9897 = vmatmul.bf16.gmra.mxu0 %v9064
        %v9898 = vpop.f32.mrf.mxu0
        %v9899 = vadd.f32 %v9850, %v9898
        %v9900 = vpop.f32.mrf.mxu0
        %v9901 = vadd.f32 %v9852, %v9900
        %9902 = vmatmul.bf16.gmra.mxu0 %v9068
        %v9903 = vpop.f32.mrf.mxu0
        %v9904 = vadd.f32 %v9855, %v9903
        %v9905 = vpop.f32.mrf.mxu0
        %v9906 = vadd.f32 %v9857, %v9905
        %9907 = vmatmul.bf16.gmra.mxu0 %v9072
        %v9908 = vpop.f32.mrf.mxu0
        %v9909 = vadd.f32 %v9860, %v9908
        %v9910 = vpop.f32.mrf.mxu0
        %v9911 = vadd.f32 %v9862, %v9910
        %9912 = vdwg.mxu0
        %9913 = vmatpush.bf16.msra.mxu0 %v9497
        %9914 = vmatpush.bf16.msra.mxu0 %v9494
        %9915 = vmatpush.bf16.msra.mxu0 %v9491
        %9916 = vmatpush.bf16.msra.mxu0 %v9488
        %9917 = vmatpush.bf16.msra.mxu0 %v9485
        %9918 = vmatpush.bf16.msra.mxu0 %v9482
        %9919 = vmatpush.bf16.msra.mxu0 %v9479
        %9920 = vmatpush.bf16.msra.mxu0 %v9476
        %9921 = vmatmul.bf16.gmra.mxu0 %v9045
        %v9922 = vpop.f32.mrf.mxu0
        %v9923 = vadd.f32 %v9874, %v9922
        %v9924 = vpop.f32.mrf.mxu0
        %v9925 = vadd.f32 %v9876, %v9924
        %9926 = vmatmul.bf16.gmra.mxu0 %v9049
        %v9927 = vpop.f32.mrf.mxu0
        %v9928 = vadd.f32 %v9879, %v9927
        %v9929 = vpop.f32.mrf.mxu0
        %v9930 = vadd.f32 %v9881, %v9929
        %9931 = vmatmul.bf16.gmra.mxu0 %v9053
        %v9932 = vpop.f32.mrf.mxu0
        %v9933 = vadd.f32 %v9884, %v9932
        %v9934 = vpop.f32.mrf.mxu0
        %v9935 = vadd.f32 %v9886, %v9934
        %9936 = vmatmul.bf16.gmra.mxu0 %v9057
        %v9937 = vpop.f32.mrf.mxu0
        %v9938 = vadd.f32 %v9889, %v9937
        %v9939 = vpop.f32.mrf.mxu0
        %v9940 = vadd.f32 %v9891, %v9939
        %9941 = vmatmul.bf16.gmra.mxu0 %v9061
        %v9942 = vpop.f32.mrf.mxu0
        %v9943 = vadd.f32 %v9894, %v9942
        %v9944 = vpop.f32.mrf.mxu0
        %v9945 = vadd.f32 %v9896, %v9944
        %9946 = vmatmul.bf16.gmra.mxu0 %v9065
        %v9947 = vpop.f32.mrf.mxu0
        %v9948 = vadd.f32 %v9899, %v9947
        %v9949 = vpop.f32.mrf.mxu0
        %v9950 = vadd.f32 %v9901, %v9949
        %9951 = vmatmul.bf16.gmra.mxu0 %v9069
        %v9952 = vpop.f32.mrf.mxu0
        %v9953 = vadd.f32 %v9904, %v9952
        %v9954 = vpop.f32.mrf.mxu0
        %v9955 = vadd.f32 %v9906, %v9954
        %9956 = vmatmul.bf16.gmra.mxu0 %v9073
        %v9957 = vpop.f32.mrf.mxu0
        %v9958 = vadd.f32 %v9909, %v9957
        %v9959 = vpop.f32.mrf.mxu0
        %v9960 = vadd.f32 %v9911, %v9959
        %9961 = vdwg.mxu0
        %9962 = vmatpush.bf16.msra.mxu0 %v9521
        %9963 = vmatpush.bf16.msra.mxu0 %v9518
        %9964 = vmatpush.bf16.msra.mxu0 %v9515
        %9965 = vmatpush.bf16.msra.mxu0 %v9512
        %9966 = vmatpush.bf16.msra.mxu0 %v9509
        %9967 = vmatpush.bf16.msra.mxu0 %v9506
        %9968 = vmatpush.bf16.msra.mxu0 %v9503
        %9969 = vmatpush.bf16.msra.mxu0 %v9500
        %9970 = vmatmul.bf16.gmra.mxu0 %v9046
        %v9971 = vpop.f32.mrf.mxu0
        %v9972 = vadd.f32 %v9923, %v9971
        %v9973 = vpop.f32.mrf.mxu0
        %v9974 = vadd.f32 %v9925, %v9973
        %9975 = vmatmul.bf16.gmra.mxu0 %v9050
        %v9976 = vpop.f32.mrf.mxu0
        %v9977 = vadd.f32 %v9928, %v9976
        %v9978 = vpop.f32.mrf.mxu0
        %v9979 = vadd.f32 %v9930, %v9978
        %9980 = vmatmul.bf16.gmra.mxu0 %v9054
        %v9981 = vpop.f32.mrf.mxu0
        %v9982 = vadd.f32 %v9933, %v9981
        %v9983 = vpop.f32.mrf.mxu0
        %v9984 = vadd.f32 %v9935, %v9983
        %9985 = vmatmul.bf16.gmra.mxu0 %v9058
        %v9986 = vpop.f32.mrf.mxu0
        %v9987 = vadd.f32 %v9938, %v9986
        %v9988 = vpop.f32.mrf.mxu0
        %v9989 = vadd.f32 %v9940, %v9988
        %9990 = vmatmul.bf16.gmra.mxu0 %v9062
        %v9991 = vpop.f32.mrf.mxu0
        %v9992 = vadd.f32 %v9943, %v9991
        %v9993 = vpop.f32.mrf.mxu0
        %v9994 = vadd.f32 %v9945, %v9993
        %9995 = vmatmul.bf16.gmra.mxu0 %v9066
        %v9996 = vpop.f32.mrf.mxu0
        %v9997 = vadd.f32 %v9948, %v9996
        %v9998 = vpop.f32.mrf.mxu0
        %v9999 = vadd.f32 %v9950, %v9998
        %10000 = vmatmul.bf16.gmra.mxu0 %v9070
        %v10001 = vpop.f32.mrf.mxu0
        %v10002 = vadd.f32 %v9953, %v10001
        %v10003 = vpop.f32.mrf.mxu0
        %v10004 = vadd.f32 %v9955, %v10003
        %10005 = vmatmul.bf16.gmra.mxu0 %v9074
        %v10006 = vpop.f32.mrf.mxu0
        %v10007 = vadd.f32 %v9958, %v10006
        %v10008 = vpop.f32.mrf.mxu0
        %v10009 = vadd.f32 %v9960, %v10008
        %10010 = vdwg.mxu0
        %10011 = vmatpush.bf16.msra.mxu0 %v9450
        %10012 = vmatpush.bf16.msra.mxu0 %v9447
        %10013 = vmatpush.bf16.msra.mxu0 %v9444
        %10014 = vmatpush.bf16.msra.mxu0 %v9441
        %10015 = vmatpush.bf16.msra.mxu0 %v9438
        %10016 = vmatpush.bf16.msra.mxu0 %v9435
        %10017 = vmatpush.bf16.msra.mxu0 %v9432
        %10018 = vmatpush.bf16.msra.mxu0 %v9429
        %10019 = vmatmul.bf16.gmra.mxu0 %v9043
        %v10020 = vpop.f32.mrf.mxu0
        %v10021 = vadd.f32 0.0, %v10020
        %v10022 = vpop.f32.mrf.mxu0
        %v10023 = vadd.f32 0.0, %v10022
        %10024 = vmatmul.bf16.gmra.mxu0 %v9047
        %v10025 = vpop.f32.mrf.mxu0
        %v10026 = vadd.f32 0.0, %v10025
        %v10027 = vpop.f32.mrf.mxu0
        %v10028 = vadd.f32 0.0, %v10027
        %10029 = vmatmul.bf16.gmra.mxu0 %v9051
        %v10030 = vpop.f32.mrf.mxu0
        %v10031 = vadd.f32 0.0, %v10030
        %v10032 = vpop.f32.mrf.mxu0
        %v10033 = vadd.f32 0.0, %v10032
        %10034 = vmatmul.bf16.gmra.mxu0 %v9055
        %v10035 = vpop.f32.mrf.mxu0
        %v10036 = vadd.f32 0.0, %v10035
        %v10037 = vpop.f32.mrf.mxu0
        %v10038 = vadd.f32 0.0, %v10037
        %10039 = vmatmul.bf16.gmra.mxu0 %v9059
        %v10040 = vpop.f32.mrf.mxu0
        %v10041 = vadd.f32 0.0, %v10040
        %v10042 = vpop.f32.mrf.mxu0
        %v10043 = vadd.f32 0.0, %v10042
        %10044 = vmatmul.bf16.gmra.mxu0 %v9063
        %v10045 = vpop.f32.mrf.mxu0
        %v10046 = vadd.f32 0.0, %v10045
        %v10047 = vpop.f32.mrf.mxu0
        %v10048 = vadd.f32 0.0, %v10047
        %10049 = vmatmul.bf16.gmra.mxu0 %v9067
        %v10050 = vpop.f32.mrf.mxu0
        %v10051 = vadd.f32 0.0, %v10050
        %v10052 = vpop.f32.mrf.mxu0
        %v10053 = vadd.f32 0.0, %v10052
        %10054 = vmatmul.bf16.gmra.mxu0 %v9071
        %v10055 = vpop.f32.mrf.mxu0
        %v10056 = vadd.f32 0.0, %v10055
        %v10057 = vpop.f32.mrf.mxu0
        %v10058 = vadd.f32 0.0, %v10057
        %10059 = vdwg.mxu0
        %10060 = vmatpush.bf16.msra.mxu0 %v9474
        %10061 = vmatpush.bf16.msra.mxu0 %v9471
        %10062 = vmatpush.bf16.msra.mxu0 %v9468
        %10063 = vmatpush.bf16.msra.mxu0 %v9465
        %10064 = vmatpush.bf16.msra.mxu0 %v9462
        %10065 = vmatpush.bf16.msra.mxu0 %v9459
        %10066 = vmatpush.bf16.msra.mxu0 %v9456
        %10067 = vmatpush.bf16.msra.mxu0 %v9453
        %10068 = vmatmul.bf16.gmra.mxu0 %v9044
        %v10069 = vpop.f32.mrf.mxu0
        %v10070 = vadd.f32 %v10021, %v10069
        %v10071 = vpop.f32.mrf.mxu0
        %v10072 = vadd.f32 %v10023, %v10071
        %10073 = vmatmul.bf16.gmra.mxu0 %v9048
        %v10074 = vpop.f32.mrf.mxu0
        %v10075 = vadd.f32 %v10026, %v10074
        %v10076 = vpop.f32.mrf.mxu0
        %v10077 = vadd.f32 %v10028, %v10076
        %10078 = vmatmul.bf16.gmra.mxu0 %v9052
        %v10079 = vpop.f32.mrf.mxu0
        %v10080 = vadd.f32 %v10031, %v10079
        %v10081 = vpop.f32.mrf.mxu0
        %v10082 = vadd.f32 %v10033, %v10081
        %10083 = vmatmul.bf16.gmra.mxu0 %v9056
        %v10084 = vpop.f32.mrf.mxu0
        %v10085 = vadd.f32 %v10036, %v10084
        %v10086 = vpop.f32.mrf.mxu0
        %v10087 = vadd.f32 %v10038, %v10086
        %10088 = vmatmul.bf16.gmra.mxu0 %v9060
        %v10089 = vpop.f32.mrf.mxu0
        %v10090 = vadd.f32 %v10041, %v10089
        %v10091 = vpop.f32.mrf.mxu0
        %v10092 = vadd.f32 %v10043, %v10091
        %10093 = vmatmul.bf16.gmra.mxu0 %v9064
        %v10094 = vpop.f32.mrf.mxu0
        %v10095 = vadd.f32 %v10046, %v10094
        %v10096 = vpop.f32.mrf.mxu0
        %v10097 = vadd.f32 %v10048, %v10096
        %10098 = vmatmul.bf16.gmra.mxu0 %v9068
        %v10099 = vpop.f32.mrf.mxu0
        %v10100 = vadd.f32 %v10051, %v10099
        %v10101 = vpop.f32.mrf.mxu0
        %v10102 = vadd.f32 %v10053, %v10101
        %10103 = vmatmul.bf16.gmra.mxu0 %v9072
        %v10104 = vpop.f32.mrf.mxu0
        %v10105 = vadd.f32 %v10056, %v10104
        %v10106 = vpop.f32.mrf.mxu0
        %v10107 = vadd.f32 %v10058, %v10106
        %10108 = vdwg.mxu0
        %10109 = vmatpush.bf16.msra.mxu0 %v9498
        %10110 = vmatpush.bf16.msra.mxu0 %v9495
        %10111 = vmatpush.bf16.msra.mxu0 %v9492
        %10112 = vmatpush.bf16.msra.mxu0 %v9489
        %10113 = vmatpush.bf16.msra.mxu0 %v9486
        %10114 = vmatpush.bf16.msra.mxu0 %v9483
        %10115 = vmatpush.bf16.msra.mxu0 %v9480
        %10116 = vmatpush.bf16.msra.mxu0 %v9477
        %10117 = vmatmul.bf16.gmra.mxu0 %v9045
        %v10118 = vpop.f32.mrf.mxu0
        %v10119 = vadd.f32 %v10070, %v10118
        %v10120 = vpop.f32.mrf.mxu0
        %v10121 = vadd.f32 %v10072, %v10120
        %10122 = vmatmul.bf16.gmra.mxu0 %v9049
        %v10123 = vpop.f32.mrf.mxu0
        %v10124 = vadd.f32 %v10075, %v10123
        %v10125 = vpop.f32.mrf.mxu0
        %v10126 = vadd.f32 %v10077, %v10125
        %10127 = vmatmul.bf16.gmra.mxu0 %v9053
        %v10128 = vpop.f32.mrf.mxu0
        %v10129 = vadd.f32 %v10080, %v10128
        %v10130 = vpop.f32.mrf.mxu0
        %v10131 = vadd.f32 %v10082, %v10130
        %10132 = vmatmul.bf16.gmra.mxu0 %v9057
        %v10133 = vpop.f32.mrf.mxu0
        %v10134 = vadd.f32 %v10085, %v10133
        %v10135 = vpop.f32.mrf.mxu0
        %v10136 = vadd.f32 %v10087, %v10135
        %10137 = vmatmul.bf16.gmra.mxu0 %v9061
        %v10138 = vpop.f32.mrf.mxu0
        %v10139 = vadd.f32 %v10090, %v10138
        %v10140 = vpop.f32.mrf.mxu0
        %v10141 = vadd.f32 %v10092, %v10140
        %10142 = vmatmul.bf16.gmra.mxu0 %v9065
        %v10143 = vpop.f32.mrf.mxu0
        %v10144 = vadd.f32 %v10095, %v10143
        %v10145 = vpop.f32.mrf.mxu0
        %v10146 = vadd.f32 %v10097, %v10145
        %10147 = vmatmul.bf16.gmra.mxu0 %v9069
        %v10148 = vpop.f32.mrf.mxu0
        %v10149 = vadd.f32 %v10100, %v10148
        %v10150 = vpop.f32.mrf.mxu0
        %v10151 = vadd.f32 %v10102, %v10150
        %10152 = vmatmul.bf16.gmra.mxu0 %v9073
        %v10153 = vpop.f32.mrf.mxu0
        %v10154 = vadd.f32 %v10105, %v10153
        %v10155 = vpop.f32.mrf.mxu0
        %v10156 = vadd.f32 %v10107, %v10155
        %10157 = vdwg.mxu0
        %10158 = vmatpush.bf16.msra.mxu0 %v9522
        %10159 = vmatpush.bf16.msra.mxu0 %v9519
        %10160 = vmatpush.bf16.msra.mxu0 %v9516
        %10161 = vmatpush.bf16.msra.mxu0 %v9513
        %10162 = vmatpush.bf16.msra.mxu0 %v9510
        %10163 = vmatpush.bf16.msra.mxu0 %v9507
        %10164 = vmatpush.bf16.msra.mxu0 %v9504
        %10165 = vmatpush.bf16.msra.mxu0 %v9501
        %10166 = vmatmul.bf16.gmra.mxu0 %v9046
        %v10167 = vpop.f32.mrf.mxu0
        %v10168 = vadd.f32 %v10119, %v10167
        %v10169 = vpop.f32.mrf.mxu0
        %v10170 = vadd.f32 %v10121, %v10169
        %10171 = vmatmul.bf16.gmra.mxu0 %v9050
        %v10172 = vpop.f32.mrf.mxu0
        %v10173 = vadd.f32 %v10124, %v10172
        %v10174 = vpop.f32.mrf.mxu0
        %v10175 = vadd.f32 %v10126, %v10174
        %10176 = vmatmul.bf16.gmra.mxu0 %v9054
        %v10177 = vpop.f32.mrf.mxu0
        %v10178 = vadd.f32 %v10129, %v10177
        %v10179 = vpop.f32.mrf.mxu0
        %v10180 = vadd.f32 %v10131, %v10179
        %10181 = vmatmul.bf16.gmra.mxu0 %v9058
        %v10182 = vpop.f32.mrf.mxu0
        %v10183 = vadd.f32 %v10134, %v10182
        %v10184 = vpop.f32.mrf.mxu0
        %v10185 = vadd.f32 %v10136, %v10184
        %10186 = vmatmul.bf16.gmra.mxu0 %v9062
        %v10187 = vpop.f32.mrf.mxu0
        %v10188 = vadd.f32 %v10139, %v10187
        %v10189 = vpop.f32.mrf.mxu0
        %v10190 = vadd.f32 %v10141, %v10189
        %10191 = vmatmul.bf16.gmra.mxu0 %v9066
        %v10192 = vpop.f32.mrf.mxu0
        %v10193 = vadd.f32 %v10144, %v10192
        %v10194 = vpop.f32.mrf.mxu0
        %v10195 = vadd.f32 %v10146, %v10194
        %10196 = vmatmul.bf16.gmra.mxu0 %v9070
        %v10197 = vpop.f32.mrf.mxu0
        %v10198 = vadd.f32 %v10149, %v10197
        %v10199 = vpop.f32.mrf.mxu0
        %v10200 = vadd.f32 %v10151, %v10199
        %10201 = vmatmul.bf16.gmra.mxu0 %v9074
        %v10202 = vpop.f32.mrf.mxu0
        %v10203 = vadd.f32 %v10154, %v10202
        %v10204 = vpop.f32.mrf.mxu0
        %v10205 = vadd.f32 %v10156, %v10204
        %10206 = vdwg.mxu0
        %v10207 = vadd.f32 %v8415, %v9776
        %v10208 = vadd.f32 %v8416, %v9972
        %v10209 = vadd.f32 %v8417, %v10168
        %v10210 = vadd.f32 %v8418, %v9778
        %v10211 = vadd.f32 %v8419, %v9974
        %v10212 = vadd.f32 %v8420, %v10170
        %v10213 = vadd.f32 %v8421, %v9781
        %v10214 = vadd.f32 %v8422, %v9977
        %v10215 = vadd.f32 %v8423, %v10173
        %v10216 = vadd.f32 %v8424, %v9783
        %v10217 = vadd.f32 %v8425, %v9979
        %v10218 = vadd.f32 %v8426, %v10175
        %v10219 = vadd.f32 %v8427, %v9786
        %v10220 = vadd.f32 %v8428, %v9982
        %v10221 = vadd.f32 %v8429, %v10178
        %v10222 = vadd.f32 %v8430, %v9788
        %v10223 = vadd.f32 %v8431, %v9984
        %v10224 = vadd.f32 %v8432, %v10180
        %v10225 = vadd.f32 %v8433, %v9791
        %v10226 = vadd.f32 %v8434, %v9987
        %v10227 = vadd.f32 %v8435, %v10183
        %v10228 = vadd.f32 %v8436, %v9793
        %v10229 = vadd.f32 %v8437, %v9989
        %v10230 = vadd.f32 %v8438, %v10185
        %v10231 = vadd.f32 %v8439, %v9796
        %v10232 = vadd.f32 %v8440, %v9992
        %v10233 = vadd.f32 %v8441, %v10188
        %v10234 = vadd.f32 %v8442, %v9798
        %v10235 = vadd.f32 %v8443, %v9994
        %v10236 = vadd.f32 %v8444, %v10190
        %v10237 = vadd.f32 %v8445, %v9801
        %v10238 = vadd.f32 %v8446, %v9997
        %v10239 = vadd.f32 %v8447, %v10193
        %v10240 = vadd.f32 %v8448, %v9803
        %v10241 = vadd.f32 %v8449, %v9999
        %v10242 = vadd.f32 %v8450, %v10195
        %v10243 = vadd.f32 %v8451, %v9806
        %v10244 = vadd.f32 %v8452, %v10002
        %v10245 = vadd.f32 %v8453, %v10198
        %v10246 = vadd.f32 %v8454, %v9808
        %v10247 = vadd.f32 %v8455, %v10004
        %v10248 = vadd.f32 %v8456, %v10200
        %v10249 = vadd.f32 %v8457, %v9811
        %v10250 = vadd.f32 %v8458, %v10007
        %v10251 = vadd.f32 %v8459, %v10203
        %v10252 = vadd.f32 %v8460, %v9813
        %v10253 = vadd.f32 %v8461, %v10009
        %v10254 = vadd.f32 %v8462, %v10205
        %v10255 = vld [vmem:[#allocation7] sm:$0x7]
        %v10257 = vperm.slane %v10255, 0
        %v10258 = vperm.slane %v10255, 1
        %v10259 = vperm.slane %v10255, 2
        %v10263 = vadd.f32 %v10207, %v10257
        %v10264 = vadd.f32 %v10208, %v10258
        %v10265 = vadd.f32 %v10209, %v10259
        %v10266 = vadd.f32 %v10210, %v10257
        %v10267 = vadd.f32 %v10211, %v10258
        %v10268 = vadd.f32 %v10212, %v10259
        %v10269 = vadd.f32 %v10213, %v10257
        %v10270 = vadd.f32 %v10214, %v10258
        %v10271 = vadd.f32 %v10215, %v10259
        %v10272 = vadd.f32 %v10216, %v10257
        %v10273 = vadd.f32 %v10217, %v10258
        %v10274 = vadd.f32 %v10218, %v10259
        %v10275 = vadd.f32 %v10219, %v10257
        %v10276 = vadd.f32 %v10220, %v10258
        %v10277 = vadd.f32 %v10221, %v10259
        %v10278 = vadd.f32 %v10222, %v10257
        %v10279 = vadd.f32 %v10223, %v10258
        %v10280 = vadd.f32 %v10224, %v10259
        %v10281 = vadd.f32 %v10225, %v10257
        %v10282 = vadd.f32 %v10226, %v10258
        %v10283 = vadd.f32 %v10227, %v10259
        %v10284 = vadd.f32 %v10228, %v10257
        %v10285 = vadd.f32 %v10229, %v10258
        %v10286 = vadd.f32 %v10230, %v10259
        %v10287 = vadd.f32 %v10231, %v10257
        %v10288 = vadd.f32 %v10232, %v10258
        %v10289 = vadd.f32 %v10233, %v10259
        %v10290 = vadd.f32 %v10234, %v10257
        %v10291 = vadd.f32 %v10235, %v10258
        %v10292 = vadd.f32 %v10236, %v10259
        %v10293 = vadd.f32 %v10237, %v10257
        %v10294 = vadd.f32 %v10238, %v10258
        %v10295 = vadd.f32 %v10239, %v10259
        %v10296 = vadd.f32 %v10240, %v10257
        %v10297 = vadd.f32 %v10241, %v10258
        %v10298 = vadd.f32 %v10242, %v10259
        %v10299 = vadd.f32 %v10243, %v10257
        %v10300 = vadd.f32 %v10244, %v10258
        %v10301 = vadd.f32 %v10245, %v10259
        %v10302 = vadd.f32 %v10246, %v10257
        %v10303 = vadd.f32 %v10247, %v10258
        %v10304 = vadd.f32 %v10248, %v10259
        %v10305 = vadd.f32 %v10249, %v10257
        %v10306 = vadd.f32 %v10250, %v10258
        %v10307 = vadd.f32 %v10251, %v10259
        %v10308 = vadd.f32 %v10252, %v10257
        %v10309 = vadd.f32 %v10253, %v10258
        %v10310 = vadd.f32 %v10254, %v10259
        %v10311 = vmax.f32 %v10263, 0.0
        %v10312 = vmax.f32 %v10264, 0.0
        %v10313 = vmax.f32 %v10265, 0.0
        %v10314 = vmax.f32 %v10266, 0.0
        %v10315 = vmax.f32 %v10267, 0.0
        %v10316 = vmax.f32 %v10268, 0.0
        %v10317 = vmax.f32 %v10269, 0.0
        %v10318 = vmax.f32 %v10270, 0.0
        %v10319 = vmax.f32 %v10271, 0.0
        %v10320 = vmax.f32 %v10272, 0.0
        %v10321 = vmax.f32 %v10273, 0.0
        %v10322 = vmax.f32 %v10274, 0.0
        %v10323 = vmax.f32 %v10275, 0.0
        %v10324 = vmax.f32 %v10276, 0.0
        %v10325 = vmax.f32 %v10277, 0.0
        %v10326 = vmax.f32 %v10278, 0.0
        %v10327 = vmax.f32 %v10279, 0.0
        %v10328 = vmax.f32 %v10280, 0.0
        %v10329 = vmax.f32 %v10281, 0.0
        %v10330 = vmax.f32 %v10282, 0.0
        %v10331 = vmax.f32 %v10283, 0.0
        %v10332 = vmax.f32 %v10284, 0.0
        %v10333 = vmax.f32 %v10285, 0.0
        %v10334 = vmax.f32 %v10286, 0.0
        %v10335 = vmax.f32 %v10287, 0.0
        %v10336 = vmax.f32 %v10288, 0.0
        %v10337 = vmax.f32 %v10289, 0.0
        %v10338 = vmax.f32 %v10290, 0.0
        %v10339 = vmax.f32 %v10291, 0.0
        %v10340 = vmax.f32 %v10292, 0.0
        %v10341 = vmax.f32 %v10293, 0.0
        %v10342 = vmax.f32 %v10294, 0.0
        %v10343 = vmax.f32 %v10295, 0.0
        %v10344 = vmax.f32 %v10296, 0.0
        %v10345 = vmax.f32 %v10297, 0.0
        %v10346 = vmax.f32 %v10298, 0.0
        %v10347 = vmax.f32 %v10299, 0.0
        %v10348 = vmax.f32 %v10300, 0.0
        %v10349 = vmax.f32 %v10301, 0.0
        %v10350 = vmax.f32 %v10302, 0.0
        %v10351 = vmax.f32 %v10303, 0.0
        %v10352 = vmax.f32 %v10304, 0.0
        %v10353 = vmax.f32 %v10305, 0.0
        %v10354 = vmax.f32 %v10306, 0.0
        %v10355 = vmax.f32 %v10307, 0.0
        %v10356 = vmax.f32 %v10308, 0.0
        %v10357 = vmax.f32 %v10309, 0.0
        %v10358 = vmax.f32 %v10310, 0.0
        %v10359 = vlaneseq
        %v10360 = vshrl.u32 %v10359, 7
        %v10361 = vadd.s32 %v10360, 8
        %v10362 = vlaneseq
        %v10363 = vand.u32 %v10362, 127
        %v10364 = vadd.s32 %v10363, 128
        %v10365 = vadd.s32 %v10363, 256
        %vm10366 = vcmp.lt.s32.totalorder %v10363, 128
        %vm10367 = vcmp.lt.s32.totalorder %v10364, 128
        %vm10368 = vcmp.lt.s32.totalorder %v10365, 128
        %vm10369 = vcmp.lt.s32.totalorder %v10363, 256
        %vm10370 = vcmp.lt.s32.totalorder %v10364, 256
        %vm10371 = vcmp.lt.s32.totalorder %v10365, 256
        %v10372 = vsel %vm10369, 12, 11
        %v10373 = vsel %vm10370, 12, 11
        %v10374 = vsel %vm10371, 12, 11
        %v10375 = vsel %vm10366, 13, %v10372
        %v10376 = vsel %vm10367, 13, %v10373
        %v10377 = vsel %vm10368, 13, %v10374
        %vm10378 = vcmp.lt.s32.totalorder %v10360, %v10375
        %vm10379 = vcmp.lt.s32.totalorder %v10360, %v10376
        %vm10380 = vcmp.lt.s32.totalorder %v10360, %v10377
        %vm10381 = vcmp.lt.s32.totalorder %v10361, %v10375
        %vm10382 = vcmp.lt.s32.totalorder %v10361, %v10376
        %vm10383 = vcmp.lt.s32.totalorder %v10361, %v10377
        %v10384 = vsel %vm10378, 1, 0
        %v10385 = vsel %vm10379, 1, 0
        %v10386 = vsel %vm10380, 1, 0
        %v10387 = vsel %vm10381, 1, 0
        %v10388 = vsel %vm10382, 1, 0
        %v10389 = vsel %vm10383, 1, 0
        %vm10390 = vcmp.eq.s32.totalorder %v10384, 1
        %vm10391 = vcmp.eq.s32.totalorder %v10385, 1
        %vm10392 = vcmp.eq.s32.totalorder %v10386, 1
        %vm10393 = vcmp.eq.s32.totalorder %v10387, 1
        %vm10394 = vcmp.eq.s32.totalorder %v10388, 1
        %vm10395 = vcmp.eq.s32.totalorder %v10389, 1
        %v10396 = vsel %vm10390, %v10311, 0.0
        %v10397 = vsel %vm10391, %v10312, 0.0
        %v10398 = vsel %vm10392, %v10313, 0.0
        %v10399 = vsel %vm10393, %v10314, 0.0
        %v10400 = vsel %vm10394, %v10315, 0.0
        %v10401 = vsel %vm10395, %v10316, 0.0
        %v10402 = vsel %vm10390, %v10317, 0.0
        %v10403 = vsel %vm10391, %v10318, 0.0
        %v10404 = vsel %vm10392, %v10319, 0.0
        %v10405 = vsel %vm10393, %v10320, 0.0
        %v10406 = vsel %vm10394, %v10321, 0.0
        %v10407 = vsel %vm10395, %v10322, 0.0
        %v10408 = vsel %vm10390, %v10323, 0.0
        %v10409 = vsel %vm10391, %v10324, 0.0
        %v10410 = vsel %vm10392, %v10325, 0.0
        %v10411 = vsel %vm10393, %v10326, 0.0
        %v10412 = vsel %vm10394, %v10327, 0.0
        %v10413 = vsel %vm10395, %v10328, 0.0
        %v10414 = vsel %vm10390, %v10329, 0.0
        %v10415 = vsel %vm10391, %v10330, 0.0
        %v10416 = vsel %vm10392, %v10331, 0.0
        %v10417 = vsel %vm10393, %v10332, 0.0
        %v10418 = vsel %vm10394, %v10333, 0.0
        %v10419 = vsel %vm10395, %v10334, 0.0
        %v10420 = vsel %vm10390, %v10335, 0.0
        %v10421 = vsel %vm10391, %v10336, 0.0
        %v10422 = vsel %vm10392, %v10337, 0.0
        %v10423 = vsel %vm10393, %v10338, 0.0
        %v10424 = vsel %vm10394, %v10339, 0.0
        %v10425 = vsel %vm10395, %v10340, 0.0
        %v10426 = vsel %vm10390, %v10341, 0.0
        %v10427 = vsel %vm10391, %v10342, 0.0
        %v10428 = vsel %vm10392, %v10343, 0.0
        %v10429 = vsel %vm10393, %v10344, 0.0
        %v10430 = vsel %vm10394, %v10345, 0.0
        %v10431 = vsel %vm10395, %v10346, 0.0
        %v10432 = vsel %vm10390, %v10347, 0.0
        %v10433 = vsel %vm10391, %v10348, 0.0
        %v10434 = vsel %vm10392, %v10349, 0.0
        %v10435 = vsel %vm10393, %v10350, 0.0
        %v10436 = vsel %vm10394, %v10351, 0.0
        %v10437 = vsel %vm10395, %v10352, 0.0
        %v10438 = vsel %vm10390, %v10353, 0.0
        %v10439 = vsel %vm10391, %v10354, 0.0
        %v10440 = vsel %vm10392, %v10355, 0.0
        %v10441 = vsel %vm10393, %v10356, 0.0
        %v10442 = vsel %vm10394, %v10357, 0.0
        %v10443 = vsel %vm10395, %v10358, 0.0
        %v10444 = vmax.f32 %v10396, %v10399
        %v10445 = vrot.slane %v10444, 4
        %v10446 = vmax.f32 %v10444, %v10445
        %v10447 = vrot.slane %v10446, 2
        %v10448 = vmax.f32 %v10446, %v10447
        %v10449 = vrot.slane %v10448, 1
        %v10450 = vmax.f32 %v10448, %v10449
        %v10451 = vmax.f32 %v10397, %v10400
        %v10452 = vrot.slane %v10451, 4
        %v10453 = vmax.f32 %v10451, %v10452
        %v10454 = vrot.slane %v10453, 2
        %v10455 = vmax.f32 %v10453, %v10454
        %v10456 = vrot.slane %v10455, 1
        %v10457 = vmax.f32 %v10455, %v10456
        %v10458 = vmax.f32 %v10398, %v10401
        %v10459 = vrot.slane %v10458, 4
        %v10460 = vmax.f32 %v10458, %v10459
        %v10461 = vrot.slane %v10460, 2
        %v10462 = vmax.f32 %v10460, %v10461
        %v10463 = vrot.slane %v10462, 1
        %v10464 = vmax.f32 %v10462, %v10463
        %v10465 = vmax.f32 %v10402, %v10405
        %v10466 = vrot.slane %v10465, 4
        %v10467 = vmax.f32 %v10465, %v10466
        %v10468 = vrot.slane %v10467, 2
        %v10469 = vmax.f32 %v10467, %v10468
        %v10470 = vrot.slane %v10469, 1
        %v10471 = vmax.f32 %v10469, %v10470
        %v10472 = vmax.f32 %v10403, %v10406
        %v10473 = vrot.slane %v10472, 4
        %v10474 = vmax.f32 %v10472, %v10473
        %v10475 = vrot.slane %v10474, 2
        %v10476 = vmax.f32 %v10474, %v10475
        %v10477 = vrot.slane %v10476, 1
        %v10478 = vmax.f32 %v10476, %v10477
        %v10479 = vmax.f32 %v10404, %v10407
        %v10480 = vrot.slane %v10479, 4
        %v10481 = vmax.f32 %v10479, %v10480
        %v10482 = vrot.slane %v10481, 2
        %v10483 = vmax.f32 %v10481, %v10482
        %v10484 = vrot.slane %v10483, 1
        %v10485 = vmax.f32 %v10483, %v10484
        %v10486 = vmax.f32 %v10408, %v10411
        %v10487 = vrot.slane %v10486, 4
        %v10488 = vmax.f32 %v10486, %v10487
        %v10489 = vrot.slane %v10488, 2
        %v10490 = vmax.f32 %v10488, %v10489
        %v10491 = vrot.slane %v10490, 1
        %v10492 = vmax.f32 %v10490, %v10491
        %v10493 = vmax.f32 %v10409, %v10412
        %v10494 = vrot.slane %v10493, 4
        %v10495 = vmax.f32 %v10493, %v10494
        %v10496 = vrot.slane %v10495, 2
        %v10497 = vmax.f32 %v10495, %v10496
        %v10498 = vrot.slane %v10497, 1
        %v10499 = vmax.f32 %v10497, %v10498
        %v10500 = vmax.f32 %v10410, %v10413
        %v10501 = vrot.slane %v10500, 4
        %v10502 = vmax.f32 %v10500, %v10501
        %v10503 = vrot.slane %v10502, 2
        %v10504 = vmax.f32 %v10502, %v10503
        %v10505 = vrot.slane %v10504, 1
        %v10506 = vmax.f32 %v10504, %v10505
        %v10507 = vmax.f32 %v10414, %v10417
        %v10508 = vrot.slane %v10507, 4
        %v10509 = vmax.f32 %v10507, %v10508
        %v10510 = vrot.slane %v10509, 2
        %v10511 = vmax.f32 %v10509, %v10510
        %v10512 = vrot.slane %v10511, 1
        %v10513 = vmax.f32 %v10511, %v10512
        %v10514 = vmax.f32 %v10415, %v10418
        %v10515 = vrot.slane %v10514, 4
        %v10516 = vmax.f32 %v10514, %v10515
        %v10517 = vrot.slane %v10516, 2
        %v10518 = vmax.f32 %v10516, %v10517
        %v10519 = vrot.slane %v10518, 1
        %v10520 = vmax.f32 %v10518, %v10519
        %v10521 = vmax.f32 %v10416, %v10419
        %v10522 = vrot.slane %v10521, 4
        %v10523 = vmax.f32 %v10521, %v10522
        %v10524 = vrot.slane %v10523, 2
        %v10525 = vmax.f32 %v10523, %v10524
        %v10526 = vrot.slane %v10525, 1
        %v10527 = vmax.f32 %v10525, %v10526
        %v10528 = vmax.f32 %v10420, %v10423
        %v10529 = vrot.slane %v10528, 4
        %v10530 = vmax.f32 %v10528, %v10529
        %v10531 = vrot.slane %v10530, 2
        %v10532 = vmax.f32 %v10530, %v10531
        %v10533 = vrot.slane %v10532, 1
        %v10534 = vmax.f32 %v10532, %v10533
        %v10535 = vmax.f32 %v10421, %v10424
        %v10536 = vrot.slane %v10535, 4
        %v10537 = vmax.f32 %v10535, %v10536
        %v10538 = vrot.slane %v10537, 2
        %v10539 = vmax.f32 %v10537, %v10538
        %v10540 = vrot.slane %v10539, 1
        %v10541 = vmax.f32 %v10539, %v10540
        %v10542 = vmax.f32 %v10422, %v10425
        %v10543 = vrot.slane %v10542, 4
        %v10544 = vmax.f32 %v10542, %v10543
        %v10545 = vrot.slane %v10544, 2
        %v10546 = vmax.f32 %v10544, %v10545
        %v10547 = vrot.slane %v10546, 1
        %v10548 = vmax.f32 %v10546, %v10547
        %v10549 = vmax.f32 %v10426, %v10429
        %v10550 = vrot.slane %v10549, 4
        %v10551 = vmax.f32 %v10549, %v10550
        %v10552 = vrot.slane %v10551, 2
        %v10553 = vmax.f32 %v10551, %v10552
        %v10554 = vrot.slane %v10553, 1
        %v10555 = vmax.f32 %v10553, %v10554
        %v10556 = vmax.f32 %v10427, %v10430
        %v10557 = vrot.slane %v10556, 4
        %v10558 = vmax.f32 %v10556, %v10557
        %v10559 = vrot.slane %v10558, 2
        %v10560 = vmax.f32 %v10558, %v10559
        %v10561 = vrot.slane %v10560, 1
        %v10562 = vmax.f32 %v10560, %v10561
        %v10563 = vmax.f32 %v10428, %v10431
        %v10564 = vrot.slane %v10563, 4
        %v10565 = vmax.f32 %v10563, %v10564
        %v10566 = vrot.slane %v10565, 2
        %v10567 = vmax.f32 %v10565, %v10566
        %v10568 = vrot.slane %v10567, 1
        %v10569 = vmax.f32 %v10567, %v10568
        %v10570 = vmax.f32 %v10432, %v10435
        %v10571 = vrot.slane %v10570, 4
        %v10572 = vmax.f32 %v10570, %v10571
        %v10573 = vrot.slane %v10572, 2
        %v10574 = vmax.f32 %v10572, %v10573
        %v10575 = vrot.slane %v10574, 1
        %v10576 = vmax.f32 %v10574, %v10575
        %v10577 = vmax.f32 %v10433, %v10436
        %v10578 = vrot.slane %v10577, 4
        %v10579 = vmax.f32 %v10577, %v10578
        %v10580 = vrot.slane %v10579, 2
        %v10581 = vmax.f32 %v10579, %v10580
        %v10582 = vrot.slane %v10581, 1
        %v10583 = vmax.f32 %v10581, %v10582
        %v10584 = vmax.f32 %v10434, %v10437
        %v10585 = vrot.slane %v10584, 4
        %v10586 = vmax.f32 %v10584, %v10585
        %v10587 = vrot.slane %v10586, 2
        %v10588 = vmax.f32 %v10586, %v10587
        %v10589 = vrot.slane %v10588, 1
        %v10590 = vmax.f32 %v10588, %v10589
        %v10591 = vmax.f32 %v10438, %v10441
        %v10592 = vrot.slane %v10591, 4
        %v10593 = vmax.f32 %v10591, %v10592
        %v10594 = vrot.slane %v10593, 2
        %v10595 = vmax.f32 %v10593, %v10594
        %v10596 = vrot.slane %v10595, 1
        %v10597 = vmax.f32 %v10595, %v10596
        %v10598 = vmax.f32 %v10439, %v10442
        %v10599 = vrot.slane %v10598, 4
        %v10600 = vmax.f32 %v10598, %v10599
        %v10601 = vrot.slane %v10600, 2
        %v10602 = vmax.f32 %v10600, %v10601
        %v10603 = vrot.slane %v10602, 1
        %v10604 = vmax.f32 %v10602, %v10603
        %v10605 = vmax.f32 %v10440, %v10443
        %v10606 = vrot.slane %v10605, 4
        %v10607 = vmax.f32 %v10605, %v10606
        %v10608 = vrot.slane %v10607, 2
        %v10609 = vmax.f32 %v10607, %v10608
        %v10610 = vrot.slane %v10609, 1
        %v10611 = vmax.f32 %v10609, %v10610
        %v10612 = vld [vmem:[#allocation8] sm:$0x7]
        %v10614 = vperm.slane %v10612, 0
        %v10615 = vperm.slane %v10612, 1
        %v10616 = vperm.slane %v10612, 2
        %v10620 = vmul.f32 %v10450, %v10614
        %v10621 = vmul.f32 %v10457, %v10615
        %v10622 = vmul.f32 %v10464, %v10616
        %v10623 = vmul.f32 %v10471, %v10614
        %v10624 = vmul.f32 %v10478, %v10615
        %v10625 = vmul.f32 %v10485, %v10616
        %v10626 = vmul.f32 %v10492, %v10614
        %v10627 = vmul.f32 %v10499, %v10615
        %v10628 = vmul.f32 %v10506, %v10616
        %v10629 = vmul.f32 %v10513, %v10614
        %v10630 = vmul.f32 %v10520, %v10615
        %v10631 = vmul.f32 %v10527, %v10616
        %v10632 = vmul.f32 %v10534, %v10614
        %v10633 = vmul.f32 %v10541, %v10615
        %v10634 = vmul.f32 %v10548, %v10616
        %v10635 = vmul.f32 %v10555, %v10614
        %v10636 = vmul.f32 %v10562, %v10615
        %v10637 = vmul.f32 %v10569, %v10616
        %v10638 = vmul.f32 %v10576, %v10614
        %v10639 = vmul.f32 %v10583, %v10615
        %v10640 = vmul.f32 %v10590, %v10616
        %v10641 = vmul.f32 %v10597, %v10614
        %v10642 = vmul.f32 %v10604, %v10615
        %v10643 = vmul.f32 %v10611, %v10616
        %v10668 = vrot.slane %v10623, 7
        %vm10669 = vcmask 1041409
        %v10670 = vsel %vm10669, %v10668, %v10620
        %v10671 = vrot.slane %v10626, 6
        %vm10672 = vcmask 1042434
        %v10673 = vsel %vm10672, %v10671, %v10670
        %v10674 = vrot.slane %v10629, 5
        %vm10675 = vcmask 1043459
        %v10676 = vsel %vm10675, %v10674, %v10673
        %v10677 = vrot.slane %v10632, 4
        %vm10678 = vcmask 1044484
        %v10679 = vsel %vm10678, %v10677, %v10676
        %v10680 = vrot.slane %v10635, 3
        %vm10681 = vcmask 1045509
        %v10682 = vsel %vm10681, %v10680, %v10679
        %v10683 = vrot.slane %v10638, 2
        %vm10684 = vcmask 1046534
        %v10685 = vsel %vm10684, %v10683, %v10682
        %v10686 = vrot.slane %v10641, 1
        %vm10687 = vcmask 1047559
        %v10688 = vsel %vm10687, %v10686, %v10685
        %v10689 = vrot.slane %v10624, 7
        %v10690 = vsel %vm10669, %v10689, %v10621
        %v10691 = vrot.slane %v10627, 6
        %v10692 = vsel %vm10672, %v10691, %v10690
        %v10693 = vrot.slane %v10630, 5
        %v10694 = vsel %vm10675, %v10693, %v10692
        %v10695 = vrot.slane %v10633, 4
        %v10696 = vsel %vm10678, %v10695, %v10694
        %v10697 = vrot.slane %v10636, 3
        %v10698 = vsel %vm10681, %v10697, %v10696
        %v10699 = vrot.slane %v10639, 2
        %v10700 = vsel %vm10684, %v10699, %v10698
        %v10701 = vrot.slane %v10642, 1
        %v10702 = vsel %vm10687, %v10701, %v10700
        %v10703 = vrot.slane %v10625, 7
        %v10704 = vsel %vm10669, %v10703, %v10622
        %v10705 = vrot.slane %v10628, 6
        %v10706 = vsel %vm10672, %v10705, %v10704
        %v10707 = vrot.slane %v10631, 5
        %v10708 = vsel %vm10675, %v10707, %v10706
        %v10709 = vrot.slane %v10634, 4
        %v10710 = vsel %vm10678, %v10709, %v10708
        %v10711 = vrot.slane %v10637, 3
        %v10712 = vsel %vm10681, %v10711, %v10710
        %v10713 = vrot.slane %v10640, 2
        %v10714 = vsel %vm10684, %v10713, %v10712
        %v10715 = vrot.slane %v10643, 1
        %v10716 = vsel %vm10687, %v10715, %v10714
        %v10720 = vadd.f32 %v10688, %v10702
        %v10721 = vadd.f32 %v10720, %v10716
        %10722 = vadd.xlane.f32.xlu0 %v10721
        %v10723 = vpop.xlane.xlu0 %10722
        %v10724 = vld [vmem:[#allocation10] sm:$0x1]
        %v10726 = vperm.slane %v10724, 0
        %v10728 = vadd.f32 %v10723, %v10726
        %v10729 = vxor.u32 %v10728, 2147483648
        %v10730 = vmul.f32 %v10729, 1.442695
        %v10731 = vpow.pop %v10730
        %v10732 = vadd.f32 %v10731, 1.0
        %v10733 = vrcp.pop %v10732
        %v10734 = vmul.f32 %v10732, %v10733
        %v10735 = vsub.f32 1.0, %v10734
        %v10736 = vmul.f32 %v10733, %v10735
        %v10737 = vadd.f32 %v10733, %v10736
        %vm10738 = vweird.f32 %v10732
        %vm10739 = vweird.f32 %v10733
        %vm10740 = vmor %vm10738, %vm10739
        %v10741 = vsel %vm10740, %v10733, %v10737
        %v10742 = vand.u32 2147483647, %v10732
        %vm10743 = vcmp.eq.f32.partialorder %v10742, 8.507059e+37
        %v10744 = vand.u32 %v10732, 2147483648
        %v10745 = vor.u32 1.1754944e-38, %v10744
        %v10746 = vsel %vm10743, %v10745, %v10741
        %v10747 = vmul.f32 1.0, %v10746
        %10748 = vst [vmem:[%s305] sm:$0xff] %v10747
        %s10749 = sand.u32 %s142, 1
        %s10750 = scalar_lea.sflag [#allocation4], %s10749
        %s10751 = sand.u32 %s142, 1
        %s10752 = smul.addr %s10751, 8
        %s10753 = scalar_lea.vmem [#allocation11], %s10752
        // Predicated region
        $region61: #{tpu_custom_call.1} parent=39 // pred_check
          %p10754 = pneg %p152
        $region62: #{tpu_custom_call.1} parent=39 // pred_check_branch
          %10756 = sbr.rel (%p10754) target = $region64
        $region63: #{tpu_custom_call.1} parent=39 // pred_region
          %10758 = vsyncadd %s10750, 0
          %s10759 = smul.addr %s24, 8
          %s10760 = scalar_lea.hbm %s5, %s10759
          %s10762 = sshll.u32 %s10753, 4
          %s10763 = int_to_ptr.vmem [resolvable:$true] %s10762
          %s10764 = sshll.u32 %s10760, 4
          %s10765 = int_to_ptr.hbm [resolvable:$true] %s10764
          %10767 = dma.vmem_to_hbm [thread:$0]  %s10763, 128, %s10765, %s10750
        $region64: #{tpu_custom_call.1} parent=39 // pred_fallthru
          _
      $region40: #{tpu_custom_call.1} parent=5 // pred_fallthru
        _
      %p10768 = scmp.le.s32.totalorder 2, %s19
      // Predicated region
      $region65: #{tpu_custom_call.1} parent=5 // pred_check
        %p10769 = pneg %p10768
      $region66: #{tpu_custom_call.1} parent=5 // pred_check_branch
        %10771 = sbr.rel (%p10769) target = $region68
      $region67: #{tpu_custom_call.1} parent=5 // pred_region
        %s10772 = ssub.s32 %s19, 2
        // Predicated region
        $region69: #{tpu_custom_call.1} parent=67 // pred_check
          %p10773 = pneg %p158
        $region70: #{tpu_custom_call.1} parent=67 // pred_check_branch
          %10775 = sbr.rel (%p10773) target = $region72
        $region71: #{tpu_custom_call.1} parent=67 // pred_region
          %s10776 = sand.u32 %s143, 1
          %s10777 = scalar_lea.sflag [#allocation4], %s10776
          %s10778 = sand.u32 %s143, 1
          %s10779 = smul.addr %s10778, 8
          %s10780 = scalar_lea.vmem [#allocation11], %s10779
          %10782 = dma.done %s10777, 128
        $region72: #{tpu_custom_call.1} parent=67 // pred_fallthru
          _
      $region68: #{tpu_custom_call.1} parent=5 // pred_fallthru
        _
    $region6: #{tpu_custom_call.1} parent=1 // loop_footer
      %s23 = sadd.s32 1, %s19
    $region7: #{tpu_custom_call.1} parent=1 // loop_footer_branch
      %18 = sbr.rel target = $region3
    $region8: #{tpu_custom_call.1} parent=1 // loop_exit
      _
    %10783 = vsyncpa [#allocation3], 1
    %s10784 = scalar_lea.sflag [#allocation3], 1
    %10785 = vsyncpa %s10784, 1
    %10786 = vsyncpa [#allocation6], 1
    %10787 = vsyncpa [#allocation9], 1
    %10788 = vsyncpa [#allocation4], 1
    %s10789 = scalar_lea.sflag [#allocation4], 1
    %10790 = vsyncpa %s10789, 1

</llo_original>
